<compile_context>
chip_gen: v6e
topology: v6e:2x2x1
jax: 0.10.0
libtpu: 0.0.40
codegen_flags: <defaults>
</compile_context>

<pallas_src>
import math

import jax
import jax.numpy as jnp
from jax.experimental import pallas as pl
from jax.experimental.pallas import tpu as pltpu

EPS = 1e-5  # torch.nn.LayerNorm default
F32 = jnp.float32
BF16 = jnp.bfloat16


# ----------------------------------------------------------------------------
# small in-kernel helpers
# ----------------------------------------------------------------------------
def _gelu(x):
    # exact (erf-based) GELU, matching torch.nn.GELU() default
    return 0.5 * x * (1.0 + jax.lax.erf(x / math.sqrt(2.0)))


def _layer_norm(x, gamma, beta):
    mu = jnp.mean(x, axis=-1, keepdims=True)
    var = jnp.mean(jnp.square(x - mu), axis=-1, keepdims=True)
    return (x - mu) * jax.lax.rsqrt(var + EPS) * gamma + beta


def _bf(x):
    return x.astype(BF16)


def _group_spec(arr):
    """BlockSpec selecting group `i` along a leading stacking axis."""
    nd = arr.ndim
    return pl.BlockSpec((1,) + tuple(arr.shape[1:]),
                        lambda i, _nd=nd: (i,) + (0,) * (_nd - 1))


# ----------------------------------------------------------------------------
# Kernel 1: grouped fused Adapter (Linear -> GELU -> LayerNorm -> Linear)
# One grid step per adapter; weights pre-stacked at init (no per-call stack).
# ----------------------------------------------------------------------------
def _grouped_adapter_kernel(x_ref, w1_ref, b1_ref, g_ref, be_ref,
                            w2_ref, b2_ref, o_ref):
    x = x_ref[0]                                                  # (rows, Din)
    h = jnp.dot(_bf(x), w1_ref[0], preferred_element_type=F32) + b1_ref[0]
    h = _layer_norm(_gelu(h), g_ref[0], be_ref[0])
    o_ref[0] = jnp.dot(_bf(h), w2_ref[0], preferred_element_type=F32) + b2_ref[0]


def grouped_adapter_apply(xg, stacked_params, B, S):
    """xg: (G, B*S, Din) stacked inputs; stacked_params: pre-stacked (G,...) arrays."""
    w1, b1, g, be, w2, b2 = stacked_params
    G, rows, din = xg.shape
    dh = w1.shape[-1]
    dout = w2.shape[-1]
    out = pl.pallas_call(
        _grouped_adapter_kernel,
        out_shape=jax.ShapeDtypeStruct((G, rows, dout), F32),
        grid_spec=pltpu.PrefetchScalarGridSpec(
            num_scalar_prefetch=0,
            grid=(G,),
            in_specs=[
                pl.BlockSpec((1, rows, din), lambda i: (i, 0, 0)),
                pl.BlockSpec((1, din, dh), lambda i: (i, 0, 0)),
                pl.BlockSpec((1, 1, dh), lambda i: (i, 0, 0)),
                pl.BlockSpec((1, 1, dh), lambda i: (i, 0, 0)),
                pl.BlockSpec((1, 1, dh), lambda i: (i, 0, 0)),
                pl.BlockSpec((1, dh, dout), lambda i: (i, 0, 0)),
                pl.BlockSpec((1, 1, dout), lambda i: (i, 0, 0)),
            ],
            out_specs=pl.BlockSpec((1, rows, dout), lambda i: (i, 0, 0)),
        ),
        compiler_params=pltpu.CompilerParams(dimension_semantics=("parallel",)),
    )(xg, w1, b1, g, be, w2, b2)
    return [out[i].reshape(B, S, dout) for i in range(G)]


# ----------------------------------------------------------------------------
# Kernel 2: grouped Encoder layer — fused QKV projection, per-head attention
# with wo folded into the head loop (no scratch), FFN, residuals, LayerNorm.
# Group axis G (size 1 or 2) is a "parallel" grid dim (megacore friendly).
# ----------------------------------------------------------------------------
def _make_encoder_kernel(num_heads):
    def kernel(q_ref, kv_ref,
               wqkv_ref, bqkv_ref, wo_ref, bo_ref,
               fw1_ref, fb1_ref, fw2_ref, fb2_ref, g_ref, b_ref, o_ref):
        _, B, Sq, D = q_ref.shape
        Sk = kv_ref.shape[2]
        hd = D // num_heads
        scale = 1.0 / math.sqrt(hd)

        q = q_ref[0]                                            # (B, Sq, D)
        kv = kv_ref[0]                                          # (B, Sk, D)
        q2 = q.reshape(B * Sq, D)
        kv2 = kv.reshape(B * Sk, D)

        # fused QKV projection: one MXU push over stacked q/kv rows, N = 3D
        rows = jnp.concatenate([q2, kv2], axis=0)               # (B*(Sq+Sk), D)
        proj = (jnp.dot(_bf(rows), wqkv_ref[0], preferred_element_type=F32)
                + bqkv_ref[0])
        qp = proj[:B * Sq, 0:D].reshape(B, Sq, D)
        kp = proj[B * Sq:, D:2 * D].reshape(B, Sk, D)
        vp = proj[B * Sq:, 2 * D:3 * D].reshape(B, Sk, D)

        # per-head attention; output projection folded into the head loop
        wo = wo_ref[0]
        out_acc = jnp.zeros((B * Sq, D), F32)
        for h in range(num_heads):                              # static unroll
            lo = h * hd
            qh = _bf(qp[:, :, lo:lo + hd])
            kh = _bf(kp[:, :, lo:lo + hd])
            vh = _bf(vp[:, :, lo:lo + hd])
            s = jnp.einsum('bqd,bkd->bqk', qh, kh,
                           preferred_element_type=F32) * scale
            s = s - jnp.max(s, axis=-1, keepdims=True)
            p = jnp.exp(s)
            p = p / jnp.sum(p, axis=-1, keepdims=True)          # exact softmax
            oh = jnp.einsum('bqk,bkd->bqd', _bf(p), vh,
                            preferred_element_type=F32)         # (B, Sq, hd)
            out_acc = out_acc + jnp.dot(_bf(oh.reshape(B * Sq, hd)),
                                        wo[lo:lo + hd, :],
                                        preferred_element_type=F32)
        attn = out_acc + bo_ref[0]

        x1 = attn + q2                                          # attn dropout = id
        hdn = _gelu(jnp.dot(_bf(x1), fw1_ref[0],
                            preferred_element_type=F32) + fb1_ref[0])
        ff = jnp.dot(_bf(hdn), fw2_ref[0],
                     preferred_element_type=F32) + fb2_ref[0]
        x2 = ff + x1                                            # fn dropout = id
        o_ref[0] = _layer_norm(x2, g_ref[0], b_ref[0]).reshape(B, Sq, D)

    return kernel


def encoder_group_apply(q_g, kv_g, layer_params, num_heads):
    """q_g: (G, B, Sq, D); kv_g: (G, B, Sk, D); layer_params: (G,...)-stacked."""
    G, B, Sq, D = q_g.shape
    Sk = kv_g.shape[2]
    assert D % num_heads == 0, "feature_dim must be divisible by head_num"
    in_specs = [_group_spec(q_g), _group_spec(kv_g)] + [_group_spec(p)
                                                        for p in layer_params]
    # TODO(synk): on v7x, an additional batch grid axis could shard B across
    # the two TensorCores for G=1 stages; omitted (neutral/negative on v5e/v6e).
    return pl.pallas_call(
        _make_encoder_kernel(num_heads),
        out_shape=jax.ShapeDtypeStruct((G, B, Sq, D), F32),
        grid_spec=pltpu.PrefetchScalarGridSpec(
            num_scalar_prefetch=0,
            grid=(G,),
            in_specs=in_specs,
            out_specs=pl.BlockSpec((1, B, Sq, D), lambda i: (i, 0, 0, 0)),
        ),
        compiler_params=pltpu.CompilerParams(dimension_semantics=("parallel",)),
    )(q_g, kv_g, *layer_params)


def _slice_group(layer_params, g):
    return tuple(p[g:g + 1] for p in layer_params)


# ----------------------------------------------------------------------------
# Kernel 3: fused bilinear + both Map_Network (full_network) applications.
# y = (image @ w) @ text^T: only column 0 and row 0 are consumed downstream,
# so only those are computed.  The concat(image, text_cls_pad) is folded in as
# x @ w1_top + cls @ w1_bottom (cls contribution computed once per batch row).
# ----------------------------------------------------------------------------
def _fusion_kernel(img_ref, txt_ref, wbil_ref, w1a_ref, w1b_ref, b1_ref,
                   g_ref, be_ref, w2_ref, b2_ref, it_ref, ti_ref):
    B, Si, Dimg = img_ref.shape
    St = txt_ref.shape[1]
    Dt = txt_ref.shape[2]
    dh = w1a_ref.shape[1]
    dout = w2_ref.shape[1]

    img = img_ref[...]
    txt = txt_ref[...]
    img2 = img.reshape(B * Si, Dimg)
    txt2 = txt.reshape(B * St, Dt)
    txt_cls = txt[:, 0, :]                                       # (B, Dt)
    img_cls = img[:, 0, :]                                       # (B, Dimg)

    # bilinear pieces: y[:, :, 0] and y[:, 0, :]
    xw = jnp.dot(_bf(img2), wbil_ref[...],
                 preferred_element_type=F32).reshape(B, Si, Dt)
    y_col = jnp.sum(xw * txt_cls[:, None, :], axis=-1, keepdims=True)  # (B,Si,1)
    y_row = jnp.sum(xw[:, 0:1, :] * txt, axis=-1, keepdims=True)       # (B,St,1)

    w1a = w1a_ref[...]
    w1b = w1b_ref[...]
    b1 = b1_ref[...]
    g = g_ref[...]
    be = be_ref[...]
    w2 = w2_ref[...]
    b2 = b2_ref[...]

    # full_network(concat(image, text_cls_pad)) + y[:, :, 0:1]
    cls_t = jnp.dot(_bf(txt_cls), w1b, preferred_element_type=F32)      # (B, dh)
    h_it = (jnp.dot(_bf(img2), w1a, preferred_element_type=F32)
            .reshape(B, Si, dh) + cls_t[:, None, :] + b1)
    h_it = _layer_norm(_gelu(h_it), g, be)
    it_ref[...] = ((jnp.dot(_bf(h_it.reshape(B * Si, dh)), w2,
                            preferred_element_type=F32) + b2)
                   .reshape(B, Si, dout) + y_col)

    # full_network(concat(text, image_cls_pad)) + y[:, 0, :][..., None]
    cls_i = jnp.dot(_bf(img_cls), w1b, preferred_element_type=F32)      # (B, dh)
    h_ti = (jnp.dot(_bf(txt2), w1a, preferred_element_type=F32)
            .reshape(B, St, dh) + cls_i[:, None, :] + b1)
    h_ti = _layer_norm(_gelu(h_ti), g, be)
    ti_ref[...] = ((jnp.dot(_bf(h_ti.reshape(B * St, dh)), w2,
                            preferred_element_type=F32) + b2)
                   .reshape(B, St, dout) + y_row)


def fusion_apply(image, text, w_bil, fn_params):
    B, Si, _ = image.shape
    St = text.shape[1]
    w1a, w1b, b1, g, be, w2, b2 = fn_params
    dout = w2.shape[1]
    return pl.pallas_call(
        _fusion_kernel,
        out_shape=(jax.ShapeDtypeStruct((B, Si, dout), F32),
                   jax.ShapeDtypeStruct((B, St, dout), F32)),
    )(image, text, w_bil, w1a, w1b, b1, g, be, w2, b2)


# ----------------------------------------------------------------------------
# Kernel 4: mean over seq + MLP head (Linear -> GELU -> LN -> Linear).
# All three head applications stacked; class dim lane-padded to 128 at init.
# ----------------------------------------------------------------------------
def _mean_mlp_kernel(x_ref, w1, b1, g, be, w2, b2, o_ref):
    m = jnp.mean(x_ref[...], axis=1)                                    # (N, D)
    h = jnp.dot(_bf(m), w1[...], preferred_element_type=F32) + b1[...]
    h = _layer_norm(_gelu(h), g[...], be[...])
    o_ref[...] = jnp.dot(_bf(h), w2[...], preferred_element_type=F32) + b2[...]


def mean_mlp_apply(x, params, class_num):
    """x: (N, S, D) -> (N, class_num)."""
    w1, b1, g, be, w2, b2 = params                       # w2/b2 lane-padded
    n = x.shape[0]
    cpad = w2.shape[1]
    out = pl.pallas_call(
        _mean_mlp_kernel,
        out_shape=jax.ShapeDtypeStruct((n, cpad), F32),
    )(x, w1, b1, g, be, w2, b2)
    return out[:, :class_num]


# ----------------------------------------------------------------------------
# deterministic parameter construction (synthetic — no checkpoint load)
# Matmul weights stored bf16; biases / LN params f32.  All group stacking
# (adapters, encoder pairs, QKV concat) is done here, outside the jit.
# ----------------------------------------------------------------------------
def init_linear(key, din, dout):
    kw, kb = jax.random.split(key)
    bound = 1.0 / math.sqrt(din)
    w = jax.random.uniform(kw, (din, dout), F32, -bound, bound).astype(BF16)
    b = jax.random.uniform(kb, (1, dout), F32, -bound, bound)
    return w, b


def init_adapter(key, din, dh, dout):
    k1, k2 = jax.random.split(key)
    w1, b1 = init_linear(k1, din, dh)
    w2, b2 = init_linear(k2, dh, dout)
    return (w1, b1, jnp.ones((1, dh), F32), jnp.zeros((1, dh), F32), w2, b2)


def init_mlp(key, din, dh, dout, lane=128):
    w1, b1, g, be, w2, b2 = init_adapter(key, din, dh, dout)
    cpad = max(lane, ((dout + lane - 1) // lane) * lane)
    w2p = jnp.zeros((dh, cpad), BF16).at[:, :dout].set(w2)
    b2p = jnp.zeros((1, cpad), F32).at[:, :dout].set(b2)
    return (w1, b1, g, be, w2p, b2p)


def init_full_network(key, d, dh, dout):
    # Map_Network(input_dim=2*d, hidden=dh, output=dout); w1 split for fused kernel.
    k1, k2 = jax.random.split(key)
    w1, b1 = init_linear(k1, 2 * d, dh)
    w2, b2 = init_linear(k2, dh, dout)
    w1a = w1[:d]          # multiplies the row-wise ("own") features
    w1b = w1[d:]          # multiplies the broadcast cls pad
    return (w1a, w1b, b1, jnp.ones((1, dh), F32), jnp.zeros((1, dh), F32), w2, b2)


def init_encoder_flat(key, d):
    keys = jax.random.split(key, 6)
    wq, bq = init_linear(keys[0], d, d)
    wk, bk = init_linear(keys[1], d, d)
    wv, bv = init_linear(keys[2], d, d)
    wqkv = jnp.concatenate([wq, wk, wv], axis=1)          # (d, 3d) bf16
    bqkv = jnp.concatenate([bq, bk, bv], axis=1)          # (1, 3d) f32
    wo, bo = init_linear(keys[3], d, d)
    fw1, fb1 = init_linear(keys[4], d, 2 * d)
    fw2, fb2 = init_linear(keys[5], 2 * d, d)
    g = jnp.ones((1, d), F32)
    b = jnp.zeros((1, d), F32)
    return (wqkv, bqkv, wo, bo, fw1, fb1, fw2, fb2, g, b)


def stack_encoder_groups(group_layer_params):
    """group_layer_params: list (over groups) of per-layer param-tuple lists.
    Returns: list over layers of tuples of (G, ...) stacked arrays."""
    num_layers = len(group_layer_params[0])
    stacked = []
    for l in range(num_layers):
        per_group = [grp[l] for grp in group_layer_params]
        stacked.append(tuple(jnp.stack([pg[i] for pg in per_group], axis=0)
                             for i in range(len(per_group[0]))))
    return stacked


# ----------------------------------------------------------------------------
# full forward pass (glue in plain JAX, compute inside Pallas kernels)
# ----------------------------------------------------------------------------
def sentiment_forward(params, cfg, id_value, text4, chatglm4, image4, cogvlm4):
    del id_value  # unused in the reference forward as well
    H = cfg["head_num"]

    def to3d(x):
        x = x.astype(F32)
        return x.reshape((x.shape[0], x.shape[2], x.shape[3]))

    raw = [to3d(text4), to3d(chatglm4), to3d(image4), to3d(cogvlm4)]
    B, S, din = raw[0].shape
    xg = jnp.stack([r.reshape(B * S, din) for r in raw], axis=0)
    text, chatglm, image, cogvlm = grouped_adapter_apply(
        xg, params["adapters"], B, S)

    # text_multi_head_attention stack (G=1 group grid)
    tq = text[None]
    tkv = chatglm[None]
    for lp in params["text_mha"]:
        tq = encoder_group_apply(tq, tkv, lp, H)
    text_chatglm = tq[0]

    # bilinear + both full_network applications (one fused call)
    image_text, text_image = fusion_apply(image, text, params["w"],
                                          params["full_network"])

    paired = (image_text.shape == text_image.shape
              and text_chatglm.shape == cogvlm.shape)
    if paired:
        # pair 1: image_text_mha (q=image_text, kv=text_chatglm)
        #      || image_cogvlm_mha (q=text_image, kv=cogvlm)
        q_g = jnp.stack([image_text, text_image], axis=0)
        kv_g = jnp.stack([text_chatglm, cogvlm], axis=0)
        for lp in params["pair1_mha"]:
            q_g = encoder_group_apply(q_g, kv_g, lp, H)
        pair1 = q_g
        # pair 2: cross_text (q=pair1[0], kv=pair1[1])
        #      || cross_image (q=pair1[1], kv=pair1[0])
        q_g2 = pair1
        kv_g2 = pair1[::-1]
        for lp in params["pair2_mha"]:
            q_g2 = encoder_group_apply(q_g2, kv_g2, lp, H)
        image_text_encoder, image_cogvlm_encoder = pair1[0], pair1[1]
        cross_text_encoder, cross_image_encoder = q_g2[0], q_g2[1]
    else:
        def one_stack(q, kv, layers, g):
            q = q[None]
            kv = kv[None]
            for lp in layers:
                q = encoder_group_apply(q, kv, _slice_group(lp, g), H)
            return q[0]
        image_text_encoder = one_stack(image_text, text_chatglm,
                                       params["pair1_mha"], 0)
        image_cogvlm_encoder = one_stack(text_image, cogvlm,
                                         params["pair1_mha"], 1)
        cross_text_encoder = one_stack(image_text_encoder, image_cogvlm_encoder,
                                       params["pair2_mha"], 0)
        cross_image_encoder = one_stack(image_cogvlm_encoder, image_text_encoder,
                                        params["pair2_mha"], 1)

    # zero-pad + add replaced by a direct (sliced) add
    n = cross_image_encoder.shape[1]
    if cross_image_encoder.shape == cross_text_encoder.shape:
        total_encoder = cross_text_encoder + cross_image_encoder
    else:
        total_encoder = cross_text_encoder.at[:, :n, :].add(cross_image_encoder)

    C = cfg["class_num"]
    if total_encoder.shape == image_text_encoder.shape == image_cogvlm_encoder.shape:
        stacked = jnp.concatenate(
            [total_encoder, image_text_encoder, image_cogvlm_encoder], axis=0)
        outs = mean_mlp_apply(stacked, params["mlp"], C)
        outputs = outs[:B]
        chatglm_output = outs[B:2 * B]
        cross_image_output = outs[2 * B:]
    else:
        outputs = mean_mlp_apply(total_encoder, params["mlp"], C)
        chatglm_output = mean_mlp_apply(image_text_encoder, params["mlp"], C)
        cross_image_output = mean_mlp_apply(image_cogvlm_encoder, params["mlp"], C)
    return outputs, chatglm_output, cross_image_output


# ----------------------------------------------------------------------------
if __name__ == "__main__":
    # small configuration consistent with the module's parser arguments
    cfg = dict(
        batch=2, seq=8,
        text_input_dim=128, text_hidden_dim=128, text_output_dim=128,
        chatglm_input_dim=128, chatglm_hidden_dim=128, chatglm_output_dim=128,
        image_input_dim=128, image_hidden_dim=128, image_output_dim=128,
        cogvlm_input_dim=128, cogvlm_hidden_dim=128, cogvlm_output_dim=128,
        head_num=4, layer_num=1, class_num=3,
    )
    D = cfg["text_output_dim"]
    L = cfg["layer_num"]

    root = jax.random.PRNGKey(0)
    keys = jax.random.split(root, 16)

    # 4 adapters, identical shapes in this config -> pre-stacked along group dim
    adapter_dims = [
        (cfg["text_input_dim"], cfg["text_hidden_dim"], cfg["text_output_dim"]),
        (cfg["chatglm_input_dim"], cfg["chatglm_hidden_dim"], cfg["chatglm_output_dim"]),
        (cfg["image_input_dim"], cfg["image_hidden_dim"], cfg["image_output_dim"]),
        (cfg["cogvlm_input_dim"], cfg["cogvlm_hidden_dim"], cfg["cogvlm_output_dim"]),
    ]
    assert len(set(adapter_dims)) == 1, "grouped adapter path assumes equal dims"
    adapters_flat = [init_adapter(k, *d) for k, d in zip(keys[:4], adapter_dims)]
    adapters = tuple(jnp.stack([a[i] for a in adapters_flat], axis=0)
                     for i in range(6))

    def make_stack(key, n_layers, d):
        return [init_encoder_flat(k, d) for k in jax.random.split(key, n_layers)]

    text_layers = make_stack(keys[4], L, D)
    image_text_layers = make_stack(keys[5], L, D)
    image_cogvlm_layers = make_stack(keys[6], L, D)
    cross_text_layers = make_stack(keys[7], L, D)
    cross_image_layers = make_stack(keys[8], L, D)

    assert cfg["text_output_dim"] == cfg["image_output_dim"]
    params = {
        "adapters": adapters,
        "text_mha": stack_encoder_groups([text_layers]),
        "pair1_mha": stack_encoder_groups([image_text_layers, image_cogvlm_layers]),
        "pair2_mha": stack_encoder_groups([cross_text_layers, cross_image_layers]),
        "mlp": init_mlp(keys[9], D, 256, cfg["class_num"]),
        # kaiming_normal_(nonlinearity='relu'): std = sqrt(2 / fan_in)
        "w": (jax.random.normal(keys[10],
                                (cfg["image_output_dim"], cfg["text_output_dim"]),
                                F32)
              * math.sqrt(2.0 / cfg["text_output_dim"])).astype(BF16),
        # full_network: Map_Network(text_output_dim + image_output_dim -> 512 -> D)
        "full_network": init_full_network(keys[11], D, 512, D),
    }

    B, S = cfg["batch"], cfg["seq"]
    dkeys = jax.random.split(keys[12], 4)
    text4 = jax.random.normal(dkeys[0], (B, 1, S, cfg["text_input_dim"]), F32)
    chatglm4 = jax.random.normal(dkeys[1], (B, 1, S, cfg["chatglm_input_dim"]), F32)
    image4 = jax.random.normal(dkeys[2], (B, 1, S, cfg["image_input_dim"]), F32)
    cogvlm4 = jax.random.normal(dkeys[3], (B, 1, S, cfg["cogvlm_input_dim"]), F32)
    id_value = jnp.arange(B, dtype=jnp.int32)

    fwd = jax.jit(lambda p, idv, t, c, i, cg:
                  sentiment_forward(p, cfg, idv, t, c, i, cg))
    outs = fwd(params, id_value, text4, chatglm4, image4, cogvlm4)
    outs = jax.block_until_ready(outs)
    assert outs[0].shape == (B, cfg["class_num"])
    assert outs[1].shape == (B, cfg["class_num"])
    assert outs[2].shape == (B, cfg["class_num"])
    print("KERNEL_OK")
</pallas_src>

<mosaic_0001>
module attributes {stable_mosaic.version = 11 : i64} {
  func.func @_grouped_adapter_kernel(%arg0: i32, %arg1: memref<1x16x128xf32, #tpu.memory_space<vmem>>, %arg2: memref<1x128x128xbf16, #tpu.memory_space<vmem>>, %arg3: memref<1x1x128xf32, #tpu.memory_space<vmem>>, %arg4: memref<1x1x128xf32, #tpu.memory_space<vmem>>, %arg5: memref<1x1x128xf32, #tpu.memory_space<vmem>>, %arg6: memref<1x128x128xbf16, #tpu.memory_space<vmem>>, %arg7: memref<1x1x128xf32, #tpu.memory_space<vmem>>, %arg8: memref<1x16x128xf32, #tpu.memory_space<vmem>>) attributes {dimension_semantics = [#tpu.dimension_semantics<parallel>], iteration_bounds = array<i64: 4>, scalar_prefetch = 0 : i64, scratch_operands = 0 : i64, tpu.core_type = #tpu.core_type<tc>, window_params = [{transform_indices = @transform_0, window_bounds = array<i64: 1, 16, 128>}, {transform_indices = @transform_1, window_bounds = array<i64: 1, 128, 128>}, {transform_indices = @transform_2, window_bounds = array<i64: 1, 1, 128>}, {transform_indices = @transform_3, window_bounds = array<i64: 1, 1, 128>}, {transform_indices = @transform_4, window_bounds = array<i64: 1, 1, 128>}, {transform_indices = @transform_5, window_bounds = array<i64: 1, 128, 128>}, {transform_indices = @transform_6, window_bounds = array<i64: 1, 1, 128>}, {transform_indices = @transform_7, window_bounds = array<i64: 1, 16, 128>}]} {
    %c0 = arith.constant 0 : index
    %c0_0 = arith.constant 0 : index
    %c0_1 = arith.constant 0 : index
    %0 = vector.load %arg1[%c0, %c0_0, %c0_1] : memref<1x16x128xf32, #tpu.memory_space<vmem>>, vector<1x16x128xf32>
    %1 = vector.shape_cast %0 : vector<1x16x128xf32> to vector<16x128xf32>
    %2 = arith.truncf %1 : vector<16x128xf32> to vector<16x128xbf16>
    %c0_2 = arith.constant 0 : index
    %c0_3 = arith.constant 0 : index
    %c0_4 = arith.constant 0 : index
    %3 = vector.load %arg2[%c0_2, %c0_3, %c0_4] : memref<1x128x128xbf16, #tpu.memory_space<vmem>>, vector<1x128x128xbf16>
    %4 = vector.shape_cast %3 : vector<1x128x128xbf16> to vector<128x128xbf16>
    %cst = arith.constant dense<0.000000e+00> : vector<16x128xf32>
    %5 = tpu.matmul %2, %4, %cst {dimension_numbers = #tpu.dot_dimension_numbers<[1], [0], [0], [1], [0, 0, 1, 1], [], []>} : vector<16x128xbf16>, vector<128x128xbf16>, vector<16x128xf32> -> vector<16x128xf32>
    %c0_5 = arith.constant 0 : index
    %c0_6 = arith.constant 0 : index
    %c0_7 = arith.constant 0 : index
    %6 = vector.load %arg3[%c0_5, %c0_6, %c0_7] : memref<1x1x128xf32, #tpu.memory_space<vmem>>, vector<1x1x128xf32>
    %7 = vector.shape_cast %6 : vector<1x1x128xf32> to vector<1x128xf32>
    %8 = vector.broadcast %7 : vector<1x128xf32> to vector<16x128xf32>
    %9 = arith.addf %5, %8 : vector<16x128xf32>
    %cst_8 = arith.constant 5.000000e-01 : f32
    %10 = vector.broadcast %cst_8 : f32 to vector<16x128xf32>
    %11 = arith.mulf %10, %9 : vector<16x128xf32>
    %cst_9 = arith.constant 1.41421354 : f32
    %12 = vector.broadcast %cst_9 : f32 to vector<16x128xf32>
    %13 = arith.divf %9, %12 : vector<16x128xf32>
    %14 = math.erf %13 : vector<16x128xf32>
    %cst_10 = arith.constant 1.000000e+00 : f32
    %15 = vector.broadcast %cst_10 : f32 to vector<16x128xf32>
    %16 = arith.addf %15, %14 : vector<16x128xf32>
    %17 = arith.mulf %11, %16 : vector<16x128xf32>
    %c0_11 = arith.constant 0 : index
    %c0_12 = arith.constant 0 : index
    %c0_13 = arith.constant 0 : index
    %18 = vector.load %arg4[%c0_11, %c0_12, %c0_13] : memref<1x1x128xf32, #tpu.memory_space<vmem>>, vector<1x1x128xf32>
    %19 = vector.shape_cast %18 : vector<1x1x128xf32> to vector<1x128xf32>
    %c0_14 = arith.constant 0 : index
    %c0_15 = arith.constant 0 : index
    %c0_16 = arith.constant 0 : index
    %20 = vector.load %arg5[%c0_14, %c0_15, %c0_16] : memref<1x1x128xf32, #tpu.memory_space<vmem>>, vector<1x1x128xf32>
    %21 = vector.shape_cast %20 : vector<1x1x128xf32> to vector<1x128xf32>
    %cst_17 = arith.constant dense<0.000000e+00> : vector<16xf32>
    %22 = vector.multi_reduction <add>, %17, %cst_17 [1] : vector<16x128xf32> to vector<16xf32>
    %23 = vector.shape_cast %22 : vector<16xf32> to vector<16x1xf32>
    %cst_18 = arith.constant 1.280000e+02 : f32
    %24 = vector.broadcast %cst_18 : f32 to vector<16x1xf32>
    %25 = arith.divf %23, %24 : vector<16x1xf32>
    %26 = vector.broadcast %25 : vector<16x1xf32> to vector<16x128xf32>
    %27 = arith.subf %17, %26 : vector<16x128xf32>
    %28 = arith.mulf %27, %27 : vector<16x128xf32>
    %cst_19 = arith.constant dense<0.000000e+00> : vector<16xf32>
    %29 = vector.multi_reduction <add>, %28, %cst_19 [1] : vector<16x128xf32> to vector<16xf32>
    %30 = vector.shape_cast %29 : vector<16xf32> to vector<16x1xf32>
    %cst_20 = arith.constant 1.280000e+02 : f32
    %31 = vector.broadcast %cst_20 : f32 to vector<16x1xf32>
    %32 = arith.divf %30, %31 : vector<16x1xf32>
    %33 = vector.broadcast %25 : vector<16x1xf32> to vector<16x128xf32>
    %34 = arith.subf %17, %33 : vector<16x128xf32>
    %cst_21 = arith.constant 9.99999974E-6 : f32
    %35 = vector.broadcast %cst_21 : f32 to vector<16x1xf32>
    %36 = arith.addf %32, %35 : vector<16x1xf32>
    %37 = math.rsqrt %36 : vector<16x1xf32>
    %38 = vector.broadcast %37 : vector<16x1xf32> to vector<16x128xf32>
    %39 = arith.mulf %34, %38 : vector<16x128xf32>
    %40 = vector.broadcast %19 : vector<1x128xf32> to vector<16x128xf32>
    %41 = arith.mulf %39, %40 : vector<16x128xf32>
    %42 = vector.broadcast %21 : vector<1x128xf32> to vector<16x128xf32>
    %43 = arith.addf %41, %42 : vector<16x128xf32>
    %44 = arith.truncf %43 : vector<16x128xf32> to vector<16x128xbf16>
    %c0_22 = arith.constant 0 : index
    %c0_23 = arith.constant 0 : index
    %c0_24 = arith.constant 0 : index
    %45 = vector.load %arg6[%c0_22, %c0_23, %c0_24] : memref<1x128x128xbf16, #tpu.memory_space<vmem>>, vector<1x128x128xbf16>
    %46 = vector.shape_cast %45 : vector<1x128x128xbf16> to vector<128x128xbf16>
    %cst_25 = arith.constant dense<0.000000e+00> : vector<16x128xf32>
    %47 = tpu.matmul %44, %46, %cst_25 {dimension_numbers = #tpu.dot_dimension_numbers<[1], [0], [0], [1], [0, 0, 1, 1], [], []>} : vector<16x128xbf16>, vector<128x128xbf16>, vector<16x128xf32> -> vector<16x128xf32>
    %c0_26 = arith.constant 0 : index
    %c0_27 = arith.constant 0 : index
    %c0_28 = arith.constant 0 : index
    %48 = vector.load %arg7[%c0_26, %c0_27, %c0_28] : memref<1x1x128xf32, #tpu.memory_space<vmem>>, vector<1x1x128xf32>
    %49 = vector.shape_cast %48 : vector<1x1x128xf32> to vector<1x128xf32>
    %50 = vector.broadcast %49 : vector<1x128xf32> to vector<16x128xf32>
    %51 = arith.addf %47, %50 : vector<16x128xf32>
    %c0_29 = arith.constant 0 : index
    %c0_30 = arith.constant 0 : index
    %c0_31 = arith.constant 0 : index
    %52 = vector.load %arg8[%c0_29, %c0_30, %c0_31] : memref<1x16x128xf32, #tpu.memory_space<vmem>>, vector<1x16x128xf32>
    %53 = vector.shape_cast %52 : vector<1x16x128xf32> to vector<16x128xf32>
    %54 = vector.shape_cast %51 : vector<16x128xf32> to vector<1x16x128xf32>
    tpu.vector_store %arg8[%c0_29, %c0_30, %c0_31], %54 {strides = array<i32>} : memref<1x16x128xf32, #tpu.memory_space<vmem>>, vector<1x16x128xf32>,
    return
  }
  func.func @transform_0(%arg0: i32) -> (i32, i32, i32) {
    %c0_i32 = arith.constant 0 : i32
    %c0_i32_0 = arith.constant 0 : i32
    %c0_i32_1 = arith.constant 0 : i32
    return %arg0, %c0_i32, %c0_i32_0 : i32, i32, i32
  }
  func.func @transform_1(%arg0: i32) -> (i32, i32, i32) {
    %c0_i32 = arith.constant 0 : i32
    %c0_i32_0 = arith.constant 0 : i32
    %c0_i32_1 = arith.constant 0 : i32
    return %arg0, %c0_i32, %c0_i32_0 : i32, i32, i32
  }
  func.func @transform_2(%arg0: i32) -> (i32, i32, i32) {
    %c0_i32 = arith.constant 0 : i32
    %c0_i32_0 = arith.constant 0 : i32
    %c0_i32_1 = arith.constant 0 : i32
    return %arg0, %c0_i32, %c0_i32_0 : i32, i32, i32
  }
  func.func @transform_3(%arg0: i32) -> (i32, i32, i32) {
    %c0_i32 = arith.constant 0 : i32
    %c0_i32_0 = arith.constant 0 : i32
    %c0_i32_1 = arith.constant 0 : i32
    return %arg0, %c0_i32, %c0_i32_0 : i32, i32, i32
  }
  func.func @transform_4(%arg0: i32) -> (i32, i32, i32) {
    %c0_i32 = arith.constant 0 : i32
    %c0_i32_0 = arith.constant 0 : i32
    %c0_i32_1 = arith.constant 0 : i32
    return %arg0, %c0_i32, %c0_i32_0 : i32, i32, i32
  }
  func.func @transform_5(%arg0: i32) -> (i32, i32, i32) {
    %c0_i32 = arith.constant 0 : i32
    %c0_i32_0 = arith.constant 0 : i32
    %c0_i32_1 = arith.constant 0 : i32
    return %arg0, %c0_i32, %c0_i32_0 : i32, i32, i32
  }
  func.func @transform_6(%arg0: i32) -> (i32, i32, i32) {
    %c0_i32 = arith.constant 0 : i32
    %c0_i32_0 = arith.constant 0 : i32
    %c0_i32_1 = arith.constant 0 : i32
    return %arg0, %c0_i32, %c0_i32_0 : i32, i32, i32
  }
  func.func @transform_7(%arg0: i32) -> (i32, i32, i32) {
    %c0_i32 = arith.constant 0 : i32
    %c0_i32_0 = arith.constant 0 : i32
    %c0_i32_1 = arith.constant 0 : i32
    return %arg0, %c0_i32, %c0_i32_0 : i32, i32, i32
  }
}

module attributes {stable_mosaic.version = 11 : i64} {
  func.func @kernel(%arg0: i32, %arg1: memref<1x2x8x128xf32, #tpu.memory_space<vmem>>, %arg2: memref<1x2x8x128xf32, #tpu.memory_space<vmem>>, %arg3: memref<1x128x384xbf16, #tpu.memory_space<vmem>>, %arg4: memref<1x1x384xf32, #tpu.memory_space<vmem>>, %arg5: memref<1x128x128xbf16, #tpu.memory_space<vmem>>, %arg6: memref<1x1x128xf32, #tpu.memory_space<vmem>>, %arg7: memref<1x128x256xbf16, #tpu.memory_space<vmem>>, %arg8: memref<1x1x256xf32, #tpu.memory_space<vmem>>, %arg9: memref<1x256x128xbf16, #tpu.memory_space<vmem>>, %arg10: memref<1x1x128xf32, #tpu.memory_space<vmem>>, %arg11: memref<1x1x128xf32, #tpu.memory_space<vmem>>, %arg12: memref<1x1x128xf32, #tpu.memory_space<vmem>>, %arg13: memref<1x2x8x128xf32, #tpu.memory_space<vmem>>) attributes {dimension_semantics = [#tpu.dimension_semantics<parallel>], iteration_bounds = array<i64: 1>, scalar_prefetch = 0 : i64, scratch_operands = 0 : i64, tpu.core_type = #tpu.core_type<tc>, window_params = [{transform_indices = @transform_0, window_bounds = array<i64: 1, 2, 8, 128>}, {transform_indices = @transform_1, window_bounds = array<i64: 1, 2, 8, 128>}, {transform_indices = @transform_2, window_bounds = array<i64: 1, 128, 384>}, {transform_indices = @transform_3, window_bounds = array<i64: 1, 1, 384>}, {transform_indices = @transform_4, window_bounds = array<i64: 1, 128, 128>}, {transform_indices = @transform_5, window_bounds = array<i64: 1, 1, 128>}, {transform_indices = @transform_6, window_bounds = array<i64: 1, 128, 256>}, {transform_indices = @transform_7, window_bounds = array<i64: 1, 1, 256>}, {transform_indices = @transform_8, window_bounds = array<i64: 1, 256, 128>}, {transform_indices = @transform_9, window_bounds = array<i64: 1, 1, 128>}, {transform_indices = @transform_10, window_bounds = array<i64: 1, 1, 128>}, {transform_indices = @transform_11, window_bounds = array<i64: 1, 1, 128>}, {transform_indices = @transform_12, window_bounds = array<i64: 1, 2, 8, 128>}]} {
    %c0 = arith.constant 0 : index
    %c0_0 = arith.constant 0 : index
    %c0_1 = arith.constant 0 : index
    %c0_2 = arith.constant 0 : index
    %0 = vector.load %arg1[%c0, %c0_0, %c0_1, %c0_2] : memref<1x2x8x128xf32, #tpu.memory_space<vmem>>, vector<1x2x8x128xf32>
    %1 = vector.shape_cast %0 : vector<1x2x8x128xf32> to vector<2x8x128xf32>
    %c0_3 = arith.constant 0 : index
    %c0_4 = arith.constant 0 : index
    %c0_5 = arith.constant 0 : index
    %c0_6 = arith.constant 0 : index
    %2 = vector.load %arg2[%c0_3, %c0_4, %c0_5, %c0_6] : memref<1x2x8x128xf32, #tpu.memory_space<vmem>>, vector<1x2x8x128xf32>
    %3 = vector.shape_cast %2 : vector<1x2x8x128xf32> to vector<2x8x128xf32>
    %4 = vector.shape_cast %1 : vector<2x8x128xf32> to vector<16x128xf32>
    %5 = vector.shape_cast %3 : vector<2x8x128xf32> to vector<16x128xf32>
    %6 = tpu.concatenate %4, %5 in 0 : vector<16x128xf32>, vector<16x128xf32> -> vector<32x128xf32>
    %7 = arith.truncf %6 : vector<32x128xf32> to vector<32x128xbf16>
    %c0_7 = arith.constant 0 : index
    %c0_8 = arith.constant 0 : index
    %c0_9 = arith.constant 0 : index
    %8 = vector.load %arg3[%c0_7, %c0_8, %c0_9] : memref<1x128x384xbf16, #tpu.memory_space<vmem>>, vector<1x128x384xbf16>
    %9 = vector.shape_cast %8 : vector<1x128x384xbf16> to vector<128x384xbf16>
    %cst = arith.constant dense<0.000000e+00> : vector<32x384xf32>
    %10 = tpu.matmul %7, %9, %cst {dimension_numbers = #tpu.dot_dimension_numbers<[1], [0], [0], [1], [0, 0, 1, 1], [], []>} : vector<32x128xbf16>, vector<128x384xbf16>, vector<32x384xf32> -> vector<32x384xf32>
    %c0_10 = arith.constant 0 : index
    %c0_11 = arith.constant 0 : index
    %c0_12 = arith.constant 0 : index
    %11 = vector.load %arg4[%c0_10, %c0_11, %c0_12] : memref<1x1x384xf32, #tpu.memory_space<vmem>>, vector<1x1x384xf32>
    %12 = vector.shape_cast %11 : vector<1x1x384xf32> to vector<1x384xf32>
    %13 = vector.broadcast %12 : vector<1x384xf32> to vector<32x384xf32>
    %14 = arith.addf %10, %13 : vector<32x384xf32>
    %15 = vector.extract_strided_slice %14 {offsets = [0, 0], sizes = [16, 128], strides = [1, 1]} : vector<32x384xf32> to vector<16x128xf32>
    %16 = vector.shape_cast %15 : vector<16x128xf32> to vector<2x8x128xf32>
    %17 = vector.extract_strided_slice %14 {offsets = [16, 128], sizes = [16, 128], strides = [1, 1]} : vector<32x384xf32> to vector<16x128xf32>
    %18 = vector.shape_cast %17 : vector<16x128xf32> to vector<2x8x128xf32>
    %19 = vector.extract_strided_slice %14 {offsets = [16, 256], sizes = [16, 128], strides = [1, 1]} : vector<32x384xf32> to vector<16x128xf32>
    %20 = vector.shape_cast %19 : vector<16x128xf32> to vector<2x8x128xf32>
    %c0_13 = arith.constant 0 : index
    %c0_14 = arith.constant 0 : index
    %c0_15 = arith.constant 0 : index
    %21 = vector.load %arg5[%c0_13, %c0_14, %c0_15] : memref<1x128x128xbf16, #tpu.memory_space<vmem>>, vector<1x128x128xbf16>
    %22 = vector.shape_cast %21 : vector<1x128x128xbf16> to vector<128x128xbf16>
    %cst_16 = arith.constant 0.000000e+00 : f32
    %23 = vector.broadcast %cst_16 : f32 to vector<16x128xf32>
    %24 = vector.extract_strided_slice %16 {offsets = [0, 0, 0], sizes = [2, 8, 32], strides = [1, 1, 1]} : vector<2x8x128xf32> to vector<2x8x32xf32>
    %25 = arith.truncf %24 : vector<2x8x32xf32> to vector<2x8x32xbf16>
    %26 = vector.extract_strided_slice %18 {offsets = [0, 0, 0], sizes = [2, 8, 32], strides = [1, 1, 1]} : vector<2x8x128xf32> to vector<2x8x32xf32>
    %27 = arith.truncf %26 : vector<2x8x32xf32> to vector<2x8x32xbf16>
    %28 = vector.extract_strided_slice %20 {offsets = [0, 0, 0], sizes = [2, 8, 32], strides = [1, 1, 1]} : vector<2x8x128xf32> to vector<2x8x32xf32>
    %29 = arith.truncf %28 : vector<2x8x32xf32> to vector<2x8x32xbf16>
    "tpu.trace_start"() <{level = 10 : i32, message = "bqd,bkd->bqk"}> : () -> ()
    %cst_17 = arith.constant dense<0.000000e+00> : vector<2x8x8xf32>
    %30 = tpu.matmul %25, %27, %cst_17 {dimension_numbers = #tpu.dot_dimension_numbers<[2], [2], [1], [1], [0, 0, 0, 1, 1, 1], [0], [0]>} : vector<2x8x32xbf16>, vector<2x8x32xbf16>, vector<2x8x8xf32> -> vector<2x8x8xf32>
    "tpu.trace_stop"() : () -> ()
    %cst_18 = arith.constant 0.176776692 : f32
    %31 = vector.broadcast %cst_18 : f32 to vector<2x8x8xf32>
    %32 = arith.mulf %30, %31 : vector<2x8x8xf32>
    %cst_19 = arith.constant dense<0xFF800000> : vector<2x8xf32>
    %33 = vector.multi_reduction <maximumf>, %32, %cst_19 [2] : vector<2x8x8xf32> to vector<2x8xf32>
    %34 = vector.shape_cast %33 : vector<2x8xf32> to vector<2x8x1xf32>
    %35 = vector.broadcast %34 : vector<2x8x1xf32> to vector<2x8x8xf32>
    %36 = arith.subf %32, %35 : vector<2x8x8xf32>
    %37 = math.exp %36 : vector<2x8x8xf32>
    %cst_20 = arith.constant dense<0.000000e+00> : vector<2x8xf32>
    %38 = vector.multi_reduction <add>, %37, %cst_20 [2] : vector<2x8x8xf32> to vector<2x8xf32>
    %39 = vector.shape_cast %38 : vector<2x8xf32> to vector<2x8x1xf32>
    %40 = vector.broadcast %39 : vector<2x8x1xf32> to vector<2x8x8xf32>
    %41 = arith.divf %37, %40 : vector<2x8x8xf32>
    %42 = arith.truncf %41 : vector<2x8x8xf32> to vector<2x8x8xbf16>
    "tpu.trace_start"() <{level = 10 : i32, message = "bqk,bkd->bqd"}> : () -> ()
    %cst_21 = arith.constant dense<0.000000e+00> : vector<2x8x32xf32>
    %43 = tpu.matmul %42, %29, %cst_21 {dimension_numbers = #tpu.dot_dimension_numbers<[2], [1], [1], [2], [0, 0, 0, 1, 1, 2], [0], [0]>} : vector<2x8x8xbf16>, vector<2x8x32xbf16>, vector<2x8x32xf32> -> vector<2x8x32xf32>
    "tpu.trace_stop"() : () -> ()
    %44 = vector.shape_cast %43 : vector<2x8x32xf32> to vector<16x32xf32>
    %45 = arith.truncf %44 : vector<16x32xf32> to vector<16x32xbf16>
    %46 = vector.extract_strided_slice %22 {offsets = [0, 0], sizes = [32, 128], strides = [1, 1]} : vector<128x128xbf16> to vector<32x128xbf16>
    %cst_22 = arith.constant dense<0.000000e+00> : vector<16x128xf32>
    %47 = tpu.matmul %45, %46, %cst_22 {dimension_numbers = #tpu.dot_dimension_numbers<[1], [0], [0], [1], [0, 0, 1, 1], [], []>} : vector<16x32xbf16>, vector<32x128xbf16>, vector<16x128xf32> -> vector<16x128xf32>
    %48 = arith.addf %23, %47 : vector<16x128xf32>
    %49 = vector.extract_strided_slice %16 {offsets = [0, 0, 32], sizes = [2, 8, 32], strides = [1, 1, 1]} : vector<2x8x128xf32> to vector<2x8x32xf32>
    %50 = arith.truncf %49 : vector<2x8x32xf32> to vector<2x8x32xbf16>
    %51 = vector.extract_strided_slice %18 {offsets = [0, 0, 32], sizes = [2, 8, 32], strides = [1, 1, 1]} : vector<2x8x128xf32> to vector<2x8x32xf32>
    %52 = arith.truncf %51 : vector<2x8x32xf32> to vector<2x8x32xbf16>
    %53 = vector.extract_strided_slice %20 {offsets = [0, 0, 32], sizes = [2, 8, 32], strides = [1, 1, 1]} : vector<2x8x128xf32> to vector<2x8x32xf32>
    %54 = arith.truncf %53 : vector<2x8x32xf32> to vector<2x8x32xbf16>
    "tpu.trace_start"() <{level = 10 : i32, message = "bqd,bkd->bqk"}> : () -> ()
    %cst_23 = arith.constant dense<0.000000e+00> : vector<2x8x8xf32>
    %55 = tpu.matmul %50, %52, %cst_23 {dimension_numbers = #tpu.dot_dimension_numbers<[2], [2], [1], [1], [0, 0, 0, 1, 1, 1], [0], [0]>} : vector<2x8x32xbf16>, vector<2x8x32xbf16>, vector<2x8x8xf32> -> vector<2x8x8xf32>
    "tpu.trace_stop"() : () -> ()
    %cst_24 = arith.constant 0.176776692 : f32
    %56 = vector.broadcast %cst_24 : f32 to vector<2x8x8xf32>
    %57 = arith.mulf %55, %56 : vector<2x8x8xf32>
    %cst_25 = arith.constant dense<0xFF800000> : vector<2x8xf32>
    %58 = vector.multi_reduction <maximumf>, %57, %cst_25 [2] : vector<2x8x8xf32> to vector<2x8xf32>
    %59 = vector.shape_cast %58 : vector<2x8xf32> to vector<2x8x1xf32>
    %60 = vector.broadcast %59 : vector<2x8x1xf32> to vector<2x8x8xf32>
    %61 = arith.subf %57, %60 : vector<2x8x8xf32>
    %62 = math.exp %61 : vector<2x8x8xf32>
    %cst_26 = arith.constant dense<0.000000e+00> : vector<2x8xf32>
    %63 = vector.multi_reduction <add>, %62, %cst_26 [2] : vector<2x8x8xf32> to vector<2x8xf32>
    %64 = vector.shape_cast %63 : vector<2x8xf32> to vector<2x8x1xf32>
    %65 = vector.broadcast %64 : vector<2x8x1xf32> to vector<2x8x8xf32>
    %66 = arith.divf %62, %65 : vector<2x8x8xf32>
    %67 = arith.truncf %66 : vector<2x8x8xf32> to vector<2x8x8xbf16>
    "tpu.trace_start"() <{level = 10 : i32, message = "bqk,bkd->bqd"}> : () -> ()
    %cst_27 = arith.constant dense<0.000000e+00> : vector<2x8x32xf32>
    %68 = tpu.matmul %67, %54, %cst_27 {dimension_numbers = #tpu.dot_dimension_numbers<[2], [1], [1], [2], [0, 0, 0, 1, 1, 2], [0], [0]>} : vector<2x8x8xbf16>, vector<2x8x32xbf16>, vector<2x8x32xf32> -> vector<2x8x32xf32>
    "tpu.trace_stop"() : () -> ()
    %69 = vector.shape_cast %68 : vector<2x8x32xf32> to vector<16x32xf32>
    %70 = arith.truncf %69 : vector<16x32xf32> to vector<16x32xbf16>
    %71 = vector.extract_strided_slice %22 {offsets = [32, 0], sizes = [32, 128], strides = [1, 1]} : vector<128x128xbf16> to vector<32x128xbf16>
    %cst_28 = arith.constant dense<0.000000e+00> : vector<16x128xf32>
    %72 = tpu.matmul %70, %71, %cst_28 {dimension_numbers = #tpu.dot_dimension_numbers<[1], [0], [0], [1], [0, 0, 1, 1], [], []>} : vector<16x32xbf16>, vector<32x128xbf16>, vector<16x128xf32> -> vector<16x128xf32>
    %73 = arith.addf %48, %72 : vector<16x128xf32>
    %74 = vector.extract_strided_slice %16 {offsets = [0, 0, 64], sizes = [2, 8, 32], strides = [1, 1, 1]} : vector<2x8x128xf32> to vector<2x8x32xf32>
    %75 = arith.truncf %74 : vector<2x8x32xf32> to vector<2x8x32xbf16>
    %76 = vector.extract_strided_slice %18 {offsets = [0, 0, 64], sizes = [2, 8, 32], strides = [1, 1, 1]} : vector<2x8x128xf32> to vector<2x8x32xf32>
    %77 = arith.truncf %76 : vector<2x8x32xf32> to vector<2x8x32xbf16>
    %78 = vector.extract_strided_slice %20 {offsets = [0, 0, 64], sizes = [2, 8, 32], strides = [1, 1, 1]} : vector<2x8x128xf32> to vector<2x8x32xf32>
    %79 = arith.truncf %78 : vector<2x8x32xf32> to vector<2x8x32xbf16>
    "tpu.trace_start"() <{level = 10 : i32, message = "bqd,bkd->bqk"}> : () -> ()
    %cst_29 = arith.constant dense<0.000000e+00> : vector<2x8x8xf32>
    %80 = tpu.matmul %75, %77, %cst_29 {dimension_numbers = #tpu.dot_dimension_numbers<[2], [2], [1], [1], [0, 0, 0, 1, 1, 1], [0], [0]>} : vector<2x8x32xbf16>, vector<2x8x32xbf16>, vector<2x8x8xf32> -> vector<2x8x8xf32>
    "tpu.trace_stop"() : () -> ()
    %cst_30 = arith.constant 0.176776692 : f32
    %81 = vector.broadcast %cst_30 : f32 to vector<2x8x8xf32>
    %82 = arith.mulf %80, %81 : vector<2x8x8xf32>
    %cst_31 = arith.constant dense<0xFF800000> : vector<2x8xf32>
    %83 = vector.multi_reduction <maximumf>, %82, %cst_31 [2] : vector<2x8x8xf32> to vector<2x8xf32>
    %84 = vector.shape_cast %83 : vector<2x8xf32> to vector<2x8x1xf32>
    %85 = vector.broadcast %84 : vector<2x8x1xf32> to vector<2x8x8xf32>
    %86 = arith.subf %82, %85 : vector<2x8x8xf32>
    %87 = math.exp %86 : vector<2x8x8xf32>
    %cst_32 = arith.constant dense<0.000000e+00> : vector<2x8xf32>
    %88 = vector.multi_reduction <add>, %87, %cst_32 [2] : vector<2x8x8xf32> to vector<2x8xf32>
    %89 = vector.shape_cast %88 : vector<2x8xf32> to vector<2x8x1xf32>
    %90 = vector.broadcast %89 : vector<2x8x1xf32> to vector<2x8x8xf32>
    %91 = arith.divf %87, %90 : vector<2x8x8xf32>
    %92 = arith.truncf %91 : vector<2x8x8xf32> to vector<2x8x8xbf16>
    "tpu.trace_start"() <{level = 10 : i32, message = "bqk,bkd->bqd"}> : () -> ()
    %cst_33 = arith.constant dense<0.000000e+00> : vector<2x8x32xf32>
    %93 = tpu.matmul %92, %79, %cst_33 {dimension_numbers = #tpu.dot_dimension_numbers<[2], [1], [1], [2], [0, 0, 0, 1, 1, 2], [0], [0]>} : vector<2x8x8xbf16>, vector<2x8x32xbf16>, vector<2x8x32xf32> -> vector<2x8x32xf32>
    "tpu.trace_stop"() : () -> ()
    %94 = vector.shape_cast %93 : vector<2x8x32xf32> to vector<16x32xf32>
    %95 = arith.truncf %94 : vector<16x32xf32> to vector<16x32xbf16>
    %96 = vector.extract_strided_slice %22 {offsets = [64, 0], sizes = [32, 128], strides = [1, 1]} : vector<128x128xbf16> to vector<32x128xbf16>
    %cst_34 = arith.constant dense<0.000000e+00> : vector<16x128xf32>
    %97 = tpu.matmul %95, %96, %cst_34 {dimension_numbers = #tpu.dot_dimension_numbers<[1], [0], [0], [1], [0, 0, 1, 1], [], []>} : vector<16x32xbf16>, vector<32x128xbf16>, vector<16x128xf32> -> vector<16x128xf32>
    %98 = arith.addf %73, %97 : vector<16x128xf32>
    %99 = vector.extract_strided_slice %16 {offsets = [0, 0, 96], sizes = [2, 8, 32], strides = [1, 1, 1]} : vector<2x8x128xf32> to vector<2x8x32xf32>
    %100 = arith.truncf %99 : vector<2x8x32xf32> to vector<2x8x32xbf16>
    %101 = vector.extract_strided_slice %18 {offsets = [0, 0, 96], sizes = [2, 8, 32], strides = [1, 1, 1]} : vector<2x8x128xf32> to vector<2x8x32xf32>
    %102 = arith.truncf %101 : vector<2x8x32xf32> to vector<2x8x32xbf16>
    %103 = vector.extract_strided_slice %20 {offsets = [0, 0, 96], sizes = [2, 8, 32], strides = [1, 1, 1]} : vector<2x8x128xf32> to vector<2x8x32xf32>
    %104 = arith.truncf %103 : vector<2x8x32xf32> to vector<2x8x32xbf16>
    "tpu.trace_start"() <{level = 10 : i32, message = "bqd,bkd->bqk"}> : () -> ()
    %cst_35 = arith.constant dense<0.000000e+00> : vector<2x8x8xf32>
    %105 = tpu.matmul %100, %102, %cst_35 {dimension_numbers = #tpu.dot_dimension_numbers<[2], [2], [1], [1], [0, 0, 0, 1, 1, 1], [0], [0]>} : vector<2x8x32xbf16>, vector<2x8x32xbf16>, vector<2x8x8xf32> -> vector<2x8x8xf32>
    "tpu.trace_stop"() : () -> ()
    %cst_36 = arith.constant 0.176776692 : f32
    %106 = vector.broadcast %cst_36 : f32 to vector<2x8x8xf32>
    %107 = arith.mulf %105, %106 : vector<2x8x8xf32>
    %cst_37 = arith.constant dense<0xFF800000> : vector<2x8xf32>
    %108 = vector.multi_reduction <maximumf>, %107, %cst_37 [2] : vector<2x8x8xf32> to vector<2x8xf32>
    %109 = vector.shape_cast %108 : vector<2x8xf32> to vector<2x8x1xf32>
    %110 = vector.broadcast %109 : vector<2x8x1xf32> to vector<2x8x8xf32>
    %111 = arith.subf %107, %110 : vector<2x8x8xf32>
    %112 = math.exp %111 : vector<2x8x8xf32>
    %cst_38 = arith.constant dense<0.000000e+00> : vector<2x8xf32>
    %113 = vector.multi_reduction <add>, %112, %cst_38 [2] : vector<2x8x8xf32> to vector<2x8xf32>
    %114 = vector.shape_cast %113 : vector<2x8xf32> to vector<2x8x1xf32>
    %115 = vector.broadcast %114 : vector<2x8x1xf32> to vector<2x8x8xf32>
    %116 = arith.divf %112, %115 : vector<2x8x8xf32>
    %117 = arith.truncf %116 : vector<2x8x8xf32> to vector<2x8x8xbf16>
    "tpu.trace_start"() <{level = 10 : i32, message = "bqk,bkd->bqd"}> : () -> ()
    %cst_39 = arith.constant dense<0.000000e+00> : vector<2x8x32xf32>
    %118 = tpu.matmul %117, %104, %cst_39 {dimension_numbers = #tpu.dot_dimension_numbers<[2], [1], [1], [2], [0, 0, 0, 1, 1, 2], [0], [0]>} : vector<2x8x8xbf16>, vector<2x8x32xbf16>, vector<2x8x32xf32> -> vector<2x8x32xf32>
    "tpu.trace_stop"() : () -> ()
    %119 = vector.shape_cast %118 : vector<2x8x32xf32> to vector<16x32xf32>
    %120 = arith.truncf %119 : vector<16x32xf32> to vector<16x32xbf16>
    %121 = vector.extract_strided_slice %22 {offsets = [96, 0], sizes = [32, 128], strides = [1, 1]} : vector<128x128xbf16> to vector<32x128xbf16>
    %cst_40 = arith.constant dense<0.000000e+00> : vector<16x128xf32>
    %122 = tpu.matmul %120, %121, %cst_40 {dimension_numbers = #tpu.dot_dimension_numbers<[1], [0], [0], [1], [0, 0, 1, 1], [], []>} : vector<16x32xbf16>, vector<32x128xbf16>, vector<16x128xf32> -> vector<16x128xf32>
    %123 = arith.addf %98, %122 : vector<16x128xf32>
    %c0_41 = arith.constant 0 : index
    %c0_42 = arith.constant 0 : index
    %c0_43 = arith.constant 0 : index
    %124 = vector.load %arg6[%c0_41, %c0_42, %c0_43] : memref<1x1x128xf32, #tpu.memory_space<vmem>>, vector<1x1x128xf32>
    %125 = vector.shape_cast %124 : vector<1x1x128xf32> to vector<1x128xf32>
    %126 = vector.broadcast %125 : vector<1x128xf32> to vector<16x128xf32>
    %127 = arith.addf %123, %126 : vector<16x128xf32>
    %128 = arith.addf %127, %4 : vector<16x128xf32>
    %129 = arith.truncf %128 : vector<16x128xf32> to vector<16x128xbf16>
    %c0_44 = arith.constant 0 : index
    %c0_45 = arith.constant 0 : index
    %c0_46 = arith.constant 0 : index
    %130 = vector.load %arg7[%c0_44, %c0_45, %c0_46] : memref<1x128x256xbf16, #tpu.memory_space<vmem>>, vector<1x128x256xbf16>
    %131 = vector.shape_cast %130 : vector<1x128x256xbf16> to vector<128x256xbf16>
    %cst_47 = arith.constant dense<0.000000e+00> : vector<16x256xf32>
    %132 = tpu.matmul %129, %131, %cst_47 {dimension_numbers = #tpu.dot_dimension_numbers<[1], [0], [0], [1], [0, 0, 1, 1], [], []>} : vector<16x128xbf16>, vector<128x256xbf16>, vector<16x256xf32> -> vector<16x256xf32>
    %c0_48 = arith.constant 0 : index
    %c0_49 = arith.constant 0 : index
    %c0_50 = arith.constant 0 : index
    %133 = vector.load %arg8[%c0_48, %c0_49, %c0_50] : memref<1x1x256xf32, #tpu.memory_space<vmem>>, vector<1x1x256xf32>
    %134 = vector.shape_cast %133 : vector<1x1x256xf32> to vector<1x256xf32>
    %135 = vector.broadcast %134 : vector<1x256xf32> to vector<16x256xf32>
    %136 = arith.addf %132, %135 : vector<16x256xf32>
    %cst_51 = arith.constant 5.000000e-01 : f32
    %137 = vector.broadcast %cst_51 : f32 to vector<16x256xf32>
    %138 = arith.mulf %137, %136 : vector<16x256xf32>
    %cst_52 = arith.constant 1.41421354 : f32
    %139 = vector.broadcast %cst_52 : f32 to vector<16x256xf32>
    %140 = arith.divf %136, %139 : vector<16x256xf32>
    %141 = math.erf %140 : vector<16x256xf32>
    %cst_53 = arith.constant 1.000000e+00 : f32
    %142 = vector.broadcast %cst_53 : f32 to vector<16x256xf32>
    %143 = arith.addf %142, %141 : vector<16x256xf32>
    %144 = arith.mulf %138, %143 : vector<16x256xf32>
    %145 = arith.truncf %144 : vector<16x256xf32> to vector<16x256xbf16>
    %c0_54 = arith.constant 0 : index
    %c0_55 = arith.constant 0 : index
    %c0_56 = arith.constant 0 : index
    %146 = vector.load %arg9[%c0_54, %c0_55, %c0_56] : memref<1x256x128xbf16, #tpu.memory_space<vmem>>, vector<1x256x128xbf16>
    %147 = vector.shape_cast %146 : vector<1x256x128xbf16> to vector<256x128xbf16>
    %cst_57 = arith.constant dense<0.000000e+00> : vector<16x128xf32>
    %148 = tpu.matmul %145, %147, %cst_57 {dimension_numbers = #tpu.dot_dimension_numbers<[1], [0], [0], [1], [0, 0, 1, 1], [], []>} : vector<16x256xbf16>, vector<256x128xbf16>, vector<16x128xf32> -> vector<16x128xf32>
    %c0_58 = arith.constant 0 : index
    %c0_59 = arith.constant 0 : index
    %c0_60 = arith.constant 0 : index
    %149 = vector.load %arg10[%c0_58, %c0_59, %c0_60] : memref<1x1x128xf32, #tpu.memory_space<vmem>>, vector<1x1x128xf32>
    %150 = vector.shape_cast %149 : vector<1x1x128xf32> to vector<1x128xf32>
    %151 = vector.broadcast %150 : vector<1x128xf32> to vector<16x128xf32>
    %152 = arith.addf %148, %151 : vector<16x128xf32>
    %153 = arith.addf %152, %128 : vector<16x128xf32>
    %c0_61 = arith.constant 0 : index
    %c0_62 = arith.constant 0 : index
    %c0_63 = arith.constant 0 : index
    %154 = vector.load %arg11[%c0_61, %c0_62, %c0_63] : memref<1x1x128xf32, #tpu.memory_space<vmem>>, vector<1x1x128xf32>
    %155 = vector.shape_cast %154 : vector<1x1x128xf32> to vector<1x128xf32>
    %c0_64 = arith.constant 0 : index
    %c0_65 = arith.constant 0 : index
    %c0_66 = arith.constant 0 : index
    %156 = vector.load %arg12[%c0_64, %c0_65, %c0_66] : memref<1x1x128xf32, #tpu.memory_space<vmem>>, vector<1x1x128xf32>
    %157 = vector.shape_cast %156 : vector<1x1x128xf32> to vector<1x128xf32>
    %cst_67 = arith.constant dense<0.000000e+00> : vector<16xf32>
    %158 = vector.multi_reduction <add>, %153, %cst_67 [1] : vector<16x128xf32> to vector<16xf32>
    %159 = vector.shape_cast %158 : vector<16xf32> to vector<16x1xf32>
    %cst_68 = arith.constant 1.280000e+02 : f32
    %160 = vector.broadcast %cst_68 : f32 to vector<16x1xf32>
    %161 = arith.divf %159, %160 : vector<16x1xf32>
    %162 = vector.broadcast %161 : vector<16x1xf32> to vector<16x128xf32>
    %163 = arith.subf %153, %162 : vector<16x128xf32>
    %164 = arith.mulf %163, %163 : vector<16x128xf32>
    %cst_69 = arith.constant dense<0.000000e+00> : vector<16xf32>
    %165 = vector.multi_reduction <add>, %164, %cst_69 [1] : vector<16x128xf32> to vector<16xf32>
    %166 = vector.shape_cast %165 : vector<16xf32> to vector<16x1xf32>
    %cst_70 = arith.constant 1.280000e+02 : f32
    %167 = vector.broadcast %cst_70 : f32 to vector<16x1xf32>
    %168 = arith.divf %166, %167 : vector<16x1xf32>
    %169 = vector.broadcast %161 : vector<16x1xf32> to vector<16x128xf32>
    %170 = arith.subf %153, %169 : vector<16x128xf32>
    %cst_71 = arith.constant 9.99999974E-6 : f32
    %171 = vector.broadcast %cst_71 : f32 to vector<16x1xf32>
    %172 = arith.addf %168, %171 : vector<16x1xf32>
    %173 = math.rsqrt %172 : vector<16x1xf32>
    %174 = vector.broadcast %173 : vector<16x1xf32> to vector<16x128xf32>
    %175 = arith.mulf %170, %174 : vector<16x128xf32>
    %176 = vector.broadcast %155 : vector<1x128xf32> to vector<16x128xf32>
    %177 = arith.mulf %175, %176 : vector<16x128xf32>
    %178 = vector.broadcast %157 : vector<1x128xf32> to vector<16x128xf32>
    %179 = arith.addf %177, %178 : vector<16x128xf32>
    %180 = vector.shape_cast %179 : vector<16x128xf32> to vector<2x8x128xf32>
    %c0_72 = arith.constant 0 : index
    %c0_73 = arith.constant 0 : index
    %c0_74 = arith.constant 0 : index
    %c0_75 = arith.constant 0 : index
    %181 = vector.load %arg13[%c0_72, %c0_73, %c0_74, %c0_75] : memref<1x2x8x128xf32, #tpu.memory_space<vmem>>, vector<1x2x8x128xf32>
    %182 = vector.shape_cast %181 : vector<1x2x8x128xf32> to vector<2x8x128xf32>
    %183 = vector.shape_cast %180 : vector<2x8x128xf32> to vector<1x2x8x128xf32>
    tpu.vector_store %arg13[%c0_72, %c0_73, %c0_74, %c0_75], %183 {strides = array<i32>} : memref<1x2x8x128xf32, #tpu.memory_space<vmem>>, vector<1x2x8x128xf32>,
    return
  }
  func.func @transform_0(%arg0: i32) -> (i32, i32, i32, i32) {
    %c0_i32 = arith.constant 0 : i32
    %c0_i32_0 = arith.constant 0 : i32
    %c0_i32_1 = arith.constant 0 : i32
    %c0_i32_2 = arith.constant 0 : i32
    return %arg0, %c0_i32, %c0_i32_0, %c0_i32_1 : i32, i32, i32, i32
  }
  func.func @transform_1(%arg0: i32) -> (i32, i32, i32, i32) {
    %c0_i32 = arith.constant 0 : i32
    %c0_i32_0 = arith.constant 0 : i32
    %c0_i32_1 = arith.constant 0 : i32
    %c0_i32_2 = arith.constant 0 : i32
    return %arg0, %c0_i32, %c0_i32_0, %c0_i32_1 : i32, i32, i32, i32
  }
  func.func @transform_2(%arg0: i32) -> (i32, i32, i32) {
    %c0_i32 = arith.constant 0 : i32
    %c0_i32_0 = arith.constant 0 : i32
    %c0_i32_1 = arith.constant 0 : i32
    return %arg0, %c0_i32, %c0_i32_0 : i32, i32, i32
  }
  func.func @transform_3(%arg0: i32) -> (i32, i32, i32) {
    %c0_i32 = arith.constant 0 : i32
    %c0_i32_0 = arith.constant 0 : i32
    %c0_i32_1 = arith.constant 0 : i32
    return %arg0, %c0_i32, %c0_i32_0 : i32, i32, i32
  }
  func.func @transform_4(%arg0: i32) -> (i32, i32, i32) {
    %c0_i32 = arith.constant 0 : i32
    %c0_i32_0 = arith.constant 0 : i32
    %c0_i32_1 = arith.constant 0 : i32
    return %arg0, %c0_i32, %c0_i32_0 : i32, i32, i32
  }
  func.func @transform_5(%arg0: i32) -> (i32, i32, i32) {
    %c0_i32 = arith.constant 0 : i32
    %c0_i32_0 = arith.constant 0 : i32
    %c0_i32_1 = arith.constant 0 : i32
    return %arg0, %c0_i32, %c0_i32_0 : i32, i32, i32
  }
  func.func @transform_6(%arg0: i32) -> (i32, i32, i32) {
    %c0_i32 = arith.constant 0 : i32
    %c0_i32_0 = arith.constant 0 : i32
    %c0_i32_1 = arith.constant 0 : i32
    return %arg0, %c0_i32, %c0_i32_0 : i32, i32, i32
  }
  func.func @transform_7(%arg0: i32) -> (i32, i32, i32) {
    %c0_i32 = arith.constant 0 : i32
    %c0_i32_0 = arith.constant 0 : i32
    %c0_i32_1 = arith.constant 0 : i32
    return %arg0, %c0_i32, %c0_i32_0 : i32, i32, i32
  }
  func.func @transform_8(%arg0: i32) -> (i32, i32, i32) {
    %c0_i32 = arith.constant 0 : i32
    %c0_i32_0 = arith.constant 0 : i32
    %c0_i32_1 = arith.constant 0 : i32
    return %arg0, %c0_i32, %c0_i32_0 : i32, i32, i32
  }
  func.func @transform_9(%arg0: i32) -> (i32, i32, i32) {
    %c0_i32 = arith.constant 0 : i32
    %c0_i32_0 = arith.constant 0 : i32
    %c0_i32_1 = arith.constant 0 : i32
    return %arg0, %c0_i32, %c0_i32_0 : i32, i32, i32
  }
  func.func @transform_10(%arg0: i32) -> (i32, i32, i32) {
    %c0_i32 = arith.constant 0 : i32
    %c0_i32_0 = arith.constant 0 : i32
    %c0_i32_1 = arith.constant 0 : i32
    return %arg0, %c0_i32, %c0_i32_0 : i32, i32, i32
  }
  func.func @transform_11(%arg0: i32) -> (i32, i32, i32) {
    %c0_i32 = arith.constant 0 : i32
    %c0_i32_0 = arith.constant 0 : i32
    %c0_i32_1 = arith.constant 0 : i32
    return %arg0, %c0_i32, %c0_i32_0 : i32, i32, i32
  }
  func.func @transform_12(%arg0: i32) -> (i32, i32, i32, i32) {
    %c0_i32 = arith.constant 0 : i32
    %c0_i32_0 = arith.constant 0 : i32
    %c0_i32_1 = arith.constant 0 : i32
    %c0_i32_2 = arith.constant 0 : i32
    return %arg0, %c0_i32, %c0_i32_0, %c0_i32_1 : i32, i32, i32, i32
  }
}

module attributes {stable_mosaic.version = 11 : i64} {
  func.func @_fusion_kernel(%arg0: memref<2x8x128xf32, #tpu.memory_space<vmem>>, %arg1: memref<2x8x128xf32, #tpu.memory_space<vmem>>, %arg2: memref<128x128xbf16, #tpu.memory_space<vmem>>, %arg3: memref<128x512xbf16, #tpu.memory_space<vmem>>, %arg4: memref<128x512xbf16, #tpu.memory_space<vmem>>, %arg5: memref<1x512xf32, #tpu.memory_space<vmem>>, %arg6: memref<1x512xf32, #tpu.memory_space<vmem>>, %arg7: memref<1x512xf32, #tpu.memory_space<vmem>>, %arg8: memref<512x128xbf16, #tpu.memory_space<vmem>>, %arg9: memref<1x128xf32, #tpu.memory_space<vmem>>, %arg10: memref<2x8x128xf32, #tpu.memory_space<vmem>>, %arg11: memref<2x8x128xf32, #tpu.memory_space<vmem>>) attributes {dimension_semantics = [], scalar_prefetch = 0 : i64, scratch_operands = 0 : i64, tpu.core_type = #tpu.core_type<tc>} {
    %c0 = arith.constant 0 : index
    %c0_0 = arith.constant 0 : index
    %c0_1 = arith.constant 0 : index
    %0 = vector.load %arg0[%c0, %c0_0, %c0_1] : memref<2x8x128xf32, #tpu.memory_space<vmem>>, vector<2x8x128xf32>
    %c0_2 = arith.constant 0 : index
    %c0_3 = arith.constant 0 : index
    %c0_4 = arith.constant 0 : index
    %1 = vector.load %arg1[%c0_2, %c0_3, %c0_4] : memref<2x8x128xf32, #tpu.memory_space<vmem>>, vector<2x8x128xf32>
    %2 = vector.shape_cast %0 : vector<2x8x128xf32> to vector<16x128xf32>
    %3 = vector.shape_cast %1 : vector<2x8x128xf32> to vector<16x128xf32>
    %4 = vector.extract_strided_slice %1 {offsets = [0, 0, 0], sizes = [2, 1, 128], strides = [1, 1, 1]} : vector<2x8x128xf32> to vector<2x1x128xf32>
    %5 = vector.shape_cast %4 : vector<2x1x128xf32> to vector<2x128xf32>
    %6 = vector.extract_strided_slice %0 {offsets = [0, 0, 0], sizes = [2, 1, 128], strides = [1, 1, 1]} : vector<2x8x128xf32> to vector<2x1x128xf32>
    %7 = vector.shape_cast %6 : vector<2x1x128xf32> to vector<2x128xf32>
    %8 = arith.truncf %2 : vector<16x128xf32> to vector<16x128xbf16>
    %c0_5 = arith.constant 0 : index
    %c0_6 = arith.constant 0 : index
    %9 = vector.load %arg2[%c0_5, %c0_6] : memref<128x128xbf16, #tpu.memory_space<vmem>>, vector<128x128xbf16>
    %cst = arith.constant dense<0.000000e+00> : vector<16x128xf32>
    %10 = tpu.matmul %8, %9, %cst {dimension_numbers = #tpu.dot_dimension_numbers<[1], [0], [0], [1], [0, 0, 1, 1], [], []>} : vector<16x128xbf16>, vector<128x128xbf16>, vector<16x128xf32> -> vector<16x128xf32>
    %11 = vector.shape_cast %10 : vector<16x128xf32> to vector<2x8x128xf32>
    %12 = vector.shape_cast %5 : vector<2x128xf32> to vector<2x1x128xf32>
    %13 = vector.broadcast %12 : vector<2x1x128xf32> to vector<2x8x128xf32>
    %14 = arith.mulf %11, %13 : vector<2x8x128xf32>
    %cst_7 = arith.constant dense<0.000000e+00> : vector<2x8xf32>
    %15 = vector.multi_reduction <add>, %14, %cst_7 [2] : vector<2x8x128xf32> to vector<2x8xf32>
    %16 = vector.shape_cast %15 : vector<2x8xf32> to vector<2x8x1xf32>
    %17 = vector.extract_strided_slice %11 {offsets = [0, 0, 0], sizes = [2, 1, 128], strides = [1, 1, 1]} : vector<2x8x128xf32> to vector<2x1x128xf32>
    %18 = vector.broadcast %17 : vector<2x1x128xf32> to vector<2x8x128xf32>
    %19 = arith.mulf %18, %1 : vector<2x8x128xf32>
    %cst_8 = arith.constant dense<0.000000e+00> : vector<2x8xf32>
    %20 = vector.multi_reduction <add>, %19, %cst_8 [2] : vector<2x8x128xf32> to vector<2x8xf32>
    %21 = vector.shape_cast %20 : vector<2x8xf32> to vector<2x8x1xf32>
    %c0_9 = arith.constant 0 : index
    %c0_10 = arith.constant 0 : index
    %22 = vector.load %arg3[%c0_9, %c0_10] : memref<128x512xbf16, #tpu.memory_space<vmem>>, vector<128x512xbf16>
    %c0_11 = arith.constant 0 : index
    %c0_12 = arith.constant 0 : index
    %23 = vector.load %arg4[%c0_11, %c0_12] : memref<128x512xbf16, #tpu.memory_space<vmem>>, vector<128x512xbf16>
    %c0_13 = arith.constant 0 : index
    %c0_14 = arith.constant 0 : index
    %24 = vector.load %arg5[%c0_13, %c0_14] : memref<1x512xf32, #tpu.memory_space<vmem>>, vector<1x512xf32>
    %c0_15 = arith.constant 0 : index
    %c0_16 = arith.constant 0 : index
    %25 = vector.load %arg6[%c0_15, %c0_16] : memref<1x512xf32, #tpu.memory_space<vmem>>, vector<1x512xf32>
    %c0_17 = arith.constant 0 : index
    %c0_18 = arith.constant 0 : index
    %26 = vector.load %arg7[%c0_17, %c0_18] : memref<1x512xf32, #tpu.memory_space<vmem>>, vector<1x512xf32>
    %c0_19 = arith.constant 0 : index
    %c0_20 = arith.constant 0 : index
    %27 = vector.load %arg8[%c0_19, %c0_20] : memref<512x128xbf16, #tpu.memory_space<vmem>>, vector<512x128xbf16>
    %c0_21 = arith.constant 0 : index
    %c0_22 = arith.constant 0 : index
    %28 = vector.load %arg9[%c0_21, %c0_22] : memref<1x128xf32, #tpu.memory_space<vmem>>, vector<1x128xf32>
    %29 = arith.truncf %5 : vector<2x128xf32> to vector<2x128xbf16>
    %cst_23 = arith.constant dense<0.000000e+00> : vector<2x512xf32>
    %30 = tpu.matmul %29, %23, %cst_23 {dimension_numbers = #tpu.dot_dimension_numbers<[1], [0], [0], [1], [0, 0, 1, 1], [], []>} : vector<2x128xbf16>, vector<128x512xbf16>, vector<2x512xf32> -> vector<2x512xf32>
    %31 = arith.truncf %2 : vector<16x128xf32> to vector<16x128xbf16>
    %cst_24 = arith.constant dense<0.000000e+00> : vector<16x512xf32>
    %32 = tpu.matmul %31, %22, %cst_24 {dimension_numbers = #tpu.dot_dimension_numbers<[1], [0], [0], [1], [0, 0, 1, 1], [], []>} : vector<16x128xbf16>, vector<128x512xbf16>, vector<16x512xf32> -> vector<16x512xf32>
    %33 = vector.shape_cast %32 : vector<16x512xf32> to vector<2x8x512xf32>
    %34 = vector.shape_cast %30 : vector<2x512xf32> to vector<2x1x512xf32>
    %35 = vector.broadcast %34 : vector<2x1x512xf32> to vector<2x8x512xf32>
    %36 = arith.addf %33, %35 : vector<2x8x512xf32>
    %37 = vector.shape_cast %24 : vector<1x512xf32> to vector<1x1x512xf32>
    %38 = vector.broadcast %37 : vector<1x1x512xf32> to vector<2x8x512xf32>
    %39 = arith.addf %36, %38 : vector<2x8x512xf32>
    %cst_25 = arith.constant 5.000000e-01 : f32
    %40 = vector.broadcast %cst_25 : f32 to vector<2x8x512xf32>
    %41 = arith.mulf %40, %39 : vector<2x8x512xf32>
    %cst_26 = arith.constant 1.41421354 : f32
    %42 = vector.broadcast %cst_26 : f32 to vector<2x8x512xf32>
    %43 = arith.divf %39, %42 : vector<2x8x512xf32>
    %44 = math.erf %43 : vector<2x8x512xf32>
    %cst_27 = arith.constant 1.000000e+00 : f32
    %45 = vector.broadcast %cst_27 : f32 to vector<2x8x512xf32>
    %46 = arith.addf %45, %44 : vector<2x8x512xf32>
    %47 = arith.mulf %41, %46 : vector<2x8x512xf32>
    %cst_28 = arith.constant dense<0.000000e+00> : vector<2x8xf32>
    %48 = vector.multi_reduction <add>, %47, %cst_28 [2] : vector<2x8x512xf32> to vector<2x8xf32>
    %49 = vector.shape_cast %48 : vector<2x8xf32> to vector<2x8x1xf32>
    %cst_29 = arith.constant 5.120000e+02 : f32
    %50 = vector.broadcast %cst_29 : f32 to vector<2x8x1xf32>
    %51 = arith.divf %49, %50 : vector<2x8x1xf32>
    %52 = vector.broadcast %51 : vector<2x8x1xf32> to vector<2x8x512xf32>
    %53 = arith.subf %47, %52 : vector<2x8x512xf32>
    %54 = arith.mulf %53, %53 : vector<2x8x512xf32>
    %cst_30 = arith.constant dense<0.000000e+00> : vector<2x8xf32>
    %55 = vector.multi_reduction <add>, %54, %cst_30 [2] : vector<2x8x512xf32> to vector<2x8xf32>
    %56 = vector.shape_cast %55 : vector<2x8xf32> to vector<2x8x1xf32>
    %cst_31 = arith.constant 5.120000e+02 : f32
    %57 = vector.broadcast %cst_31 : f32 to vector<2x8x1xf32>
    %58 = arith.divf %56, %57 : vector<2x8x1xf32>
    %59 = vector.broadcast %51 : vector<2x8x1xf32> to vector<2x8x512xf32>
    %60 = arith.subf %47, %59 : vector<2x8x512xf32>
    %cst_32 = arith.constant 9.99999974E-6 : f32
    %61 = vector.broadcast %cst_32 : f32 to vector<2x8x1xf32>
    %62 = arith.addf %58, %61 : vector<2x8x1xf32>
    %63 = math.rsqrt %62 : vector<2x8x1xf32>
    %64 = vector.broadcast %63 : vector<2x8x1xf32> to vector<2x8x512xf32>
    %65 = arith.mulf %60, %64 : vector<2x8x512xf32>
    %66 = vector.shape_cast %25 : vector<1x512xf32> to vector<1x1x512xf32>
    %67 = vector.broadcast %66 : vector<1x1x512xf32> to vector<2x8x512xf32>
    %68 = arith.mulf %65, %67 : vector<2x8x512xf32>
    %69 = vector.shape_cast %26 : vector<1x512xf32> to vector<1x1x512xf32>
    %70 = vector.broadcast %69 : vector<1x1x512xf32> to vector<2x8x512xf32>
    %71 = arith.addf %68, %70 : vector<2x8x512xf32>
    %72 = vector.shape_cast %71 : vector<2x8x512xf32> to vector<16x512xf32>
    %73 = arith.truncf %72 : vector<16x512xf32> to vector<16x512xbf16>
    %cst_33 = arith.constant dense<0.000000e+00> : vector<16x128xf32>
    %74 = tpu.matmul %73, %27, %cst_33 {dimension_numbers = #tpu.dot_dimension_numbers<[1], [0], [0], [1], [0, 0, 1, 1], [], []>} : vector<16x512xbf16>, vector<512x128xbf16>, vector<16x128xf32> -> vector<16x128xf32>
    %75 = vector.broadcast %28 : vector<1x128xf32> to vector<16x128xf32>
    %76 = arith.addf %74, %75 : vector<16x128xf32>
    %77 = vector.shape_cast %76 : vector<16x128xf32> to vector<2x8x128xf32>
    %78 = vector.broadcast %16 : vector<2x8x1xf32> to vector<2x8x128xf32>
    %79 = arith.addf %77, %78 : vector<2x8x128xf32>
    %c0_34 = arith.constant 0 : index
    %c0_35 = arith.constant 0 : index
    %c0_36 = arith.constant 0 : index
    %80 = vector.load %arg10[%c0_34, %c0_35, %c0_36] : memref<2x8x128xf32, #tpu.memory_space<vmem>>, vector<2x8x128xf32>
    tpu.vector_store %arg10[%c0_34, %c0_35, %c0_36], %79 {strides = array<i32>} : memref<2x8x128xf32, #tpu.memory_space<vmem>>, vector<2x8x128xf32>,
    %81 = arith.truncf %7 : vector<2x128xf32> to vector<2x128xbf16>
    %cst_37 = arith.constant dense<0.000000e+00> : vector<2x512xf32>
    %82 = tpu.matmul %81, %23, %cst_37 {dimension_numbers = #tpu.dot_dimension_numbers<[1], [0], [0], [1], [0, 0, 1, 1], [], []>} : vector<2x128xbf16>, vector<128x512xbf16>, vector<2x512xf32> -> vector<2x512xf32>
    %83 = arith.truncf %3 : vector<16x128xf32> to vector<16x128xbf16>
    %cst_38 = arith.constant dense<0.000000e+00> : vector<16x512xf32>
    %84 = tpu.matmul %83, %22, %cst_38 {dimension_numbers = #tpu.dot_dimension_numbers<[1], [0], [0], [1], [0, 0, 1, 1], [], []>} : vector<16x128xbf16>, vector<128x512xbf16>, vector<16x512xf32> -> vector<16x512xf32>
    %85 = vector.shape_cast %84 : vector<16x512xf32> to vector<2x8x512xf32>
    %86 = vector.shape_cast %82 : vector<2x512xf32> to vector<2x1x512xf32>
    %87 = vector.broadcast %86 : vector<2x1x512xf32> to vector<2x8x512xf32>
    %88 = arith.addf %85, %87 : vector<2x8x512xf32>
    %89 = vector.shape_cast %24 : vector<1x512xf32> to vector<1x1x512xf32>
    %90 = vector.broadcast %89 : vector<1x1x512xf32> to vector<2x8x512xf32>
    %91 = arith.addf %88, %90 : vector<2x8x512xf32>
    %cst_39 = arith.constant 5.000000e-01 : f32
    %92 = vector.broadcast %cst_39 : f32 to vector<2x8x512xf32>
    %93 = arith.mulf %92, %91 : vector<2x8x512xf32>
    %cst_40 = arith.constant 1.41421354 : f32
    %94 = vector.broadcast %cst_40 : f32 to vector<2x8x512xf32>
    %95 = arith.divf %91, %94 : vector<2x8x512xf32>
    %96 = math.erf %95 : vector<2x8x512xf32>
    %cst_41 = arith.constant 1.000000e+00 : f32
    %97 = vector.broadcast %cst_41 : f32 to vector<2x8x512xf32>
    %98 = arith.addf %97, %96 : vector<2x8x512xf32>
    %99 = arith.mulf %93, %98 : vector<2x8x512xf32>
    %cst_42 = arith.constant dense<0.000000e+00> : vector<2x8xf32>
    %100 = vector.multi_reduction <add>, %99, %cst_42 [2] : vector<2x8x512xf32> to vector<2x8xf32>
    %101 = vector.shape_cast %100 : vector<2x8xf32> to vector<2x8x1xf32>
    %cst_43 = arith.constant 5.120000e+02 : f32
    %102 = vector.broadcast %cst_43 : f32 to vector<2x8x1xf32>
    %103 = arith.divf %101, %102 : vector<2x8x1xf32>
    %104 = vector.broadcast %103 : vector<2x8x1xf32> to vector<2x8x512xf32>
    %105 = arith.subf %99, %104 : vector<2x8x512xf32>
    %106 = arith.mulf %105, %105 : vector<2x8x512xf32>
    %cst_44 = arith.constant dense<0.000000e+00> : vector<2x8xf32>
    %107 = vector.multi_reduction <add>, %106, %cst_44 [2] : vector<2x8x512xf32> to vector<2x8xf32>
    %108 = vector.shape_cast %107 : vector<2x8xf32> to vector<2x8x1xf32>
    %cst_45 = arith.constant 5.120000e+02 : f32
    %109 = vector.broadcast %cst_45 : f32 to vector<2x8x1xf32>
    %110 = arith.divf %108, %109 : vector<2x8x1xf32>
    %111 = vector.broadcast %103 : vector<2x8x1xf32> to vector<2x8x512xf32>
    %112 = arith.subf %99, %111 : vector<2x8x512xf32>
    %cst_46 = arith.constant 9.99999974E-6 : f32
    %113 = vector.broadcast %cst_46 : f32 to vector<2x8x1xf32>
    %114 = arith.addf %110, %113 : vector<2x8x1xf32>
    %115 = math.rsqrt %114 : vector<2x8x1xf32>
    %116 = vector.broadcast %115 : vector<2x8x1xf32> to vector<2x8x512xf32>
    %117 = arith.mulf %112, %116 : vector<2x8x512xf32>
    %118 = vector.shape_cast %25 : vector<1x512xf32> to vector<1x1x512xf32>
    %119 = vector.broadcast %118 : vector<1x1x512xf32> to vector<2x8x512xf32>
    %120 = arith.mulf %117, %119 : vector<2x8x512xf32>
    %121 = vector.shape_cast %26 : vector<1x512xf32> to vector<1x1x512xf32>
    %122 = vector.broadcast %121 : vector<1x1x512xf32> to vector<2x8x512xf32>
    %123 = arith.addf %120, %122 : vector<2x8x512xf32>
    %124 = vector.shape_cast %123 : vector<2x8x512xf32> to vector<16x512xf32>
    %125 = arith.truncf %124 : vector<16x512xf32> to vector<16x512xbf16>
    %cst_47 = arith.constant dense<0.000000e+00> : vector<16x128xf32>
    %126 = tpu.matmul %125, %27, %cst_47 {dimension_numbers = #tpu.dot_dimension_numbers<[1], [0], [0], [1], [0, 0, 1, 1], [], []>} : vector<16x512xbf16>, vector<512x128xbf16>, vector<16x128xf32> -> vector<16x128xf32>
    %127 = vector.broadcast %28 : vector<1x128xf32> to vector<16x128xf32>
    %128 = arith.addf %126, %127 : vector<16x128xf32>
    %129 = vector.shape_cast %128 : vector<16x128xf32> to vector<2x8x128xf32>
    %130 = vector.broadcast %21 : vector<2x8x1xf32> to vector<2x8x128xf32>
    %131 = arith.addf %129, %130 : vector<2x8x128xf32>
    %c0_48 = arith.constant 0 : index
    %c0_49 = arith.constant 0 : index
    %c0_50 = arith.constant 0 : index
    %132 = vector.load %arg11[%c0_48, %c0_49, %c0_50] : memref<2x8x128xf32, #tpu.memory_space<vmem>>, vector<2x8x128xf32>
    tpu.vector_store %arg11[%c0_48, %c0_49, %c0_50], %131 {strides = array<i32>} : memref<2x8x128xf32, #tpu.memory_space<vmem>>, vector<2x8x128xf32>,
    return
  }
}

module attributes {stable_mosaic.version = 11 : i64} {
  func.func @kernel(%arg0: i32, %arg1: memref<1x2x8x128xf32, #tpu.memory_space<vmem>>, %arg2: memref<1x2x8x128xf32, #tpu.memory_space<vmem>>, %arg3: memref<1x128x384xbf16, #tpu.memory_space<vmem>>, %arg4: memref<1x1x384xf32, #tpu.memory_space<vmem>>, %arg5: memref<1x128x128xbf16, #tpu.memory_space<vmem>>, %arg6: memref<1x1x128xf32, #tpu.memory_space<vmem>>, %arg7: memref<1x128x256xbf16, #tpu.memory_space<vmem>>, %arg8: memref<1x1x256xf32, #tpu.memory_space<vmem>>, %arg9: memref<1x256x128xbf16, #tpu.memory_space<vmem>>, %arg10: memref<1x1x128xf32, #tpu.memory_space<vmem>>, %arg11: memref<1x1x128xf32, #tpu.memory_space<vmem>>, %arg12: memref<1x1x128xf32, #tpu.memory_space<vmem>>, %arg13: memref<1x2x8x128xf32, #tpu.memory_space<vmem>>) attributes {dimension_semantics = [#tpu.dimension_semantics<parallel>], iteration_bounds = array<i64: 2>, scalar_prefetch = 0 : i64, scratch_operands = 0 : i64, tpu.core_type = #tpu.core_type<tc>, window_params = [{transform_indices = @transform_0, window_bounds = array<i64: 1, 2, 8, 128>}, {transform_indices = @transform_1, window_bounds = array<i64: 1, 2, 8, 128>}, {transform_indices = @transform_2, window_bounds = array<i64: 1, 128, 384>}, {transform_indices = @transform_3, window_bounds = array<i64: 1, 1, 384>}, {transform_indices = @transform_4, window_bounds = array<i64: 1, 128, 128>}, {transform_indices = @transform_5, window_bounds = array<i64: 1, 1, 128>}, {transform_indices = @transform_6, window_bounds = array<i64: 1, 128, 256>}, {transform_indices = @transform_7, window_bounds = array<i64: 1, 1, 256>}, {transform_indices = @transform_8, window_bounds = array<i64: 1, 256, 128>}, {transform_indices = @transform_9, window_bounds = array<i64: 1, 1, 128>}, {transform_indices = @transform_10, window_bounds = array<i64: 1, 1, 128>}, {transform_indices = @transform_11, window_bounds = array<i64: 1, 1, 128>}, {transform_indices = @transform_12, window_bounds = array<i64: 1, 2, 8, 128>}]} {
    %c0 = arith.constant 0 : index
    %c0_0 = arith.constant 0 : index
    %c0_1 = arith.constant 0 : index
    %c0_2 = arith.constant 0 : index
    %0 = vector.load %arg1[%c0, %c0_0, %c0_1, %c0_2] : memref<1x2x8x128xf32, #tpu.memory_space<vmem>>, vector<1x2x8x128xf32>
    %1 = vector.shape_cast %0 : vector<1x2x8x128xf32> to vector<2x8x128xf32>
    %c0_3 = arith.constant 0 : index
    %c0_4 = arith.constant 0 : index
    %c0_5 = arith.constant 0 : index
    %c0_6 = arith.constant 0 : index
    %2 = vector.load %arg2[%c0_3, %c0_4, %c0_5, %c0_6] : memref<1x2x8x128xf32, #tpu.memory_space<vmem>>, vector<1x2x8x128xf32>
    %3 = vector.shape_cast %2 : vector<1x2x8x128xf32> to vector<2x8x128xf32>
    %4 = vector.shape_cast %1 : vector<2x8x128xf32> to vector<16x128xf32>
    %5 = vector.shape_cast %3 : vector<2x8x128xf32> to vector<16x128xf32>
    %6 = tpu.concatenate %4, %5 in 0 : vector<16x128xf32>, vector<16x128xf32> -> vector<32x128xf32>
    %7 = arith.truncf %6 : vector<32x128xf32> to vector<32x128xbf16>
    %c0_7 = arith.constant 0 : index
    %c0_8 = arith.constant 0 : index
    %c0_9 = arith.constant 0 : index
    %8 = vector.load %arg3[%c0_7, %c0_8, %c0_9] : memref<1x128x384xbf16, #tpu.memory_space<vmem>>, vector<1x128x384xbf16>
    %9 = vector.shape_cast %8 : vector<1x128x384xbf16> to vector<128x384xbf16>
    %cst = arith.constant dense<0.000000e+00> : vector<32x384xf32>
    %10 = tpu.matmul %7, %9, %cst {dimension_numbers = #tpu.dot_dimension_numbers<[1], [0], [0], [1], [0, 0, 1, 1], [], []>} : vector<32x128xbf16>, vector<128x384xbf16>, vector<32x384xf32> -> vector<32x384xf32>
    %c0_10 = arith.constant 0 : index
    %c0_11 = arith.constant 0 : index
    %c0_12 = arith.constant 0 : index
    %11 = vector.load %arg4[%c0_10, %c0_11, %c0_12] : memref<1x1x384xf32, #tpu.memory_space<vmem>>, vector<1x1x384xf32>
    %12 = vector.shape_cast %11 : vector<1x1x384xf32> to vector<1x384xf32>
    %13 = vector.broadcast %12 : vector<1x384xf32> to vector<32x384xf32>
    %14 = arith.addf %10, %13 : vector<32x384xf32>
    %15 = vector.extract_strided_slice %14 {offsets = [0, 0], sizes = [16, 128], strides = [1, 1]} : vector<32x384xf32> to vector<16x128xf32>
    %16 = vector.shape_cast %15 : vector<16x128xf32> to vector<2x8x128xf32>
    %17 = vector.extract_strided_slice %14 {offsets = [16, 128], sizes = [16, 128], strides = [1, 1]} : vector<32x384xf32> to vector<16x128xf32>
    %18 = vector.shape_cast %17 : vector<16x128xf32> to vector<2x8x128xf32>
    %19 = vector.extract_strided_slice %14 {offsets = [16, 256], sizes = [16, 128], strides = [1, 1]} : vector<32x384xf32> to vector<16x128xf32>
    %20 = vector.shape_cast %19 : vector<16x128xf32> to vector<2x8x128xf32>
    %c0_13 = arith.constant 0 : index
    %c0_14 = arith.constant 0 : index
    %c0_15 = arith.constant 0 : index
    %21 = vector.load %arg5[%c0_13, %c0_14, %c0_15] : memref<1x128x128xbf16, #tpu.memory_space<vmem>>, vector<1x128x128xbf16>
    %22 = vector.shape_cast %21 : vector<1x128x128xbf16> to vector<128x128xbf16>
    %cst_16 = arith.constant 0.000000e+00 : f32
    %23 = vector.broadcast %cst_16 : f32 to vector<16x128xf32>
    %24 = vector.extract_strided_slice %16 {offsets = [0, 0, 0], sizes = [2, 8, 32], strides = [1, 1, 1]} : vector<2x8x128xf32> to vector<2x8x32xf32>
    %25 = arith.truncf %24 : vector<2x8x32xf32> to vector<2x8x32xbf16>
    %26 = vector.extract_strided_slice %18 {offsets = [0, 0, 0], sizes = [2, 8, 32], strides = [1, 1, 1]} : vector<2x8x128xf32> to vector<2x8x32xf32>
    %27 = arith.truncf %26 : vector<2x8x32xf32> to vector<2x8x32xbf16>
    %28 = vector.extract_strided_slice %20 {offsets = [0, 0, 0], sizes = [2, 8, 32], strides = [1, 1, 1]} : vector<2x8x128xf32> to vector<2x8x32xf32>
    %29 = arith.truncf %28 : vector<2x8x32xf32> to vector<2x8x32xbf16>
    "tpu.trace_start"() <{level = 10 : i32, message = "bqd,bkd->bqk"}> : () -> ()
    %cst_17 = arith.constant dense<0.000000e+00> : vector<2x8x8xf32>
    %30 = tpu.matmul %25, %27, %cst_17 {dimension_numbers = #tpu.dot_dimension_numbers<[2], [2], [1], [1], [0, 0, 0, 1, 1, 1], [0], [0]>} : vector<2x8x32xbf16>, vector<2x8x32xbf16>, vector<2x8x8xf32> -> vector<2x8x8xf32>
    "tpu.trace_stop"() : () -> ()
    %cst_18 = arith.constant 0.176776692 : f32
    %31 = vector.broadcast %cst_18 : f32 to vector<2x8x8xf32>
    %32 = arith.mulf %30, %31 : vector<2x8x8xf32>
    %cst_19 = arith.constant dense<0xFF800000> : vector<2x8xf32>
    %33 = vector.multi_reduction <maximumf>, %32, %cst_19 [2] : vector<2x8x8xf32> to vector<2x8xf32>
    %34 = vector.shape_cast %33 : vector<2x8xf32> to vector<2x8x1xf32>
    %35 = vector.broadcast %34 : vector<2x8x1xf32> to vector<2x8x8xf32>
    %36 = arith.subf %32, %35 : vector<2x8x8xf32>
    %37 = math.exp %36 : vector<2x8x8xf32>
    %cst_20 = arith.constant dense<0.000000e+00> : vector<2x8xf32>
    %38 = vector.multi_reduction <add>, %37, %cst_20 [2] : vector<2x8x8xf32> to vector<2x8xf32>
    %39 = vector.shape_cast %38 : vector<2x8xf32> to vector<2x8x1xf32>
    %40 = vector.broadcast %39 : vector<2x8x1xf32> to vector<2x8x8xf32>
    %41 = arith.divf %37, %40 : vector<2x8x8xf32>
    %42 = arith.truncf %41 : vector<2x8x8xf32> to vector<2x8x8xbf16>
    "tpu.trace_start"() <{level = 10 : i32, message = "bqk,bkd->bqd"}> : () -> ()
    %cst_21 = arith.constant dense<0.000000e+00> : vector<2x8x32xf32>
    %43 = tpu.matmul %42, %29, %cst_21 {dimension_numbers = #tpu.dot_dimension_numbers<[2], [1], [1], [2], [0, 0, 0, 1, 1, 2], [0], [0]>} : vector<2x8x8xbf16>, vector<2x8x32xbf16>, vector<2x8x32xf32> -> vector<2x8x32xf32>
    "tpu.trace_stop"() : () -> ()
    %44 = vector.shape_cast %43 : vector<2x8x32xf32> to vector<16x32xf32>
    %45 = arith.truncf %44 : vector<16x32xf32> to vector<16x32xbf16>
    %46 = vector.extract_strided_slice %22 {offsets = [0, 0], sizes = [32, 128], strides = [1, 1]} : vector<128x128xbf16> to vector<32x128xbf16>
    %cst_22 = arith.constant dense<0.000000e+00> : vector<16x128xf32>
    %47 = tpu.matmul %45, %46, %cst_22 {dimension_numbers = #tpu.dot_dimension_numbers<[1], [0], [0], [1], [0, 0, 1, 1], [], []>} : vector<16x32xbf16>, vector<32x128xbf16>, vector<16x128xf32> -> vector<16x128xf32>
    %48 = arith.addf %23, %47 : vector<16x128xf32>
    %49 = vector.extract_strided_slice %16 {offsets = [0, 0, 32], sizes = [2, 8, 32], strides = [1, 1, 1]} : vector<2x8x128xf32> to vector<2x8x32xf32>
    %50 = arith.truncf %49 : vector<2x8x32xf32> to vector<2x8x32xbf16>
    %51 = vector.extract_strided_slice %18 {offsets = [0, 0, 32], sizes = [2, 8, 32], strides = [1, 1, 1]} : vector<2x8x128xf32> to vector<2x8x32xf32>
    %52 = arith.truncf %51 : vector<2x8x32xf32> to vector<2x8x32xbf16>
    %53 = vector.extract_strided_slice %20 {offsets = [0, 0, 32], sizes = [2, 8, 32], strides = [1, 1, 1]} : vector<2x8x128xf32> to vector<2x8x32xf32>
    %54 = arith.truncf %53 : vector<2x8x32xf32> to vector<2x8x32xbf16>
    "tpu.trace_start"() <{level = 10 : i32, message = "bqd,bkd->bqk"}> : () -> ()
    %cst_23 = arith.constant dense<0.000000e+00> : vector<2x8x8xf32>
    %55 = tpu.matmul %50, %52, %cst_23 {dimension_numbers = #tpu.dot_dimension_numbers<[2], [2], [1], [1], [0, 0, 0, 1, 1, 1], [0], [0]>} : vector<2x8x32xbf16>, vector<2x8x32xbf16>, vector<2x8x8xf32> -> vector<2x8x8xf32>
    "tpu.trace_stop"() : () -> ()
    %cst_24 = arith.constant 0.176776692 : f32
    %56 = vector.broadcast %cst_24 : f32 to vector<2x8x8xf32>
    %57 = arith.mulf %55, %56 : vector<2x8x8xf32>
    %cst_25 = arith.constant dense<0xFF800000> : vector<2x8xf32>
    %58 = vector.multi_reduction <maximumf>, %57, %cst_25 [2] : vector<2x8x8xf32> to vector<2x8xf32>
    %59 = vector.shape_cast %58 : vector<2x8xf32> to vector<2x8x1xf32>
    %60 = vector.broadcast %59 : vector<2x8x1xf32> to vector<2x8x8xf32>
    %61 = arith.subf %57, %60 : vector<2x8x8xf32>
    %62 = math.exp %61 : vector<2x8x8xf32>
    %cst_26 = arith.constant dense<0.000000e+00> : vector<2x8xf32>
    %63 = vector.multi_reduction <add>, %62, %cst_26 [2] : vector<2x8x8xf32> to vector<2x8xf32>
    %64 = vector.shape_cast %63 : vector<2x8xf32> to vector<2x8x1xf32>
    %65 = vector.broadcast %64 : vector<2x8x1xf32> to vector<2x8x8xf32>
    %66 = arith.divf %62, %65 : vector<2x8x8xf32>
    %67 = arith.truncf %66 : vector<2x8x8xf32> to vector<2x8x8xbf16>
    "tpu.trace_start"() <{level = 10 : i32, message = "bqk,bkd->bqd"}> : () -> ()
    %cst_27 = arith.constant dense<0.000000e+00> : vector<2x8x32xf32>
    %68 = tpu.matmul %67, %54, %cst_27 {dimension_numbers = #tpu.dot_dimension_numbers<[2], [1], [1], [2], [0, 0, 0, 1, 1, 2], [0], [0]>} : vector<2x8x8xbf16>, vector<2x8x32xbf16>, vector<2x8x32xf32> -> vector<2x8x32xf32>
    "tpu.trace_stop"() : () -> ()
    %69 = vector.shape_cast %68 : vector<2x8x32xf32> to vector<16x32xf32>
    %70 = arith.truncf %69 : vector<16x32xf32> to vector<16x32xbf16>
    %71 = vector.extract_strided_slice %22 {offsets = [32, 0], sizes = [32, 128], strides = [1, 1]} : vector<128x128xbf16> to vector<32x128xbf16>
    %cst_28 = arith.constant dense<0.000000e+00> : vector<16x128xf32>
    %72 = tpu.matmul %70, %71, %cst_28 {dimension_numbers = #tpu.dot_dimension_numbers<[1], [0], [0], [1], [0, 0, 1, 1], [], []>} : vector<16x32xbf16>, vector<32x128xbf16>, vector<16x128xf32> -> vector<16x128xf32>
    %73 = arith.addf %48, %72 : vector<16x128xf32>
    %74 = vector.extract_strided_slice %16 {offsets = [0, 0, 64], sizes = [2, 8, 32], strides = [1, 1, 1]} : vector<2x8x128xf32> to vector<2x8x32xf32>
    %75 = arith.truncf %74 : vector<2x8x32xf32> to vector<2x8x32xbf16>
    %76 = vector.extract_strided_slice %18 {offsets = [0, 0, 64], sizes = [2, 8, 32], strides = [1, 1, 1]} : vector<2x8x128xf32> to vector<2x8x32xf32>
    %77 = arith.truncf %76 : vector<2x8x32xf32> to vector<2x8x32xbf16>
    %78 = vector.extract_strided_slice %20 {offsets = [0, 0, 64], sizes = [2, 8, 32], strides = [1, 1, 1]} : vector<2x8x128xf32> to vector<2x8x32xf32>
    %79 = arith.truncf %78 : vector<2x8x32xf32> to vector<2x8x32xbf16>
    "tpu.trace_start"() <{level = 10 : i32, message = "bqd,bkd->bqk"}> : () -> ()
    %cst_29 = arith.constant dense<0.000000e+00> : vector<2x8x8xf32>
    %80 = tpu.matmul %75, %77, %cst_29 {dimension_numbers = #tpu.dot_dimension_numbers<[2], [2], [1], [1], [0, 0, 0, 1, 1, 1], [0], [0]>} : vector<2x8x32xbf16>, vector<2x8x32xbf16>, vector<2x8x8xf32> -> vector<2x8x8xf32>
    "tpu.trace_stop"() : () -> ()
    %cst_30 = arith.constant 0.176776692 : f32
    %81 = vector.broadcast %cst_30 : f32 to vector<2x8x8xf32>
    %82 = arith.mulf %80, %81 : vector<2x8x8xf32>
    %cst_31 = arith.constant dense<0xFF800000> : vector<2x8xf32>
    %83 = vector.multi_reduction <maximumf>, %82, %cst_31 [2] : vector<2x8x8xf32> to vector<2x8xf32>
    %84 = vector.shape_cast %83 : vector<2x8xf32> to vector<2x8x1xf32>
    %85 = vector.broadcast %84 : vector<2x8x1xf32> to vector<2x8x8xf32>
    %86 = arith.subf %82, %85 : vector<2x8x8xf32>
    %87 = math.exp %86 : vector<2x8x8xf32>
    %cst_32 = arith.constant dense<0.000000e+00> : vector<2x8xf32>
    %88 = vector.multi_reduction <add>, %87, %cst_32 [2] : vector<2x8x8xf32> to vector<2x8xf32>
    %89 = vector.shape_cast %88 : vector<2x8xf32> to vector<2x8x1xf32>
    %90 = vector.broadcast %89 : vector<2x8x1xf32> to vector<2x8x8xf32>
    %91 = arith.divf %87, %90 : vector<2x8x8xf32>
    %92 = arith.truncf %91 : vector<2x8x8xf32> to vector<2x8x8xbf16>
    "tpu.trace_start"() <{level = 10 : i32, message = "bqk,bkd->bqd"}> : () -> ()
    %cst_33 = arith.constant dense<0.000000e+00> : vector<2x8x32xf32>
    %93 = tpu.matmul %92, %79, %cst_33 {dimension_numbers = #tpu.dot_dimension_numbers<[2], [1], [1], [2], [0, 0, 0, 1, 1, 2], [0], [0]>} : vector<2x8x8xbf16>, vector<2x8x32xbf16>, vector<2x8x32xf32> -> vector<2x8x32xf32>
    "tpu.trace_stop"() : () -> ()
    %94 = vector.shape_cast %93 : vector<2x8x32xf32> to vector<16x32xf32>
    %95 = arith.truncf %94 : vector<16x32xf32> to vector<16x32xbf16>
    %96 = vector.extract_strided_slice %22 {offsets = [64, 0], sizes = [32, 128], strides = [1, 1]} : vector<128x128xbf16> to vector<32x128xbf16>
    %cst_34 = arith.constant dense<0.000000e+00> : vector<16x128xf32>
    %97 = tpu.matmul %95, %96, %cst_34 {dimension_numbers = #tpu.dot_dimension_numbers<[1], [0], [0], [1], [0, 0, 1, 1], [], []>} : vector<16x32xbf16>, vector<32x128xbf16>, vector<16x128xf32> -> vector<16x128xf32>
    %98 = arith.addf %73, %97 : vector<16x128xf32>
    %99 = vector.extract_strided_slice %16 {offsets = [0, 0, 96], sizes = [2, 8, 32], strides = [1, 1, 1]} : vector<2x8x128xf32> to vector<2x8x32xf32>
    %100 = arith.truncf %99 : vector<2x8x32xf32> to vector<2x8x32xbf16>
    %101 = vector.extract_strided_slice %18 {offsets = [0, 0, 96], sizes = [2, 8, 32], strides = [1, 1, 1]} : vector<2x8x128xf32> to vector<2x8x32xf32>
    %102 = arith.truncf %101 : vector<2x8x32xf32> to vector<2x8x32xbf16>
    %103 = vector.extract_strided_slice %20 {offsets = [0, 0, 96], sizes = [2, 8, 32], strides = [1, 1, 1]} : vector<2x8x128xf32> to vector<2x8x32xf32>
    %104 = arith.truncf %103 : vector<2x8x32xf32> to vector<2x8x32xbf16>
    "tpu.trace_start"() <{level = 10 : i32, message = "bqd,bkd->bqk"}> : () -> ()
    %cst_35 = arith.constant dense<0.000000e+00> : vector<2x8x8xf32>
    %105 = tpu.matmul %100, %102, %cst_35 {dimension_numbers = #tpu.dot_dimension_numbers<[2], [2], [1], [1], [0, 0, 0, 1, 1, 1], [0], [0]>} : vector<2x8x32xbf16>, vector<2x8x32xbf16>, vector<2x8x8xf32> -> vector<2x8x8xf32>
    "tpu.trace_stop"() : () -> ()
    %cst_36 = arith.constant 0.176776692 : f32
    %106 = vector.broadcast %cst_36 : f32 to vector<2x8x8xf32>
    %107 = arith.mulf %105, %106 : vector<2x8x8xf32>
    %cst_37 = arith.constant dense<0xFF800000> : vector<2x8xf32>
    %108 = vector.multi_reduction <maximumf>, %107, %cst_37 [2] : vector<2x8x8xf32> to vector<2x8xf32>
    %109 = vector.shape_cast %108 : vector<2x8xf32> to vector<2x8x1xf32>
    %110 = vector.broadcast %109 : vector<2x8x1xf32> to vector<2x8x8xf32>
    %111 = arith.subf %107, %110 : vector<2x8x8xf32>
    %112 = math.exp %111 : vector<2x8x8xf32>
    %cst_38 = arith.constant dense<0.000000e+00> : vector<2x8xf32>
    %113 = vector.multi_reduction <add>, %112, %cst_38 [2] : vector<2x8x8xf32> to vector<2x8xf32>
    %114 = vector.shape_cast %113 : vector<2x8xf32> to vector<2x8x1xf32>
    %115 = vector.broadcast %114 : vector<2x8x1xf32> to vector<2x8x8xf32>
    %116 = arith.divf %112, %115 : vector<2x8x8xf32>
    %117 = arith.truncf %116 : vector<2x8x8xf32> to vector<2x8x8xbf16>
    "tpu.trace_start"() <{level = 10 : i32, message = "bqk,bkd->bqd"}> : () -> ()
    %cst_39 = arith.constant dense<0.000000e+00> : vector<2x8x32xf32>
    %118 = tpu.matmul %117, %104, %cst_39 {dimension_numbers = #tpu.dot_dimension_numbers<[2], [1], [1], [2], [0, 0, 0, 1, 1, 2], [0], [0]>} : vector<2x8x8xbf16>, vector<2x8x32xbf16>, vector<2x8x32xf32> -> vector<2x8x32xf32>
    "tpu.trace_stop"() : () -> ()
    %119 = vector.shape_cast %118 : vector<2x8x32xf32> to vector<16x32xf32>
    %120 = arith.truncf %119 : vector<16x32xf32> to vector<16x32xbf16>
    %121 = vector.extract_strided_slice %22 {offsets = [96, 0], sizes = [32, 128], strides = [1, 1]} : vector<128x128xbf16> to vector<32x128xbf16>
    %cst_40 = arith.constant dense<0.000000e+00> : vector<16x128xf32>
    %122 = tpu.matmul %120, %121, %cst_40 {dimension_numbers = #tpu.dot_dimension_numbers<[1], [0], [0], [1], [0, 0, 1, 1], [], []>} : vector<16x32xbf16>, vector<32x128xbf16>, vector<16x128xf32> -> vector<16x128xf32>
    %123 = arith.addf %98, %122 : vector<16x128xf32>
    %c0_41 = arith.constant 0 : index
    %c0_42 = arith.constant 0 : index
    %c0_43 = arith.constant 0 : index
    %124 = vector.load %arg6[%c0_41, %c0_42, %c0_43] : memref<1x1x128xf32, #tpu.memory_space<vmem>>, vector<1x1x128xf32>
    %125 = vector.shape_cast %124 : vector<1x1x128xf32> to vector<1x128xf32>
    %126 = vector.broadcast %125 : vector<1x128xf32> to vector<16x128xf32>
    %127 = arith.addf %123, %126 : vector<16x128xf32>
    %128 = arith.addf %127, %4 : vector<16x128xf32>
    %129 = arith.truncf %128 : vector<16x128xf32> to vector<16x128xbf16>
    %c0_44 = arith.constant 0 : index
    %c0_45 = arith.constant 0 : index
    %c0_46 = arith.constant 0 : index
    %130 = vector.load %arg7[%c0_44, %c0_45, %c0_46] : memref<1x128x256xbf16, #tpu.memory_space<vmem>>, vector<1x128x256xbf16>
    %131 = vector.shape_cast %130 : vector<1x128x256xbf16> to vector<128x256xbf16>
    %cst_47 = arith.constant dense<0.000000e+00> : vector<16x256xf32>
    %132 = tpu.matmul %129, %131, %cst_47 {dimension_numbers = #tpu.dot_dimension_numbers<[1], [0], [0], [1], [0, 0, 1, 1], [], []>} : vector<16x128xbf16>, vector<128x256xbf16>, vector<16x256xf32> -> vector<16x256xf32>
    %c0_48 = arith.constant 0 : index
    %c0_49 = arith.constant 0 : index
    %c0_50 = arith.constant 0 : index
    %133 = vector.load %arg8[%c0_48, %c0_49, %c0_50] : memref<1x1x256xf32, #tpu.memory_space<vmem>>, vector<1x1x256xf32>
    %134 = vector.shape_cast %133 : vector<1x1x256xf32> to vector<1x256xf32>
    %135 = vector.broadcast %134 : vector<1x256xf32> to vector<16x256xf32>
    %136 = arith.addf %132, %135 : vector<16x256xf32>
    %cst_51 = arith.constant 5.000000e-01 : f32
    %137 = vector.broadcast %cst_51 : f32 to vector<16x256xf32>
    %138 = arith.mulf %137, %136 : vector<16x256xf32>
    %cst_52 = arith.constant 1.41421354 : f32
    %139 = vector.broadcast %cst_52 : f32 to vector<16x256xf32>
    %140 = arith.divf %136, %139 : vector<16x256xf32>
    %141 = math.erf %140 : vector<16x256xf32>
    %cst_53 = arith.constant 1.000000e+00 : f32
    %142 = vector.broadcast %cst_53 : f32 to vector<16x256xf32>
    %143 = arith.addf %142, %141 : vector<16x256xf32>
    %144 = arith.mulf %138, %143 : vector<16x256xf32>
    %145 = arith.truncf %144 : vector<16x256xf32> to vector<16x256xbf16>
    %c0_54 = arith.constant 0 : index
    %c0_55 = arith.constant 0 : index
    %c0_56 = arith.constant 0 : index
    %146 = vector.load %arg9[%c0_54, %c0_55, %c0_56] : memref<1x256x128xbf16, #tpu.memory_space<vmem>>, vector<1x256x128xbf16>
    %147 = vector.shape_cast %146 : vector<1x256x128xbf16> to vector<256x128xbf16>
    %cst_57 = arith.constant dense<0.000000e+00> : vector<16x128xf32>
    %148 = tpu.matmul %145, %147, %cst_57 {dimension_numbers = #tpu.dot_dimension_numbers<[1], [0], [0], [1], [0, 0, 1, 1], [], []>} : vector<16x256xbf16>, vector<256x128xbf16>, vector<16x128xf32> -> vector<16x128xf32>
    %c0_58 = arith.constant 0 : index
    %c0_59 = arith.constant 0 : index
    %c0_60 = arith.constant 0 : index
    %149 = vector.load %arg10[%c0_58, %c0_59, %c0_60] : memref<1x1x128xf32, #tpu.memory_space<vmem>>, vector<1x1x128xf32>
    %150 = vector.shape_cast %149 : vector<1x1x128xf32> to vector<1x128xf32>
    %151 = vector.broadcast %150 : vector<1x128xf32> to vector<16x128xf32>
    %152 = arith.addf %148, %151 : vector<16x128xf32>
    %153 = arith.addf %152, %128 : vector<16x128xf32>
    %c0_61 = arith.constant 0 : index
    %c0_62 = arith.constant 0 : index
    %c0_63 = arith.constant 0 : index
    %154 = vector.load %arg11[%c0_61, %c0_62, %c0_63] : memref<1x1x128xf32, #tpu.memory_space<vmem>>, vector<1x1x128xf32>
    %155 = vector.shape_cast %154 : vector<1x1x128xf32> to vector<1x128xf32>
    %c0_64 = arith.constant 0 : index
    %c0_65 = arith.constant 0 : index
    %c0_66 = arith.constant 0 : index
    %156 = vector.load %arg12[%c0_64, %c0_65, %c0_66] : memref<1x1x128xf32, #tpu.memory_space<vmem>>, vector<1x1x128xf32>
    %157 = vector.shape_cast %156 : vector<1x1x128xf32> to vector<1x128xf32>
    %cst_67 = arith.constant dense<0.000000e+00> : vector<16xf32>
    %158 = vector.multi_reduction <add>, %153, %cst_67 [1] : vector<16x128xf32> to vector<16xf32>
    %159 = vector.shape_cast %158 : vector<16xf32> to vector<16x1xf32>
    %cst_68 = arith.constant 1.280000e+02 : f32
    %160 = vector.broadcast %cst_68 : f32 to vector<16x1xf32>
    %161 = arith.divf %159, %160 : vector<16x1xf32>
    %162 = vector.broadcast %161 : vector<16x1xf32> to vector<16x128xf32>
    %163 = arith.subf %153, %162 : vector<16x128xf32>
    %164 = arith.mulf %163, %163 : vector<16x128xf32>
    %cst_69 = arith.constant dense<0.000000e+00> : vector<16xf32>
    %165 = vector.multi_reduction <add>, %164, %cst_69 [1] : vector<16x128xf32> to vector<16xf32>
    %166 = vector.shape_cast %165 : vector<16xf32> to vector<16x1xf32>
    %cst_70 = arith.constant 1.280000e+02 : f32
    %167 = vector.broadcast %cst_70 : f32 to vector<16x1xf32>
    %168 = arith.divf %166, %167 : vector<16x1xf32>
    %169 = vector.broadcast %161 : vector<16x1xf32> to vector<16x128xf32>
    %170 = arith.subf %153, %169 : vector<16x128xf32>
    %cst_71 = arith.constant 9.99999974E-6 : f32
    %171 = vector.broadcast %cst_71 : f32 to vector<16x1xf32>
    %172 = arith.addf %168, %171 : vector<16x1xf32>
    %173 = math.rsqrt %172 : vector<16x1xf32>
    %174 = vector.broadcast %173 : vector<16x1xf32> to vector<16x128xf32>
    %175 = arith.mulf %170, %174 : vector<16x128xf32>
    %176 = vector.broadcast %155 : vector<1x128xf32> to vector<16x128xf32>
    %177 = arith.mulf %175, %176 : vector<16x128xf32>
    %178 = vector.broadcast %157 : vector<1x128xf32> to vector<16x128xf32>
    %179 = arith.addf %177, %178 : vector<16x128xf32>
    %180 = vector.shape_cast %179 : vector<16x128xf32> to vector<2x8x128xf32>
    %c0_72 = arith.constant 0 : index
    %c0_73 = arith.constant 0 : index
    %c0_74 = arith.constant 0 : index
    %c0_75 = arith.constant 0 : index
    %181 = vector.load %arg13[%c0_72, %c0_73, %c0_74, %c0_75] : memref<1x2x8x128xf32, #tpu.memory_space<vmem>>, vector<1x2x8x128xf32>
    %182 = vector.shape_cast %181 : vector<1x2x8x128xf32> to vector<2x8x128xf32>
    %183 = vector.shape_cast %180 : vector<2x8x128xf32> to vector<1x2x8x128xf32>
    tpu.vector_store %arg13[%c0_72, %c0_73, %c0_74, %c0_75], %183 {strides = array<i32>} : memref<1x2x8x128xf32, #tpu.memory_space<vmem>>, vector<1x2x8x128xf32>,
    return
  }
  func.func @transform_0(%arg0: i32) -> (i32, i32, i32, i32) {
    %c0_i32 = arith.constant 0 : i32
    %c0_i32_0 = arith.constant 0 : i32
    %c0_i32_1 = arith.constant 0 : i32
    %c0_i32_2 = arith.constant 0 : i32
    return %arg0, %c0_i32, %c0_i32_0, %c0_i32_1 : i32, i32, i32, i32
  }
  func.func @transform_1(%arg0: i32) -> (i32, i32, i32, i32) {
    %c0_i32 = arith.constant 0 : i32
    %c0_i32_0 = arith.constant 0 : i32
    %c0_i32_1 = arith.constant 0 : i32
    %c0_i32_2 = arith.constant 0 : i32
    return %arg0, %c0_i32, %c0_i32_0, %c0_i32_1 : i32, i32, i32, i32
  }
  func.func @transform_2(%arg0: i32) -> (i32, i32, i32) {
    %c0_i32 = arith.constant 0 : i32
    %c0_i32_0 = arith.constant 0 : i32
    %c0_i32_1 = arith.constant 0 : i32
    return %arg0, %c0_i32, %c0_i32_0 : i32, i32, i32
  }
  func.func @transform_3(%arg0: i32) -> (i32, i32, i32) {
    %c0_i32 = arith.constant 0 : i32
    %c0_i32_0 = arith.constant 0 : i32
    %c0_i32_1 = arith.constant 0 : i32
    return %arg0, %c0_i32, %c0_i32_0 : i32, i32, i32
  }
  func.func @transform_4(%arg0: i32) -> (i32, i32, i32) {
    %c0_i32 = arith.constant 0 : i32
    %c0_i32_0 = arith.constant 0 : i32
    %c0_i32_1 = arith.constant 0 : i32
    return %arg0, %c0_i32, %c0_i32_0 : i32, i32, i32
  }
  func.func @transform_5(%arg0: i32) -> (i32, i32, i32) {
    %c0_i32 = arith.constant 0 : i32
    %c0_i32_0 = arith.constant 0 : i32
    %c0_i32_1 = arith.constant 0 : i32
    return %arg0, %c0_i32, %c0_i32_0 : i32, i32, i32
  }
  func.func @transform_6(%arg0: i32) -> (i32, i32, i32) {
    %c0_i32 = arith.constant 0 : i32
    %c0_i32_0 = arith.constant 0 : i32
    %c0_i32_1 = arith.constant 0 : i32
    return %arg0, %c0_i32, %c0_i32_0 : i32, i32, i32
  }
  func.func @transform_7(%arg0: i32) -> (i32, i32, i32) {
    %c0_i32 = arith.constant 0 : i32
    %c0_i32_0 = arith.constant 0 : i32
    %c0_i32_1 = arith.constant 0 : i32
    return %arg0, %c0_i32, %c0_i32_0 : i32, i32, i32
  }
  func.func @transform_8(%arg0: i32) -> (i32, i32, i32) {
    %c0_i32 = arith.constant 0 : i32
    %c0_i32_0 = arith.constant 0 : i32
    %c0_i32_1 = arith.constant 0 : i32
    return %arg0, %c0_i32, %c0_i32_0 : i32, i32, i32
  }
  func.func @transform_9(%arg0: i32) -> (i32, i32, i32) {
    %c0_i32 = arith.constant 0 : i32
    %c0_i32_0 = arith.constant 0 : i32
    %c0_i32_1 = arith.constant 0 : i32
    return %arg0, %c0_i32, %c0_i32_0 : i32, i32, i32
  }
  func.func @transform_10(%arg0: i32) -> (i32, i32, i32) {
    %c0_i32 = arith.constant 0 : i32
    %c0_i32_0 = arith.constant 0 : i32
    %c0_i32_1 = arith.constant 0 : i32
    return %arg0, %c0_i32, %c0_i32_0 : i32, i32, i32
  }
  func.func @transform_11(%arg0: i32) -> (i32, i32, i32) {
    %c0_i32 = arith.constant 0 : i32
    %c0_i32_0 = arith.constant 0 : i32
    %c0_i32_1 = arith.constant 0 : i32
    return %arg0, %c0_i32, %c0_i32_0 : i32, i32, i32
  }
  func.func @transform_12(%arg0: i32) -> (i32, i32, i32, i32) {
    %c0_i32 = arith.constant 0 : i32
    %c0_i32_0 = arith.constant 0 : i32
    %c0_i32_1 = arith.constant 0 : i32
    %c0_i32_2 = arith.constant 0 : i32
    return %arg0, %c0_i32, %c0_i32_0, %c0_i32_1 : i32, i32, i32, i32
  }
}

module attributes {stable_mosaic.version = 11 : i64} {
  func.func @_mean_mlp_kernel(%arg0: memref<6x8x128xf32, #tpu.memory_space<vmem>>, %arg1: memref<128x256xbf16, #tpu.memory_space<vmem>>, %arg2: memref<1x256xf32, #tpu.memory_space<vmem>>, %arg3: memref<1x256xf32, #tpu.memory_space<vmem>>, %arg4: memref<1x256xf32, #tpu.memory_space<vmem>>, %arg5: memref<256x128xbf16, #tpu.memory_space<vmem>>, %arg6: memref<1x128xf32, #tpu.memory_space<vmem>>, %arg7: memref<6x128xf32, #tpu.memory_space<vmem>>) attributes {dimension_semantics = [], scalar_prefetch = 0 : i64, scratch_operands = 0 : i64, tpu.core_type = #tpu.core_type<tc>} {
    %c0 = arith.constant 0 : index
    %c0_0 = arith.constant 0 : index
    %c0_1 = arith.constant 0 : index
    %0 = vector.load %arg0[%c0, %c0_0, %c0_1] : memref<6x8x128xf32, #tpu.memory_space<vmem>>, vector<6x8x128xf32>
    %cst = arith.constant dense<0.000000e+00> : vector<6x128xf32>
    %1 = vector.multi_reduction <add>, %0, %cst [1] : vector<6x8x128xf32> to vector<6x128xf32>
    %cst_2 = arith.constant 8.000000e+00 : f32
    %2 = vector.broadcast %cst_2 : f32 to vector<6x128xf32>
    %3 = arith.divf %1, %2 : vector<6x128xf32>
    %4 = arith.truncf %3 : vector<6x128xf32> to vector<6x128xbf16>
    %c0_3 = arith.constant 0 : index
    %c0_4 = arith.constant 0 : index
    %5 = vector.load %arg1[%c0_3, %c0_4] : memref<128x256xbf16, #tpu.memory_space<vmem>>, vector<128x256xbf16>
    %cst_5 = arith.constant dense<0.000000e+00> : vector<6x256xf32>
    %6 = tpu.matmul %4, %5, %cst_5 {dimension_numbers = #tpu.dot_dimension_numbers<[1], [0], [0], [1], [0, 0, 1, 1], [], []>} : vector<6x128xbf16>, vector<128x256xbf16>, vector<6x256xf32> -> vector<6x256xf32>
    %c0_6 = arith.constant 0 : index
    %c0_7 = arith.constant 0 : index
    %7 = vector.load %arg2[%c0_6, %c0_7] : memref<1x256xf32, #tpu.memory_space<vmem>>, vector<1x256xf32>
    %8 = vector.broadcast %7 : vector<1x256xf32> to vector<6x256xf32>
    %9 = arith.addf %6, %8 : vector<6x256xf32>
    %cst_8 = arith.constant 5.000000e-01 : f32
    %10 = vector.broadcast %cst_8 : f32 to vector<6x256xf32>
    %11 = arith.mulf %10, %9 : vector<6x256xf32>
    %cst_9 = arith.constant 1.41421354 : f32
    %12 = vector.broadcast %cst_9 : f32 to vector<6x256xf32>
    %13 = arith.divf %9, %12 : vector<6x256xf32>
    %14 = math.erf %13 : vector<6x256xf32>
    %cst_10 = arith.constant 1.000000e+00 : f32
    %15 = vector.broadcast %cst_10 : f32 to vector<6x256xf32>
    %16 = arith.addf %15, %14 : vector<6x256xf32>
    %17 = arith.mulf %11, %16 : vector<6x256xf32>
    %c0_11 = arith.constant 0 : index
    %c0_12 = arith.constant 0 : index
    %18 = vector.load %arg3[%c0_11, %c0_12] : memref<1x256xf32, #tpu.memory_space<vmem>>, vector<1x256xf32>
    %c0_13 = arith.constant 0 : index
    %c0_14 = arith.constant 0 : index
    %19 = vector.load %arg4[%c0_13, %c0_14] : memref<1x256xf32, #tpu.memory_space<vmem>>, vector<1x256xf32>
    %cst_15 = arith.constant dense<0.000000e+00> : vector<6xf32>
    %20 = vector.multi_reduction <add>, %17, %cst_15 [1] : vector<6x256xf32> to vector<6xf32>
    %21 = vector.shape_cast %20 : vector<6xf32> to vector<6x1xf32>
    %cst_16 = arith.constant 2.560000e+02 : f32
    %22 = vector.broadcast %cst_16 : f32 to vector<6x1xf32>
    %23 = arith.divf %21, %22 : vector<6x1xf32>
    %24 = vector.broadcast %23 : vector<6x1xf32> to vector<6x256xf32>
    %25 = arith.subf %17, %24 : vector<6x256xf32>
    %26 = arith.mulf %25, %25 : vector<6x256xf32>
    %cst_17 = arith.constant dense<0.000000e+00> : vector<6xf32>
    %27 = vector.multi_reduction <add>, %26, %cst_17 [1] : vector<6x256xf32> to vector<6xf32>
    %28 = vector.shape_cast %27 : vector<6xf32> to vector<6x1xf32>
    %cst_18 = arith.constant 2.560000e+02 : f32
    %29 = vector.broadcast %cst_18 : f32 to vector<6x1xf32>
    %30 = arith.divf %28, %29 : vector<6x1xf32>
    %31 = vector.broadcast %23 : vector<6x1xf32> to vector<6x256xf32>
    %32 = arith.subf %17, %31 : vector<6x256xf32>
    %cst_19 = arith.constant 9.99999974E-6 : f32
    %33 = vector.broadcast %cst_19 : f32 to vector<6x1xf32>
    %34 = arith.addf %30, %33 : vector<6x1xf32>
    %35 = math.rsqrt %34 : vector<6x1xf32>
    %36 = vector.broadcast %35 : vector<6x1xf32> to vector<6x256xf32>
    %37 = arith.mulf %32, %36 : vector<6x256xf32>
    %38 = vector.broadcast %18 : vector<1x256xf32> to vector<6x256xf32>
    %39 = arith.mulf %37, %38 : vector<6x256xf32>
    %40 = vector.broadcast %19 : vector<1x256xf32> to vector<6x256xf32>
    %41 = arith.addf %39, %40 : vector<6x256xf32>
    %42 = arith.truncf %41 : vector<6x256xf32> to vector<6x256xbf16>
    %c0_20 = arith.constant 0 : index
    %c0_21 = arith.constant 0 : index
    %43 = vector.load %arg5[%c0_20, %c0_21] : memref<256x128xbf16, #tpu.memory_space<vmem>>, vector<256x128xbf16>
    %cst_22 = arith.constant dense<0.000000e+00> : vector<6x128xf32>
    %44 = tpu.matmul %42, %43, %cst_22 {dimension_numbers = #tpu.dot_dimension_numbers<[1], [0], [0], [1], [0, 0, 1, 1], [], []>} : vector<6x256xbf16>, vector<256x128xbf16>, vector<6x128xf32> -> vector<6x128xf32>
    %c0_23 = arith.constant 0 : index
    %c0_24 = arith.constant 0 : index
    %45 = vector.load %arg6[%c0_23, %c0_24] : memref<1x128xf32, #tpu.memory_space<vmem>>, vector<1x128xf32>
    %46 = vector.broadcast %45 : vector<1x128xf32> to vector<6x128xf32>
    %47 = arith.addf %44, %46 : vector<6x128xf32>
    %c0_25 = arith.constant 0 : index
    %c0_26 = arith.constant 0 : index
    %48 = vector.load %arg7[%c0_25, %c0_26] : memref<6x128xf32, #tpu.memory_space<vmem>>, vector<6x128xf32>
    tpu.vector_store %arg7[%c0_25, %c0_26], %47 {strides = array<i32>} : memref<6x128xf32, #tpu.memory_space<vmem>>, vector<6x128xf32>,
    return
  }
}

</mosaic_0001>

<llo_original>
// kernel: _lambda_.6
$region0: #{_lambda_.6}
  #allocation0 [shape = 'u32[]', space=smem, size = 0x4, offset = 0x4, fixed_abs, tag = 'smem constant byte address 0x4 - core index']
  #allocation1 [shape = 'u32[144,128]{1,0:T(1,128)}', space=vmem, size = 0x12000, scoped, tag = 'internal scratch']
  %s0 = inlined_call_operand.vmem [shape: f32[4,16,128], index: 0, kind: input, shape index: {}]
  %s1 = inlined_call_operand.hbm [shape: bf16[4,128,128], index: 1, kind: input, shape index: {}]
  %s2 = inlined_call_operand.vmem [shape: f32[4,1,128], index: 2, kind: input, shape index: {}]
  %s3 = inlined_call_operand.vmem [shape: f32[4,1,128], index: 3, kind: input, shape index: {}]
  %s4 = inlined_call_operand.vmem [shape: f32[4,1,128], index: 4, kind: input, shape index: {}]
  %s5 = inlined_call_operand.hbm [shape: bf16[4,128,128], index: 5, kind: input, shape index: {}]
  %s6 = inlined_call_operand.vmem [shape: f32[4,1,128], index: 6, kind: input, shape index: {}]
  %s7 = inlined_call_operand.vmem [shape: f32[4,16,128], index: 7, kind: output, shape index: {}]
  %s8 = sld [smem:[#allocation0]]
  $region69: #{_lambda_.6} parent=0
    _
  %s10 = ssub.s32 1, %s8
  %s11 = scalar_select 0, %s10, %s8
  $region1: #{_lambda_.6} parent=0
    #allocation2 [shape = 'u8[65536]{0}', space=vmem, size = 0x10000, scoped, tag = 'input window, operand 1']
    #allocation3 [shape = 's32[2]{0}', space=sflag, size = 0x8, scoped, tag = 'scoped memory for _lambda_.6']
    #allocation4 [shape = 'u8[65536]{0}', space=vmem, size = 0x10000, scoped, tag = 'input window, operand 5']
    #allocation5 [shape = 's32[2]{0}', space=sflag, size = 0x8, scoped, tag = 'scoped memory for _lambda_.6']
    %12 = vsyncpa [#allocation3], 0
    %s13 = scalar_lea.sflag [#allocation3], 1
    %14 = vsyncpa %s13, 0
    %15 = vsyncpa [#allocation5], 0
    %s16 = scalar_lea.sflag [#allocation5], 1
    %17 = vsyncpa %s16, 0
    loop: start=0, step=1, limit=6
    $region2: #{_lambda_.6} parent=1 // loop_pre_header
      _
    $region3: #{_lambda_.6} parent=1 // loop_header
      %s19 = sphi 0, %s23
      %p20 = scmp.ge.s32.totalorder %s19, 6
      %s29 = sphi 0, %s31
      %s32 = sphi 0, %s29
      %s33 = sphi 0, %s32
      %s49 = sphi 0, %s33
      %s55 = sphi 0, %s57
      %s58 = sphi 0, %s55
      %s59 = sphi 0, %s58
      %s75 = sphi 0, %s59
      %s81 = sphi 0, %s83
      %s84 = sphi 0, %s81
      %s85 = sphi 0, %s84
      %s101 = sphi 0, %s85
      %s107 = sphi 0, %s109
      %s110 = sphi 0, %s107
      %s111 = sphi 0, %s110
      %s127 = sphi 0, %s111
      %s133 = sphi 0, %s135
      %s136 = sphi 0, %s133
      %s137 = sphi 0, %s136
      %s153 = sphi 0, %s137
      %s159 = sphi 0, %s161
      %s162 = sphi 0, %s159
      %s163 = sphi 0, %s162
      %s179 = sphi 0, %s163
      %s185 = sphi 0, %s187
      %s188 = sphi 0, %s185
      %s189 = sphi 0, %s188
      %s205 = sphi 0, %s189
      %s211 = sphi 0, %s213
      %s214 = sphi 0, %s211
      %s215 = sphi 0, %s214
      %s231 = sphi 0, %s215
    $region4: #{_lambda_.6} parent=1 // loop_header_branch
      %22 = sbr.rel (%p20) target = $region8
    $region5: #{_lambda_.6} parent=1 // loop_body
      %s24 = ssub.s32 %s19, 1
      %s25 = ssub.s32 %s19, 2
      %s26 = sadd.s32 %s19, 1
      %s27 = ssub.s32 %s19, %s26
      %p28 = scmp.eq.s32.totalorder %s27, 0
      %s30 = sadd.s32 %s29, 1
      %s31 = scalar_select %p28, %s29, %s30
      %p34 = pneg %p28
      %p35 = scmp.eq.s32.totalorder %s19, 3
      %p36 = por %p34, %p35
      %p37 = scmp.ne.s32.totalorder %s29, %s32
      %p38 = scmp.eq.s32.totalorder %s19, 0
      %p39 = por %p37, %p38
      %p40 = scmp.ne.s32.totalorder %s29, %s32
      %p41 = scmp.eq.s32.totalorder %s24, 3
      %p42 = por %p40, %p41
      %p43 = scmp.ne.s32.totalorder %s32, %s33
      %p44 = scmp.eq.s32.totalorder %s24, 0
      %p45 = por %p43, %p44
      %p46 = scmp.ne.s32.totalorder %s32, %s33
      %p47 = scmp.eq.s32.totalorder %s25, 3
      %p48 = por %p46, %p47
      %p50 = scmp.ne.s32.totalorder %s33, %s49
      %p51 = scmp.eq.s32.totalorder %s25, 0
      %p52 = por %p50, %p51
      %s53 = ssub.s32 %s19, %s26
      %p54 = scmp.eq.s32.totalorder %s53, 0
      %s56 = sadd.s32 %s55, 1
      %s57 = scalar_select %p54, %s55, %s56
      %p60 = pneg %p54
      %p61 = scmp.eq.s32.totalorder %s19, 3
      %p62 = por %p60, %p61
      %p63 = scmp.ne.s32.totalorder %s55, %s58
      %p64 = scmp.eq.s32.totalorder %s19, 0
      %p65 = por %p63, %p64
      %p66 = scmp.ne.s32.totalorder %s55, %s58
      %p67 = scmp.eq.s32.totalorder %s24, 3
      %p68 = por %p66, %p67
      %p69 = scmp.ne.s32.totalorder %s58, %s59
      %p70 = scmp.eq.s32.totalorder %s24, 0
      %p71 = por %p69, %p70
      %p72 = scmp.ne.s32.totalorder %s58, %s59
      %p73 = scmp.eq.s32.totalorder %s25, 3
      %p74 = por %p72, %p73
      %p76 = scmp.ne.s32.totalorder %s59, %s75
      %p77 = scmp.eq.s32.totalorder %s25, 0
      %p78 = por %p76, %p77
      %s79 = ssub.s32 %s19, %s26
      %p80 = scmp.eq.s32.totalorder %s79, 0
      %s82 = sadd.s32 %s81, 1
      %s83 = scalar_select %p80, %s81, %s82
      %p86 = pneg %p80
      %p87 = scmp.eq.s32.totalorder %s19, 3
      %p88 = por %p86, %p87
      %p89 = scmp.ne.s32.totalorder %s81, %s84
      %p90 = scmp.eq.s32.totalorder %s19, 0
      %p91 = por %p89, %p90
      %p92 = scmp.ne.s32.totalorder %s81, %s84
      %p93 = scmp.eq.s32.totalorder %s24, 3
      %p94 = por %p92, %p93
      %p95 = scmp.ne.s32.totalorder %s84, %s85
      %p96 = scmp.eq.s32.totalorder %s24, 0
      %p97 = por %p95, %p96
      %p98 = scmp.ne.s32.totalorder %s84, %s85
      %p99 = scmp.eq.s32.totalorder %s25, 3
      %p100 = por %p98, %p99
      %p102 = scmp.ne.s32.totalorder %s85, %s101
      %p103 = scmp.eq.s32.totalorder %s25, 0
      %p104 = por %p102, %p103
      %s105 = ssub.s32 %s19, %s26
      %p106 = scmp.eq.s32.totalorder %s105, 0
      %s108 = sadd.s32 %s107, 1
      %s109 = scalar_select %p106, %s107, %s108
      %p112 = pneg %p106
      %p113 = scmp.eq.s32.totalorder %s19, 3
      %p114 = por %p112, %p113
      %p115 = scmp.ne.s32.totalorder %s107, %s110
      %p116 = scmp.eq.s32.totalorder %s19, 0
      %p117 = por %p115, %p116
      %p118 = scmp.ne.s32.totalorder %s107, %s110
      %p119 = scmp.eq.s32.totalorder %s24, 3
      %p120 = por %p118, %p119
      %p121 = scmp.ne.s32.totalorder %s110, %s111
      %p122 = scmp.eq.s32.totalorder %s24, 0
      %p123 = por %p121, %p122
      %p124 = scmp.ne.s32.totalorder %s110, %s111
      %p125 = scmp.eq.s32.totalorder %s25, 3
      %p126 = por %p124, %p125
      %p128 = scmp.ne.s32.totalorder %s111, %s127
      %p129 = scmp.eq.s32.totalorder %s25, 0
      %p130 = por %p128, %p129
      %s131 = ssub.s32 %s19, %s26
      %p132 = scmp.eq.s32.totalorder %s131, 0
      %s134 = sadd.s32 %s133, 1
      %s135 = scalar_select %p132, %s133, %s134
      %p138 = pneg %p132
      %p139 = scmp.eq.s32.totalorder %s19, 3
      %p140 = por %p138, %p139
      %p141 = scmp.ne.s32.totalorder %s133, %s136
      %p142 = scmp.eq.s32.totalorder %s19, 0
      %p143 = por %p141, %p142
      %p144 = scmp.ne.s32.totalorder %s133, %s136
      %p145 = scmp.eq.s32.totalorder %s24, 3
      %p146 = por %p144, %p145
      %p147 = scmp.ne.s32.totalorder %s136, %s137
      %p148 = scmp.eq.s32.totalorder %s24, 0
      %p149 = por %p147, %p148
      %p150 = scmp.ne.s32.totalorder %s136, %s137
      %p151 = scmp.eq.s32.totalorder %s25, 3
      %p152 = por %p150, %p151
      %p154 = scmp.ne.s32.totalorder %s137, %s153
      %p155 = scmp.eq.s32.totalorder %s25, 0
      %p156 = por %p154, %p155
      %s157 = ssub.s32 %s19, %s26
      %p158 = scmp.eq.s32.totalorder %s157, 0
      %s160 = sadd.s32 %s159, 1
      %s161 = scalar_select %p158, %s159, %s160
      %p164 = pneg %p158
      %p165 = scmp.eq.s32.totalorder %s19, 3
      %p166 = por %p164, %p165
      %p167 = scmp.ne.s32.totalorder %s159, %s162
      %p168 = scmp.eq.s32.totalorder %s19, 0
      %p169 = por %p167, %p168
      %p170 = scmp.ne.s32.totalorder %s159, %s162
      %p171 = scmp.eq.s32.totalorder %s24, 3
      %p172 = por %p170, %p171
      %p173 = scmp.ne.s32.totalorder %s162, %s163
      %p174 = scmp.eq.s32.totalorder %s24, 0
      %p175 = por %p173, %p174
      %p176 = scmp.ne.s32.totalorder %s162, %s163
      %p177 = scmp.eq.s32.totalorder %s25, 3
      %p178 = por %p176, %p177
      %p180 = scmp.ne.s32.totalorder %s163, %s179
      %p181 = scmp.eq.s32.totalorder %s25, 0
      %p182 = por %p180, %p181
      %s183 = ssub.s32 %s19, %s26
      %p184 = scmp.eq.s32.totalorder %s183, 0
      %s186 = sadd.s32 %s185, 1
      %s187 = scalar_select %p184, %s185, %s186
      %p190 = pneg %p184
      %p191 = scmp.eq.s32.totalorder %s19, 3
      %p192 = por %p190, %p191
      %p193 = scmp.ne.s32.totalorder %s185, %s188
      %p194 = scmp.eq.s32.totalorder %s19, 0
      %p195 = por %p193, %p194
      %p196 = scmp.ne.s32.totalorder %s185, %s188
      %p197 = scmp.eq.s32.totalorder %s24, 3
      %p198 = por %p196, %p197
      %p199 = scmp.ne.s32.totalorder %s188, %s189
      %p200 = scmp.eq.s32.totalorder %s24, 0
      %p201 = por %p199, %p200
      %p202 = scmp.ne.s32.totalorder %s188, %s189
      %p203 = scmp.eq.s32.totalorder %s25, 3
      %p204 = por %p202, %p203
      %p206 = scmp.ne.s32.totalorder %s189, %s205
      %p207 = scmp.eq.s32.totalorder %s25, 0
      %p208 = por %p206, %p207
      %s209 = ssub.s32 %s19, %s26
      %p210 = scmp.eq.s32.totalorder %s209, 0
      %s212 = sadd.s32 %s211, 1
      %s213 = scalar_select %p210, %s211, %s212
      %p216 = pneg %p210
      %p217 = scmp.eq.s32.totalorder %s19, 3
      %p218 = por %p216, %p217
      %p219 = scmp.ne.s32.totalorder %s211, %s214
      %p220 = scmp.eq.s32.totalorder %s19, 0
      %p221 = por %p219, %p220
      %p222 = scmp.ne.s32.totalorder %s211, %s214
      %p223 = scmp.eq.s32.totalorder %s24, 3
      %p224 = por %p222, %p223
      %p225 = scmp.ne.s32.totalorder %s214, %s215
      %p226 = scmp.eq.s32.totalorder %s24, 0
      %p227 = por %p225, %p226
      %p228 = scmp.ne.s32.totalorder %s214, %s215
      %p229 = scmp.eq.s32.totalorder %s25, 3
      %p230 = por %p228, %p229
      %p232 = scmp.ne.s32.totalorder %s215, %s231
      %p233 = scmp.eq.s32.totalorder %s25, 0
      %p234 = por %p232, %p233
      %p235 = scmp.le.s32.totalorder 1, %s19
      %p236 = scmp.lt.s32.totalorder %s19, 5
      %p237 = pnand %p235, %p236
      %p238 = pneg %p237
      // Predicated region
      $region9: #{_lambda_.6} parent=5 // pred_check
        _
      $region10: #{_lambda_.6} parent=5 // pred_check_branch
        %240 = sbr.rel (%p237) target = $region12
      $region11: #{_lambda_.6} parent=5 // pred_region
        %s241 = ssub.s32 %s19, 1
      $region12: #{_lambda_.6} parent=5 // pred_fallthru
        _
      %p242 = scmp.lt.s32.totalorder %s19, 4
      // Predicated region
      $region13: #{_lambda_.6} parent=5 // pred_check
        %p243 = pneg %p242
      $region14: #{_lambda_.6} parent=5 // pred_check_branch
        %245 = sbr.rel (%p243) target = $region16
      $region15: #{_lambda_.6} parent=5 // pred_region
        // Predicated region
        $region17: #{_lambda_.6} parent=15 // pred_check
          %p246 = pneg %p39
        $region18: #{_lambda_.6} parent=15 // pred_check_branch
          %248 = sbr.rel (%p246) target = $region20
        $region19: #{_lambda_.6} parent=15 // pred_region
          %p249 = scmp.lt.s32.totalorder %s19, 3
          %s250 = scalar_select %p249, %s19, 3
          %s251 = smul.addr %s250, 2
          %s252 = smul.addr %s251, 8
          %s253 = scalar_lea.vmem %s0, %s252
        $region20: #{_lambda_.6} parent=15 // pred_fallthru
          _
        // Predicated region
        $region21: #{_lambda_.6} parent=15 // pred_check
          %p254 = pneg %p65
        $region22: #{_lambda_.6} parent=15 // pred_check_branch
          %256 = sbr.rel (%p254) target = $region24
        $region23: #{_lambda_.6} parent=15 // pred_region
          %s257 = sand.u32 %s55, 1
          %s258 = scalar_lea.sflag [#allocation3], %s257
          %s259 = sand.u32 %s55, 1
          %s260 = smul.addr %s259, 64
          %s261 = scalar_lea.vmem [#allocation2], %s260
          %s263 = ssub.s32 1024, 1024
          %264 = vsyncadd %s258, %s263
          %s265 = smul.addr %s19, 16
          %s266 = smul.addr %s265, 64
          %s267 = scalar_lea.hbm %s1, %s266
          %s268 = sshll.u32 %s261, 4
          %s269 = int_to_ptr.vmem [resolvable:$true] %s268
          %274 = dma.hbm_to_vmem [thread:$0]  %s267, 1024, %s269, %s258, 64, 64, 4
        $region24: #{_lambda_.6} parent=15 // pred_fallthru
          _
        // Predicated region
        $region25: #{_lambda_.6} parent=15 // pred_check
          %p275 = pneg %p91
        $region26: #{_lambda_.6} parent=15 // pred_check_branch
          %277 = sbr.rel (%p275) target = $region28
        $region27: #{_lambda_.6} parent=15 // pred_region
          %p278 = scmp.lt.s32.totalorder %s19, 3
          %s279 = scalar_select %p278, %s19, 3
          %s280 = scalar_lea.vmem %s2, %s279
        $region28: #{_lambda_.6} parent=15 // pred_fallthru
          _
        // Predicated region
        $region29: #{_lambda_.6} parent=15 // pred_check
          %p281 = pneg %p117
        $region30: #{_lambda_.6} parent=15 // pred_check_branch
          %283 = sbr.rel (%p281) target = $region32
        $region31: #{_lambda_.6} parent=15 // pred_region
          %p284 = scmp.lt.s32.totalorder %s19, 3
          %s285 = scalar_select %p284, %s19, 3
          %s286 = scalar_lea.vmem %s3, %s285
        $region32: #{_lambda_.6} parent=15 // pred_fallthru
          _
        // Predicated region
        $region33: #{_lambda_.6} parent=15 // pred_check
          %p287 = pneg %p143
        $region34: #{_lambda_.6} parent=15 // pred_check_branch
          %289 = sbr.rel (%p287) target = $region36
        $region35: #{_lambda_.6} parent=15 // pred_region
          %p290 = scmp.lt.s32.totalorder %s19, 3
          %s291 = scalar_select %p290, %s19, 3
          %s292 = scalar_lea.vmem %s4, %s291
        $region36: #{_lambda_.6} parent=15 // pred_fallthru
          _
        // Predicated region
        $region37: #{_lambda_.6} parent=15 // pred_check
          %p293 = pneg %p169
        $region38: #{_lambda_.6} parent=15 // pred_check_branch
          %295 = sbr.rel (%p293) target = $region40
        $region39: #{_lambda_.6} parent=15 // pred_region
          %s296 = sand.u32 %s159, 1
          %s297 = scalar_lea.sflag [#allocation5], %s296
          %s298 = sand.u32 %s159, 1
          %s299 = smul.addr %s298, 64
          %s300 = scalar_lea.vmem [#allocation4], %s299
          %s302 = ssub.s32 1024, 1024
          %303 = vsyncadd %s297, %s302
          %s304 = smul.addr %s19, 16
          %s305 = smul.addr %s304, 64
          %s306 = scalar_lea.hbm %s5, %s305
          %s307 = sshll.u32 %s300, 4
          %s308 = int_to_ptr.vmem [resolvable:$true] %s307
          %313 = dma.hbm_to_vmem [thread:$0]  %s306, 1024, %s308, %s297, 64, 64, 4
        $region40: #{_lambda_.6} parent=15 // pred_fallthru
          _
        // Predicated region
        $region41: #{_lambda_.6} parent=15 // pred_check
          %p314 = pneg %p195
        $region42: #{_lambda_.6} parent=15 // pred_check_branch
          %316 = sbr.rel (%p314) target = $region44
        $region43: #{_lambda_.6} parent=15 // pred_region
          %p317 = scmp.lt.s32.totalorder %s19, 3
          %s318 = scalar_select %p317, %s19, 3
          %s319 = scalar_lea.vmem %s6, %s318
        $region44: #{_lambda_.6} parent=15 // pred_fallthru
          _
      $region16: #{_lambda_.6} parent=5 // pred_fallthru
        _
      %p320 = scmp.le.s32.totalorder 1, %s19
      %p321 = scmp.lt.s32.totalorder %s19, 5
      %p322 = pnand %p320, %p321
      %p323 = pneg %p322
      // Predicated region
      $region45: #{_lambda_.6} parent=5 // pred_check
        _
      $region46: #{_lambda_.6} parent=5 // pred_check_branch
        %325 = sbr.rel (%p322) target = $region48
      $region47: #{_lambda_.6} parent=5 // pred_region
        %s326 = ssub.s32 %s19, 1
        %s327 = sand.u32 %s58, 1
        %s328 = scalar_lea.sflag [#allocation3], %s327
        %s329 = sand.u32 %s58, 1
        %s330 = smul.addr %s329, 64
        %s331 = scalar_lea.vmem [#allocation2], %s330
        // Predicated region
        $region49: #{_lambda_.6} parent=47 // pred_check
          %p332 = pneg %p71
        $region50: #{_lambda_.6} parent=47 // pred_check_branch
          %334 = sbr.rel (%p332) target = $region52
        $region51: #{_lambda_.6} parent=47 // pred_region
          %335 = dma.done %s328, 1024
        $region52: #{_lambda_.6} parent=47 // pred_fallthru
          _
        %s336 = sand.u32 %s162, 1
        %s337 = scalar_lea.sflag [#allocation5], %s336
        %s338 = sand.u32 %s162, 1
        %s339 = smul.addr %s338, 64
        %s340 = scalar_lea.vmem [#allocation4], %s339
        // Predicated region
        $region53: #{_lambda_.6} parent=47 // pred_check
          %p341 = pneg %p175
        $region54: #{_lambda_.6} parent=47 // pred_check_branch
          %343 = sbr.rel (%p341) target = $region56
        $region55: #{_lambda_.6} parent=47 // pred_region
          %344 = dma.done %s337, 1024
        $region56: #{_lambda_.6} parent=47 // pred_fallthru
          _
        %p345 = scmp.lt.s32.totalorder %s24, 3
        %s346 = scalar_select %p345, %s24, 3
        %s347 = smul.addr %s346, 2
        %s348 = smul.addr %s347, 8
        %s349 = scalar_lea.vmem %s0, %s348
        %p350 = pneg %p45
        %p351 = pneg %p42
        %s352 = sand.u32 %s58, 1
        %s353 = scalar_lea.sflag [#allocation3], %s352
        %s354 = sand.u32 %s58, 1
        %s355 = smul.addr %s354, 64
        %s356 = scalar_lea.vmem [#allocation2], %s355
        %p357 = pneg %p71
        %p358 = pneg %p68
        %p359 = scmp.lt.s32.totalorder %s24, 3
        %s360 = scalar_select %p359, %s24, 3
        %s361 = scalar_lea.vmem %s2, %s360
        %p362 = pneg %p97
        %p363 = pneg %p94
        %p364 = scmp.lt.s32.totalorder %s24, 3
        %s365 = scalar_select %p364, %s24, 3
        %s366 = scalar_lea.vmem %s3, %s365
        %p367 = pneg %p123
        %p368 = pneg %p120
        %p369 = scmp.lt.s32.totalorder %s24, 3
        %s370 = scalar_select %p369, %s24, 3
        %s371 = scalar_lea.vmem %s4, %s370
        %p372 = pneg %p149
        %p373 = pneg %p146
        %s374 = sand.u32 %s162, 1
        %s375 = scalar_lea.sflag [#allocation5], %s374
        %s376 = sand.u32 %s162, 1
        %s377 = smul.addr %s376, 64
        %s378 = scalar_lea.vmem [#allocation4], %s377
        %p379 = pneg %p175
        %p380 = pneg %p172
        %p381 = scmp.lt.s32.totalorder %s24, 3
        %s382 = scalar_select %p381, %s24, 3
        %s383 = scalar_lea.vmem %s6, %s382
        %p384 = pneg %p201
        %p385 = pneg %p198
        %p386 = pneg %p227
        %p387 = pneg %p224
        %p388 = scmp.lt.s32.totalorder %s24, 3
        %s389 = scalar_select %p388, %s24, 3
        %s390 = smul.addr %s389, 2
        %s391 = smul.addr %s390, 8
        %s392 = scalar_lea.vmem %s7, %s391
        %p393 = scmp.lt.s32.totalorder %s24, 3
        %s394 = scalar_select %p393, %s24, 3
        %s395 = smul.addr %s394, 2
        %s396 = smul.addr %s395, 8
        %s397 = scalar_lea.vmem %s0, %s396
        %p398 = scmp.lt.s32.totalorder %s24, 3
        %s399 = scalar_select %p398, %s24, 3
        %s400 = scalar_lea.vmem %s2, %s399
        %p401 = scmp.lt.s32.totalorder %s24, 3
        %s402 = scalar_select %p401, %s24, 3
        %s403 = scalar_lea.vmem %s3, %s402
        %p404 = scmp.lt.s32.totalorder %s24, 3
        %s405 = scalar_select %p404, %s24, 3
        %s406 = scalar_lea.vmem %s4, %s405
        %p407 = scmp.lt.s32.totalorder %s24, 3
        %s408 = scalar_select %p407, %s24, 3
        %s409 = scalar_lea.vmem %s6, %s408
        %p410 = scmp.lt.s32.totalorder %s24, 3
        %s411 = scalar_select %p410, %s24, 3
        %s412 = smul.addr %s411, 2
        %s413 = smul.addr %s412, 8
        %s414 = scalar_lea.vmem %s7, %s413
        %v416 = vld [vmem:[%s397] sm:$0xff]
        %v417 = vld [vmem:[%s397 + $0x8] sm:$0xff]
        %v418 = vpack.c.bf16 %v417, %v416
        %v419 = vld [vmem:[%s331] sm:$0xf]
        %v420 = vld [vmem:[%s331 + $0x4] sm:$0xf]
        %v421 = vld [vmem:[%s331 + $0x8] sm:$0xf]
        %v422 = vld [vmem:[%s331 + $0xc] sm:$0xf]
        %v423 = vld [vmem:[%s331 + $0x10] sm:$0xf]
        %v424 = vld [vmem:[%s331 + $0x14] sm:$0xf]
        %v425 = vld [vmem:[%s331 + $0x18] sm:$0xf]
        %v426 = vld [vmem:[%s331 + $0x1c] sm:$0xf]
        %v427 = vld [vmem:[%s331 + $0x20] sm:$0xf]
        %v428 = vld [vmem:[%s331 + $0x24] sm:$0xf]
        %v429 = vld [vmem:[%s331 + $0x28] sm:$0xf]
        %v430 = vld [vmem:[%s331 + $0x2c] sm:$0xf]
        %v431 = vld [vmem:[%s331 + $0x30] sm:$0xf]
        %v432 = vld [vmem:[%s331 + $0x34] sm:$0xf]
        %v433 = vld [vmem:[%s331 + $0x38] sm:$0xf]
        %v434 = vld [vmem:[%s331 + $0x3c] sm:$0xf]
        %v435 = vld [vmem:[%s400] sm:$0x1]
        %v437 = vlaneseq
        %v438 = vshrl.u32 %v437, 7
        %v439 = vsub.s32 0, %v438
        %v440 = vrot.slane %v435, %v439
        %v458 = vunpack.c.l.b16 %v419
        %v459 = vunpack.c.l.b16 %v420
        %v460 = vunpack.c.l.b16 %v421
        %v461 = vunpack.c.l.b16 %v422
        %v462 = vunpack.c.l.b16 %v423
        %v463 = vunpack.c.l.b16 %v424
        %v464 = vunpack.c.l.b16 %v425
        %v465 = vunpack.c.l.b16 %v426
        %v466 = vunpack.c.l.b16 %v427
        %v467 = vunpack.c.l.b16 %v428
        %v468 = vunpack.c.l.b16 %v429
        %v469 = vunpack.c.l.b16 %v430
        %v470 = vunpack.c.l.b16 %v431
        %v471 = vunpack.c.l.b16 %v432
        %v472 = vunpack.c.l.b16 %v433
        %v473 = vunpack.c.l.b16 %v434
        %v474 = vpack.c.b16 %v459, %v458
        %v475 = vpack.c.b16 %v461, %v460
        %v476 = vpack.c.b16 %v463, %v462
        %v477 = vpack.c.b16 %v465, %v464
        %v478 = vpack.c.b16 %v467, %v466
        %v479 = vpack.c.b16 %v469, %v468
        %v480 = vpack.c.b16 %v471, %v470
        %v481 = vpack.c.b16 %v473, %v472
        %490 = vmatprep.subr.bf16.mxu0 0
        %491 = vmatpush1.bf16.msra.mxu0 %v481
        %492 = vmatprep.subr.bf16.mxu0 0
        %493 = vmatpush1.bf16.msra.mxu0 %v480
        %494 = vmatprep.subr.bf16.mxu0 0
        %495 = vmatpush1.bf16.msra.mxu0 %v479
        %496 = vmatprep.subr.bf16.mxu0 0
        %497 = vmatpush1.bf16.msra.mxu0 %v478
        %498 = vmatprep.subr.bf16.mxu0 0
        %499 = vmatpush1.bf16.msra.mxu0 %v477
        %500 = vmatprep.subr.bf16.mxu0 0
        %501 = vmatpush1.bf16.msra.mxu0 %v476
        %502 = vmatprep.subr.bf16.mxu0 0
        %503 = vmatpush1.bf16.msra.mxu0 %v475
        %504 = vmatprep.subr.bf16.mxu0 0
        %505 = vmatpush1.bf16.msra.mxu0 %v474
        %506 = vmatprep.subr.bf16.mxu0 0
        %507 = vmatpush2.bf16.msra.mxu0 0
        %508 = vmatprep.subr.bf16.mxu0 0
        %509 = vmatpush2.bf16.msra.mxu0 0
        %510 = vmatprep.subr.bf16.mxu0 0
        %511 = vmatpush2.bf16.msra.mxu0 0
        %512 = vmatprep.subr.bf16.mxu0 0
        %513 = vmatpush2.bf16.msra.mxu0 0
        %514 = vmatprep.subr.bf16.mxu0 0
        %515 = vmatpush2.bf16.msra.mxu0 0
        %516 = vmatprep.subr.bf16.mxu0 0
        %517 = vmatpush2.bf16.msra.mxu0 0
        %518 = vmatprep.subr.bf16.mxu0 0
        %519 = vmatpush2.bf16.msra.mxu0 0
        %520 = vmatprep.subr.bf16.mxu0 0
        %521 = vmatpush2.bf16.msra.mxu0 0
        %522 = vmatprep.mubr.bf16.mxu0 0
        %523 = vmatmul.mubr.bf16.gmra.mxu0 %v418
        %v524 = vpop.f32.mrf.mxu0
        %v525 = vadd.f32 %v440, %v524
        %v526 = vpop.f32.mrf.mxu0
        %v527 = vpop.f32.mrf.mxu0
        %v528 = vadd.f32 %v440, %v527
        %v529 = vpop.f32.mrf.mxu0
        %530 = vdwg.mxu0
        %v531 = vmul.f32 %v525, 0.5
        %v532 = vmul.f32 %v528, 0.5
        %v533 = vrcp.pop 1.4142135
        %v534 = vmul.f32 %v525, %v533
        %v535 = vmul.f32 %v528, %v533
        %v536 = verf.f32.pop %v534
        %v537 = verf.f32.pop %v535
        %v538 = vadd.f32 %v536, 1.0
        %v539 = vadd.f32 %v537, 1.0
        %v540 = vmul.f32 %v531, %v538
        %v541 = vmul.f32 %v532, %v539
        %v542 = vld [vmem:[%s403] sm:$0x1]
        %v543 = vld [vmem:[%s406] sm:$0x1]
        %544 = vadd.xlane.f32.xlu0 %v540
        %v545 = vpop.xlane.xlu0 %544
        %546 = vadd.xlane.f32.xlu0 %v541
        %v547 = vpop.xlane.xlu0 %546
        %v548 = vrcp.pop 128.0
        %v549 = vmul.f32 %v545, %v548
        %v550 = vmul.f32 %v547, %v548
        %v551 = vsub.f32 %v540, %v549
        %v552 = vsub.f32 %v541, %v550
        %v553 = vmul.f32 %v551, %v551
        %v554 = vmul.f32 %v552, %v552
        %555 = vadd.xlane.f32.xlu0 %v553
        %v556 = vpop.xlane.xlu0 %555
        %557 = vadd.xlane.f32.xlu0 %v554
        %v558 = vpop.xlane.xlu0 %557
        %v559 = vmul.f32 %v556, %v548
        %v560 = vmul.f32 %v558, %v548
        %v561 = vadd.f32 %v559, 1e-05
        %v562 = vadd.f32 %v560, 1e-05
        %v563 = vrsqrt.pop %v561
        %v564 = vrsqrt.pop %v562
        %v565 = vmul.f32 %v551, %v563
        %v566 = vmul.f32 %v552, %v564
        %v568 = vlaneseq
        %v569 = vshrl.u32 %v568, 7
        %v570 = vsub.s32 0, %v569
        %v571 = vrot.slane %v542, %v570
        %v573 = vmul.f32 %v565, %v571
        %v574 = vmul.f32 %v566, %v571
        %v576 = vlaneseq
        %v577 = vshrl.u32 %v576, 7
        %v578 = vsub.s32 0, %v577
        %v579 = vrot.slane %v543, %v578
        %v581 = vadd.f32 %v573, %v579
        %v582 = vadd.f32 %v574, %v579
        %v583 = vpack.c.bf16 %v582, %v581
        %v584 = vld [vmem:[%s340] sm:$0xf]
        %v585 = vld [vmem:[%s340 + $0x4] sm:$0xf]
        %v586 = vld [vmem:[%s340 + $0x8] sm:$0xf]
        %v587 = vld [vmem:[%s340 + $0xc] sm:$0xf]
        %v588 = vld [vmem:[%s340 + $0x10] sm:$0xf]
        %v589 = vld [vmem:[%s340 + $0x14] sm:$0xf]
        %v590 = vld [vmem:[%s340 + $0x18] sm:$0xf]
        %v591 = vld [vmem:[%s340 + $0x1c] sm:$0xf]
        %v592 = vld [vmem:[%s340 + $0x20] sm:$0xf]
        %v593 = vld [vmem:[%s340 + $0x24] sm:$0xf]
        %v594 = vld [vmem:[%s340 + $0x28] sm:$0xf]
        %v595 = vld [vmem:[%s340 + $0x2c] sm:$0xf]
        %v596 = vld [vmem:[%s340 + $0x30] sm:$0xf]
        %v597 = vld [vmem:[%s340 + $0x34] sm:$0xf]
        %v598 = vld [vmem:[%s340 + $0x38] sm:$0xf]
        %v599 = vld [vmem:[%s340 + $0x3c] sm:$0xf]
        %v600 = vld [vmem:[%s409] sm:$0x1]
        %v602 = vlaneseq
        %v603 = vshrl.u32 %v602, 7
        %v604 = vsub.s32 0, %v603
        %v605 = vrot.slane %v600, %v604
        %v623 = vunpack.c.l.b16 %v584
        %v624 = vunpack.c.l.b16 %v585
        %v625 = vunpack.c.l.b16 %v586
        %v626 = vunpack.c.l.b16 %v587
        %v627 = vunpack.c.l.b16 %v588
        %v628 = vunpack.c.l.b16 %v589
        %v629 = vunpack.c.l.b16 %v590
        %v630 = vunpack.c.l.b16 %v591
        %v631 = vunpack.c.l.b16 %v592
        %v632 = vunpack.c.l.b16 %v593
        %v633 = vunpack.c.l.b16 %v594
        %v634 = vunpack.c.l.b16 %v595
        %v635 = vunpack.c.l.b16 %v596
        %v636 = vunpack.c.l.b16 %v597
        %v637 = vunpack.c.l.b16 %v598
        %v638 = vunpack.c.l.b16 %v599
        %v639 = vpack.c.b16 %v624, %v623
        %v640 = vpack.c.b16 %v626, %v625
        %v641 = vpack.c.b16 %v628, %v627
        %v642 = vpack.c.b16 %v630, %v629
        %v643 = vpack.c.b16 %v632, %v631
        %v644 = vpack.c.b16 %v634, %v633
        %v645 = vpack.c.b16 %v636, %v635
        %v646 = vpack.c.b16 %v638, %v637
        %655 = vmatprep.subr.bf16.mxu0 0
        %656 = vmatpush1.bf16.msra.mxu0 %v646
        %657 = vmatprep.subr.bf16.mxu0 0
        %658 = vmatpush1.bf16.msra.mxu0 %v645
        %659 = vmatprep.subr.bf16.mxu0 0
        %660 = vmatpush1.bf16.msra.mxu0 %v644
        %661 = vmatprep.subr.bf16.mxu0 0
        %662 = vmatpush1.bf16.msra.mxu0 %v643
        %663 = vmatprep.subr.bf16.mxu0 0
        %664 = vmatpush1.bf16.msra.mxu0 %v642
        %665 = vmatprep.subr.bf16.mxu0 0
        %666 = vmatpush1.bf16.msra.mxu0 %v641
        %667 = vmatprep.subr.bf16.mxu0 0
        %668 = vmatpush1.bf16.msra.mxu0 %v640
        %669 = vmatprep.subr.bf16.mxu0 0
        %670 = vmatpush1.bf16.msra.mxu0 %v639
        %671 = vmatprep.subr.bf16.mxu0 0
        %672 = vmatpush2.bf16.msra.mxu0 0
        %673 = vmatprep.subr.bf16.mxu0 0
        %674 = vmatpush2.bf16.msra.mxu0 0
        %675 = vmatprep.subr.bf16.mxu0 0
        %676 = vmatpush2.bf16.msra.mxu0 0
        %677 = vmatprep.subr.bf16.mxu0 0
        %678 = vmatpush2.bf16.msra.mxu0 0
        %679 = vmatprep.subr.bf16.mxu0 0
        %680 = vmatpush2.bf16.msra.mxu0 0
        %681 = vmatprep.subr.bf16.mxu0 0
        %682 = vmatpush2.bf16.msra.mxu0 0
        %683 = vmatprep.subr.bf16.mxu0 0
        %684 = vmatpush2.bf16.msra.mxu0 0
        %685 = vmatprep.subr.bf16.mxu0 0
        %686 = vmatpush2.bf16.msra.mxu0 0
        %687 = vmatprep.mubr.bf16.mxu0 0
        %688 = vmatmul.mubr.bf16.gmra.mxu0 %v583
        %v689 = vpop.f32.mrf.mxu0
        %v690 = vadd.f32 %v605, %v689
        %v691 = vpop.f32.mrf.mxu0
        %v692 = vpop.f32.mrf.mxu0
        %v693 = vadd.f32 %v605, %v692
        %v694 = vpop.f32.mrf.mxu0
        %695 = vdwg.mxu0
        %696 = vst [vmem:[%s414] sm:$0xff] %v690
        %697 = vst [vmem:[%s414 + $0x8] sm:$0xff] %v693
        %p698 = scmp.lt.s32.totalorder %s24, 3
        %s699 = scalar_select %p698, %s24, 3
        %s700 = smul.addr %s699, 2
        %s701 = smul.addr %s700, 8
        %s702 = scalar_lea.vmem %s7, %s701
        // Predicated region
        $region57: #{_lambda_.6} parent=47 // pred_check
          %p703 = pneg %p224
        $region58: #{_lambda_.6} parent=47 // pred_check_branch
          %705 = sbr.rel (%p703) target = $region60
        $region59: #{_lambda_.6} parent=47 // pred_region
          _
        $region60: #{_lambda_.6} parent=47 // pred_fallthru
          _
      $region48: #{_lambda_.6} parent=5 // pred_fallthru
        _
      %p706 = scmp.le.s32.totalorder 2, %s19
      // Predicated region
      $region61: #{_lambda_.6} parent=5 // pred_check
        %p707 = pneg %p706
      $region62: #{_lambda_.6} parent=5 // pred_check_branch
        %709 = sbr.rel (%p707) target = $region64
      $region63: #{_lambda_.6} parent=5 // pred_region
        %s710 = ssub.s32 %s19, 2
        // Predicated region
        $region65: #{_lambda_.6} parent=63 // pred_check
          %p711 = pneg %p230
        $region66: #{_lambda_.6} parent=63 // pred_check_branch
          %713 = sbr.rel (%p711) target = $region68
        $region67: #{_lambda_.6} parent=63 // pred_region
          %p714 = scmp.lt.s32.totalorder %s25, 3
          %s715 = scalar_select %p714, %s25, 3
          %s716 = smul.addr %s715, 2
          %s717 = smul.addr %s716, 8
          %s718 = scalar_lea.vmem %s7, %s717
        $region68: #{_lambda_.6} parent=63 // pred_fallthru
          _
      $region64: #{_lambda_.6} parent=5 // pred_fallthru
        _
    $region6: #{_lambda_.6} parent=1 // loop_footer
      %s23 = sadd.s32 1, %s19
    $region7: #{_lambda_.6} parent=1 // loop_footer_branch
      %18 = sbr.rel target = $region3
    $region8: #{_lambda_.6} parent=1 // loop_exit
      _
    %719 = vsyncpa [#allocation3], 1
    %s720 = scalar_lea.sflag [#allocation3], 1
    %721 = vsyncpa %s720, 1
    %722 = vsyncpa [#allocation5], 1
    %s723 = scalar_lea.sflag [#allocation5], 1
    %724 = vsyncpa %s723, 1

// kernel: _lambda_.7
$region0: #{_lambda_.7}
  #allocation0 [shape = 'u32[]', space=smem, size = 0x4, offset = 0x4, fixed_abs, tag = 'smem constant byte address 0x4 - core index']
  #allocation1 [shape = 'u32[144,128]{1,0:T(1,128)}', space=vmem, size = 0x12000, scoped, tag = 'internal scratch']
  %s0 = inlined_call_operand.vmem [shape: f32[1,2,8,128], index: 0, kind: input, shape index: {}]
  %s1 = inlined_call_operand.vmem [shape: f32[1,2,8,128], index: 1, kind: input, shape index: {}]
  %s2 = inlined_call_operand.vmem [shape: bf16[1,128,384], index: 2, kind: input, shape index: {}]
  %s3 = inlined_call_operand.vmem [shape: f32[1,1,384], index: 3, kind: input, shape index: {}]
  %s4 = inlined_call_operand.vmem [shape: bf16[1,128,128], index: 4, kind: input, shape index: {}]
  %s5 = inlined_call_operand.vmem [shape: f32[1,1,128], index: 5, kind: input, shape index: {}]
  %s6 = inlined_call_operand.vmem [shape: bf16[1,128,256], index: 6, kind: input, shape index: {}]
  %s7 = inlined_call_operand.vmem [shape: f32[1,1,256], index: 7, kind: input, shape index: {}]
  %s8 = inlined_call_operand.vmem [shape: bf16[1,256,128], index: 8, kind: input, shape index: {}]
  %s9 = inlined_call_operand.vmem [shape: f32[1,1,128], index: 9, kind: input, shape index: {}]
  %s10 = inlined_call_operand.vmem [shape: f32[1,1,128], index: 10, kind: input, shape index: {}]
  %s11 = inlined_call_operand.vmem [shape: f32[1,1,128], index: 11, kind: input, shape index: {}]
  %s12 = inlined_call_operand.vmem [shape: f32[1,2,8,128], index: 12, kind: output, shape index: {}]
  %s13 = sld [smem:[#allocation0]]
  $region58: #{_lambda_.7} parent=0
    _
  %s15 = ssub.s32 1, %s13
  %s16 = scalar_select 0, %s15, %s13
  // Predicated region
  $region2: #{_lambda_.7} parent=0 // pred_check
    _
  $region3: #{_lambda_.7} parent=0 // pred_check_branch
    %18 = sbr.rel (0) target = $region5
  $region4: #{_lambda_.7} parent=0 // pred_region
    _
  $region5: #{_lambda_.7} parent=0 // pred_fallthru
    _
  // Predicated region
  $region6: #{_lambda_.7} parent=0 // pred_check
    _
  $region7: #{_lambda_.7} parent=0 // pred_check_branch
    %20 = sbr.rel (0) target = $region9
  $region8: #{_lambda_.7} parent=0 // pred_region
    _
  $region9: #{_lambda_.7} parent=0 // pred_fallthru
    _
  // Predicated region
  $region10: #{_lambda_.7} parent=0 // pred_check
    _
  $region11: #{_lambda_.7} parent=0 // pred_check_branch
    %22 = sbr.rel (0) target = $region13
  $region12: #{_lambda_.7} parent=0 // pred_region
    _
  $region13: #{_lambda_.7} parent=0 // pred_fallthru
    _
  // Predicated region
  $region14: #{_lambda_.7} parent=0 // pred_check
    _
  $region15: #{_lambda_.7} parent=0 // pred_check_branch
    %24 = sbr.rel (0) target = $region17
  $region16: #{_lambda_.7} parent=0 // pred_region
    _
  $region17: #{_lambda_.7} parent=0 // pred_fallthru
    _
  // Predicated region
  $region18: #{_lambda_.7} parent=0 // pred_check
    _
  $region19: #{_lambda_.7} parent=0 // pred_check_branch
    %26 = sbr.rel (0) target = $region21
  $region20: #{_lambda_.7} parent=0 // pred_region
    _
  $region21: #{_lambda_.7} parent=0 // pred_fallthru
    _
  // Predicated region
  $region22: #{_lambda_.7} parent=0 // pred_check
    _
  $region23: #{_lambda_.7} parent=0 // pred_check_branch
    %28 = sbr.rel (0) target = $region25
  $region24: #{_lambda_.7} parent=0 // pred_region
    _
  $region25: #{_lambda_.7} parent=0 // pred_fallthru
    _
  // Predicated region
  $region26: #{_lambda_.7} parent=0 // pred_check
    _
  $region27: #{_lambda_.7} parent=0 // pred_check_branch
    %30 = sbr.rel (0) target = $region29
  $region28: #{_lambda_.7} parent=0 // pred_region
    _
  $region29: #{_lambda_.7} parent=0 // pred_fallthru
    _
  // Predicated region
  $region30: #{_lambda_.7} parent=0 // pred_check
    _
  $region31: #{_lambda_.7} parent=0 // pred_check_branch
    %32 = sbr.rel (0) target = $region33
  $region32: #{_lambda_.7} parent=0 // pred_region
    _
  $region33: #{_lambda_.7} parent=0 // pred_fallthru
    _
  // Predicated region
  $region34: #{_lambda_.7} parent=0 // pred_check
    _
  $region35: #{_lambda_.7} parent=0 // pred_check_branch
    %34 = sbr.rel (0) target = $region37
  $region36: #{_lambda_.7} parent=0 // pred_region
    _
  $region37: #{_lambda_.7} parent=0 // pred_fallthru
    _
  // Predicated region
  $region38: #{_lambda_.7} parent=0 // pred_check
    _
  $region39: #{_lambda_.7} parent=0 // pred_check_branch
    %36 = sbr.rel (0) target = $region41
  $region40: #{_lambda_.7} parent=0 // pred_region
    _
  $region41: #{_lambda_.7} parent=0 // pred_fallthru
    _
  // Predicated region
  $region42: #{_lambda_.7} parent=0 // pred_check
    _
  $region43: #{_lambda_.7} parent=0 // pred_check_branch
    %38 = sbr.rel (0) target = $region45
  $region44: #{_lambda_.7} parent=0 // pred_region
    _
  $region45: #{_lambda_.7} parent=0 // pred_fallthru
    _
  // Predicated region
  $region46: #{_lambda_.7} parent=0 // pred_check
    _
  $region47: #{_lambda_.7} parent=0 // pred_check_branch
    %40 = sbr.rel (0) target = $region49
  $region48: #{_lambda_.7} parent=0 // pred_region
    _
  $region49: #{_lambda_.7} parent=0 // pred_fallthru
    _
  %v42 = vld [vmem:[%s0] sm:$0xff]
  %v43 = vld [vmem:[%s0 + $0x8] sm:$0xff]
  %v44 = vld [vmem:[%s1] sm:$0xff]
  %v45 = vld [vmem:[%s1 + $0x8] sm:$0xff]
  %v46 = vpack.c.bf16 %v43, %v42
  %v47 = vpack.c.bf16 %v45, %v44
  %v48 = vld [vmem:[%s2] sm:$0xff]
  %v49 = vld [vmem:[%s2 + $0x8] sm:$0xf]
  %v50 = vld [vmem:[%s2 + $0xc] sm:$0xff]
  %v51 = vld [vmem:[%s2 + $0x14] sm:$0xf]
  %v52 = vld [vmem:[%s2 + $0x18] sm:$0xff]
  %v53 = vld [vmem:[%s2 + $0x20] sm:$0xf]
  %v54 = vld [vmem:[%s2 + $0x24] sm:$0xff]
  %v55 = vld [vmem:[%s2 + $0x2c] sm:$0xf]
  %v56 = vld [vmem:[%s2 + $0x30] sm:$0xff]
  %v57 = vld [vmem:[%s2 + $0x38] sm:$0xf]
  %v58 = vld [vmem:[%s2 + $0x3c] sm:$0xff]
  %v59 = vld [vmem:[%s2 + $0x44] sm:$0xf]
  %v60 = vld [vmem:[%s2 + $0x48] sm:$0xff]
  %v61 = vld [vmem:[%s2 + $0x50] sm:$0xf]
  %v62 = vld [vmem:[%s2 + $0x54] sm:$0xff]
  %v63 = vld [vmem:[%s2 + $0x5c] sm:$0xf]
  %v64 = vld [vmem:[%s2 + $0x60] sm:$0xff]
  %v65 = vld [vmem:[%s2 + $0x68] sm:$0xf]
  %v66 = vld [vmem:[%s2 + $0x6c] sm:$0xff]
  %v67 = vld [vmem:[%s2 + $0x74] sm:$0xf]
  %v68 = vld [vmem:[%s2 + $0x78] sm:$0xff]
  %v69 = vld [vmem:[%s2 + $0x80] sm:$0xf]
  %v70 = vld [vmem:[%s2 + $0x84] sm:$0xff]
  %v71 = vld [vmem:[%s2 + $0x8c] sm:$0xf]
  %v72 = vld [vmem:[%s2 + $0x90] sm:$0xff]
  %v73 = vld [vmem:[%s2 + $0x98] sm:$0xf]
  %v74 = vld [vmem:[%s2 + $0x9c] sm:$0xff]
  %v75 = vld [vmem:[%s2 + $0xa4] sm:$0xf]
  %v76 = vld [vmem:[%s2 + $0xa8] sm:$0xff]
  %v77 = vld [vmem:[%s2 + $0xb0] sm:$0xf]
  %v78 = vld [vmem:[%s2 + $0xb4] sm:$0xff]
  %v79 = vld [vmem:[%s2 + $0xbc] sm:$0xf]
  %v80 = vld [vmem:[%s3] sm:$0x7]
  %v82 = vlaneseq
  %v83 = vshrl.u32 %v82, 7
  %v84 = vsub.s32 0, %v83
  %v85 = vrot.slane %v80, %v84
  %v86 = vlaneseq
  %v87 = vshrl.u32 %v86, 7
  %v88 = vsub.s32 1, %v87
  %v89 = vrot.slane %v80, %v88
  %v90 = vlaneseq
  %v91 = vshrl.u32 %v90, 7
  %v92 = vsub.s32 2, %v91
  %v93 = vrot.slane %v80, %v92
  %v129 = vunpack.c.l.b16 %v48
  %v130 = vunpack.c.h.b16 %v48
  %v131 = vunpack.c.l.b16 %v49
  %v132 = vunpack.c.l.b16 %v50
  %v133 = vunpack.c.h.b16 %v50
  %v134 = vunpack.c.l.b16 %v51
  %v135 = vunpack.c.l.b16 %v52
  %v136 = vunpack.c.h.b16 %v52
  %v137 = vunpack.c.l.b16 %v53
  %v138 = vunpack.c.l.b16 %v54
  %v139 = vunpack.c.h.b16 %v54
  %v140 = vunpack.c.l.b16 %v55
  %v141 = vunpack.c.l.b16 %v56
  %v142 = vunpack.c.h.b16 %v56
  %v143 = vunpack.c.l.b16 %v57
  %v144 = vunpack.c.l.b16 %v58
  %v145 = vunpack.c.h.b16 %v58
  %v146 = vunpack.c.l.b16 %v59
  %v147 = vunpack.c.l.b16 %v60
  %v148 = vunpack.c.h.b16 %v60
  %v149 = vunpack.c.l.b16 %v61
  %v150 = vunpack.c.l.b16 %v62
  %v151 = vunpack.c.h.b16 %v62
  %v152 = vunpack.c.l.b16 %v63
  %v153 = vunpack.c.l.b16 %v64
  %v154 = vunpack.c.h.b16 %v64
  %v155 = vunpack.c.l.b16 %v65
  %v156 = vunpack.c.l.b16 %v66
  %v157 = vunpack.c.h.b16 %v66
  %v158 = vunpack.c.l.b16 %v67
  %v159 = vunpack.c.l.b16 %v68
  %v160 = vunpack.c.h.b16 %v68
  %v161 = vunpack.c.l.b16 %v69
  %v162 = vunpack.c.l.b16 %v70
  %v163 = vunpack.c.h.b16 %v70
  %v164 = vunpack.c.l.b16 %v71
  %v165 = vunpack.c.l.b16 %v72
  %v166 = vunpack.c.h.b16 %v72
  %v167 = vunpack.c.l.b16 %v73
  %v168 = vunpack.c.l.b16 %v74
  %v169 = vunpack.c.h.b16 %v74
  %v170 = vunpack.c.l.b16 %v75
  %v171 = vunpack.c.l.b16 %v76
  %v172 = vunpack.c.h.b16 %v76
  %v173 = vunpack.c.l.b16 %v77
  %v174 = vunpack.c.l.b16 %v78
  %v175 = vunpack.c.h.b16 %v78
  %v176 = vunpack.c.l.b16 %v79
  %v177 = vpack.c.b16 %v132, %v129
  %v178 = vpack.c.b16 %v133, %v130
  %v179 = vpack.c.b16 %v134, %v131
  %v180 = vpack.c.b16 %v138, %v135
  %v181 = vpack.c.b16 %v139, %v136
  %v182 = vpack.c.b16 %v140, %v137
  %v183 = vpack.c.b16 %v144, %v141
  %v184 = vpack.c.b16 %v145, %v142
  %v185 = vpack.c.b16 %v146, %v143
  %v186 = vpack.c.b16 %v150, %v147
  %v187 = vpack.c.b16 %v151, %v148
  %v188 = vpack.c.b16 %v152, %v149
  %v189 = vpack.c.b16 %v156, %v153
  %v190 = vpack.c.b16 %v157, %v154
  %v191 = vpack.c.b16 %v158, %v155
  %v192 = vpack.c.b16 %v162, %v159
  %v193 = vpack.c.b16 %v163, %v160
  %v194 = vpack.c.b16 %v164, %v161
  %v195 = vpack.c.b16 %v168, %v165
  %v196 = vpack.c.b16 %v169, %v166
  %v197 = vpack.c.b16 %v170, %v167
  %v198 = vpack.c.b16 %v174, %v171
  %v199 = vpack.c.b16 %v175, %v172
  %v200 = vpack.c.b16 %v176, %v173
  %225 = vmatprep.subr.bf16.mxu0 %v199
  %226 = vmatpush1.bf16.msra.mxu0 %v198
  %227 = vmatprep.subr.bf16.mxu0 %v196
  %228 = vmatpush1.bf16.msra.mxu0 %v195
  %229 = vmatprep.subr.bf16.mxu0 %v193
  %230 = vmatpush1.bf16.msra.mxu0 %v192
  %231 = vmatprep.subr.bf16.mxu0 %v190
  %232 = vmatpush1.bf16.msra.mxu0 %v189
  %233 = vmatprep.subr.bf16.mxu0 %v187
  %234 = vmatpush1.bf16.msra.mxu0 %v186
  %235 = vmatprep.subr.bf16.mxu0 %v184
  %236 = vmatpush1.bf16.msra.mxu0 %v183
  %237 = vmatprep.subr.bf16.mxu0 %v181
  %238 = vmatpush1.bf16.msra.mxu0 %v180
  %239 = vmatprep.subr.bf16.mxu0 %v178
  %240 = vmatpush1.bf16.msra.mxu0 %v177
  %241 = vmatprep.subr.bf16.mxu0 0
  %242 = vmatpush2.bf16.msra.mxu0 0
  %243 = vmatprep.subr.bf16.mxu0 0
  %244 = vmatpush2.bf16.msra.mxu0 0
  %245 = vmatprep.subr.bf16.mxu0 0
  %246 = vmatpush2.bf16.msra.mxu0 0
  %247 = vmatprep.subr.bf16.mxu0 0
  %248 = vmatpush2.bf16.msra.mxu0 0
  %249 = vmatprep.subr.bf16.mxu0 0
  %250 = vmatpush2.bf16.msra.mxu0 0
  %251 = vmatprep.subr.bf16.mxu0 0
  %252 = vmatpush2.bf16.msra.mxu0 0
  %253 = vmatprep.subr.bf16.mxu0 0
  %254 = vmatpush2.bf16.msra.mxu0 0
  %255 = vmatprep.subr.bf16.mxu0 0
  %256 = vmatpush2.bf16.msra.mxu0 0
  %257 = vmatprep.mubr.bf16.mxu0 0
  %258 = vmatmul.mubr.bf16.gmra.mxu0 %v46
  %v259 = vpop.f32.mrf.mxu0
  %v260 = vadd.f32 %v85, %v259
  %v261 = vpop.f32.mrf.mxu0
  %v262 = vpop.f32.mrf.mxu0
  %v263 = vadd.f32 %v85, %v262
  %v264 = vpop.f32.mrf.mxu0
  %265 = vmatprep.mubr.bf16.mxu0 0
  %266 = vmatmul.mubr.bf16.gmra.mxu0 %v47
  %v267 = vpop.f32.mrf.mxu0
  %v268 = vpop.f32.mrf.mxu0
  %v269 = vadd.f32 %v89, %v268
  %v270 = vpop.f32.mrf.mxu0
  %v271 = vpop.f32.mrf.mxu0
  %v272 = vadd.f32 %v89, %v271
  %273 = vdwg.mxu0
  %274 = vmatprep.subr.bf16.mxu0 0
  %275 = vmatpush1.bf16.msra.mxu0 %v200
  %276 = vmatprep.subr.bf16.mxu0 0
  %277 = vmatpush1.bf16.msra.mxu0 %v197
  %278 = vmatprep.subr.bf16.mxu0 0
  %279 = vmatpush1.bf16.msra.mxu0 %v194
  %280 = vmatprep.subr.bf16.mxu0 0
  %281 = vmatpush1.bf16.msra.mxu0 %v191
  %282 = vmatprep.subr.bf16.mxu0 0
  %283 = vmatpush1.bf16.msra.mxu0 %v188
  %284 = vmatprep.subr.bf16.mxu0 0
  %285 = vmatpush1.bf16.msra.mxu0 %v185
  %286 = vmatprep.subr.bf16.mxu0 0
  %287 = vmatpush1.bf16.msra.mxu0 %v182
  %288 = vmatprep.subr.bf16.mxu0 0
  %289 = vmatpush1.bf16.msra.mxu0 %v179
  %290 = vmatprep.subr.bf16.mxu0 0
  %291 = vmatpush2.bf16.msra.mxu0 0
  %292 = vmatprep.subr.bf16.mxu0 0
  %293 = vmatpush2.bf16.msra.mxu0 0
  %294 = vmatprep.subr.bf16.mxu0 0
  %295 = vmatpush2.bf16.msra.mxu0 0
  %296 = vmatprep.subr.bf16.mxu0 0
  %297 = vmatpush2.bf16.msra.mxu0 0
  %298 = vmatprep.subr.bf16.mxu0 0
  %299 = vmatpush2.bf16.msra.mxu0 0
  %300 = vmatprep.subr.bf16.mxu0 0
  %301 = vmatpush2.bf16.msra.mxu0 0
  %302 = vmatprep.subr.bf16.mxu0 0
  %303 = vmatpush2.bf16.msra.mxu0 0
  %304 = vmatprep.subr.bf16.mxu0 0
  %305 = vmatpush2.bf16.msra.mxu0 0
  %306 = vmatprep.mubr.bf16.mxu0 0
  %307 = vmatmul.mubr.bf16.gmra.mxu0 %v46
  %v308 = vpop.f32.mrf.mxu0
  %v309 = vpop.f32.mrf.mxu0
  %v310 = vpop.f32.mrf.mxu0
  %v311 = vpop.f32.mrf.mxu0
  %312 = vmatprep.mubr.bf16.mxu0 0
  %313 = vmatmul.mubr.bf16.gmra.mxu0 %v47
  %v314 = vpop.f32.mrf.mxu0
  %v315 = vadd.f32 %v93, %v314
  %v316 = vpop.f32.mrf.mxu0
  %v317 = vpop.f32.mrf.mxu0
  %v318 = vadd.f32 %v93, %v317
  %v319 = vpop.f32.mrf.mxu0
  %320 = vdwg.mxu0
  %v321 = vld [vmem:[%s4] sm:$0xf]
  %v322 = vld [vmem:[%s4 + $0x4] sm:$0xf]
  %v323 = vld [vmem:[%s4 + $0x8] sm:$0xf]
  %v324 = vld [vmem:[%s4 + $0xc] sm:$0xf]
  %v325 = vld [vmem:[%s4 + $0x10] sm:$0xf]
  %v326 = vld [vmem:[%s4 + $0x14] sm:$0xf]
  %v327 = vld [vmem:[%s4 + $0x18] sm:$0xf]
  %v328 = vld [vmem:[%s4 + $0x1c] sm:$0xf]
  %v329 = vld [vmem:[%s4 + $0x20] sm:$0xf]
  %v330 = vld [vmem:[%s4 + $0x24] sm:$0xf]
  %v331 = vld [vmem:[%s4 + $0x28] sm:$0xf]
  %v332 = vld [vmem:[%s4 + $0x2c] sm:$0xf]
  %v333 = vld [vmem:[%s4 + $0x30] sm:$0xf]
  %v334 = vld [vmem:[%s4 + $0x34] sm:$0xf]
  %v335 = vld [vmem:[%s4 + $0x38] sm:$0xf]
  %v336 = vld [vmem:[%s4 + $0x3c] sm:$0xf]
  %v337 = vpack.c.bf16 %v260, %v260
  %v338 = vpack.c.bf16 %v263, %v263
  %v339 = vpack.c.bf16 %v269, %v269
  %v340 = vpack.c.bf16 %v272, %v272
  %v341 = vpack.c.bf16 %v315, %v315
  %v342 = vpack.c.bf16 %v318, %v318
  %vm343 = vcmask 261120
  %v345 = vsel %vm343, %v337, 0
  %v348 = vsel %vm343, %v339, 0
  %350 = vmatprep.subr.bf16.mxu0 0
  %351 = vmatpush1.bf16.xpose.msra.mxu0 0
  %352 = vmatprep.subr.bf16.mxu0 0
  %353 = vmatpush1.bf16.xpose.msra.mxu0 0
  %354 = vmatprep.subr.bf16.mxu0 0
  %355 = vmatpush1.bf16.xpose.msra.mxu0 0
  %356 = vmatprep.subr.bf16.mxu0 0
  %357 = vmatpush1.bf16.xpose.msra.mxu0 0
  %358 = vmatprep.subr.bf16.mxu0 0
  %359 = vmatpush1.bf16.xpose.msra.mxu0 0
  %360 = vmatprep.subr.bf16.mxu0 0
  %361 = vmatpush1.bf16.xpose.msra.mxu0 0
  %362 = vmatprep.subr.bf16.mxu0 0
  %363 = vmatpush1.bf16.xpose.msra.mxu0 0
  %364 = vmatprep.subr.bf16.mxu0 0
  %365 = vmatpush1.bf16.xpose.msra.mxu0 %v348
  %366 = vmatprep.subr.bf16.mxu0 0
  %367 = vmatpush2.bf16.xpose.msra.mxu0 0
  %368 = vmatprep.subr.bf16.mxu0 0
  %369 = vmatpush2.bf16.xpose.msra.mxu0 0
  %370 = vmatprep.subr.bf16.mxu0 0
  %371 = vmatpush2.bf16.xpose.msra.mxu0 0
  %372 = vmatprep.subr.bf16.mxu0 0
  %373 = vmatpush2.bf16.xpose.msra.mxu0 0
  %374 = vmatprep.subr.bf16.mxu0 0
  %375 = vmatpush2.bf16.xpose.msra.mxu0 0
  %376 = vmatprep.subr.bf16.mxu0 0
  %377 = vmatpush2.bf16.xpose.msra.mxu0 0
  %378 = vmatprep.subr.bf16.mxu0 0
  %379 = vmatpush2.bf16.xpose.msra.mxu0 0
  %380 = vmatprep.subr.bf16.mxu0 0
  %381 = vmatpush2.bf16.xpose.msra.mxu0 0
  %382 = vmatprep.mubr.bf16.mxu0 0
  %383 = vmatmul.mubr.bf16.gmra.mxu0 %v345
  %v384 = vpop.f32.mrf.mxu0
  %v385 = vadd.f32 0.0, %v384
  %v386 = vpop.f32.mrf.mxu0
  %v387 = vpop.f32.mrf.mxu0
  %v388 = vpop.f32.mrf.mxu0
  %389 = vdwg.mxu0
  %v391 = vsel %vm343, %v338, 0
  %v394 = vsel %vm343, %v340, 0
  %396 = vmatprep.subr.bf16.mxu0 0
  %397 = vmatpush1.bf16.xpose.msra.mxu0 0
  %398 = vmatprep.subr.bf16.mxu0 0
  %399 = vmatpush1.bf16.xpose.msra.mxu0 0
  %400 = vmatprep.subr.bf16.mxu0 0
  %401 = vmatpush1.bf16.xpose.msra.mxu0 0
  %402 = vmatprep.subr.bf16.mxu0 0
  %403 = vmatpush1.bf16.xpose.msra.mxu0 0
  %404 = vmatprep.subr.bf16.mxu0 0
  %405 = vmatpush1.bf16.xpose.msra.mxu0 0
  %406 = vmatprep.subr.bf16.mxu0 0
  %407 = vmatpush1.bf16.xpose.msra.mxu0 0
  %408 = vmatprep.subr.bf16.mxu0 0
  %409 = vmatpush1.bf16.xpose.msra.mxu0 0
  %410 = vmatprep.subr.bf16.mxu0 0
  %411 = vmatpush1.bf16.xpose.msra.mxu0 %v394
  %412 = vmatprep.subr.bf16.mxu0 0
  %413 = vmatpush2.bf16.xpose.msra.mxu0 0
  %414 = vmatprep.subr.bf16.mxu0 0
  %415 = vmatpush2.bf16.xpose.msra.mxu0 0
  %416 = vmatprep.subr.bf16.mxu0 0
  %417 = vmatpush2.bf16.xpose.msra.mxu0 0
  %418 = vmatprep.subr.bf16.mxu0 0
  %419 = vmatpush2.bf16.xpose.msra.mxu0 0
  %420 = vmatprep.subr.bf16.mxu0 0
  %421 = vmatpush2.bf16.xpose.msra.mxu0 0
  %422 = vmatprep.subr.bf16.mxu0 0
  %423 = vmatpush2.bf16.xpose.msra.mxu0 0
  %424 = vmatprep.subr.bf16.mxu0 0
  %425 = vmatpush2.bf16.xpose.msra.mxu0 0
  %426 = vmatprep.subr.bf16.mxu0 0
  %427 = vmatpush2.bf16.xpose.msra.mxu0 0
  %428 = vmatprep.mubr.bf16.mxu0 0
  %429 = vmatmul.mubr.bf16.gmra.mxu0 %v391
  %v430 = vpop.f32.mrf.mxu0
  %v431 = vadd.f32 0.0, %v430
  %v432 = vpop.f32.mrf.mxu0
  %v433 = vpop.f32.mrf.mxu0
  %v434 = vpop.f32.mrf.mxu0
  %435 = vdwg.mxu0
  %v436 = vmul.f32 %v385, 0.17677669
  %v437 = vmul.f32 %v431, 0.17677669
  %vm438 = vcmask 64512
  %v439 = vsel %vm438, %v436, -inf
  %440 = vmax.xlane.f32.xlu0 %v439
  %v441 = vpop.xlane.xlu0 %440
  %v442 = vsel %vm438, %v437, -inf
  %443 = vmax.xlane.f32.xlu0 %v442
  %v444 = vpop.xlane.xlu0 %443
  %v445 = vsub.f32 %v436, %v441
  %v446 = vsub.f32 %v437, %v444
  %v447 = vmul.f32 %v445, 1.442695
  %v448 = vpow.pop %v447
  %v449 = vmul.f32 %v446, 1.442695
  %v450 = vpow.pop %v449
  %v451 = vsel %vm438, %v448, 0.0
  %452 = vadd.xlane.f32.xlu0 %v451
  %v453 = vpop.xlane.xlu0 %452
  %v454 = vsel %vm438, %v450, 0.0
  %455 = vadd.xlane.f32.xlu0 %v454
  %v456 = vpop.xlane.xlu0 %455
  %v457 = vrcp.pop %v453
  %v458 = vmul.f32 %v448, %v457
  %v459 = vrcp.pop %v456
  %v460 = vmul.f32 %v450, %v459
  %v461 = vpack.c.bf16 %v458, %v458
  %v462 = vpack.c.bf16 %v460, %v460
  %v464 = vsel %vm438, %v461, 0
  %vm466 = vcmask 1043456
  %v468 = vsel %vm466, %v341, 0
  %470 = vmatprep.subr.bf16.mxu0 0
  %471 = vmatpush1.bf16.msra.mxu0 0
  %472 = vmatprep.subr.bf16.mxu0 0
  %473 = vmatpush1.bf16.msra.mxu0 0
  %474 = vmatprep.subr.bf16.mxu0 0
  %475 = vmatpush1.bf16.msra.mxu0 0
  %476 = vmatprep.subr.bf16.mxu0 0
  %477 = vmatpush1.bf16.msra.mxu0 0
  %478 = vmatprep.subr.bf16.mxu0 0
  %479 = vmatpush1.bf16.msra.mxu0 0
  %480 = vmatprep.subr.bf16.mxu0 0
  %481 = vmatpush1.bf16.msra.mxu0 0
  %482 = vmatprep.subr.bf16.mxu0 0
  %483 = vmatpush1.bf16.msra.mxu0 0
  %484 = vmatprep.subr.bf16.mxu0 0
  %485 = vmatpush1.bf16.msra.mxu0 %v468
  %486 = vmatprep.subr.bf16.mxu0 0
  %487 = vmatpush2.bf16.msra.mxu0 0
  %488 = vmatprep.subr.bf16.mxu0 0
  %489 = vmatpush2.bf16.msra.mxu0 0
  %490 = vmatprep.subr.bf16.mxu0 0
  %491 = vmatpush2.bf16.msra.mxu0 0
  %492 = vmatprep.subr.bf16.mxu0 0
  %493 = vmatpush2.bf16.msra.mxu0 0
  %494 = vmatprep.subr.bf16.mxu0 0
  %495 = vmatpush2.bf16.msra.mxu0 0
  %496 = vmatprep.subr.bf16.mxu0 0
  %497 = vmatpush2.bf16.msra.mxu0 0
  %498 = vmatprep.subr.bf16.mxu0 0
  %499 = vmatpush2.bf16.msra.mxu0 0
  %500 = vmatprep.subr.bf16.mxu0 0
  %501 = vmatpush2.bf16.msra.mxu0 0
  %502 = vmatprep.mubr.bf16.mxu0 0
  %503 = vmatmul.mubr.bf16.gmra.mxu0 %v464
  %v504 = vpop.f32.mrf.mxu0
  %v505 = vadd.f32 0.0, %v504
  %v506 = vpop.f32.mrf.mxu0
  %v507 = vpop.f32.mrf.mxu0
  %v508 = vpop.f32.mrf.mxu0
  %509 = vdwg.mxu0
  %v511 = vsel %vm438, %v462, 0
  %v514 = vsel %vm466, %v342, 0
  %516 = vmatprep.subr.bf16.mxu0 0
  %517 = vmatpush1.bf16.msra.mxu0 0
  %518 = vmatprep.subr.bf16.mxu0 0
  %519 = vmatpush1.bf16.msra.mxu0 0
  %520 = vmatprep.subr.bf16.mxu0 0
  %521 = vmatpush1.bf16.msra.mxu0 0
  %522 = vmatprep.subr.bf16.mxu0 0
  %523 = vmatpush1.bf16.msra.mxu0 0
  %524 = vmatprep.subr.bf16.mxu0 0
  %525 = vmatpush1.bf16.msra.mxu0 0
  %526 = vmatprep.subr.bf16.mxu0 0
  %527 = vmatpush1.bf16.msra.mxu0 0
  %528 = vmatprep.subr.bf16.mxu0 0
  %529 = vmatpush1.bf16.msra.mxu0 0
  %530 = vmatprep.subr.bf16.mxu0 0
  %531 = vmatpush1.bf16.msra.mxu0 %v514
  %532 = vmatprep.subr.bf16.mxu0 0
  %533 = vmatpush2.bf16.msra.mxu0 0
  %534 = vmatprep.subr.bf16.mxu0 0
  %535 = vmatpush2.bf16.msra.mxu0 0
  %536 = vmatprep.subr.bf16.mxu0 0
  %537 = vmatpush2.bf16.msra.mxu0 0
  %538 = vmatprep.subr.bf16.mxu0 0
  %539 = vmatpush2.bf16.msra.mxu0 0
  %540 = vmatprep.subr.bf16.mxu0 0
  %541 = vmatpush2.bf16.msra.mxu0 0
  %542 = vmatprep.subr.bf16.mxu0 0
  %543 = vmatpush2.bf16.msra.mxu0 0
  %544 = vmatprep.subr.bf16.mxu0 0
  %545 = vmatpush2.bf16.msra.mxu0 0
  %546 = vmatprep.subr.bf16.mxu0 0
  %547 = vmatpush2.bf16.msra.mxu0 0
  %548 = vmatprep.mubr.bf16.mxu0 0
  %549 = vmatmul.mubr.bf16.gmra.mxu0 %v511
  %v550 = vpop.f32.mrf.mxu0
  %v551 = vadd.f32 0.0, %v550
  %v552 = vpop.f32.mrf.mxu0
  %v553 = vpop.f32.mrf.mxu0
  %v554 = vpop.f32.mrf.mxu0
  %555 = vdwg.mxu0
  %v556 = vpack.c.bf16 %v551, %v505
  %558 = vrot.lane.b32.xlu0 %v337, 96
  %v559 = vpop.permute.xlu0 %558
  %561 = vrot.lane.b32.xlu0 %v339, 96
  %v562 = vpop.permute.xlu0 %561
  %v564 = vsel %vm343, %v559, 0
  %v567 = vsel %vm343, %v562, 0
  %569 = vmatprep.subr.bf16.mxu0 0
  %570 = vmatpush1.bf16.xpose.msra.mxu0 0
  %571 = vmatprep.subr.bf16.mxu0 0
  %572 = vmatpush1.bf16.xpose.msra.mxu0 0
  %573 = vmatprep.subr.bf16.mxu0 0
  %574 = vmatpush1.bf16.xpose.msra.mxu0 0
  %575 = vmatprep.subr.bf16.mxu0 0
  %576 = vmatpush1.bf16.xpose.msra.mxu0 0
  %577 = vmatprep.subr.bf16.mxu0 0
  %578 = vmatpush1.bf16.xpose.msra.mxu0 0
  %579 = vmatprep.subr.bf16.mxu0 0
  %580 = vmatpush1.bf16.xpose.msra.mxu0 0
  %581 = vmatprep.subr.bf16.mxu0 0
  %582 = vmatpush1.bf16.xpose.msra.mxu0 0
  %583 = vmatprep.subr.bf16.mxu0 0
  %584 = vmatpush1.bf16.xpose.msra.mxu0 %v567
  %585 = vmatprep.subr.bf16.mxu0 0
  %586 = vmatpush2.bf16.xpose.msra.mxu0 0
  %587 = vmatprep.subr.bf16.mxu0 0
  %588 = vmatpush2.bf16.xpose.msra.mxu0 0
  %589 = vmatprep.subr.bf16.mxu0 0
  %590 = vmatpush2.bf16.xpose.msra.mxu0 0
  %591 = vmatprep.subr.bf16.mxu0 0
  %592 = vmatpush2.bf16.xpose.msra.mxu0 0
  %593 = vmatprep.subr.bf16.mxu0 0
  %594 = vmatpush2.bf16.xpose.msra.mxu0 0
  %595 = vmatprep.subr.bf16.mxu0 0
  %596 = vmatpush2.bf16.xpose.msra.mxu0 0
  %597 = vmatprep.subr.bf16.mxu0 0
  %598 = vmatpush2.bf16.xpose.msra.mxu0 0
  %599 = vmatprep.subr.bf16.mxu0 0
  %600 = vmatpush2.bf16.xpose.msra.mxu0 0
  %601 = vmatprep.mubr.bf16.mxu0 0
  %602 = vmatmul.mubr.bf16.gmra.mxu0 %v564
  %v603 = vpop.f32.mrf.mxu0
  %v604 = vadd.f32 0.0, %v603
  %v605 = vpop.f32.mrf.mxu0
  %v606 = vpop.f32.mrf.mxu0
  %v607 = vpop.f32.mrf.mxu0
  %608 = vdwg.mxu0
  %610 = vrot.lane.b32.xlu0 %v338, 96
  %v611 = vpop.permute.xlu0 %610
  %613 = vrot.lane.b32.xlu0 %v340, 96
  %v614 = vpop.permute.xlu0 %613
  %v616 = vsel %vm343, %v611, 0
  %v619 = vsel %vm343, %v614, 0
  %621 = vmatprep.subr.bf16.mxu0 0
  %622 = vmatpush1.bf16.xpose.msra.mxu0 0
  %623 = vmatprep.subr.bf16.mxu0 0
  %624 = vmatpush1.bf16.xpose.msra.mxu0 0
  %625 = vmatprep.subr.bf16.mxu0 0
  %626 = vmatpush1.bf16.xpose.msra.mxu0 0
  %627 = vmatprep.subr.bf16.mxu0 0
  %628 = vmatpush1.bf16.xpose.msra.mxu0 0
  %629 = vmatprep.subr.bf16.mxu0 0
  %630 = vmatpush1.bf16.xpose.msra.mxu0 0
  %631 = vmatprep.subr.bf16.mxu0 0
  %632 = vmatpush1.bf16.xpose.msra.mxu0 0
  %633 = vmatprep.subr.bf16.mxu0 0
  %634 = vmatpush1.bf16.xpose.msra.mxu0 0
  %635 = vmatprep.subr.bf16.mxu0 0
  %636 = vmatpush1.bf16.xpose.msra.mxu0 %v619
  %637 = vmatprep.subr.bf16.mxu0 0
  %638 = vmatpush2.bf16.xpose.msra.mxu0 0
  %639 = vmatprep.subr.bf16.mxu0 0
  %640 = vmatpush2.bf16.xpose.msra.mxu0 0
  %641 = vmatprep.subr.bf16.mxu0 0
  %642 = vmatpush2.bf16.xpose.msra.mxu0 0
  %643 = vmatprep.subr.bf16.mxu0 0
  %644 = vmatpush2.bf16.xpose.msra.mxu0 0
  %645 = vmatprep.subr.bf16.mxu0 0
  %646 = vmatpush2.bf16.xpose.msra.mxu0 0
  %647 = vmatprep.subr.bf16.mxu0 0
  %648 = vmatpush2.bf16.xpose.msra.mxu0 0
  %649 = vmatprep.subr.bf16.mxu0 0
  %650 = vmatpush2.bf16.xpose.msra.mxu0 0
  %651 = vmatprep.subr.bf16.mxu0 0
  %652 = vmatpush2.bf16.xpose.msra.mxu0 0
  %653 = vmatprep.mubr.bf16.mxu0 0
  %654 = vmatmul.mubr.bf16.gmra.mxu0 %v616
  %v655 = vpop.f32.mrf.mxu0
  %v656 = vadd.f32 0.0, %v655
  %v657 = vpop.f32.mrf.mxu0
  %v658 = vpop.f32.mrf.mxu0
  %v659 = vpop.f32.mrf.mxu0
  %660 = vdwg.mxu0
  %v661 = vmul.f32 %v604, 0.17677669
  %v662 = vmul.f32 %v656, 0.17677669
  %v663 = vsel %vm438, %v661, -inf
  %664 = vmax.xlane.f32.xlu0 %v663
  %v665 = vpop.xlane.xlu0 %664
  %v666 = vsel %vm438, %v662, -inf
  %667 = vmax.xlane.f32.xlu0 %v666
  %v668 = vpop.xlane.xlu0 %667
  %v669 = vsub.f32 %v661, %v665
  %v670 = vsub.f32 %v662, %v668
  %v671 = vmul.f32 %v669, 1.442695
  %v672 = vpow.pop %v671
  %v673 = vmul.f32 %v670, 1.442695
  %v674 = vpow.pop %v673
  %v675 = vsel %vm438, %v672, 0.0
  %676 = vadd.xlane.f32.xlu0 %v675
  %v677 = vpop.xlane.xlu0 %676
  %v678 = vsel %vm438, %v674, 0.0
  %679 = vadd.xlane.f32.xlu0 %v678
  %v680 = vpop.xlane.xlu0 %679
  %v681 = vrcp.pop %v677
  %v682 = vmul.f32 %v672, %v681
  %v683 = vrcp.pop %v680
  %v684 = vmul.f32 %v674, %v683
  %v685 = vpack.c.bf16 %v682, %v682
  %v686 = vpack.c.bf16 %v684, %v684
  %688 = vrot.lane.b32.xlu0 %v341, 96
  %v689 = vpop.permute.xlu0 %688
  %v691 = vsel %vm438, %v685, 0
  %v694 = vsel %vm466, %v689, 0
  %696 = vmatprep.subr.bf16.mxu0 0
  %697 = vmatpush1.bf16.msra.mxu0 0
  %698 = vmatprep.subr.bf16.mxu0 0
  %699 = vmatpush1.bf16.msra.mxu0 0
  %700 = vmatprep.subr.bf16.mxu0 0
  %701 = vmatpush1.bf16.msra.mxu0 0
  %702 = vmatprep.subr.bf16.mxu0 0
  %703 = vmatpush1.bf16.msra.mxu0 0
  %704 = vmatprep.subr.bf16.mxu0 0
  %705 = vmatpush1.bf16.msra.mxu0 0
  %706 = vmatprep.subr.bf16.mxu0 0
  %707 = vmatpush1.bf16.msra.mxu0 0
  %708 = vmatprep.subr.bf16.mxu0 0
  %709 = vmatpush1.bf16.msra.mxu0 0
  %710 = vmatprep.subr.bf16.mxu0 0
  %711 = vmatpush1.bf16.msra.mxu0 %v694
  %712 = vmatprep.subr.bf16.mxu0 0
  %713 = vmatpush2.bf16.msra.mxu0 0
  %714 = vmatprep.subr.bf16.mxu0 0
  %715 = vmatpush2.bf16.msra.mxu0 0
  %716 = vmatprep.subr.bf16.mxu0 0
  %717 = vmatpush2.bf16.msra.mxu0 0
  %718 = vmatprep.subr.bf16.mxu0 0
  %719 = vmatpush2.bf16.msra.mxu0 0
  %720 = vmatprep.subr.bf16.mxu0 0
  %721 = vmatpush2.bf16.msra.mxu0 0
  %722 = vmatprep.subr.bf16.mxu0 0
  %723 = vmatpush2.bf16.msra.mxu0 0
  %724 = vmatprep.subr.bf16.mxu0 0
  %725 = vmatpush2.bf16.msra.mxu0 0
  %726 = vmatprep.subr.bf16.mxu0 0
  %727 = vmatpush2.bf16.msra.mxu0 0
  %728 = vmatprep.mubr.bf16.mxu0 0
  %729 = vmatmul.mubr.bf16.gmra.mxu0 %v691
  %v730 = vpop.f32.mrf.mxu0
  %v731 = vadd.f32 0.0, %v730
  %v732 = vpop.f32.mrf.mxu0
  %v733 = vpop.f32.mrf.mxu0
  %v734 = vpop.f32.mrf.mxu0
  %735 = vdwg.mxu0
  %737 = vrot.lane.b32.xlu0 %v342, 96
  %v738 = vpop.permute.xlu0 %737
  %v740 = vsel %vm438, %v686, 0
  %v743 = vsel %vm466, %v738, 0
  %745 = vmatprep.subr.bf16.mxu0 0
  %746 = vmatpush1.bf16.msra.mxu0 0
  %747 = vmatprep.subr.bf16.mxu0 0
  %748 = vmatpush1.bf16.msra.mxu0 0
  %749 = vmatprep.subr.bf16.mxu0 0
  %750 = vmatpush1.bf16.msra.mxu0 0
  %751 = vmatprep.subr.bf16.mxu0 0
  %752 = vmatpush1.bf16.msra.mxu0 0
  %753 = vmatprep.subr.bf16.mxu0 0
  %754 = vmatpush1.bf16.msra.mxu0 0
  %755 = vmatprep.subr.bf16.mxu0 0
  %756 = vmatpush1.bf16.msra.mxu0 0
  %757 = vmatprep.subr.bf16.mxu0 0
  %758 = vmatpush1.bf16.msra.mxu0 0
  %759 = vmatprep.subr.bf16.mxu0 0
  %760 = vmatpush1.bf16.msra.mxu0 %v743
  %761 = vmatprep.subr.bf16.mxu0 0
  %762 = vmatpush2.bf16.msra.mxu0 0
  %763 = vmatprep.subr.bf16.mxu0 0
  %764 = vmatpush2.bf16.msra.mxu0 0
  %765 = vmatprep.subr.bf16.mxu0 0
  %766 = vmatpush2.bf16.msra.mxu0 0
  %767 = vmatprep.subr.bf16.mxu0 0
  %768 = vmatpush2.bf16.msra.mxu0 0
  %769 = vmatprep.subr.bf16.mxu0 0
  %770 = vmatpush2.bf16.msra.mxu0 0
  %771 = vmatprep.subr.bf16.mxu0 0
  %772 = vmatpush2.bf16.msra.mxu0 0
  %773 = vmatprep.subr.bf16.mxu0 0
  %774 = vmatpush2.bf16.msra.mxu0 0
  %775 = vmatprep.subr.bf16.mxu0 0
  %776 = vmatpush2.bf16.msra.mxu0 0
  %777 = vmatprep.mubr.bf16.mxu0 0
  %778 = vmatmul.mubr.bf16.gmra.mxu0 %v740
  %v779 = vpop.f32.mrf.mxu0
  %v780 = vadd.f32 0.0, %v779
  %v781 = vpop.f32.mrf.mxu0
  %v782 = vpop.f32.mrf.mxu0
  %v783 = vpop.f32.mrf.mxu0
  %784 = vdwg.mxu0
  %v785 = vpack.c.bf16 %v780, %v731
  %v790 = vunpack.c.l.b16 %v325
  %v791 = vunpack.c.l.b16 %v326
  %v792 = vunpack.c.l.b16 %v327
  %v793 = vunpack.c.l.b16 %v328
  %v794 = vpack.c.b16 %v791, %v790
  %v795 = vpack.c.b16 %v793, %v792
  %v799 = vsel %vm343, %v785, 0
  %801 = vmatprep.subr.bf16.mxu0 0
  %802 = vmatpush1.bf16.msra.mxu0 0
  %803 = vmatprep.subr.bf16.mxu0 0
  %804 = vmatpush1.bf16.msra.mxu0 0
  %805 = vmatprep.subr.bf16.mxu0 0
  %806 = vmatpush1.bf16.msra.mxu0 0
  %807 = vmatprep.subr.bf16.mxu0 0
  %808 = vmatpush1.bf16.msra.mxu0 0
  %809 = vmatprep.subr.bf16.mxu0 0
  %810 = vmatpush1.bf16.msra.mxu0 0
  %811 = vmatprep.subr.bf16.mxu0 0
  %812 = vmatpush1.bf16.msra.mxu0 0
  %813 = vmatprep.subr.bf16.mxu0 0
  %814 = vmatpush1.bf16.msra.mxu0 %v795
  %815 = vmatprep.subr.bf16.mxu0 0
  %816 = vmatpush1.bf16.msra.mxu0 %v794
  %817 = vmatprep.subr.bf16.mxu0 0
  %818 = vmatpush2.bf16.msra.mxu0 0
  %819 = vmatprep.subr.bf16.mxu0 0
  %820 = vmatpush2.bf16.msra.mxu0 0
  %821 = vmatprep.subr.bf16.mxu0 0
  %822 = vmatpush2.bf16.msra.mxu0 0
  %823 = vmatprep.subr.bf16.mxu0 0
  %824 = vmatpush2.bf16.msra.mxu0 0
  %825 = vmatprep.subr.bf16.mxu0 0
  %826 = vmatpush2.bf16.msra.mxu0 0
  %827 = vmatprep.subr.bf16.mxu0 0
  %828 = vmatpush2.bf16.msra.mxu0 0
  %829 = vmatprep.subr.bf16.mxu0 0
  %830 = vmatpush2.bf16.msra.mxu0 0
  %831 = vmatprep.subr.bf16.mxu0 0
  %832 = vmatpush2.bf16.msra.mxu0 0
  %833 = vmatprep.mubr.bf16.mxu0 0
  %834 = vmatmul.mubr.bf16.gmra.mxu0 %v799
  %v835 = vpop.f32.mrf.mxu0
  %v836 = vadd.f32 0.0, %v835
  %v837 = vpop.f32.mrf.mxu0
  %v838 = vpop.f32.mrf.mxu0
  %v839 = vadd.f32 0.0, %v838
  %v840 = vpop.f32.mrf.mxu0
  %841 = vdwg.mxu0
  %v846 = vunpack.c.l.b16 %v321
  %v847 = vunpack.c.l.b16 %v322
  %v848 = vunpack.c.l.b16 %v323
  %v849 = vunpack.c.l.b16 %v324
  %v850 = vpack.c.b16 %v847, %v846
  %v851 = vpack.c.b16 %v849, %v848
  %v855 = vsel %vm343, %v556, 0
  %857 = vmatprep.subr.bf16.mxu0 0
  %858 = vmatpush1.bf16.msra.mxu0 0
  %859 = vmatprep.subr.bf16.mxu0 0
  %860 = vmatpush1.bf16.msra.mxu0 0
  %861 = vmatprep.subr.bf16.mxu0 0
  %862 = vmatpush1.bf16.msra.mxu0 0
  %863 = vmatprep.subr.bf16.mxu0 0
  %864 = vmatpush1.bf16.msra.mxu0 0
  %865 = vmatprep.subr.bf16.mxu0 0
  %866 = vmatpush1.bf16.msra.mxu0 0
  %867 = vmatprep.subr.bf16.mxu0 0
  %868 = vmatpush1.bf16.msra.mxu0 0
  %869 = vmatprep.subr.bf16.mxu0 0
  %870 = vmatpush1.bf16.msra.mxu0 %v851
  %871 = vmatprep.subr.bf16.mxu0 0
  %872 = vmatpush1.bf16.msra.mxu0 %v850
  %873 = vmatprep.subr.bf16.mxu0 0
  %874 = vmatpush2.bf16.msra.mxu0 0
  %875 = vmatprep.subr.bf16.mxu0 0
  %876 = vmatpush2.bf16.msra.mxu0 0
  %877 = vmatprep.subr.bf16.mxu0 0
  %878 = vmatpush2.bf16.msra.mxu0 0
  %879 = vmatprep.subr.bf16.mxu0 0
  %880 = vmatpush2.bf16.msra.mxu0 0
  %881 = vmatprep.subr.bf16.mxu0 0
  %882 = vmatpush2.bf16.msra.mxu0 0
  %883 = vmatprep.subr.bf16.mxu0 0
  %884 = vmatpush2.bf16.msra.mxu0 0
  %885 = vmatprep.subr.bf16.mxu0 0
  %886 = vmatpush2.bf16.msra.mxu0 0
  %887 = vmatprep.subr.bf16.mxu0 0
  %888 = vmatpush2.bf16.msra.mxu0 0
  %889 = vmatprep.mubr.bf16.mxu0 0
  %890 = vmatmul.mubr.bf16.gmra.mxu0 %v855
  %v891 = vpop.f32.mrf.mxu0
  %v892 = vadd.f32 %v836, %v891
  %v893 = vpop.f32.mrf.mxu0
  %v894 = vpop.f32.mrf.mxu0
  %v895 = vadd.f32 %v839, %v894
  %v896 = vpop.f32.mrf.mxu0
  %897 = vdwg.mxu0
  %898 = vrot.lane.b32.xlu0 %v337, 64
  %v899 = vpop.permute.xlu0 %898
  %900 = vrot.lane.b32.xlu0 %v339, 64
  %v901 = vpop.permute.xlu0 %900
  %v903 = vsel %vm343, %v899, 0
  %v906 = vsel %vm343, %v901, 0
  %908 = vmatprep.subr.bf16.mxu0 0
  %909 = vmatpush1.bf16.xpose.msra.mxu0 0
  %910 = vmatprep.subr.bf16.mxu0 0
  %911 = vmatpush1.bf16.xpose.msra.mxu0 0
  %912 = vmatprep.subr.bf16.mxu0 0
  %913 = vmatpush1.bf16.xpose.msra.mxu0 0
  %914 = vmatprep.subr.bf16.mxu0 0
  %915 = vmatpush1.bf16.xpose.msra.mxu0 0
  %916 = vmatprep.subr.bf16.mxu0 0
  %917 = vmatpush1.bf16.xpose.msra.mxu0 0
  %918 = vmatprep.subr.bf16.mxu0 0
  %919 = vmatpush1.bf16.xpose.msra.mxu0 0
  %920 = vmatprep.subr.bf16.mxu0 0
  %921 = vmatpush1.bf16.xpose.msra.mxu0 0
  %922 = vmatprep.subr.bf16.mxu0 0
  %923 = vmatpush1.bf16.xpose.msra.mxu0 %v906
  %924 = vmatprep.subr.bf16.mxu0 0
  %925 = vmatpush2.bf16.xpose.msra.mxu0 0
  %926 = vmatprep.subr.bf16.mxu0 0
  %927 = vmatpush2.bf16.xpose.msra.mxu0 0
  %928 = vmatprep.subr.bf16.mxu0 0
  %929 = vmatpush2.bf16.xpose.msra.mxu0 0
  %930 = vmatprep.subr.bf16.mxu0 0
  %931 = vmatpush2.bf16.xpose.msra.mxu0 0
  %932 = vmatprep.subr.bf16.mxu0 0
  %933 = vmatpush2.bf16.xpose.msra.mxu0 0
  %934 = vmatprep.subr.bf16.mxu0 0
  %935 = vmatpush2.bf16.xpose.msra.mxu0 0
  %936 = vmatprep.subr.bf16.mxu0 0
  %937 = vmatpush2.bf16.xpose.msra.mxu0 0
  %938 = vmatprep.subr.bf16.mxu0 0
  %939 = vmatpush2.bf16.xpose.msra.mxu0 0
  %940 = vmatprep.mubr.bf16.mxu0 0
  %941 = vmatmul.mubr.bf16.gmra.mxu0 %v903
  %v942 = vpop.f32.mrf.mxu0
  %v943 = vadd.f32 0.0, %v942
  %v944 = vpop.f32.mrf.mxu0
  %v945 = vpop.f32.mrf.mxu0
  %v946 = vpop.f32.mrf.mxu0
  %947 = vdwg.mxu0
  %948 = vrot.lane.b32.xlu0 %v338, 64
  %v949 = vpop.permute.xlu0 %948
  %950 = vrot.lane.b32.xlu0 %v340, 64
  %v951 = vpop.permute.xlu0 %950
  %v953 = vsel %vm343, %v949, 0
  %v956 = vsel %vm343, %v951, 0
  %958 = vmatprep.subr.bf16.mxu0 0
  %959 = vmatpush1.bf16.xpose.msra.mxu0 0
  %960 = vmatprep.subr.bf16.mxu0 0
  %961 = vmatpush1.bf16.xpose.msra.mxu0 0
  %962 = vmatprep.subr.bf16.mxu0 0
  %963 = vmatpush1.bf16.xpose.msra.mxu0 0
  %964 = vmatprep.subr.bf16.mxu0 0
  %965 = vmatpush1.bf16.xpose.msra.mxu0 0
  %966 = vmatprep.subr.bf16.mxu0 0
  %967 = vmatpush1.bf16.xpose.msra.mxu0 0
  %968 = vmatprep.subr.bf16.mxu0 0
  %969 = vmatpush1.bf16.xpose.msra.mxu0 0
  %970 = vmatprep.subr.bf16.mxu0 0
  %971 = vmatpush1.bf16.xpose.msra.mxu0 0
  %972 = vmatprep.subr.bf16.mxu0 0
  %973 = vmatpush1.bf16.xpose.msra.mxu0 %v956
  %974 = vmatprep.subr.bf16.mxu0 0
  %975 = vmatpush2.bf16.xpose.msra.mxu0 0
  %976 = vmatprep.subr.bf16.mxu0 0
  %977 = vmatpush2.bf16.xpose.msra.mxu0 0
  %978 = vmatprep.subr.bf16.mxu0 0
  %979 = vmatpush2.bf16.xpose.msra.mxu0 0
  %980 = vmatprep.subr.bf16.mxu0 0
  %981 = vmatpush2.bf16.xpose.msra.mxu0 0
  %982 = vmatprep.subr.bf16.mxu0 0
  %983 = vmatpush2.bf16.xpose.msra.mxu0 0
  %984 = vmatprep.subr.bf16.mxu0 0
  %985 = vmatpush2.bf16.xpose.msra.mxu0 0
  %986 = vmatprep.subr.bf16.mxu0 0
  %987 = vmatpush2.bf16.xpose.msra.mxu0 0
  %988 = vmatprep.subr.bf16.mxu0 0
  %989 = vmatpush2.bf16.xpose.msra.mxu0 0
  %990 = vmatprep.mubr.bf16.mxu0 0
  %991 = vmatmul.mubr.bf16.gmra.mxu0 %v953
  %v992 = vpop.f32.mrf.mxu0
  %v993 = vadd.f32 0.0, %v992
  %v994 = vpop.f32.mrf.mxu0
  %v995 = vpop.f32.mrf.mxu0
  %v996 = vpop.f32.mrf.mxu0
  %997 = vdwg.mxu0
  %v998 = vmul.f32 %v943, 0.17677669
  %v999 = vmul.f32 %v993, 0.17677669
  %v1000 = vsel %vm438, %v998, -inf
  %1001 = vmax.xlane.f32.xlu0 %v1000
  %v1002 = vpop.xlane.xlu0 %1001
  %v1003 = vsel %vm438, %v999, -inf
  %1004 = vmax.xlane.f32.xlu0 %v1003
  %v1005 = vpop.xlane.xlu0 %1004
  %v1006 = vsub.f32 %v998, %v1002
  %v1007 = vsub.f32 %v999, %v1005
  %v1008 = vmul.f32 %v1006, 1.442695
  %v1009 = vpow.pop %v1008
  %v1010 = vmul.f32 %v1007, 1.442695
  %v1011 = vpow.pop %v1010
  %v1012 = vsel %vm438, %v1009, 0.0
  %1013 = vadd.xlane.f32.xlu0 %v1012
  %v1014 = vpop.xlane.xlu0 %1013
  %v1015 = vsel %vm438, %v1011, 0.0
  %1016 = vadd.xlane.f32.xlu0 %v1015
  %v1017 = vpop.xlane.xlu0 %1016
  %v1018 = vrcp.pop %v1014
  %v1019 = vmul.f32 %v1009, %v1018
  %v1020 = vrcp.pop %v1017
  %v1021 = vmul.f32 %v1011, %v1020
  %v1022 = vpack.c.bf16 %v1019, %v1019
  %v1023 = vpack.c.bf16 %v1021, %v1021
  %1024 = vrot.lane.b32.xlu0 %v341, 64
  %v1025 = vpop.permute.xlu0 %1024
  %v1027 = vsel %vm438, %v1022, 0
  %v1030 = vsel %vm466, %v1025, 0
  %1032 = vmatprep.subr.bf16.mxu0 0
  %1033 = vmatpush1.bf16.msra.mxu0 0
  %1034 = vmatprep.subr.bf16.mxu0 0
  %1035 = vmatpush1.bf16.msra.mxu0 0
  %1036 = vmatprep.subr.bf16.mxu0 0
  %1037 = vmatpush1.bf16.msra.mxu0 0
  %1038 = vmatprep.subr.bf16.mxu0 0
  %1039 = vmatpush1.bf16.msra.mxu0 0
  %1040 = vmatprep.subr.bf16.mxu0 0
  %1041 = vmatpush1.bf16.msra.mxu0 0
  %1042 = vmatprep.subr.bf16.mxu0 0
  %1043 = vmatpush1.bf16.msra.mxu0 0
  %1044 = vmatprep.subr.bf16.mxu0 0
  %1045 = vmatpush1.bf16.msra.mxu0 0
  %1046 = vmatprep.subr.bf16.mxu0 0
  %1047 = vmatpush1.bf16.msra.mxu0 %v1030
  %1048 = vmatprep.subr.bf16.mxu0 0
  %1049 = vmatpush2.bf16.msra.mxu0 0
  %1050 = vmatprep.subr.bf16.mxu0 0
  %1051 = vmatpush2.bf16.msra.mxu0 0
  %1052 = vmatprep.subr.bf16.mxu0 0
  %1053 = vmatpush2.bf16.msra.mxu0 0
  %1054 = vmatprep.subr.bf16.mxu0 0
  %1055 = vmatpush2.bf16.msra.mxu0 0
  %1056 = vmatprep.subr.bf16.mxu0 0
  %1057 = vmatpush2.bf16.msra.mxu0 0
  %1058 = vmatprep.subr.bf16.mxu0 0
  %1059 = vmatpush2.bf16.msra.mxu0 0
  %1060 = vmatprep.subr.bf16.mxu0 0
  %1061 = vmatpush2.bf16.msra.mxu0 0
  %1062 = vmatprep.subr.bf16.mxu0 0
  %1063 = vmatpush2.bf16.msra.mxu0 0
  %1064 = vmatprep.mubr.bf16.mxu0 0
  %1065 = vmatmul.mubr.bf16.gmra.mxu0 %v1027
  %v1066 = vpop.f32.mrf.mxu0
  %v1067 = vadd.f32 0.0, %v1066
  %v1068 = vpop.f32.mrf.mxu0
  %v1069 = vpop.f32.mrf.mxu0
  %v1070 = vpop.f32.mrf.mxu0
  %1071 = vdwg.mxu0
  %1072 = vrot.lane.b32.xlu0 %v342, 64
  %v1073 = vpop.permute.xlu0 %1072
  %v1075 = vsel %vm438, %v1023, 0
  %v1078 = vsel %vm466, %v1073, 0
  %1080 = vmatprep.subr.bf16.mxu0 0
  %1081 = vmatpush1.bf16.msra.mxu0 0
  %1082 = vmatprep.subr.bf16.mxu0 0
  %1083 = vmatpush1.bf16.msra.mxu0 0
  %1084 = vmatprep.subr.bf16.mxu0 0
  %1085 = vmatpush1.bf16.msra.mxu0 0
  %1086 = vmatprep.subr.bf16.mxu0 0
  %1087 = vmatpush1.bf16.msra.mxu0 0
  %1088 = vmatprep.subr.bf16.mxu0 0
  %1089 = vmatpush1.bf16.msra.mxu0 0
  %1090 = vmatprep.subr.bf16.mxu0 0
  %1091 = vmatpush1.bf16.msra.mxu0 0
  %1092 = vmatprep.subr.bf16.mxu0 0
  %1093 = vmatpush1.bf16.msra.mxu0 0
  %1094 = vmatprep.subr.bf16.mxu0 0
  %1095 = vmatpush1.bf16.msra.mxu0 %v1078
  %1096 = vmatprep.subr.bf16.mxu0 0
  %1097 = vmatpush2.bf16.msra.mxu0 0
  %1098 = vmatprep.subr.bf16.mxu0 0
  %1099 = vmatpush2.bf16.msra.mxu0 0
  %1100 = vmatprep.subr.bf16.mxu0 0
  %1101 = vmatpush2.bf16.msra.mxu0 0
  %1102 = vmatprep.subr.bf16.mxu0 0
  %1103 = vmatpush2.bf16.msra.mxu0 0
  %1104 = vmatprep.subr.bf16.mxu0 0
  %1105 = vmatpush2.bf16.msra.mxu0 0
  %1106 = vmatprep.subr.bf16.mxu0 0
  %1107 = vmatpush2.bf16.msra.mxu0 0
  %1108 = vmatprep.subr.bf16.mxu0 0
  %1109 = vmatpush2.bf16.msra.mxu0 0
  %1110 = vmatprep.subr.bf16.mxu0 0
  %1111 = vmatpush2.bf16.msra.mxu0 0
  %1112 = vmatprep.mubr.bf16.mxu0 0
  %1113 = vmatmul.mubr.bf16.gmra.mxu0 %v1075
  %v1114 = vpop.f32.mrf.mxu0
  %v1115 = vadd.f32 0.0, %v1114
  %v1116 = vpop.f32.mrf.mxu0
  %v1117 = vpop.f32.mrf.mxu0
  %v1118 = vpop.f32.mrf.mxu0
  %1119 = vdwg.mxu0
  %v1120 = vpack.c.bf16 %v1115, %v1067
  %v1125 = vunpack.c.l.b16 %v329
  %v1126 = vunpack.c.l.b16 %v330
  %v1127 = vunpack.c.l.b16 %v331
  %v1128 = vunpack.c.l.b16 %v332
  %v1129 = vpack.c.b16 %v1126, %v1125
  %v1130 = vpack.c.b16 %v1128, %v1127
  %v1134 = vsel %vm343, %v1120, 0
  %1136 = vmatprep.subr.bf16.mxu0 0
  %1137 = vmatpush1.bf16.msra.mxu0 0
  %1138 = vmatprep.subr.bf16.mxu0 0
  %1139 = vmatpush1.bf16.msra.mxu0 0
  %1140 = vmatprep.subr.bf16.mxu0 0
  %1141 = vmatpush1.bf16.msra.mxu0 0
  %1142 = vmatprep.subr.bf16.mxu0 0
  %1143 = vmatpush1.bf16.msra.mxu0 0
  %1144 = vmatprep.subr.bf16.mxu0 0
  %1145 = vmatpush1.bf16.msra.mxu0 0
  %1146 = vmatprep.subr.bf16.mxu0 0
  %1147 = vmatpush1.bf16.msra.mxu0 0
  %1148 = vmatprep.subr.bf16.mxu0 0
  %1149 = vmatpush1.bf16.msra.mxu0 %v1130
  %1150 = vmatprep.subr.bf16.mxu0 0
  %1151 = vmatpush1.bf16.msra.mxu0 %v1129
  %1152 = vmatprep.subr.bf16.mxu0 0
  %1153 = vmatpush2.bf16.msra.mxu0 0
  %1154 = vmatprep.subr.bf16.mxu0 0
  %1155 = vmatpush2.bf16.msra.mxu0 0
  %1156 = vmatprep.subr.bf16.mxu0 0
  %1157 = vmatpush2.bf16.msra.mxu0 0
  %1158 = vmatprep.subr.bf16.mxu0 0
  %1159 = vmatpush2.bf16.msra.mxu0 0
  %1160 = vmatprep.subr.bf16.mxu0 0
  %1161 = vmatpush2.bf16.msra.mxu0 0
  %1162 = vmatprep.subr.bf16.mxu0 0
  %1163 = vmatpush2.bf16.msra.mxu0 0
  %1164 = vmatprep.subr.bf16.mxu0 0
  %1165 = vmatpush2.bf16.msra.mxu0 0
  %1166 = vmatprep.subr.bf16.mxu0 0
  %1167 = vmatpush2.bf16.msra.mxu0 0
  %1168 = vmatprep.mubr.bf16.mxu0 0
  %1169 = vmatmul.mubr.bf16.gmra.mxu0 %v1134
  %v1170 = vpop.f32.mrf.mxu0
  %v1171 = vadd.f32 0.0, %v1170
  %v1172 = vpop.f32.mrf.mxu0
  %v1173 = vpop.f32.mrf.mxu0
  %v1174 = vadd.f32 0.0, %v1173
  %v1175 = vpop.f32.mrf.mxu0
  %1176 = vdwg.mxu0
  %v1177 = vadd.f32 %v892, %v1171
  %v1178 = vadd.f32 %v895, %v1174
  %1179 = vrot.lane.b32.xlu0 %v337, 32
  %v1180 = vpop.permute.xlu0 %1179
  %1181 = vrot.lane.b32.xlu0 %v339, 32
  %v1182 = vpop.permute.xlu0 %1181
  %v1184 = vsel %vm343, %v1180, 0
  %v1187 = vsel %vm343, %v1182, 0
  %1189 = vmatprep.subr.bf16.mxu0 0
  %1190 = vmatpush1.bf16.xpose.msra.mxu0 0
  %1191 = vmatprep.subr.bf16.mxu0 0
  %1192 = vmatpush1.bf16.xpose.msra.mxu0 0
  %1193 = vmatprep.subr.bf16.mxu0 0
  %1194 = vmatpush1.bf16.xpose.msra.mxu0 0
  %1195 = vmatprep.subr.bf16.mxu0 0
  %1196 = vmatpush1.bf16.xpose.msra.mxu0 0
  %1197 = vmatprep.subr.bf16.mxu0 0
  %1198 = vmatpush1.bf16.xpose.msra.mxu0 0
  %1199 = vmatprep.subr.bf16.mxu0 0
  %1200 = vmatpush1.bf16.xpose.msra.mxu0 0
  %1201 = vmatprep.subr.bf16.mxu0 0
  %1202 = vmatpush1.bf16.xpose.msra.mxu0 0
  %1203 = vmatprep.subr.bf16.mxu0 0
  %1204 = vmatpush1.bf16.xpose.msra.mxu0 %v1187
  %1205 = vmatprep.subr.bf16.mxu0 0
  %1206 = vmatpush2.bf16.xpose.msra.mxu0 0
  %1207 = vmatprep.subr.bf16.mxu0 0
  %1208 = vmatpush2.bf16.xpose.msra.mxu0 0
  %1209 = vmatprep.subr.bf16.mxu0 0
  %1210 = vmatpush2.bf16.xpose.msra.mxu0 0
  %1211 = vmatprep.subr.bf16.mxu0 0
  %1212 = vmatpush2.bf16.xpose.msra.mxu0 0
  %1213 = vmatprep.subr.bf16.mxu0 0
  %1214 = vmatpush2.bf16.xpose.msra.mxu0 0
  %1215 = vmatprep.subr.bf16.mxu0 0
  %1216 = vmatpush2.bf16.xpose.msra.mxu0 0
  %1217 = vmatprep.subr.bf16.mxu0 0
  %1218 = vmatpush2.bf16.xpose.msra.mxu0 0
  %1219 = vmatprep.subr.bf16.mxu0 0
  %1220 = vmatpush2.bf16.xpose.msra.mxu0 0
  %1221 = vmatprep.mubr.bf16.mxu0 0
  %1222 = vmatmul.mubr.bf16.gmra.mxu0 %v1184
  %v1223 = vpop.f32.mrf.mxu0
  %v1224 = vadd.f32 0.0, %v1223
  %v1225 = vpop.f32.mrf.mxu0
  %v1226 = vpop.f32.mrf.mxu0
  %v1227 = vpop.f32.mrf.mxu0
  %1228 = vdwg.mxu0
  %1229 = vrot.lane.b32.xlu0 %v338, 32
  %v1230 = vpop.permute.xlu0 %1229
  %1231 = vrot.lane.b32.xlu0 %v340, 32
  %v1232 = vpop.permute.xlu0 %1231
  %v1234 = vsel %vm343, %v1230, 0
  %v1237 = vsel %vm343, %v1232, 0
  %1239 = vmatprep.subr.bf16.mxu0 0
  %1240 = vmatpush1.bf16.xpose.msra.mxu0 0
  %1241 = vmatprep.subr.bf16.mxu0 0
  %1242 = vmatpush1.bf16.xpose.msra.mxu0 0
  %1243 = vmatprep.subr.bf16.mxu0 0
  %1244 = vmatpush1.bf16.xpose.msra.mxu0 0
  %1245 = vmatprep.subr.bf16.mxu0 0
  %1246 = vmatpush1.bf16.xpose.msra.mxu0 0
  %1247 = vmatprep.subr.bf16.mxu0 0
  %1248 = vmatpush1.bf16.xpose.msra.mxu0 0
  %1249 = vmatprep.subr.bf16.mxu0 0
  %1250 = vmatpush1.bf16.xpose.msra.mxu0 0
  %1251 = vmatprep.subr.bf16.mxu0 0
  %1252 = vmatpush1.bf16.xpose.msra.mxu0 0
  %1253 = vmatprep.subr.bf16.mxu0 0
  %1254 = vmatpush1.bf16.xpose.msra.mxu0 %v1237
  %1255 = vmatprep.subr.bf16.mxu0 0
  %1256 = vmatpush2.bf16.xpose.msra.mxu0 0
  %1257 = vmatprep.subr.bf16.mxu0 0
  %1258 = vmatpush2.bf16.xpose.msra.mxu0 0
  %1259 = vmatprep.subr.bf16.mxu0 0
  %1260 = vmatpush2.bf16.xpose.msra.mxu0 0
  %1261 = vmatprep.subr.bf16.mxu0 0
  %1262 = vmatpush2.bf16.xpose.msra.mxu0 0
  %1263 = vmatprep.subr.bf16.mxu0 0
  %1264 = vmatpush2.bf16.xpose.msra.mxu0 0
  %1265 = vmatprep.subr.bf16.mxu0 0
  %1266 = vmatpush2.bf16.xpose.msra.mxu0 0
  %1267 = vmatprep.subr.bf16.mxu0 0
  %1268 = vmatpush2.bf16.xpose.msra.mxu0 0
  %1269 = vmatprep.subr.bf16.mxu0 0
  %1270 = vmatpush2.bf16.xpose.msra.mxu0 0
  %1271 = vmatprep.mubr.bf16.mxu0 0
  %1272 = vmatmul.mubr.bf16.gmra.mxu0 %v1234
  %v1273 = vpop.f32.mrf.mxu0
  %v1274 = vadd.f32 0.0, %v1273
  %v1275 = vpop.f32.mrf.mxu0
  %v1276 = vpop.f32.mrf.mxu0
  %v1277 = vpop.f32.mrf.mxu0
  %1278 = vdwg.mxu0
  %v1279 = vmul.f32 %v1224, 0.17677669
  %v1280 = vmul.f32 %v1274, 0.17677669
  %v1281 = vsel %vm438, %v1279, -inf
  %1282 = vmax.xlane.f32.xlu0 %v1281
  %v1283 = vpop.xlane.xlu0 %1282
  %v1284 = vsel %vm438, %v1280, -inf
  %1285 = vmax.xlane.f32.xlu0 %v1284
  %v1286 = vpop.xlane.xlu0 %1285
  %v1287 = vsub.f32 %v1279, %v1283
  %v1288 = vsub.f32 %v1280, %v1286
  %v1289 = vmul.f32 %v1287, 1.442695
  %v1290 = vpow.pop %v1289
  %v1291 = vmul.f32 %v1288, 1.442695
  %v1292 = vpow.pop %v1291
  %v1293 = vsel %vm438, %v1290, 0.0
  %1294 = vadd.xlane.f32.xlu0 %v1293
  %v1295 = vpop.xlane.xlu0 %1294
  %v1296 = vsel %vm438, %v1292, 0.0
  %1297 = vadd.xlane.f32.xlu0 %v1296
  %v1298 = vpop.xlane.xlu0 %1297
  %v1299 = vrcp.pop %v1295
  %v1300 = vmul.f32 %v1290, %v1299
  %v1301 = vrcp.pop %v1298
  %v1302 = vmul.f32 %v1292, %v1301
  %v1303 = vpack.c.bf16 %v1300, %v1300
  %v1304 = vpack.c.bf16 %v1302, %v1302
  %1305 = vrot.lane.b32.xlu0 %v341, 32
  %v1306 = vpop.permute.xlu0 %1305
  %v1308 = vsel %vm438, %v1303, 0
  %v1311 = vsel %vm466, %v1306, 0
  %1313 = vmatprep.subr.bf16.mxu0 0
  %1314 = vmatpush1.bf16.msra.mxu0 0
  %1315 = vmatprep.subr.bf16.mxu0 0
  %1316 = vmatpush1.bf16.msra.mxu0 0
  %1317 = vmatprep.subr.bf16.mxu0 0
  %1318 = vmatpush1.bf16.msra.mxu0 0
  %1319 = vmatprep.subr.bf16.mxu0 0
  %1320 = vmatpush1.bf16.msra.mxu0 0
  %1321 = vmatprep.subr.bf16.mxu0 0
  %1322 = vmatpush1.bf16.msra.mxu0 0
  %1323 = vmatprep.subr.bf16.mxu0 0
  %1324 = vmatpush1.bf16.msra.mxu0 0
  %1325 = vmatprep.subr.bf16.mxu0 0
  %1326 = vmatpush1.bf16.msra.mxu0 0
  %1327 = vmatprep.subr.bf16.mxu0 0
  %1328 = vmatpush1.bf16.msra.mxu0 %v1311
  %1329 = vmatprep.subr.bf16.mxu0 0
  %1330 = vmatpush2.bf16.msra.mxu0 0
  %1331 = vmatprep.subr.bf16.mxu0 0
  %1332 = vmatpush2.bf16.msra.mxu0 0
  %1333 = vmatprep.subr.bf16.mxu0 0
  %1334 = vmatpush2.bf16.msra.mxu0 0
  %1335 = vmatprep.subr.bf16.mxu0 0
  %1336 = vmatpush2.bf16.msra.mxu0 0
  %1337 = vmatprep.subr.bf16.mxu0 0
  %1338 = vmatpush2.bf16.msra.mxu0 0
  %1339 = vmatprep.subr.bf16.mxu0 0
  %1340 = vmatpush2.bf16.msra.mxu0 0
  %1341 = vmatprep.subr.bf16.mxu0 0
  %1342 = vmatpush2.bf16.msra.mxu0 0
  %1343 = vmatprep.subr.bf16.mxu0 0
  %1344 = vmatpush2.bf16.msra.mxu0 0
  %1345 = vmatprep.mubr.bf16.mxu0 0
  %1346 = vmatmul.mubr.bf16.gmra.mxu0 %v1308
  %v1347 = vpop.f32.mrf.mxu0
  %v1348 = vadd.f32 0.0, %v1347
  %v1349 = vpop.f32.mrf.mxu0
  %v1350 = vpop.f32.mrf.mxu0
  %v1351 = vpop.f32.mrf.mxu0
  %1352 = vdwg.mxu0
  %1353 = vrot.lane.b32.xlu0 %v342, 32
  %v1354 = vpop.permute.xlu0 %1353
  %v1356 = vsel %vm438, %v1304, 0
  %v1359 = vsel %vm466, %v1354, 0
  %1361 = vmatprep.subr.bf16.mxu0 0
  %1362 = vmatpush1.bf16.msra.mxu0 0
  %1363 = vmatprep.subr.bf16.mxu0 0
  %1364 = vmatpush1.bf16.msra.mxu0 0
  %1365 = vmatprep.subr.bf16.mxu0 0
  %1366 = vmatpush1.bf16.msra.mxu0 0
  %1367 = vmatprep.subr.bf16.mxu0 0
  %1368 = vmatpush1.bf16.msra.mxu0 0
  %1369 = vmatprep.subr.bf16.mxu0 0
  %1370 = vmatpush1.bf16.msra.mxu0 0
  %1371 = vmatprep.subr.bf16.mxu0 0
  %1372 = vmatpush1.bf16.msra.mxu0 0
  %1373 = vmatprep.subr.bf16.mxu0 0
  %1374 = vmatpush1.bf16.msra.mxu0 0
  %1375 = vmatprep.subr.bf16.mxu0 0
  %1376 = vmatpush1.bf16.msra.mxu0 %v1359
  %1377 = vmatprep.subr.bf16.mxu0 0
  %1378 = vmatpush2.bf16.msra.mxu0 0
  %1379 = vmatprep.subr.bf16.mxu0 0
  %1380 = vmatpush2.bf16.msra.mxu0 0
  %1381 = vmatprep.subr.bf16.mxu0 0
  %1382 = vmatpush2.bf16.msra.mxu0 0
  %1383 = vmatprep.subr.bf16.mxu0 0
  %1384 = vmatpush2.bf16.msra.mxu0 0
  %1385 = vmatprep.subr.bf16.mxu0 0
  %1386 = vmatpush2.bf16.msra.mxu0 0
  %1387 = vmatprep.subr.bf16.mxu0 0
  %1388 = vmatpush2.bf16.msra.mxu0 0
  %1389 = vmatprep.subr.bf16.mxu0 0
  %1390 = vmatpush2.bf16.msra.mxu0 0
  %1391 = vmatprep.subr.bf16.mxu0 0
  %1392 = vmatpush2.bf16.msra.mxu0 0
  %1393 = vmatprep.mubr.bf16.mxu0 0
  %1394 = vmatmul.mubr.bf16.gmra.mxu0 %v1356
  %v1395 = vpop.f32.mrf.mxu0
  %v1396 = vadd.f32 0.0, %v1395
  %v1397 = vpop.f32.mrf.mxu0
  %v1398 = vpop.f32.mrf.mxu0
  %v1399 = vpop.f32.mrf.mxu0
  %1400 = vdwg.mxu0
  %v1401 = vpack.c.bf16 %v1396, %v1348
  %v1406 = vunpack.c.l.b16 %v333
  %v1407 = vunpack.c.l.b16 %v334
  %v1408 = vunpack.c.l.b16 %v335
  %v1409 = vunpack.c.l.b16 %v336
  %v1410 = vpack.c.b16 %v1407, %v1406
  %v1411 = vpack.c.b16 %v1409, %v1408
  %v1415 = vsel %vm343, %v1401, 0
  %1417 = vmatprep.subr.bf16.mxu0 0
  %1418 = vmatpush1.bf16.msra.mxu0 0
  %1419 = vmatprep.subr.bf16.mxu0 0
  %1420 = vmatpush1.bf16.msra.mxu0 0
  %1421 = vmatprep.subr.bf16.mxu0 0
  %1422 = vmatpush1.bf16.msra.mxu0 0
  %1423 = vmatprep.subr.bf16.mxu0 0
  %1424 = vmatpush1.bf16.msra.mxu0 0
  %1425 = vmatprep.subr.bf16.mxu0 0
  %1426 = vmatpush1.bf16.msra.mxu0 0
  %1427 = vmatprep.subr.bf16.mxu0 0
  %1428 = vmatpush1.bf16.msra.mxu0 0
  %1429 = vmatprep.subr.bf16.mxu0 0
  %1430 = vmatpush1.bf16.msra.mxu0 %v1411
  %1431 = vmatprep.subr.bf16.mxu0 0
  %1432 = vmatpush1.bf16.msra.mxu0 %v1410
  %1433 = vmatprep.subr.bf16.mxu0 0
  %1434 = vmatpush2.bf16.msra.mxu0 0
  %1435 = vmatprep.subr.bf16.mxu0 0
  %1436 = vmatpush2.bf16.msra.mxu0 0
  %1437 = vmatprep.subr.bf16.mxu0 0
  %1438 = vmatpush2.bf16.msra.mxu0 0
  %1439 = vmatprep.subr.bf16.mxu0 0
  %1440 = vmatpush2.bf16.msra.mxu0 0
  %1441 = vmatprep.subr.bf16.mxu0 0
  %1442 = vmatpush2.bf16.msra.mxu0 0
  %1443 = vmatprep.subr.bf16.mxu0 0
  %1444 = vmatpush2.bf16.msra.mxu0 0
  %1445 = vmatprep.subr.bf16.mxu0 0
  %1446 = vmatpush2.bf16.msra.mxu0 0
  %1447 = vmatprep.subr.bf16.mxu0 0
  %1448 = vmatpush2.bf16.msra.mxu0 0
  %1449 = vmatprep.mubr.bf16.mxu0 0
  %1450 = vmatmul.mubr.bf16.gmra.mxu0 %v1415
  %v1451 = vpop.f32.mrf.mxu0
  %v1452 = vadd.f32 0.0, %v1451
  %v1453 = vpop.f32.mrf.mxu0
  %v1454 = vpop.f32.mrf.mxu0
  %v1455 = vadd.f32 0.0, %v1454
  %v1456 = vpop.f32.mrf.mxu0
  %1457 = vdwg.mxu0
  %v1458 = vadd.f32 %v1177, %v1452
  %v1459 = vadd.f32 %v1178, %v1455
  %v1460 = vld [vmem:[%s5] sm:$0x1]
  %v1462 = vlaneseq
  %v1463 = vshrl.u32 %v1462, 7
  %v1464 = vsub.s32 0, %v1463
  %v1465 = vrot.slane %v1460, %v1464
  %v1467 = vadd.f32 %v1458, %v1465
  %v1468 = vadd.f32 %v1459, %v1465
  %v1469 = vadd.f32 %v1467, %v42
  %v1470 = vadd.f32 %v1468, %v43
  %v1471 = vpack.c.bf16 %v1470, %v1469
  %v1472 = vld [vmem:[%s6] sm:$0xff]
  %v1473 = vld [vmem:[%s6 + $0x8] sm:$0xff]
  %v1474 = vld [vmem:[%s6 + $0x10] sm:$0xff]
  %v1475 = vld [vmem:[%s6 + $0x18] sm:$0xff]
  %v1476 = vld [vmem:[%s6 + $0x20] sm:$0xff]
  %v1477 = vld [vmem:[%s6 + $0x28] sm:$0xff]
  %v1478 = vld [vmem:[%s6 + $0x30] sm:$0xff]
  %v1479 = vld [vmem:[%s6 + $0x38] sm:$0xff]
  %v1480 = vld [vmem:[%s6 + $0x40] sm:$0xff]
  %v1481 = vld [vmem:[%s6 + $0x48] sm:$0xff]
  %v1482 = vld [vmem:[%s6 + $0x50] sm:$0xff]
  %v1483 = vld [vmem:[%s6 + $0x58] sm:$0xff]
  %v1484 = vld [vmem:[%s6 + $0x60] sm:$0xff]
  %v1485 = vld [vmem:[%s6 + $0x68] sm:$0xff]
  %v1486 = vld [vmem:[%s6 + $0x70] sm:$0xff]
  %v1487 = vld [vmem:[%s6 + $0x78] sm:$0xff]
  %v1488 = vld [vmem:[%s7] sm:$0x3]
  %v1490 = vlaneseq
  %v1491 = vshrl.u32 %v1490, 7
  %v1492 = vsub.s32 0, %v1491
  %v1493 = vrot.slane %v1488, %v1492
  %v1494 = vlaneseq
  %v1495 = vshrl.u32 %v1494, 7
  %v1496 = vsub.s32 1, %v1495
  %v1497 = vrot.slane %v1488, %v1496
  %v1516 = vunpack.c.l.b16 %v1472
  %v1517 = vunpack.c.h.b16 %v1472
  %v1518 = vunpack.c.l.b16 %v1473
  %v1519 = vunpack.c.h.b16 %v1473
  %v1520 = vunpack.c.l.b16 %v1474
  %v1521 = vunpack.c.h.b16 %v1474
  %v1522 = vunpack.c.l.b16 %v1475
  %v1523 = vunpack.c.h.b16 %v1475
  %v1524 = vunpack.c.l.b16 %v1476
  %v1525 = vunpack.c.h.b16 %v1476
  %v1526 = vunpack.c.l.b16 %v1477
  %v1527 = vunpack.c.h.b16 %v1477
  %v1528 = vunpack.c.l.b16 %v1478
  %v1529 = vunpack.c.h.b16 %v1478
  %v1530 = vunpack.c.l.b16 %v1479
  %v1531 = vunpack.c.h.b16 %v1479
  %v1532 = vunpack.c.l.b16 %v1480
  %v1533 = vunpack.c.h.b16 %v1480
  %v1534 = vunpack.c.l.b16 %v1481
  %v1535 = vunpack.c.h.b16 %v1481
  %v1536 = vunpack.c.l.b16 %v1482
  %v1537 = vunpack.c.h.b16 %v1482
  %v1538 = vunpack.c.l.b16 %v1483
  %v1539 = vunpack.c.h.b16 %v1483
  %v1540 = vunpack.c.l.b16 %v1484
  %v1541 = vunpack.c.h.b16 %v1484
  %v1542 = vunpack.c.l.b16 %v1485
  %v1543 = vunpack.c.h.b16 %v1485
  %v1544 = vunpack.c.l.b16 %v1486
  %v1545 = vunpack.c.h.b16 %v1486
  %v1546 = vunpack.c.l.b16 %v1487
  %v1547 = vunpack.c.h.b16 %v1487
  %v1548 = vpack.c.b16 %v1518, %v1516
  %v1549 = vpack.c.b16 %v1519, %v1517
  %v1550 = vpack.c.b16 %v1522, %v1520
  %v1551 = vpack.c.b16 %v1523, %v1521
  %v1552 = vpack.c.b16 %v1526, %v1524
  %v1553 = vpack.c.b16 %v1527, %v1525
  %v1554 = vpack.c.b16 %v1530, %v1528
  %v1555 = vpack.c.b16 %v1531, %v1529
  %v1556 = vpack.c.b16 %v1534, %v1532
  %v1557 = vpack.c.b16 %v1535, %v1533
  %v1558 = vpack.c.b16 %v1538, %v1536
  %v1559 = vpack.c.b16 %v1539, %v1537
  %v1560 = vpack.c.b16 %v1542, %v1540
  %v1561 = vpack.c.b16 %v1543, %v1541
  %v1562 = vpack.c.b16 %v1546, %v1544
  %v1563 = vpack.c.b16 %v1547, %v1545
  %1580 = vmatprep.subr.bf16.mxu0 %v1563
  %1581 = vmatpush1.bf16.msra.mxu0 %v1562
  %1582 = vmatprep.subr.bf16.mxu0 %v1561
  %1583 = vmatpush1.bf16.msra.mxu0 %v1560
  %1584 = vmatprep.subr.bf16.mxu0 %v1559
  %1585 = vmatpush1.bf16.msra.mxu0 %v1558
  %1586 = vmatprep.subr.bf16.mxu0 %v1557
  %1587 = vmatpush1.bf16.msra.mxu0 %v1556
  %1588 = vmatprep.subr.bf16.mxu0 %v1555
  %1589 = vmatpush1.bf16.msra.mxu0 %v1554
  %1590 = vmatprep.subr.bf16.mxu0 %v1553
  %1591 = vmatpush1.bf16.msra.mxu0 %v1552
  %1592 = vmatprep.subr.bf16.mxu0 %v1551
  %1593 = vmatpush1.bf16.msra.mxu0 %v1550
  %1594 = vmatprep.subr.bf16.mxu0 %v1549
  %1595 = vmatpush1.bf16.msra.mxu0 %v1548
  %1596 = vmatprep.subr.bf16.mxu0 0
  %1597 = vmatpush2.bf16.msra.mxu0 0
  %1598 = vmatprep.subr.bf16.mxu0 0
  %1599 = vmatpush2.bf16.msra.mxu0 0
  %1600 = vmatprep.subr.bf16.mxu0 0
  %1601 = vmatpush2.bf16.msra.mxu0 0
  %1602 = vmatprep.subr.bf16.mxu0 0
  %1603 = vmatpush2.bf16.msra.mxu0 0
  %1604 = vmatprep.subr.bf16.mxu0 0
  %1605 = vmatpush2.bf16.msra.mxu0 0
  %1606 = vmatprep.subr.bf16.mxu0 0
  %1607 = vmatpush2.bf16.msra.mxu0 0
  %1608 = vmatprep.subr.bf16.mxu0 0
  %1609 = vmatpush2.bf16.msra.mxu0 0
  %1610 = vmatprep.subr.bf16.mxu0 0
  %1611 = vmatpush2.bf16.msra.mxu0 0
  %1612 = vmatprep.mubr.bf16.mxu0 0
  %1613 = vmatmul.mubr.bf16.gmra.mxu0 %v1471
  %v1614 = vpop.f32.mrf.mxu0
  %v1615 = vadd.f32 %v1493, %v1614
  %v1616 = vpop.f32.mrf.mxu0
  %v1617 = vadd.f32 %v1497, %v1616
  %v1618 = vpop.f32.mrf.mxu0
  %v1619 = vadd.f32 %v1493, %v1618
  %v1620 = vpop.f32.mrf.mxu0
  %v1621 = vadd.f32 %v1497, %v1620
  %1622 = vdwg.mxu0
  %v1623 = vmul.f32 %v1615, 0.5
  %v1624 = vmul.f32 %v1617, 0.5
  %v1625 = vmul.f32 %v1619, 0.5
  %v1626 = vmul.f32 %v1621, 0.5
  %v1627 = vrcp.pop 1.4142135
  %v1628 = vmul.f32 %v1615, %v1627
  %v1629 = vmul.f32 %v1617, %v1627
  %v1630 = vmul.f32 %v1619, %v1627
  %v1631 = vmul.f32 %v1621, %v1627
  %v1632 = verf.f32.pop %v1628
  %v1633 = verf.f32.pop %v1629
  %v1634 = verf.f32.pop %v1630
  %v1635 = verf.f32.pop %v1631
  %v1636 = vadd.f32 %v1632, 1.0
  %v1637 = vadd.f32 %v1633, 1.0
  %v1638 = vadd.f32 %v1634, 1.0
  %v1639 = vadd.f32 %v1635, 1.0
  %v1640 = vmul.f32 %v1623, %v1636
  %v1641 = vmul.f32 %v1624, %v1637
  %v1642 = vmul.f32 %v1625, %v1638
  %v1643 = vmul.f32 %v1626, %v1639
  %v1644 = vpack.c.bf16 %v1642, %v1640
  %v1645 = vpack.c.bf16 %v1643, %v1641
  %v1646 = vld [vmem:[%s8] sm:$0xf]
  %v1647 = vld [vmem:[%s8 + $0x4] sm:$0xf]
  %v1648 = vld [vmem:[%s8 + $0x8] sm:$0xf]
  %v1649 = vld [vmem:[%s8 + $0xc] sm:$0xf]
  %v1650 = vld [vmem:[%s8 + $0x10] sm:$0xf]
  %v1651 = vld [vmem:[%s8 + $0x14] sm:$0xf]
  %v1652 = vld [vmem:[%s8 + $0x18] sm:$0xf]
  %v1653 = vld [vmem:[%s8 + $0x1c] sm:$0xf]
  %v1654 = vld [vmem:[%s8 + $0x20] sm:$0xf]
  %v1655 = vld [vmem:[%s8 + $0x24] sm:$0xf]
  %v1656 = vld [vmem:[%s8 + $0x28] sm:$0xf]
  %v1657 = vld [vmem:[%s8 + $0x2c] sm:$0xf]
  %v1658 = vld [vmem:[%s8 + $0x30] sm:$0xf]
  %v1659 = vld [vmem:[%s8 + $0x34] sm:$0xf]
  %v1660 = vld [vmem:[%s8 + $0x38] sm:$0xf]
  %v1661 = vld [vmem:[%s8 + $0x3c] sm:$0xf]
  %v1662 = vld [vmem:[%s8 + $0x40] sm:$0xf]
  %v1663 = vld [vmem:[%s8 + $0x44] sm:$0xf]
  %v1664 = vld [vmem:[%s8 + $0x48] sm:$0xf]
  %v1665 = vld [vmem:[%s8 + $0x4c] sm:$0xf]
  %v1666 = vld [vmem:[%s8 + $0x50] sm:$0xf]
  %v1667 = vld [vmem:[%s8 + $0x54] sm:$0xf]
  %v1668 = vld [vmem:[%s8 + $0x58] sm:$0xf]
  %v1669 = vld [vmem:[%s8 + $0x5c] sm:$0xf]
  %v1670 = vld [vmem:[%s8 + $0x60] sm:$0xf]
  %v1671 = vld [vmem:[%s8 + $0x64] sm:$0xf]
  %v1672 = vld [vmem:[%s8 + $0x68] sm:$0xf]
  %v1673 = vld [vmem:[%s8 + $0x6c] sm:$0xf]
  %v1674 = vld [vmem:[%s8 + $0x70] sm:$0xf]
  %v1675 = vld [vmem:[%s8 + $0x74] sm:$0xf]
  %v1676 = vld [vmem:[%s8 + $0x78] sm:$0xf]
  %v1677 = vld [vmem:[%s8 + $0x7c] sm:$0xf]
  %v1678 = vld [vmem:[%s9] sm:$0x1]
  %v1680 = vlaneseq
  %v1681 = vshrl.u32 %v1680, 7
  %v1682 = vsub.s32 0, %v1681
  %v1683 = vrot.slane %v1678, %v1682
  %v1717 = vunpack.c.l.b16 %v1646
  %v1718 = vunpack.c.l.b16 %v1647
  %v1719 = vunpack.c.l.b16 %v1648
  %v1720 = vunpack.c.l.b16 %v1649
  %v1721 = vunpack.c.l.b16 %v1650
  %v1722 = vunpack.c.l.b16 %v1651
  %v1723 = vunpack.c.l.b16 %v1652
  %v1724 = vunpack.c.l.b16 %v1653
  %v1725 = vunpack.c.l.b16 %v1654
  %v1726 = vunpack.c.l.b16 %v1655
  %v1727 = vunpack.c.l.b16 %v1656
  %v1728 = vunpack.c.l.b16 %v1657
  %v1729 = vunpack.c.l.b16 %v1658
  %v1730 = vunpack.c.l.b16 %v1659
  %v1731 = vunpack.c.l.b16 %v1660
  %v1732 = vunpack.c.l.b16 %v1661
  %v1733 = vunpack.c.l.b16 %v1662
  %v1734 = vunpack.c.l.b16 %v1663
  %v1735 = vunpack.c.l.b16 %v1664
  %v1736 = vunpack.c.l.b16 %v1665
  %v1737 = vunpack.c.l.b16 %v1666
  %v1738 = vunpack.c.l.b16 %v1667
  %v1739 = vunpack.c.l.b16 %v1668
  %v1740 = vunpack.c.l.b16 %v1669
  %v1741 = vunpack.c.l.b16 %v1670
  %v1742 = vunpack.c.l.b16 %v1671
  %v1743 = vunpack.c.l.b16 %v1672
  %v1744 = vunpack.c.l.b16 %v1673
  %v1745 = vunpack.c.l.b16 %v1674
  %v1746 = vunpack.c.l.b16 %v1675
  %v1747 = vunpack.c.l.b16 %v1676
  %v1748 = vunpack.c.l.b16 %v1677
  %v1749 = vpack.c.b16 %v1718, %v1717
  %v1750 = vpack.c.b16 %v1720, %v1719
  %v1751 = vpack.c.b16 %v1722, %v1721
  %v1752 = vpack.c.b16 %v1724, %v1723
  %v1753 = vpack.c.b16 %v1726, %v1725
  %v1754 = vpack.c.b16 %v1728, %v1727
  %v1755 = vpack.c.b16 %v1730, %v1729
  %v1756 = vpack.c.b16 %v1732, %v1731
  %v1757 = vpack.c.b16 %v1734, %v1733
  %v1758 = vpack.c.b16 %v1736, %v1735
  %v1759 = vpack.c.b16 %v1738, %v1737
  %v1760 = vpack.c.b16 %v1740, %v1739
  %v1761 = vpack.c.b16 %v1742, %v1741
  %v1762 = vpack.c.b16 %v1744, %v1743
  %v1763 = vpack.c.b16 %v1746, %v1745
  %v1764 = vpack.c.b16 %v1748, %v1747
  %1781 = vmatprep.subr.bf16.mxu0 0
  %1782 = vmatpush1.bf16.msra.mxu0 %v1756
  %1783 = vmatprep.subr.bf16.mxu0 0
  %1784 = vmatpush1.bf16.msra.mxu0 %v1755
  %1785 = vmatprep.subr.bf16.mxu0 0
  %1786 = vmatpush1.bf16.msra.mxu0 %v1754
  %1787 = vmatprep.subr.bf16.mxu0 0
  %1788 = vmatpush1.bf16.msra.mxu0 %v1753
  %1789 = vmatprep.subr.bf16.mxu0 0
  %1790 = vmatpush1.bf16.msra.mxu0 %v1752
  %1791 = vmatprep.subr.bf16.mxu0 0
  %1792 = vmatpush1.bf16.msra.mxu0 %v1751
  %1793 = vmatprep.subr.bf16.mxu0 0
  %1794 = vmatpush1.bf16.msra.mxu0 %v1750
  %1795 = vmatprep.subr.bf16.mxu0 0
  %1796 = vmatpush1.bf16.msra.mxu0 %v1749
  %1797 = vmatprep.subr.bf16.mxu0 0
  %1798 = vmatpush2.bf16.msra.mxu0 %v1764
  %1799 = vmatprep.subr.bf16.mxu0 0
  %1800 = vmatpush2.bf16.msra.mxu0 %v1763
  %1801 = vmatprep.subr.bf16.mxu0 0
  %1802 = vmatpush2.bf16.msra.mxu0 %v1762
  %1803 = vmatprep.subr.bf16.mxu0 0
  %1804 = vmatpush2.bf16.msra.mxu0 %v1761
  %1805 = vmatprep.subr.bf16.mxu0 0
  %1806 = vmatpush2.bf16.msra.mxu0 %v1760
  %1807 = vmatprep.subr.bf16.mxu0 0
  %1808 = vmatpush2.bf16.msra.mxu0 %v1759
  %1809 = vmatprep.subr.bf16.mxu0 0
  %1810 = vmatpush2.bf16.msra.mxu0 %v1758
  %1811 = vmatprep.subr.bf16.mxu0 0
  %1812 = vmatpush2.bf16.msra.mxu0 %v1757
  %1813 = vmatprep.mubr.bf16.mxu0 %v1645
  %1814 = vmatmul.mubr.bf16.gmra.mxu0 %v1644
  %v1815 = vpop.f32.mrf.mxu0
  %v1816 = vadd.f32 %v1683, %v1815
  %v1817 = vpop.f32.mrf.mxu0
  %v1818 = vpop.f32.mrf.mxu0
  %v1819 = vadd.f32 %v1683, %v1818
  %v1820 = vpop.f32.mrf.mxu0
  %1821 = vdwg.mxu0
  %v1822 = vadd.f32 %v1816, %v1469
  %v1823 = vadd.f32 %v1819, %v1470
  %v1824 = vld [vmem:[%s10] sm:$0x1]
  %v1825 = vld [vmem:[%s11] sm:$0x1]
  %1826 = vadd.xlane.f32.xlu0 %v1822
  %v1827 = vpop.xlane.xlu0 %1826
  %1828 = vadd.xlane.f32.xlu0 %v1823
  %v1829 = vpop.xlane.xlu0 %1828
  %v1830 = vrcp.pop 128.0
  %v1831 = vmul.f32 %v1827, %v1830
  %v1832 = vmul.f32 %v1829, %v1830
  %v1833 = vsub.f32 %v1822, %v1831
  %v1834 = vsub.f32 %v1823, %v1832
  %v1835 = vmul.f32 %v1833, %v1833
  %v1836 = vmul.f32 %v1834, %v1834
  %1837 = vadd.xlane.f32.xlu0 %v1835
  %v1838 = vpop.xlane.xlu0 %1837
  %1839 = vadd.xlane.f32.xlu0 %v1836
  %v1840 = vpop.xlane.xlu0 %1839
  %v1841 = vmul.f32 %v1838, %v1830
  %v1842 = vmul.f32 %v1840, %v1830
  %v1843 = vadd.f32 %v1841, 1e-05
  %v1844 = vadd.f32 %v1842, 1e-05
  %v1845 = vrsqrt.pop %v1843
  %v1846 = vrsqrt.pop %v1844
  %v1847 = vmul.f32 %v1833, %v1845
  %v1848 = vmul.f32 %v1834, %v1846
  %v1850 = vlaneseq
  %v1851 = vshrl.u32 %v1850, 7
  %v1852 = vsub.s32 0, %v1851
  %v1853 = vrot.slane %v1824, %v1852
  %v1855 = vmul.f32 %v1847, %v1853
  %v1856 = vmul.f32 %v1848, %v1853
  %v1858 = vlaneseq
  %v1859 = vshrl.u32 %v1858, 7
  %v1860 = vsub.s32 0, %v1859
  %v1861 = vrot.slane %v1825, %v1860
  %v1863 = vadd.f32 %v1855, %v1861
  %v1864 = vadd.f32 %v1856, %v1861
  %1865 = vst [vmem:[%s12] sm:$0xff] %v1863
  %1866 = vst [vmem:[%s12 + $0x8] sm:$0xff] %v1864
  // Predicated region
  $region50: #{_lambda_.7} parent=0 // pred_check
    _
  $region51: #{_lambda_.7} parent=0 // pred_check_branch
    %1868 = sbr.rel (0) target = $region53
  $region52: #{_lambda_.7} parent=0 // pred_region
    _
  $region53: #{_lambda_.7} parent=0 // pred_fallthru
    _
  // Predicated region
  $region54: #{_lambda_.7} parent=0 // pred_check
    _
  $region55: #{_lambda_.7} parent=0 // pred_check_branch
    %1870 = sbr.rel (0) target = $region57
  $region56: #{_lambda_.7} parent=0 // pred_region
    _
  $region57: #{_lambda_.7} parent=0 // pred_fallthru
    _

// kernel: _lambda_.8
$region0: #{_lambda_.8}
  #allocation0 [shape = 'u32[]', space=smem, size = 0x4, offset = 0x4, fixed_abs, tag = 'smem constant byte address 0x4 - core index']
  #allocation1 [shape = 'u32[144,128]{1,0:T(1,128)}', space=vmem, size = 0x12000, scoped, tag = 'internal scratch']
  %s0 = inlined_call_operand.vmem [shape: f32[2,8,128], index: 0, kind: input, shape index: {}]
  %s1 = inlined_call_operand.vmem [shape: f32[2,8,128], index: 1, kind: input, shape index: {}]
  %s2 = inlined_call_operand.vmem [shape: bf16[128,128], index: 2, kind: input, shape index: {}]
  %s3 = inlined_call_operand.vmem [shape: bf16[128,512], index: 3, kind: input, shape index: {}]
  %s4 = inlined_call_operand.vmem [shape: bf16[128,512], index: 4, kind: input, shape index: {}]
  %s5 = inlined_call_operand.vmem [shape: f32[1,512], index: 5, kind: input, shape index: {}]
  %s6 = inlined_call_operand.vmem [shape: f32[1,512], index: 6, kind: input, shape index: {}]
  %s7 = inlined_call_operand.vmem [shape: f32[1,512], index: 7, kind: input, shape index: {}]
  %s8 = inlined_call_operand.vmem [shape: bf16[512,128], index: 8, kind: input, shape index: {}]
  %s9 = inlined_call_operand.vmem [shape: f32[1,128], index: 9, kind: input, shape index: {}]
  %s10 = inlined_call_operand.vmem [shape: f32[2,8,128], index: 10, kind: output, shape index: {0}]
  %s11 = inlined_call_operand.vmem [shape: f32[2,8,128], index: 11, kind: output, shape index: {1}]
  %12 = xla_tuple %s10, %s11
  %s13 = sld [smem:[#allocation0]]
  $region58: #{_lambda_.8} parent=0
    _
  %s15 = ssub.s32 1, %s13
  %s16 = scalar_select 0, %s15, %s13
  // Predicated region
  $region2: #{_lambda_.8} parent=0 // pred_check
    _
  $region3: #{_lambda_.8} parent=0 // pred_check_branch
    %18 = sbr.rel (0) target = $region5
  $region4: #{_lambda_.8} parent=0 // pred_region
    _
  $region5: #{_lambda_.8} parent=0 // pred_fallthru
    _
  // Predicated region
  $region6: #{_lambda_.8} parent=0 // pred_check
    _
  $region7: #{_lambda_.8} parent=0 // pred_check_branch
    %20 = sbr.rel (0) target = $region9
  $region8: #{_lambda_.8} parent=0 // pred_region
    _
  $region9: #{_lambda_.8} parent=0 // pred_fallthru
    _
  // Predicated region
  $region10: #{_lambda_.8} parent=0 // pred_check
    _
  $region11: #{_lambda_.8} parent=0 // pred_check_branch
    %22 = sbr.rel (0) target = $region13
  $region12: #{_lambda_.8} parent=0 // pred_region
    _
  $region13: #{_lambda_.8} parent=0 // pred_fallthru
    _
  // Predicated region
  $region14: #{_lambda_.8} parent=0 // pred_check
    _
  $region15: #{_lambda_.8} parent=0 // pred_check_branch
    %24 = sbr.rel (0) target = $region17
  $region16: #{_lambda_.8} parent=0 // pred_region
    _
  $region17: #{_lambda_.8} parent=0 // pred_fallthru
    _
  // Predicated region
  $region18: #{_lambda_.8} parent=0 // pred_check
    _
  $region19: #{_lambda_.8} parent=0 // pred_check_branch
    %26 = sbr.rel (0) target = $region21
  $region20: #{_lambda_.8} parent=0 // pred_region
    _
  $region21: #{_lambda_.8} parent=0 // pred_fallthru
    _
  // Predicated region
  $region22: #{_lambda_.8} parent=0 // pred_check
    _
  $region23: #{_lambda_.8} parent=0 // pred_check_branch
    %28 = sbr.rel (0) target = $region25
  $region24: #{_lambda_.8} parent=0 // pred_region
    _
  $region25: #{_lambda_.8} parent=0 // pred_fallthru
    _
  // Predicated region
  $region26: #{_lambda_.8} parent=0 // pred_check
    _
  $region27: #{_lambda_.8} parent=0 // pred_check_branch
    %30 = sbr.rel (0) target = $region29
  $region28: #{_lambda_.8} parent=0 // pred_region
    _
  $region29: #{_lambda_.8} parent=0 // pred_fallthru
    _
  // Predicated region
  $region30: #{_lambda_.8} parent=0 // pred_check
    _
  $region31: #{_lambda_.8} parent=0 // pred_check_branch
    %32 = sbr.rel (0) target = $region33
  $region32: #{_lambda_.8} parent=0 // pred_region
    _
  $region33: #{_lambda_.8} parent=0 // pred_fallthru
    _
  // Predicated region
  $region34: #{_lambda_.8} parent=0 // pred_check
    _
  $region35: #{_lambda_.8} parent=0 // pred_check_branch
    %34 = sbr.rel (0) target = $region37
  $region36: #{_lambda_.8} parent=0 // pred_region
    _
  $region37: #{_lambda_.8} parent=0 // pred_fallthru
    _
  // Predicated region
  $region38: #{_lambda_.8} parent=0 // pred_check
    _
  $region39: #{_lambda_.8} parent=0 // pred_check_branch
    %36 = sbr.rel (0) target = $region41
  $region40: #{_lambda_.8} parent=0 // pred_region
    _
  $region41: #{_lambda_.8} parent=0 // pred_fallthru
    _
  %v38 = vld [vmem:[%s0] sm:$0xff]
  %v39 = vld [vmem:[%s0 + $0x8] sm:$0xff]
  %v40 = vld [vmem:[%s1] sm:$0xff]
  %v41 = vld [vmem:[%s1 + $0x8] sm:$0xff]
  %v42 = vpack.c.bf16 %v39, %v38
  %v43 = vld [vmem:[%s2] sm:$0xf]
  %v44 = vld [vmem:[%s2 + $0x4] sm:$0xf]
  %v45 = vld [vmem:[%s2 + $0x8] sm:$0xf]
  %v46 = vld [vmem:[%s2 + $0xc] sm:$0xf]
  %v47 = vld [vmem:[%s2 + $0x10] sm:$0xf]
  %v48 = vld [vmem:[%s2 + $0x14] sm:$0xf]
  %v49 = vld [vmem:[%s2 + $0x18] sm:$0xf]
  %v50 = vld [vmem:[%s2 + $0x1c] sm:$0xf]
  %v51 = vld [vmem:[%s2 + $0x20] sm:$0xf]
  %v52 = vld [vmem:[%s2 + $0x24] sm:$0xf]
  %v53 = vld [vmem:[%s2 + $0x28] sm:$0xf]
  %v54 = vld [vmem:[%s2 + $0x2c] sm:$0xf]
  %v55 = vld [vmem:[%s2 + $0x30] sm:$0xf]
  %v56 = vld [vmem:[%s2 + $0x34] sm:$0xf]
  %v57 = vld [vmem:[%s2 + $0x38] sm:$0xf]
  %v58 = vld [vmem:[%s2 + $0x3c] sm:$0xf]
  %v75 = vunpack.c.l.b16 %v43
  %v76 = vunpack.c.l.b16 %v44
  %v77 = vunpack.c.l.b16 %v45
  %v78 = vunpack.c.l.b16 %v46
  %v79 = vunpack.c.l.b16 %v47
  %v80 = vunpack.c.l.b16 %v48
  %v81 = vunpack.c.l.b16 %v49
  %v82 = vunpack.c.l.b16 %v50
  %v83 = vunpack.c.l.b16 %v51
  %v84 = vunpack.c.l.b16 %v52
  %v85 = vunpack.c.l.b16 %v53
  %v86 = vunpack.c.l.b16 %v54
  %v87 = vunpack.c.l.b16 %v55
  %v88 = vunpack.c.l.b16 %v56
  %v89 = vunpack.c.l.b16 %v57
  %v90 = vunpack.c.l.b16 %v58
  %v91 = vpack.c.b16 %v76, %v75
  %v92 = vpack.c.b16 %v78, %v77
  %v93 = vpack.c.b16 %v80, %v79
  %v94 = vpack.c.b16 %v82, %v81
  %v95 = vpack.c.b16 %v84, %v83
  %v96 = vpack.c.b16 %v86, %v85
  %v97 = vpack.c.b16 %v88, %v87
  %v98 = vpack.c.b16 %v90, %v89
  %107 = vmatprep.subr.bf16.mxu0 0
  %108 = vmatpush1.bf16.msra.mxu0 %v98
  %109 = vmatprep.subr.bf16.mxu0 0
  %110 = vmatpush1.bf16.msra.mxu0 %v97
  %111 = vmatprep.subr.bf16.mxu0 0
  %112 = vmatpush1.bf16.msra.mxu0 %v96
  %113 = vmatprep.subr.bf16.mxu0 0
  %114 = vmatpush1.bf16.msra.mxu0 %v95
  %115 = vmatprep.subr.bf16.mxu0 0
  %116 = vmatpush1.bf16.msra.mxu0 %v94
  %117 = vmatprep.subr.bf16.mxu0 0
  %118 = vmatpush1.bf16.msra.mxu0 %v93
  %119 = vmatprep.subr.bf16.mxu0 0
  %120 = vmatpush1.bf16.msra.mxu0 %v92
  %121 = vmatprep.subr.bf16.mxu0 0
  %122 = vmatpush1.bf16.msra.mxu0 %v91
  %123 = vmatprep.subr.bf16.mxu0 0
  %124 = vmatpush2.bf16.msra.mxu0 0
  %125 = vmatprep.subr.bf16.mxu0 0
  %126 = vmatpush2.bf16.msra.mxu0 0
  %127 = vmatprep.subr.bf16.mxu0 0
  %128 = vmatpush2.bf16.msra.mxu0 0
  %129 = vmatprep.subr.bf16.mxu0 0
  %130 = vmatpush2.bf16.msra.mxu0 0
  %131 = vmatprep.subr.bf16.mxu0 0
  %132 = vmatpush2.bf16.msra.mxu0 0
  %133 = vmatprep.subr.bf16.mxu0 0
  %134 = vmatpush2.bf16.msra.mxu0 0
  %135 = vmatprep.subr.bf16.mxu0 0
  %136 = vmatpush2.bf16.msra.mxu0 0
  %137 = vmatprep.subr.bf16.mxu0 0
  %138 = vmatpush2.bf16.msra.mxu0 0
  %139 = vmatprep.mubr.bf16.mxu0 0
  %140 = vmatmul.mubr.bf16.gmra.mxu0 %v42
  %v141 = vpop.f32.mrf.mxu0
  %v142 = vadd.f32 0.0, %v141
  %v143 = vpop.f32.mrf.mxu0
  %v144 = vpop.f32.mrf.mxu0
  %v145 = vadd.f32 0.0, %v144
  %v146 = vpop.f32.mrf.mxu0
  %147 = vdwg.mxu0
  %v148 = vlaneseq
  %v149 = vshrl.u32 %v148, 7
  %v150 = vsub.s32 0, %v149
  %v151 = vrot.slane %v40, %v150
  %v152 = vlaneseq
  %v153 = vshrl.u32 %v152, 7
  %v154 = vsub.s32 0, %v153
  %v155 = vrot.slane %v41, %v154
  %v156 = vmul.f32 %v142, %v151
  %v157 = vmul.f32 %v145, %v155
  %158 = vadd.xlane.f32.xlu0 %v156
  %v159 = vpop.xlane.xlu0 %158
  %160 = vadd.xlane.f32.xlu0 %v157
  %v161 = vpop.xlane.xlu0 %160
  %v162 = vlaneseq
  %v163 = vshrl.u32 %v162, 7
  %v164 = vsub.s32 0, %v163
  %v165 = vrot.slane %v142, %v164
  %v166 = vlaneseq
  %v167 = vshrl.u32 %v166, 7
  %v168 = vsub.s32 0, %v167
  %v169 = vrot.slane %v145, %v168
  %v170 = vmul.f32 %v165, %v40
  %v171 = vmul.f32 %v169, %v41
  %172 = vadd.xlane.f32.xlu0 %v170
  %v173 = vpop.xlane.xlu0 %172
  %174 = vadd.xlane.f32.xlu0 %v171
  %v175 = vpop.xlane.xlu0 %174
  %v176 = vld [vmem:[%s3] sm:$0xff]
  %v177 = vld [vmem:[%s3 + $0x8] sm:$0xff]
  %v178 = vld [vmem:[%s3 + $0x10] sm:$0xff]
  %v179 = vld [vmem:[%s3 + $0x18] sm:$0xff]
  %v180 = vld [vmem:[%s3 + $0x20] sm:$0xff]
  %v181 = vld [vmem:[%s3 + $0x28] sm:$0xff]
  %v182 = vld [vmem:[%s3 + $0x30] sm:$0xff]
  %v183 = vld [vmem:[%s3 + $0x38] sm:$0xff]
  %v184 = vld [vmem:[%s3 + $0x40] sm:$0xff]
  %v185 = vld [vmem:[%s3 + $0x48] sm:$0xff]
  %v186 = vld [vmem:[%s3 + $0x50] sm:$0xff]
  %v187 = vld [vmem:[%s3 + $0x58] sm:$0xff]
  %v188 = vld [vmem:[%s3 + $0x60] sm:$0xff]
  %v189 = vld [vmem:[%s3 + $0x68] sm:$0xff]
  %v190 = vld [vmem:[%s3 + $0x70] sm:$0xff]
  %v191 = vld [vmem:[%s3 + $0x78] sm:$0xff]
  %v192 = vld [vmem:[%s3 + $0x80] sm:$0xff]
  %v193 = vld [vmem:[%s3 + $0x88] sm:$0xff]
  %v194 = vld [vmem:[%s3 + $0x90] sm:$0xff]
  %v195 = vld [vmem:[%s3 + $0x98] sm:$0xff]
  %v196 = vld [vmem:[%s3 + $0xa0] sm:$0xff]
  %v197 = vld [vmem:[%s3 + $0xa8] sm:$0xff]
  %v198 = vld [vmem:[%s3 + $0xb0] sm:$0xff]
  %v199 = vld [vmem:[%s3 + $0xb8] sm:$0xff]
  %v200 = vld [vmem:[%s3 + $0xc0] sm:$0xff]
  %v201 = vld [vmem:[%s3 + $0xc8] sm:$0xff]
  %v202 = vld [vmem:[%s3 + $0xd0] sm:$0xff]
  %v203 = vld [vmem:[%s3 + $0xd8] sm:$0xff]
  %v204 = vld [vmem:[%s3 + $0xe0] sm:$0xff]
  %v205 = vld [vmem:[%s3 + $0xe8] sm:$0xff]
  %v206 = vld [vmem:[%s3 + $0xf0] sm:$0xff]
  %v207 = vld [vmem:[%s3 + $0xf8] sm:$0xff]
  %v208 = vld [vmem:[%s4] sm:$0xff]
  %v209 = vld [vmem:[%s4 + $0x8] sm:$0xff]
  %v210 = vld [vmem:[%s4 + $0x10] sm:$0xff]
  %v211 = vld [vmem:[%s4 + $0x18] sm:$0xff]
  %v212 = vld [vmem:[%s4 + $0x20] sm:$0xff]
  %v213 = vld [vmem:[%s4 + $0x28] sm:$0xff]
  %v214 = vld [vmem:[%s4 + $0x30] sm:$0xff]
  %v215 = vld [vmem:[%s4 + $0x38] sm:$0xff]
  %v216 = vld [vmem:[%s4 + $0x40] sm:$0xff]
  %v217 = vld [vmem:[%s4 + $0x48] sm:$0xff]
  %v218 = vld [vmem:[%s4 + $0x50] sm:$0xff]
  %v219 = vld [vmem:[%s4 + $0x58] sm:$0xff]
  %v220 = vld [vmem:[%s4 + $0x60] sm:$0xff]
  %v221 = vld [vmem:[%s4 + $0x68] sm:$0xff]
  %v222 = vld [vmem:[%s4 + $0x70] sm:$0xff]
  %v223 = vld [vmem:[%s4 + $0x78] sm:$0xff]
  %v224 = vld [vmem:[%s4 + $0x80] sm:$0xff]
  %v225 = vld [vmem:[%s4 + $0x88] sm:$0xff]
  %v226 = vld [vmem:[%s4 + $0x90] sm:$0xff]
  %v227 = vld [vmem:[%s4 + $0x98] sm:$0xff]
  %v228 = vld [vmem:[%s4 + $0xa0] sm:$0xff]
  %v229 = vld [vmem:[%s4 + $0xa8] sm:$0xff]
  %v230 = vld [vmem:[%s4 + $0xb0] sm:$0xff]
  %v231 = vld [vmem:[%s4 + $0xb8] sm:$0xff]
  %v232 = vld [vmem:[%s4 + $0xc0] sm:$0xff]
  %v233 = vld [vmem:[%s4 + $0xc8] sm:$0xff]
  %v234 = vld [vmem:[%s4 + $0xd0] sm:$0xff]
  %v235 = vld [vmem:[%s4 + $0xd8] sm:$0xff]
  %v236 = vld [vmem:[%s4 + $0xe0] sm:$0xff]
  %v237 = vld [vmem:[%s4 + $0xe8] sm:$0xff]
  %v238 = vld [vmem:[%s4 + $0xf0] sm:$0xff]
  %v239 = vld [vmem:[%s4 + $0xf8] sm:$0xff]
  %v240 = vld [vmem:[%s5] sm:$0xf]
  %v241 = vld [vmem:[%s6] sm:$0xf]
  %v242 = vld [vmem:[%s7] sm:$0xf]
  %v243 = vld [vmem:[%s8] sm:$0xf]
  %v244 = vld [vmem:[%s8 + $0x4] sm:$0xf]
  %v245 = vld [vmem:[%s8 + $0x8] sm:$0xf]
  %v246 = vld [vmem:[%s8 + $0xc] sm:$0xf]
  %v247 = vld [vmem:[%s8 + $0x10] sm:$0xf]
  %v248 = vld [vmem:[%s8 + $0x14] sm:$0xf]
  %v249 = vld [vmem:[%s8 + $0x18] sm:$0xf]
  %v250 = vld [vmem:[%s8 + $0x1c] sm:$0xf]
  %v251 = vld [vmem:[%s8 + $0x20] sm:$0xf]
  %v252 = vld [vmem:[%s8 + $0x24] sm:$0xf]
  %v253 = vld [vmem:[%s8 + $0x28] sm:$0xf]
  %v254 = vld [vmem:[%s8 + $0x2c] sm:$0xf]
  %v255 = vld [vmem:[%s8 + $0x30] sm:$0xf]
  %v256 = vld [vmem:[%s8 + $0x34] sm:$0xf]
  %v257 = vld [vmem:[%s8 + $0x38] sm:$0xf]
  %v258 = vld [vmem:[%s8 + $0x3c] sm:$0xf]
  %v259 = vld [vmem:[%s8 + $0x40] sm:$0xf]
  %v260 = vld [vmem:[%s8 + $0x44] sm:$0xf]
  %v261 = vld [vmem:[%s8 + $0x48] sm:$0xf]
  %v262 = vld [vmem:[%s8 + $0x4c] sm:$0xf]
  %v263 = vld [vmem:[%s8 + $0x50] sm:$0xf]
  %v264 = vld [vmem:[%s8 + $0x54] sm:$0xf]
  %v265 = vld [vmem:[%s8 + $0x58] sm:$0xf]
  %v266 = vld [vmem:[%s8 + $0x5c] sm:$0xf]
  %v267 = vld [vmem:[%s8 + $0x60] sm:$0xf]
  %v268 = vld [vmem:[%s8 + $0x64] sm:$0xf]
  %v269 = vld [vmem:[%s8 + $0x68] sm:$0xf]
  %v270 = vld [vmem:[%s8 + $0x6c] sm:$0xf]
  %v271 = vld [vmem:[%s8 + $0x70] sm:$0xf]
  %v272 = vld [vmem:[%s8 + $0x74] sm:$0xf]
  %v273 = vld [vmem:[%s8 + $0x78] sm:$0xf]
  %v274 = vld [vmem:[%s8 + $0x7c] sm:$0xf]
  %v275 = vld [vmem:[%s8 + $0x80] sm:$0xf]
  %v276 = vld [vmem:[%s8 + $0x84] sm:$0xf]
  %v277 = vld [vmem:[%s8 + $0x88] sm:$0xf]
  %v278 = vld [vmem:[%s8 + $0x8c] sm:$0xf]
  %v279 = vld [vmem:[%s8 + $0x90] sm:$0xf]
  %v280 = vld [vmem:[%s8 + $0x94] sm:$0xf]
  %v281 = vld [vmem:[%s8 + $0x98] sm:$0xf]
  %v282 = vld [vmem:[%s8 + $0x9c] sm:$0xf]
  %v283 = vld [vmem:[%s8 + $0xa0] sm:$0xf]
  %v284 = vld [vmem:[%s8 + $0xa4] sm:$0xf]
  %v285 = vld [vmem:[%s8 + $0xa8] sm:$0xf]
  %v286 = vld [vmem:[%s8 + $0xac] sm:$0xf]
  %v287 = vld [vmem:[%s8 + $0xb0] sm:$0xf]
  %v288 = vld [vmem:[%s8 + $0xb4] sm:$0xf]
  %v289 = vld [vmem:[%s8 + $0xb8] sm:$0xf]
  %v290 = vld [vmem:[%s8 + $0xbc] sm:$0xf]
  %v291 = vld [vmem:[%s8 + $0xc0] sm:$0xf]
  %v292 = vld [vmem:[%s8 + $0xc4] sm:$0xf]
  %v293 = vld [vmem:[%s8 + $0xc8] sm:$0xf]
  %v294 = vld [vmem:[%s8 + $0xcc] sm:$0xf]
  %v295 = vld [vmem:[%s8 + $0xd0] sm:$0xf]
  %v296 = vld [vmem:[%s8 + $0xd4] sm:$0xf]
  %v297 = vld [vmem:[%s8 + $0xd8] sm:$0xf]
  %v298 = vld [vmem:[%s8 + $0xdc] sm:$0xf]
  %v299 = vld [vmem:[%s8 + $0xe0] sm:$0xf]
  %v300 = vld [vmem:[%s8 + $0xe4] sm:$0xf]
  %v301 = vld [vmem:[%s8 + $0xe8] sm:$0xf]
  %v302 = vld [vmem:[%s8 + $0xec] sm:$0xf]
  %v303 = vld [vmem:[%s8 + $0xf0] sm:$0xf]
  %v304 = vld [vmem:[%s8 + $0xf4] sm:$0xf]
  %v305 = vld [vmem:[%s8 + $0xf8] sm:$0xf]
  %v306 = vld [vmem:[%s8 + $0xfc] sm:$0xf]
  %v307 = vld [vmem:[%s9] sm:$0x1]
  %v308 = vpack.c.bf16 %v40, %v40
  %v309 = vpack.c.bf16 %v41, %v41
  %v312 = vunpack.c.l.b16 %v308
  %v313 = vunpack.c.l.b16 %v309
  %v314 = vrot.slane %v313, 7
  %vm315 = vcmask 1041409
  %v316 = vsel %vm315, %v314, %v312
  %v317 = vpack.c.b16 %v316, %v316
  %v351 = vunpack.c.l.b16 %v208
  %v352 = vunpack.c.h.b16 %v208
  %v353 = vunpack.c.l.b16 %v209
  %v354 = vunpack.c.h.b16 %v209
  %v355 = vunpack.c.l.b16 %v210
  %v356 = vunpack.c.h.b16 %v210
  %v357 = vunpack.c.l.b16 %v211
  %v358 = vunpack.c.h.b16 %v211
  %v359 = vunpack.c.l.b16 %v212
  %v360 = vunpack.c.h.b16 %v212
  %v361 = vunpack.c.l.b16 %v213
  %v362 = vunpack.c.h.b16 %v213
  %v363 = vunpack.c.l.b16 %v214
  %v364 = vunpack.c.h.b16 %v214
  %v365 = vunpack.c.l.b16 %v215
  %v366 = vunpack.c.h.b16 %v215
  %v367 = vunpack.c.l.b16 %v216
  %v368 = vunpack.c.h.b16 %v216
  %v369 = vunpack.c.l.b16 %v217
  %v370 = vunpack.c.h.b16 %v217
  %v371 = vunpack.c.l.b16 %v218
  %v372 = vunpack.c.h.b16 %v218
  %v373 = vunpack.c.l.b16 %v219
  %v374 = vunpack.c.h.b16 %v219
  %v375 = vunpack.c.l.b16 %v220
  %v376 = vunpack.c.h.b16 %v220
  %v377 = vunpack.c.l.b16 %v221
  %v378 = vunpack.c.h.b16 %v221
  %v379 = vunpack.c.l.b16 %v222
  %v380 = vunpack.c.h.b16 %v222
  %v381 = vunpack.c.l.b16 %v223
  %v382 = vunpack.c.h.b16 %v223
  %v383 = vunpack.c.l.b16 %v224
  %v384 = vunpack.c.h.b16 %v224
  %v385 = vunpack.c.l.b16 %v225
  %v386 = vunpack.c.h.b16 %v225
  %v387 = vunpack.c.l.b16 %v226
  %v388 = vunpack.c.h.b16 %v226
  %v389 = vunpack.c.l.b16 %v227
  %v390 = vunpack.c.h.b16 %v227
  %v391 = vunpack.c.l.b16 %v228
  %v392 = vunpack.c.h.b16 %v228
  %v393 = vunpack.c.l.b16 %v229
  %v394 = vunpack.c.h.b16 %v229
  %v395 = vunpack.c.l.b16 %v230
  %v396 = vunpack.c.h.b16 %v230
  %v397 = vunpack.c.l.b16 %v231
  %v398 = vunpack.c.h.b16 %v231
  %v399 = vunpack.c.l.b16 %v232
  %v400 = vunpack.c.h.b16 %v232
  %v401 = vunpack.c.l.b16 %v233
  %v402 = vunpack.c.h.b16 %v233
  %v403 = vunpack.c.l.b16 %v234
  %v404 = vunpack.c.h.b16 %v234
  %v405 = vunpack.c.l.b16 %v235
  %v406 = vunpack.c.h.b16 %v235
  %v407 = vunpack.c.l.b16 %v236
  %v408 = vunpack.c.h.b16 %v236
  %v409 = vunpack.c.l.b16 %v237
  %v410 = vunpack.c.h.b16 %v237
  %v411 = vunpack.c.l.b16 %v238
  %v412 = vunpack.c.h.b16 %v238
  %v413 = vunpack.c.l.b16 %v239
  %v414 = vunpack.c.h.b16 %v239
  %v415 = vpack.c.b16 %v355, %v351
  %v416 = vpack.c.b16 %v356, %v352
  %v417 = vpack.c.b16 %v357, %v353
  %v418 = vpack.c.b16 %v358, %v354
  %v419 = vpack.c.b16 %v363, %v359
  %v420 = vpack.c.b16 %v364, %v360
  %v421 = vpack.c.b16 %v365, %v361
  %v422 = vpack.c.b16 %v366, %v362
  %v423 = vpack.c.b16 %v371, %v367
  %v424 = vpack.c.b16 %v372, %v368
  %v425 = vpack.c.b16 %v373, %v369
  %v426 = vpack.c.b16 %v374, %v370
  %v427 = vpack.c.b16 %v379, %v375
  %v428 = vpack.c.b16 %v380, %v376
  %v429 = vpack.c.b16 %v381, %v377
  %v430 = vpack.c.b16 %v382, %v378
  %v431 = vpack.c.b16 %v387, %v383
  %v432 = vpack.c.b16 %v388, %v384
  %v433 = vpack.c.b16 %v389, %v385
  %v434 = vpack.c.b16 %v390, %v386
  %v435 = vpack.c.b16 %v395, %v391
  %v436 = vpack.c.b16 %v396, %v392
  %v437 = vpack.c.b16 %v397, %v393
  %v438 = vpack.c.b16 %v398, %v394
  %v439 = vpack.c.b16 %v403, %v399
  %v440 = vpack.c.b16 %v404, %v400
  %v441 = vpack.c.b16 %v405, %v401
  %v442 = vpack.c.b16 %v406, %v402
  %v443 = vpack.c.b16 %v411, %v407
  %v444 = vpack.c.b16 %v412, %v408
  %v445 = vpack.c.b16 %v413, %v409
  %v446 = vpack.c.b16 %v414, %v410
  %479 = vmatprep.subr.bf16.mxu0 %v444
  %480 = vmatpush1.bf16.msra.mxu0 %v443
  %481 = vmatprep.subr.bf16.mxu0 %v440
  %482 = vmatpush1.bf16.msra.mxu0 %v439
  %483 = vmatprep.subr.bf16.mxu0 %v436
  %484 = vmatpush1.bf16.msra.mxu0 %v435
  %485 = vmatprep.subr.bf16.mxu0 %v432
  %486 = vmatpush1.bf16.msra.mxu0 %v431
  %487 = vmatprep.subr.bf16.mxu0 %v428
  %488 = vmatpush1.bf16.msra.mxu0 %v427
  %489 = vmatprep.subr.bf16.mxu0 %v424
  %490 = vmatpush1.bf16.msra.mxu0 %v423
  %491 = vmatprep.subr.bf16.mxu0 %v420
  %492 = vmatpush1.bf16.msra.mxu0 %v419
  %493 = vmatprep.subr.bf16.mxu0 %v416
  %494 = vmatpush1.bf16.msra.mxu0 %v415
  %495 = vmatprep.subr.bf16.mxu0 0
  %496 = vmatpush2.bf16.msra.mxu0 0
  %497 = vmatprep.subr.bf16.mxu0 0
  %498 = vmatpush2.bf16.msra.mxu0 0
  %499 = vmatprep.subr.bf16.mxu0 0
  %500 = vmatpush2.bf16.msra.mxu0 0
  %501 = vmatprep.subr.bf16.mxu0 0
  %502 = vmatpush2.bf16.msra.mxu0 0
  %503 = vmatprep.subr.bf16.mxu0 0
  %504 = vmatpush2.bf16.msra.mxu0 0
  %505 = vmatprep.subr.bf16.mxu0 0
  %506 = vmatpush2.bf16.msra.mxu0 0
  %507 = vmatprep.subr.bf16.mxu0 0
  %508 = vmatpush2.bf16.msra.mxu0 0
  %509 = vmatprep.subr.bf16.mxu0 0
  %510 = vmatpush2.bf16.msra.mxu0 0
  %511 = vmatprep.mubr.bf16.mxu0 0
  %512 = vmatmul.mubr.bf16.gmra.mxu0 %v317
  %v513 = vpop.f32.mrf.mxu0
  %v514 = vadd.f32 0.0, %v513
  %v515 = vpop.f32.mrf.mxu0
  %v516 = vadd.f32 0.0, %v515
  %v517 = vpop.f32.mrf.mxu0
  %v518 = vpop.f32.mrf.mxu0
  %519 = vdwg.mxu0
  %520 = vmatprep.subr.bf16.mxu0 %v446
  %521 = vmatpush1.bf16.msra.mxu0 %v445
  %522 = vmatprep.subr.bf16.mxu0 %v442
  %523 = vmatpush1.bf16.msra.mxu0 %v441
  %524 = vmatprep.subr.bf16.mxu0 %v438
  %525 = vmatpush1.bf16.msra.mxu0 %v437
  %526 = vmatprep.subr.bf16.mxu0 %v434
  %527 = vmatpush1.bf16.msra.mxu0 %v433
  %528 = vmatprep.subr.bf16.mxu0 %v430
  %529 = vmatpush1.bf16.msra.mxu0 %v429
  %530 = vmatprep.subr.bf16.mxu0 %v426
  %531 = vmatpush1.bf16.msra.mxu0 %v425
  %532 = vmatprep.subr.bf16.mxu0 %v422
  %533 = vmatpush1.bf16.msra.mxu0 %v421
  %534 = vmatprep.subr.bf16.mxu0 %v418
  %535 = vmatpush1.bf16.msra.mxu0 %v417
  %536 = vmatprep.subr.bf16.mxu0 0
  %537 = vmatpush2.bf16.msra.mxu0 0
  %538 = vmatprep.subr.bf16.mxu0 0
  %539 = vmatpush2.bf16.msra.mxu0 0
  %540 = vmatprep.subr.bf16.mxu0 0
  %541 = vmatpush2.bf16.msra.mxu0 0
  %542 = vmatprep.subr.bf16.mxu0 0
  %543 = vmatpush2.bf16.msra.mxu0 0
  %544 = vmatprep.subr.bf16.mxu0 0
  %545 = vmatpush2.bf16.msra.mxu0 0
  %546 = vmatprep.subr.bf16.mxu0 0
  %547 = vmatpush2.bf16.msra.mxu0 0
  %548 = vmatprep.subr.bf16.mxu0 0
  %549 = vmatpush2.bf16.msra.mxu0 0
  %550 = vmatprep.subr.bf16.mxu0 0
  %551 = vmatpush2.bf16.msra.mxu0 0
  %552 = vmatprep.mubr.bf16.mxu0 0
  %553 = vmatmul.mubr.bf16.gmra.mxu0 %v317
  %v554 = vpop.f32.mrf.mxu0
  %v555 = vadd.f32 0.0, %v554
  %v556 = vpop.f32.mrf.mxu0
  %v557 = vadd.f32 0.0, %v556
  %v558 = vpop.f32.mrf.mxu0
  %v559 = vpop.f32.mrf.mxu0
  %560 = vdwg.mxu0
  %v593 = vunpack.c.l.b16 %v176
  %v594 = vunpack.c.h.b16 %v176
  %v595 = vunpack.c.l.b16 %v177
  %v596 = vunpack.c.h.b16 %v177
  %v597 = vunpack.c.l.b16 %v178
  %v598 = vunpack.c.h.b16 %v178
  %v599 = vunpack.c.l.b16 %v179
  %v600 = vunpack.c.h.b16 %v179
  %v601 = vunpack.c.l.b16 %v180
  %v602 = vunpack.c.h.b16 %v180
  %v603 = vunpack.c.l.b16 %v181
  %v604 = vunpack.c.h.b16 %v181
  %v605 = vunpack.c.l.b16 %v182
  %v606 = vunpack.c.h.b16 %v182
  %v607 = vunpack.c.l.b16 %v183
  %v608 = vunpack.c.h.b16 %v183
  %v609 = vunpack.c.l.b16 %v184
  %v610 = vunpack.c.h.b16 %v184
  %v611 = vunpack.c.l.b16 %v185
  %v612 = vunpack.c.h.b16 %v185
  %v613 = vunpack.c.l.b16 %v186
  %v614 = vunpack.c.h.b16 %v186
  %v615 = vunpack.c.l.b16 %v187
  %v616 = vunpack.c.h.b16 %v187
  %v617 = vunpack.c.l.b16 %v188
  %v618 = vunpack.c.h.b16 %v188
  %v619 = vunpack.c.l.b16 %v189
  %v620 = vunpack.c.h.b16 %v189
  %v621 = vunpack.c.l.b16 %v190
  %v622 = vunpack.c.h.b16 %v190
  %v623 = vunpack.c.l.b16 %v191
  %v624 = vunpack.c.h.b16 %v191
  %v625 = vunpack.c.l.b16 %v192
  %v626 = vunpack.c.h.b16 %v192
  %v627 = vunpack.c.l.b16 %v193
  %v628 = vunpack.c.h.b16 %v193
  %v629 = vunpack.c.l.b16 %v194
  %v630 = vunpack.c.h.b16 %v194
  %v631 = vunpack.c.l.b16 %v195
  %v632 = vunpack.c.h.b16 %v195
  %v633 = vunpack.c.l.b16 %v196
  %v634 = vunpack.c.h.b16 %v196
  %v635 = vunpack.c.l.b16 %v197
  %v636 = vunpack.c.h.b16 %v197
  %v637 = vunpack.c.l.b16 %v198
  %v638 = vunpack.c.h.b16 %v198
  %v639 = vunpack.c.l.b16 %v199
  %v640 = vunpack.c.h.b16 %v199
  %v641 = vunpack.c.l.b16 %v200
  %v642 = vunpack.c.h.b16 %v200
  %v643 = vunpack.c.l.b16 %v201
  %v644 = vunpack.c.h.b16 %v201
  %v645 = vunpack.c.l.b16 %v202
  %v646 = vunpack.c.h.b16 %v202
  %v647 = vunpack.c.l.b16 %v203
  %v648 = vunpack.c.h.b16 %v203
  %v649 = vunpack.c.l.b16 %v204
  %v650 = vunpack.c.h.b16 %v204
  %v651 = vunpack.c.l.b16 %v205
  %v652 = vunpack.c.h.b16 %v205
  %v653 = vunpack.c.l.b16 %v206
  %v654 = vunpack.c.h.b16 %v206
  %v655 = vunpack.c.l.b16 %v207
  %v656 = vunpack.c.h.b16 %v207
  %v657 = vpack.c.b16 %v597, %v593
  %v658 = vpack.c.b16 %v598, %v594
  %v659 = vpack.c.b16 %v599, %v595
  %v660 = vpack.c.b16 %v600, %v596
  %v661 = vpack.c.b16 %v605, %v601
  %v662 = vpack.c.b16 %v606, %v602
  %v663 = vpack.c.b16 %v607, %v603
  %v664 = vpack.c.b16 %v608, %v604
  %v665 = vpack.c.b16 %v613, %v609
  %v666 = vpack.c.b16 %v614, %v610
  %v667 = vpack.c.b16 %v615, %v611
  %v668 = vpack.c.b16 %v616, %v612
  %v669 = vpack.c.b16 %v621, %v617
  %v670 = vpack.c.b16 %v622, %v618
  %v671 = vpack.c.b16 %v623, %v619
  %v672 = vpack.c.b16 %v624, %v620
  %v673 = vpack.c.b16 %v629, %v625
  %v674 = vpack.c.b16 %v630, %v626
  %v675 = vpack.c.b16 %v631, %v627
  %v676 = vpack.c.b16 %v632, %v628
  %v677 = vpack.c.b16 %v637, %v633
  %v678 = vpack.c.b16 %v638, %v634
  %v679 = vpack.c.b16 %v639, %v635
  %v680 = vpack.c.b16 %v640, %v636
  %v681 = vpack.c.b16 %v645, %v641
  %v682 = vpack.c.b16 %v646, %v642
  %v683 = vpack.c.b16 %v647, %v643
  %v684 = vpack.c.b16 %v648, %v644
  %v685 = vpack.c.b16 %v653, %v649
  %v686 = vpack.c.b16 %v654, %v650
  %v687 = vpack.c.b16 %v655, %v651
  %v688 = vpack.c.b16 %v656, %v652
  %721 = vmatprep.subr.bf16.mxu0 %v686
  %722 = vmatpush1.bf16.msra.mxu0 %v685
  %723 = vmatprep.subr.bf16.mxu0 %v682
  %724 = vmatpush1.bf16.msra.mxu0 %v681
  %725 = vmatprep.subr.bf16.mxu0 %v678
  %726 = vmatpush1.bf16.msra.mxu0 %v677
  %727 = vmatprep.subr.bf16.mxu0 %v674
  %728 = vmatpush1.bf16.msra.mxu0 %v673
  %729 = vmatprep.subr.bf16.mxu0 %v670
  %730 = vmatpush1.bf16.msra.mxu0 %v669
  %731 = vmatprep.subr.bf16.mxu0 %v666
  %732 = vmatpush1.bf16.msra.mxu0 %v665
  %733 = vmatprep.subr.bf16.mxu0 %v662
  %734 = vmatpush1.bf16.msra.mxu0 %v661
  %735 = vmatprep.subr.bf16.mxu0 %v658
  %736 = vmatpush1.bf16.msra.mxu0 %v657
  %737 = vmatprep.subr.bf16.mxu0 0
  %738 = vmatpush2.bf16.msra.mxu0 0
  %739 = vmatprep.subr.bf16.mxu0 0
  %740 = vmatpush2.bf16.msra.mxu0 0
  %741 = vmatprep.subr.bf16.mxu0 0
  %742 = vmatpush2.bf16.msra.mxu0 0
  %743 = vmatprep.subr.bf16.mxu0 0
  %744 = vmatpush2.bf16.msra.mxu0 0
  %745 = vmatprep.subr.bf16.mxu0 0
  %746 = vmatpush2.bf16.msra.mxu0 0
  %747 = vmatprep.subr.bf16.mxu0 0
  %748 = vmatpush2.bf16.msra.mxu0 0
  %749 = vmatprep.subr.bf16.mxu0 0
  %750 = vmatpush2.bf16.msra.mxu0 0
  %751 = vmatprep.subr.bf16.mxu0 0
  %752 = vmatpush2.bf16.msra.mxu0 0
  %753 = vmatprep.mubr.bf16.mxu0 0
  %754 = vmatmul.mubr.bf16.gmra.mxu0 %v42
  %v755 = vpop.f32.mrf.mxu0
  %v756 = vadd.f32 0.0, %v755
  %v757 = vpop.f32.mrf.mxu0
  %v758 = vadd.f32 0.0, %v757
  %v759 = vpop.f32.mrf.mxu0
  %v760 = vadd.f32 0.0, %v759
  %v761 = vpop.f32.mrf.mxu0
  %v762 = vadd.f32 0.0, %v761
  %763 = vdwg.mxu0
  %764 = vmatprep.subr.bf16.mxu0 %v688
  %765 = vmatpush1.bf16.msra.mxu0 %v687
  %766 = vmatprep.subr.bf16.mxu0 %v684
  %767 = vmatpush1.bf16.msra.mxu0 %v683
  %768 = vmatprep.subr.bf16.mxu0 %v680
  %769 = vmatpush1.bf16.msra.mxu0 %v679
  %770 = vmatprep.subr.bf16.mxu0 %v676
  %771 = vmatpush1.bf16.msra.mxu0 %v675
  %772 = vmatprep.subr.bf16.mxu0 %v672
  %773 = vmatpush1.bf16.msra.mxu0 %v671
  %774 = vmatprep.subr.bf16.mxu0 %v668
  %775 = vmatpush1.bf16.msra.mxu0 %v667
  %776 = vmatprep.subr.bf16.mxu0 %v664
  %777 = vmatpush1.bf16.msra.mxu0 %v663
  %778 = vmatprep.subr.bf16.mxu0 %v660
  %779 = vmatpush1.bf16.msra.mxu0 %v659
  %780 = vmatprep.subr.bf16.mxu0 0
  %781 = vmatpush2.bf16.msra.mxu0 0
  %782 = vmatprep.subr.bf16.mxu0 0
  %783 = vmatpush2.bf16.msra.mxu0 0
  %784 = vmatprep.subr.bf16.mxu0 0
  %785 = vmatpush2.bf16.msra.mxu0 0
  %786 = vmatprep.subr.bf16.mxu0 0
  %787 = vmatpush2.bf16.msra.mxu0 0
  %788 = vmatprep.subr.bf16.mxu0 0
  %789 = vmatpush2.bf16.msra.mxu0 0
  %790 = vmatprep.subr.bf16.mxu0 0
  %791 = vmatpush2.bf16.msra.mxu0 0
  %792 = vmatprep.subr.bf16.mxu0 0
  %793 = vmatpush2.bf16.msra.mxu0 0
  %794 = vmatprep.subr.bf16.mxu0 0
  %795 = vmatpush2.bf16.msra.mxu0 0
  %796 = vmatprep.mubr.bf16.mxu0 0
  %797 = vmatmul.mubr.bf16.gmra.mxu0 %v42
  %v798 = vpop.f32.mrf.mxu0
  %v799 = vadd.f32 0.0, %v798
  %v800 = vpop.f32.mrf.mxu0
  %v801 = vadd.f32 0.0, %v800
  %v802 = vpop.f32.mrf.mxu0
  %v803 = vadd.f32 0.0, %v802
  %v804 = vpop.f32.mrf.mxu0
  %v805 = vadd.f32 0.0, %v804
  %806 = vdwg.mxu0
  %v811 = vcombine.low %v514, %v516
  %v812 = vcombine.low %v555, %v557
  %v814 = vunpack.c.l.s4 1966171168
  %v815 = vunpack.c.0.s8 %v814
  %v816 = vlaneseq
  %v817 = vshrl.u32 %v816, 7
  %v818 = vsub.s32 %v815, %v817
  %v819 = vrot.slane %v811, %v818
  %v821 = vunpack.c.l.s4 1966171168
  %v822 = vunpack.c.0.s8 %v821
  %v823 = vlaneseq
  %v824 = vshrl.u32 %v823, 7
  %v825 = vsub.s32 %v822, %v824
  %v826 = vrot.slane %v812, %v825
  %v827 = vcombine.low %v819, %v826
  %v828 = vcombine.high %v819, %v826
  %v830 = vunpack.c.l.s4 1966171168
  %v831 = vunpack.c.0.s8 %v830
  %v832 = vlaneseq
  %v833 = vshrl.u32 %v832, 7
  %v834 = vsub.s32 %v831, %v833
  %v835 = vrot.slane %v827, %v834
  %v837 = vunpack.c.l.s4 1966171168
  %v838 = vunpack.c.0.s8 %v837
  %v839 = vlaneseq
  %v840 = vshrl.u32 %v839, 7
  %v841 = vsub.s32 %v838, %v840
  %v842 = vrot.slane %v828, %v841
  %v843 = vlaneseq
  %v844 = vshrl.u32 %v843, 7
  %v845 = vsub.s32 0, %v844
  %v846 = vrot.slane %v835, %v845
  %v847 = vlaneseq
  %v848 = vshrl.u32 %v847, 7
  %v849 = vsub.s32 1, %v848
  %v850 = vrot.slane %v835, %v849
  %v851 = vlaneseq
  %v852 = vshrl.u32 %v851, 7
  %v853 = vsub.s32 2, %v852
  %v854 = vrot.slane %v835, %v853
  %v855 = vlaneseq
  %v856 = vshrl.u32 %v855, 7
  %v857 = vsub.s32 3, %v856
  %v858 = vrot.slane %v835, %v857
  %v859 = vlaneseq
  %v860 = vshrl.u32 %v859, 7
  %v861 = vsub.s32 0, %v860
  %v862 = vrot.slane %v842, %v861
  %v863 = vlaneseq
  %v864 = vshrl.u32 %v863, 7
  %v865 = vsub.s32 1, %v864
  %v866 = vrot.slane %v842, %v865
  %v867 = vlaneseq
  %v868 = vshrl.u32 %v867, 7
  %v869 = vsub.s32 2, %v868
  %v870 = vrot.slane %v842, %v869
  %v871 = vlaneseq
  %v872 = vshrl.u32 %v871, 7
  %v873 = vsub.s32 3, %v872
  %v874 = vrot.slane %v842, %v873
  %v883 = vadd.f32 %v756, %v846
  %v884 = vadd.f32 %v758, %v850
  %v885 = vadd.f32 %v799, %v854
  %v886 = vadd.f32 %v801, %v858
  %v887 = vadd.f32 %v760, %v862
  %v888 = vadd.f32 %v762, %v866
  %v889 = vadd.f32 %v803, %v870
  %v890 = vadd.f32 %v805, %v874
  %v892 = vlaneseq
  %v893 = vshrl.u32 %v892, 7
  %v894 = vsub.s32 0, %v893
  %v895 = vrot.slane %v240, %v894
  %v896 = vlaneseq
  %v897 = vshrl.u32 %v896, 7
  %v898 = vsub.s32 1, %v897
  %v899 = vrot.slane %v240, %v898
  %v900 = vlaneseq
  %v901 = vshrl.u32 %v900, 7
  %v902 = vsub.s32 2, %v901
  %v903 = vrot.slane %v240, %v902
  %v904 = vlaneseq
  %v905 = vshrl.u32 %v904, 7
  %v906 = vsub.s32 3, %v905
  %v907 = vrot.slane %v240, %v906
  %v912 = vadd.f32 %v883, %v895
  %v913 = vadd.f32 %v884, %v899
  %v914 = vadd.f32 %v885, %v903
  %v915 = vadd.f32 %v886, %v907
  %v916 = vadd.f32 %v887, %v895
  %v917 = vadd.f32 %v888, %v899
  %v918 = vadd.f32 %v889, %v903
  %v919 = vadd.f32 %v890, %v907
  %v920 = vmul.f32 %v912, 0.5
  %v921 = vmul.f32 %v913, 0.5
  %v922 = vmul.f32 %v914, 0.5
  %v923 = vmul.f32 %v915, 0.5
  %v924 = vmul.f32 %v916, 0.5
  %v925 = vmul.f32 %v917, 0.5
  %v926 = vmul.f32 %v918, 0.5
  %v927 = vmul.f32 %v919, 0.5
  %v928 = vrcp.pop 1.4142135
  %v929 = vmul.f32 %v912, %v928
  %v930 = vmul.f32 %v913, %v928
  %v931 = vmul.f32 %v914, %v928
  %v932 = vmul.f32 %v915, %v928
  %v933 = vmul.f32 %v916, %v928
  %v934 = vmul.f32 %v917, %v928
  %v935 = vmul.f32 %v918, %v928
  %v936 = vmul.f32 %v919, %v928
  %v937 = verf.f32.pop %v929
  %v938 = verf.f32.pop %v930
  %v939 = verf.f32.pop %v931
  %v940 = verf.f32.pop %v932
  %v941 = verf.f32.pop %v933
  %v942 = verf.f32.pop %v934
  %v943 = verf.f32.pop %v935
  %v944 = verf.f32.pop %v936
  %v945 = vadd.f32 %v937, 1.0
  %v946 = vadd.f32 %v938, 1.0
  %v947 = vadd.f32 %v939, 1.0
  %v948 = vadd.f32 %v940, 1.0
  %v949 = vadd.f32 %v941, 1.0
  %v950 = vadd.f32 %v942, 1.0
  %v951 = vadd.f32 %v943, 1.0
  %v952 = vadd.f32 %v944, 1.0
  %v953 = vmul.f32 %v920, %v945
  %v954 = vmul.f32 %v921, %v946
  %v955 = vmul.f32 %v922, %v947
  %v956 = vmul.f32 %v923, %v948
  %v957 = vmul.f32 %v924, %v949
  %v958 = vmul.f32 %v925, %v950
  %v959 = vmul.f32 %v926, %v951
  %v960 = vmul.f32 %v927, %v952
  %v961 = vadd.f32 %v953, %v954
  %v962 = vadd.f32 %v961, %v955
  %v963 = vadd.f32 %v962, %v956
  %964 = vadd.xlane.f32.xlu0 %v963
  %v965 = vpop.xlane.xlu0 %964
  %v966 = vadd.f32 %v957, %v958
  %v967 = vadd.f32 %v966, %v959
  %v968 = vadd.f32 %v967, %v960
  %969 = vadd.xlane.f32.xlu0 %v968
  %v970 = vpop.xlane.xlu0 %969
  %v971 = vrcp.pop 512.0
  %v972 = vmul.f32 %v965, %v971
  %v973 = vmul.f32 %v970, %v971
  %v974 = vsub.f32 %v953, %v972
  %v975 = vsub.f32 %v954, %v972
  %v976 = vsub.f32 %v955, %v972
  %v977 = vsub.f32 %v956, %v972
  %v978 = vsub.f32 %v957, %v973
  %v979 = vsub.f32 %v958, %v973
  %v980 = vsub.f32 %v959, %v973
  %v981 = vsub.f32 %v960, %v973
  %v982 = vmul.f32 %v974, %v974
  %v983 = vmul.f32 %v975, %v975
  %v984 = vmul.f32 %v976, %v976
  %v985 = vmul.f32 %v977, %v977
  %v986 = vmul.f32 %v978, %v978
  %v987 = vmul.f32 %v979, %v979
  %v988 = vmul.f32 %v980, %v980
  %v989 = vmul.f32 %v981, %v981
  %v990 = vadd.f32 %v982, %v983
  %v991 = vadd.f32 %v990, %v984
  %v992 = vadd.f32 %v991, %v985
  %993 = vadd.xlane.f32.xlu0 %v992
  %v994 = vpop.xlane.xlu0 %993
  %v995 = vadd.f32 %v986, %v987
  %v996 = vadd.f32 %v995, %v988
  %v997 = vadd.f32 %v996, %v989
  %998 = vadd.xlane.f32.xlu0 %v997
  %v999 = vpop.xlane.xlu0 %998
  %v1000 = vmul.f32 %v994, %v971
  %v1001 = vmul.f32 %v999, %v971
  %v1002 = vadd.f32 %v1000, 1e-05
  %v1003 = vadd.f32 %v1001, 1e-05
  %v1004 = vrsqrt.pop %v1002
  %v1005 = vrsqrt.pop %v1003
  %v1006 = vmul.f32 %v974, %v1004
  %v1007 = vmul.f32 %v975, %v1004
  %v1008 = vmul.f32 %v976, %v1004
  %v1009 = vmul.f32 %v977, %v1004
  %v1010 = vmul.f32 %v978, %v1005
  %v1011 = vmul.f32 %v979, %v1005
  %v1012 = vmul.f32 %v980, %v1005
  %v1013 = vmul.f32 %v981, %v1005
  %v1015 = vlaneseq
  %v1016 = vshrl.u32 %v1015, 7
  %v1017 = vsub.s32 0, %v1016
  %v1018 = vrot.slane %v241, %v1017
  %v1019 = vlaneseq
  %v1020 = vshrl.u32 %v1019, 7
  %v1021 = vsub.s32 1, %v1020
  %v1022 = vrot.slane %v241, %v1021
  %v1023 = vlaneseq
  %v1024 = vshrl.u32 %v1023, 7
  %v1025 = vsub.s32 2, %v1024
  %v1026 = vrot.slane %v241, %v1025
  %v1027 = vlaneseq
  %v1028 = vshrl.u32 %v1027, 7
  %v1029 = vsub.s32 3, %v1028
  %v1030 = vrot.slane %v241, %v1029
  %v1035 = vmul.f32 %v1006, %v1018
  %v1036 = vmul.f32 %v1007, %v1022
  %v1037 = vmul.f32 %v1008, %v1026
  %v1038 = vmul.f32 %v1009, %v1030
  %v1039 = vmul.f32 %v1010, %v1018
  %v1040 = vmul.f32 %v1011, %v1022
  %v1041 = vmul.f32 %v1012, %v1026
  %v1042 = vmul.f32 %v1013, %v1030
  %v1044 = vlaneseq
  %v1045 = vshrl.u32 %v1044, 7
  %v1046 = vsub.s32 0, %v1045
  %v1047 = vrot.slane %v242, %v1046
  %v1048 = vlaneseq
  %v1049 = vshrl.u32 %v1048, 7
  %v1050 = vsub.s32 1, %v1049
  %v1051 = vrot.slane %v242, %v1050
  %v1052 = vlaneseq
  %v1053 = vshrl.u32 %v1052, 7
  %v1054 = vsub.s32 2, %v1053
  %v1055 = vrot.slane %v242, %v1054
  %v1056 = vlaneseq
  %v1057 = vshrl.u32 %v1056, 7
  %v1058 = vsub.s32 3, %v1057
  %v1059 = vrot.slane %v242, %v1058
  %v1064 = vadd.f32 %v1035, %v1047
  %v1065 = vadd.f32 %v1036, %v1051
  %v1066 = vadd.f32 %v1037, %v1055
  %v1067 = vadd.f32 %v1038, %v1059
  %v1068 = vadd.f32 %v1039, %v1047
  %v1069 = vadd.f32 %v1040, %v1051
  %v1070 = vadd.f32 %v1041, %v1055
  %v1071 = vadd.f32 %v1042, %v1059
  %v1072 = vpack.c.bf16 %v1068, %v1064
  %v1073 = vpack.c.bf16 %v1069, %v1065
  %v1074 = vpack.c.bf16 %v1070, %v1066
  %v1075 = vpack.c.bf16 %v1071, %v1067
  %v1077 = vlaneseq
  %v1078 = vshrl.u32 %v1077, 7
  %v1079 = vsub.s32 0, %v1078
  %v1080 = vrot.slane %v307, %v1079
  %v1146 = vunpack.c.l.b16 %v243
  %v1147 = vunpack.c.l.b16 %v244
  %v1148 = vunpack.c.l.b16 %v245
  %v1149 = vunpack.c.l.b16 %v246
  %v1150 = vunpack.c.l.b16 %v247
  %v1151 = vunpack.c.l.b16 %v248
  %v1152 = vunpack.c.l.b16 %v249
  %v1153 = vunpack.c.l.b16 %v250
  %v1154 = vunpack.c.l.b16 %v251
  %v1155 = vunpack.c.l.b16 %v252
  %v1156 = vunpack.c.l.b16 %v253
  %v1157 = vunpack.c.l.b16 %v254
  %v1158 = vunpack.c.l.b16 %v255
  %v1159 = vunpack.c.l.b16 %v256
  %v1160 = vunpack.c.l.b16 %v257
  %v1161 = vunpack.c.l.b16 %v258
  %v1162 = vunpack.c.l.b16 %v259
  %v1163 = vunpack.c.l.b16 %v260
  %v1164 = vunpack.c.l.b16 %v261
  %v1165 = vunpack.c.l.b16 %v262
  %v1166 = vunpack.c.l.b16 %v263
  %v1167 = vunpack.c.l.b16 %v264
  %v1168 = vunpack.c.l.b16 %v265
  %v1169 = vunpack.c.l.b16 %v266
  %v1170 = vunpack.c.l.b16 %v267
  %v1171 = vunpack.c.l.b16 %v268
  %v1172 = vunpack.c.l.b16 %v269
  %v1173 = vunpack.c.l.b16 %v270
  %v1174 = vunpack.c.l.b16 %v271
  %v1175 = vunpack.c.l.b16 %v272
  %v1176 = vunpack.c.l.b16 %v273
  %v1177 = vunpack.c.l.b16 %v274
  %v1178 = vunpack.c.l.b16 %v275
  %v1179 = vunpack.c.l.b16 %v276
  %v1180 = vunpack.c.l.b16 %v277
  %v1181 = vunpack.c.l.b16 %v278
  %v1182 = vunpack.c.l.b16 %v279
  %v1183 = vunpack.c.l.b16 %v280
  %v1184 = vunpack.c.l.b16 %v281
  %v1185 = vunpack.c.l.b16 %v282
  %v1186 = vunpack.c.l.b16 %v283
  %v1187 = vunpack.c.l.b16 %v284
  %v1188 = vunpack.c.l.b16 %v285
  %v1189 = vunpack.c.l.b16 %v286
  %v1190 = vunpack.c.l.b16 %v287
  %v1191 = vunpack.c.l.b16 %v288
  %v1192 = vunpack.c.l.b16 %v289
  %v1193 = vunpack.c.l.b16 %v290
  %v1194 = vunpack.c.l.b16 %v291
  %v1195 = vunpack.c.l.b16 %v292
  %v1196 = vunpack.c.l.b16 %v293
  %v1197 = vunpack.c.l.b16 %v294
  %v1198 = vunpack.c.l.b16 %v295
  %v1199 = vunpack.c.l.b16 %v296
  %v1200 = vunpack.c.l.b16 %v297
  %v1201 = vunpack.c.l.b16 %v298
  %v1202 = vunpack.c.l.b16 %v299
  %v1203 = vunpack.c.l.b16 %v300
  %v1204 = vunpack.c.l.b16 %v301
  %v1205 = vunpack.c.l.b16 %v302
  %v1206 = vunpack.c.l.b16 %v303
  %v1207 = vunpack.c.l.b16 %v304
  %v1208 = vunpack.c.l.b16 %v305
  %v1209 = vunpack.c.l.b16 %v306
  %v1210 = vpack.c.b16 %v1147, %v1146
  %v1211 = vpack.c.b16 %v1149, %v1148
  %v1212 = vpack.c.b16 %v1151, %v1150
  %v1213 = vpack.c.b16 %v1153, %v1152
  %v1214 = vpack.c.b16 %v1155, %v1154
  %v1215 = vpack.c.b16 %v1157, %v1156
  %v1216 = vpack.c.b16 %v1159, %v1158
  %v1217 = vpack.c.b16 %v1161, %v1160
  %v1218 = vpack.c.b16 %v1163, %v1162
  %v1219 = vpack.c.b16 %v1165, %v1164
  %v1220 = vpack.c.b16 %v1167, %v1166
  %v1221 = vpack.c.b16 %v1169, %v1168
  %v1222 = vpack.c.b16 %v1171, %v1170
  %v1223 = vpack.c.b16 %v1173, %v1172
  %v1224 = vpack.c.b16 %v1175, %v1174
  %v1225 = vpack.c.b16 %v1177, %v1176
  %v1226 = vpack.c.b16 %v1179, %v1178
  %v1227 = vpack.c.b16 %v1181, %v1180
  %v1228 = vpack.c.b16 %v1183, %v1182
  %v1229 = vpack.c.b16 %v1185, %v1184
  %v1230 = vpack.c.b16 %v1187, %v1186
  %v1231 = vpack.c.b16 %v1189, %v1188
  %v1232 = vpack.c.b16 %v1191, %v1190
  %v1233 = vpack.c.b16 %v1193, %v1192
  %v1234 = vpack.c.b16 %v1195, %v1194
  %v1235 = vpack.c.b16 %v1197, %v1196
  %v1236 = vpack.c.b16 %v1199, %v1198
  %v1237 = vpack.c.b16 %v1201, %v1200
  %v1238 = vpack.c.b16 %v1203, %v1202
  %v1239 = vpack.c.b16 %v1205, %v1204
  %v1240 = vpack.c.b16 %v1207, %v1206
  %v1241 = vpack.c.b16 %v1209, %v1208
  %1274 = vmatprep.subr.bf16.mxu0 0
  %1275 = vmatpush1.bf16.msra.mxu0 %v1217
  %1276 = vmatprep.subr.bf16.mxu0 0
  %1277 = vmatpush1.bf16.msra.mxu0 %v1216
  %1278 = vmatprep.subr.bf16.mxu0 0
  %1279 = vmatpush1.bf16.msra.mxu0 %v1215
  %1280 = vmatprep.subr.bf16.mxu0 0
  %1281 = vmatpush1.bf16.msra.mxu0 %v1214
  %1282 = vmatprep.subr.bf16.mxu0 0
  %1283 = vmatpush1.bf16.msra.mxu0 %v1213
  %1284 = vmatprep.subr.bf16.mxu0 0
  %1285 = vmatpush1.bf16.msra.mxu0 %v1212
  %1286 = vmatprep.subr.bf16.mxu0 0
  %1287 = vmatpush1.bf16.msra.mxu0 %v1211
  %1288 = vmatprep.subr.bf16.mxu0 0
  %1289 = vmatpush1.bf16.msra.mxu0 %v1210
  %1290 = vmatprep.subr.bf16.mxu0 0
  %1291 = vmatpush2.bf16.msra.mxu0 %v1225
  %1292 = vmatprep.subr.bf16.mxu0 0
  %1293 = vmatpush2.bf16.msra.mxu0 %v1224
  %1294 = vmatprep.subr.bf16.mxu0 0
  %1295 = vmatpush2.bf16.msra.mxu0 %v1223
  %1296 = vmatprep.subr.bf16.mxu0 0
  %1297 = vmatpush2.bf16.msra.mxu0 %v1222
  %1298 = vmatprep.subr.bf16.mxu0 0
  %1299 = vmatpush2.bf16.msra.mxu0 %v1221
  %1300 = vmatprep.subr.bf16.mxu0 0
  %1301 = vmatpush2.bf16.msra.mxu0 %v1220
  %1302 = vmatprep.subr.bf16.mxu0 0
  %1303 = vmatpush2.bf16.msra.mxu0 %v1219
  %1304 = vmatprep.subr.bf16.mxu0 0
  %1305 = vmatpush2.bf16.msra.mxu0 %v1218
  %1306 = vmatprep.mubr.bf16.mxu0 %v1073
  %1307 = vmatmul.mubr.bf16.gmra.mxu0 %v1072
  %v1308 = vpop.f32.mrf.mxu0
  %v1309 = vadd.f32 %v1080, %v1308
  %v1310 = vpop.f32.mrf.mxu0
  %v1311 = vpop.f32.mrf.mxu0
  %v1312 = vadd.f32 %v1080, %v1311
  %v1313 = vpop.f32.mrf.mxu0
  %1314 = vdwg.mxu0
  %1315 = vmatprep.subr.bf16.mxu0 0
  %1316 = vmatpush1.bf16.msra.mxu0 %v1233
  %1317 = vmatprep.subr.bf16.mxu0 0
  %1318 = vmatpush1.bf16.msra.mxu0 %v1232
  %1319 = vmatprep.subr.bf16.mxu0 0
  %1320 = vmatpush1.bf16.msra.mxu0 %v1231
  %1321 = vmatprep.subr.bf16.mxu0 0
  %1322 = vmatpush1.bf16.msra.mxu0 %v1230
  %1323 = vmatprep.subr.bf16.mxu0 0
  %1324 = vmatpush1.bf16.msra.mxu0 %v1229
  %1325 = vmatprep.subr.bf16.mxu0 0
  %1326 = vmatpush1.bf16.msra.mxu0 %v1228
  %1327 = vmatprep.subr.bf16.mxu0 0
  %1328 = vmatpush1.bf16.msra.mxu0 %v1227
  %1329 = vmatprep.subr.bf16.mxu0 0
  %1330 = vmatpush1.bf16.msra.mxu0 %v1226
  %1331 = vmatprep.subr.bf16.mxu0 0
  %1332 = vmatpush2.bf16.msra.mxu0 %v1241
  %1333 = vmatprep.subr.bf16.mxu0 0
  %1334 = vmatpush2.bf16.msra.mxu0 %v1240
  %1335 = vmatprep.subr.bf16.mxu0 0
  %1336 = vmatpush2.bf16.msra.mxu0 %v1239
  %1337 = vmatprep.subr.bf16.mxu0 0
  %1338 = vmatpush2.bf16.msra.mxu0 %v1238
  %1339 = vmatprep.subr.bf16.mxu0 0
  %1340 = vmatpush2.bf16.msra.mxu0 %v1237
  %1341 = vmatprep.subr.bf16.mxu0 0
  %1342 = vmatpush2.bf16.msra.mxu0 %v1236
  %1343 = vmatprep.subr.bf16.mxu0 0
  %1344 = vmatpush2.bf16.msra.mxu0 %v1235
  %1345 = vmatprep.subr.bf16.mxu0 0
  %1346 = vmatpush2.bf16.msra.mxu0 %v1234
  %1347 = vmatprep.mubr.bf16.mxu0 %v1075
  %1348 = vmatmul.mubr.bf16.gmra.mxu0 %v1074
  %v1349 = vpop.f32.mrf.mxu0
  %v1350 = vadd.f32 %v1309, %v1349
  %v1351 = vpop.f32.mrf.mxu0
  %v1352 = vpop.f32.mrf.mxu0
  %v1353 = vadd.f32 %v1312, %v1352
  %v1354 = vpop.f32.mrf.mxu0
  %1355 = vdwg.mxu0
  %v1356 = vadd.f32 %v1350, %v159
  %v1357 = vadd.f32 %v1353, %v161
  %1358 = vst [vmem:[%s10] sm:$0xff] %v1356
  %1359 = vst [vmem:[%s10 + $0x8] sm:$0xff] %v1357
  %v1360 = vpack.c.bf16 %v38, %v38
  %v1361 = vpack.c.bf16 %v39, %v39
  %v1364 = vunpack.c.l.b16 %v1360
  %v1365 = vunpack.c.l.b16 %v1361
  %v1366 = vrot.slane %v1365, 7
  %v1367 = vsel %vm315, %v1366, %v1364
  %v1368 = vpack.c.b16 %v1367, %v1367
  %1370 = vmatprep.subr.bf16.mxu0 %v444
  %1371 = vmatpush1.bf16.msra.mxu0 %v443
  %1372 = vmatprep.subr.bf16.mxu0 %v440
  %1373 = vmatpush1.bf16.msra.mxu0 %v439
  %1374 = vmatprep.subr.bf16.mxu0 %v436
  %1375 = vmatpush1.bf16.msra.mxu0 %v435
  %1376 = vmatprep.subr.bf16.mxu0 %v432
  %1377 = vmatpush1.bf16.msra.mxu0 %v431
  %1378 = vmatprep.subr.bf16.mxu0 %v428
  %1379 = vmatpush1.bf16.msra.mxu0 %v427
  %1380 = vmatprep.subr.bf16.mxu0 %v424
  %1381 = vmatpush1.bf16.msra.mxu0 %v423
  %1382 = vmatprep.subr.bf16.mxu0 %v420
  %1383 = vmatpush1.bf16.msra.mxu0 %v419
  %1384 = vmatprep.subr.bf16.mxu0 %v416
  %1385 = vmatpush1.bf16.msra.mxu0 %v415
  %1386 = vmatprep.subr.bf16.mxu0 0
  %1387 = vmatpush2.bf16.msra.mxu0 0
  %1388 = vmatprep.subr.bf16.mxu0 0
  %1389 = vmatpush2.bf16.msra.mxu0 0
  %1390 = vmatprep.subr.bf16.mxu0 0
  %1391 = vmatpush2.bf16.msra.mxu0 0
  %1392 = vmatprep.subr.bf16.mxu0 0
  %1393 = vmatpush2.bf16.msra.mxu0 0
  %1394 = vmatprep.subr.bf16.mxu0 0
  %1395 = vmatpush2.bf16.msra.mxu0 0
  %1396 = vmatprep.subr.bf16.mxu0 0
  %1397 = vmatpush2.bf16.msra.mxu0 0
  %1398 = vmatprep.subr.bf16.mxu0 0
  %1399 = vmatpush2.bf16.msra.mxu0 0
  %1400 = vmatprep.subr.bf16.mxu0 0
  %1401 = vmatpush2.bf16.msra.mxu0 0
  %1402 = vmatprep.mubr.bf16.mxu0 0
  %1403 = vmatmul.mubr.bf16.gmra.mxu0 %v1368
  %v1404 = vpop.f32.mrf.mxu0
  %v1405 = vadd.f32 0.0, %v1404
  %v1406 = vpop.f32.mrf.mxu0
  %v1407 = vadd.f32 0.0, %v1406
  %v1408 = vpop.f32.mrf.mxu0
  %v1409 = vpop.f32.mrf.mxu0
  %1410 = vdwg.mxu0
  %1411 = vmatprep.subr.bf16.mxu0 %v446
  %1412 = vmatpush1.bf16.msra.mxu0 %v445
  %1413 = vmatprep.subr.bf16.mxu0 %v442
  %1414 = vmatpush1.bf16.msra.mxu0 %v441
  %1415 = vmatprep.subr.bf16.mxu0 %v438
  %1416 = vmatpush1.bf16.msra.mxu0 %v437
  %1417 = vmatprep.subr.bf16.mxu0 %v434
  %1418 = vmatpush1.bf16.msra.mxu0 %v433
  %1419 = vmatprep.subr.bf16.mxu0 %v430
  %1420 = vmatpush1.bf16.msra.mxu0 %v429
  %1421 = vmatprep.subr.bf16.mxu0 %v426
  %1422 = vmatpush1.bf16.msra.mxu0 %v425
  %1423 = vmatprep.subr.bf16.mxu0 %v422
  %1424 = vmatpush1.bf16.msra.mxu0 %v421
  %1425 = vmatprep.subr.bf16.mxu0 %v418
  %1426 = vmatpush1.bf16.msra.mxu0 %v417
  %1427 = vmatprep.subr.bf16.mxu0 0
  %1428 = vmatpush2.bf16.msra.mxu0 0
  %1429 = vmatprep.subr.bf16.mxu0 0
  %1430 = vmatpush2.bf16.msra.mxu0 0
  %1431 = vmatprep.subr.bf16.mxu0 0
  %1432 = vmatpush2.bf16.msra.mxu0 0
  %1433 = vmatprep.subr.bf16.mxu0 0
  %1434 = vmatpush2.bf16.msra.mxu0 0
  %1435 = vmatprep.subr.bf16.mxu0 0
  %1436 = vmatpush2.bf16.msra.mxu0 0
  %1437 = vmatprep.subr.bf16.mxu0 0
  %1438 = vmatpush2.bf16.msra.mxu0 0
  %1439 = vmatprep.subr.bf16.mxu0 0
  %1440 = vmatpush2.bf16.msra.mxu0 0
  %1441 = vmatprep.subr.bf16.mxu0 0
  %1442 = vmatpush2.bf16.msra.mxu0 0
  %1443 = vmatprep.mubr.bf16.mxu0 0
  %1444 = vmatmul.mubr.bf16.gmra.mxu0 %v1368
  %v1445 = vpop.f32.mrf.mxu0
  %v1446 = vadd.f32 0.0, %v1445
  %v1447 = vpop.f32.mrf.mxu0
  %v1448 = vadd.f32 0.0, %v1447
  %v1449 = vpop.f32.mrf.mxu0
  %v1450 = vpop.f32.mrf.mxu0
  %1451 = vdwg.mxu0
  %v1452 = vpack.c.bf16 %v41, %v40
  %1453 = vmatprep.subr.bf16.mxu0 %v686
  %1454 = vmatpush1.bf16.msra.mxu0 %v685
  %1455 = vmatprep.subr.bf16.mxu0 %v682
  %1456 = vmatpush1.bf16.msra.mxu0 %v681
  %1457 = vmatprep.subr.bf16.mxu0 %v678
  %1458 = vmatpush1.bf16.msra.mxu0 %v677
  %1459 = vmatprep.subr.bf16.mxu0 %v674
  %1460 = vmatpush1.bf16.msra.mxu0 %v673
  %1461 = vmatprep.subr.bf16.mxu0 %v670
  %1462 = vmatpush1.bf16.msra.mxu0 %v669
  %1463 = vmatprep.subr.bf16.mxu0 %v666
  %1464 = vmatpush1.bf16.msra.mxu0 %v665
  %1465 = vmatprep.subr.bf16.mxu0 %v662
  %1466 = vmatpush1.bf16.msra.mxu0 %v661
  %1467 = vmatprep.subr.bf16.mxu0 %v658
  %1468 = vmatpush1.bf16.msra.mxu0 %v657
  %1469 = vmatprep.subr.bf16.mxu0 0
  %1470 = vmatpush2.bf16.msra.mxu0 0
  %1471 = vmatprep.subr.bf16.mxu0 0
  %1472 = vmatpush2.bf16.msra.mxu0 0
  %1473 = vmatprep.subr.bf16.mxu0 0
  %1474 = vmatpush2.bf16.msra.mxu0 0
  %1475 = vmatprep.subr.bf16.mxu0 0
  %1476 = vmatpush2.bf16.msra.mxu0 0
  %1477 = vmatprep.subr.bf16.mxu0 0
  %1478 = vmatpush2.bf16.msra.mxu0 0
  %1479 = vmatprep.subr.bf16.mxu0 0
  %1480 = vmatpush2.bf16.msra.mxu0 0
  %1481 = vmatprep.subr.bf16.mxu0 0
  %1482 = vmatpush2.bf16.msra.mxu0 0
  %1483 = vmatprep.subr.bf16.mxu0 0
  %1484 = vmatpush2.bf16.msra.mxu0 0
  %1485 = vmatprep.mubr.bf16.mxu0 0
  %1486 = vmatmul.mubr.bf16.gmra.mxu0 %v1452
  %v1487 = vpop.f32.mrf.mxu0
  %v1488 = vadd.f32 0.0, %v1487
  %v1489 = vpop.f32.mrf.mxu0
  %v1490 = vadd.f32 0.0, %v1489
  %v1491 = vpop.f32.mrf.mxu0
  %v1492 = vadd.f32 0.0, %v1491
  %v1493 = vpop.f32.mrf.mxu0
  %v1494 = vadd.f32 0.0, %v1493
  %1495 = vdwg.mxu0
  %1496 = vmatprep.subr.bf16.mxu0 %v688
  %1497 = vmatpush1.bf16.msra.mxu0 %v687
  %1498 = vmatprep.subr.bf16.mxu0 %v684
  %1499 = vmatpush1.bf16.msra.mxu0 %v683
  %1500 = vmatprep.subr.bf16.mxu0 %v680
  %1501 = vmatpush1.bf16.msra.mxu0 %v679
  %1502 = vmatprep.subr.bf16.mxu0 %v676
  %1503 = vmatpush1.bf16.msra.mxu0 %v675
  %1504 = vmatprep.subr.bf16.mxu0 %v672
  %1505 = vmatpush1.bf16.msra.mxu0 %v671
  %1506 = vmatprep.subr.bf16.mxu0 %v668
  %1507 = vmatpush1.bf16.msra.mxu0 %v667
  %1508 = vmatprep.subr.bf16.mxu0 %v664
  %1509 = vmatpush1.bf16.msra.mxu0 %v663
  %1510 = vmatprep.subr.bf16.mxu0 %v660
  %1511 = vmatpush1.bf16.msra.mxu0 %v659
  %1512 = vmatprep.subr.bf16.mxu0 0
  %1513 = vmatpush2.bf16.msra.mxu0 0
  %1514 = vmatprep.subr.bf16.mxu0 0
  %1515 = vmatpush2.bf16.msra.mxu0 0
  %1516 = vmatprep.subr.bf16.mxu0 0
  %1517 = vmatpush2.bf16.msra.mxu0 0
  %1518 = vmatprep.subr.bf16.mxu0 0
  %1519 = vmatpush2.bf16.msra.mxu0 0
  %1520 = vmatprep.subr.bf16.mxu0 0
  %1521 = vmatpush2.bf16.msra.mxu0 0
  %1522 = vmatprep.subr.bf16.mxu0 0
  %1523 = vmatpush2.bf16.msra.mxu0 0
  %1524 = vmatprep.subr.bf16.mxu0 0
  %1525 = vmatpush2.bf16.msra.mxu0 0
  %1526 = vmatprep.subr.bf16.mxu0 0
  %1527 = vmatpush2.bf16.msra.mxu0 0
  %1528 = vmatprep.mubr.bf16.mxu0 0
  %1529 = vmatmul.mubr.bf16.gmra.mxu0 %v1452
  %v1530 = vpop.f32.mrf.mxu0
  %v1531 = vadd.f32 0.0, %v1530
  %v1532 = vpop.f32.mrf.mxu0
  %v1533 = vadd.f32 0.0, %v1532
  %v1534 = vpop.f32.mrf.mxu0
  %v1535 = vadd.f32 0.0, %v1534
  %v1536 = vpop.f32.mrf.mxu0
  %v1537 = vadd.f32 0.0, %v1536
  %1538 = vdwg.mxu0
  %v1543 = vcombine.low %v1405, %v1407
  %v1544 = vcombine.low %v1446, %v1448
  %v1546 = vunpack.c.l.s4 1966171168
  %v1547 = vunpack.c.0.s8 %v1546
  %v1548 = vlaneseq
  %v1549 = vshrl.u32 %v1548, 7
  %v1550 = vsub.s32 %v1547, %v1549
  %v1551 = vrot.slane %v1543, %v1550
  %v1553 = vunpack.c.l.s4 1966171168
  %v1554 = vunpack.c.0.s8 %v1553
  %v1555 = vlaneseq
  %v1556 = vshrl.u32 %v1555, 7
  %v1557 = vsub.s32 %v1554, %v1556
  %v1558 = vrot.slane %v1544, %v1557
  %v1559 = vcombine.low %v1551, %v1558
  %v1560 = vcombine.high %v1551, %v1558
  %v1562 = vunpack.c.l.s4 1966171168
  %v1563 = vunpack.c.0.s8 %v1562
  %v1564 = vlaneseq
  %v1565 = vshrl.u32 %v1564, 7
  %v1566 = vsub.s32 %v1563, %v1565
  %v1567 = vrot.slane %v1559, %v1566
  %v1569 = vunpack.c.l.s4 1966171168
  %v1570 = vunpack.c.0.s8 %v1569
  %v1571 = vlaneseq
  %v1572 = vshrl.u32 %v1571, 7
  %v1573 = vsub.s32 %v1570, %v1572
  %v1574 = vrot.slane %v1560, %v1573
  %v1575 = vlaneseq
  %v1576 = vshrl.u32 %v1575, 7
  %v1577 = vsub.s32 0, %v1576
  %v1578 = vrot.slane %v1567, %v1577
  %v1579 = vlaneseq
  %v1580 = vshrl.u32 %v1579, 7
  %v1581 = vsub.s32 1, %v1580
  %v1582 = vrot.slane %v1567, %v1581
  %v1583 = vlaneseq
  %v1584 = vshrl.u32 %v1583, 7
  %v1585 = vsub.s32 2, %v1584
  %v1586 = vrot.slane %v1567, %v1585
  %v1587 = vlaneseq
  %v1588 = vshrl.u32 %v1587, 7
  %v1589 = vsub.s32 3, %v1588
  %v1590 = vrot.slane %v1567, %v1589
  %v1591 = vlaneseq
  %v1592 = vshrl.u32 %v1591, 7
  %v1593 = vsub.s32 0, %v1592
  %v1594 = vrot.slane %v1574, %v1593
  %v1595 = vlaneseq
  %v1596 = vshrl.u32 %v1595, 7
  %v1597 = vsub.s32 1, %v1596
  %v1598 = vrot.slane %v1574, %v1597
  %v1599 = vlaneseq
  %v1600 = vshrl.u32 %v1599, 7
  %v1601 = vsub.s32 2, %v1600
  %v1602 = vrot.slane %v1574, %v1601
  %v1603 = vlaneseq
  %v1604 = vshrl.u32 %v1603, 7
  %v1605 = vsub.s32 3, %v1604
  %v1606 = vrot.slane %v1574, %v1605
  %v1615 = vadd.f32 %v1488, %v1578
  %v1616 = vadd.f32 %v1490, %v1582
  %v1617 = vadd.f32 %v1531, %v1586
  %v1618 = vadd.f32 %v1533, %v1590
  %v1619 = vadd.f32 %v1492, %v1594
  %v1620 = vadd.f32 %v1494, %v1598
  %v1621 = vadd.f32 %v1535, %v1602
  %v1622 = vadd.f32 %v1537, %v1606
  %v1623 = vadd.f32 %v1615, %v895
  %v1624 = vadd.f32 %v1616, %v899
  %v1625 = vadd.f32 %v1617, %v903
  %v1626 = vadd.f32 %v1618, %v907
  %v1627 = vadd.f32 %v1619, %v895
  %v1628 = vadd.f32 %v1620, %v899
  %v1629 = vadd.f32 %v1621, %v903
  %v1630 = vadd.f32 %v1622, %v907
  %v1631 = vmul.f32 %v1623, 0.5
  %v1632 = vmul.f32 %v1624, 0.5
  %v1633 = vmul.f32 %v1625, 0.5
  %v1634 = vmul.f32 %v1626, 0.5
  %v1635 = vmul.f32 %v1627, 0.5
  %v1636 = vmul.f32 %v1628, 0.5
  %v1637 = vmul.f32 %v1629, 0.5
  %v1638 = vmul.f32 %v1630, 0.5
  %v1639 = vmul.f32 %v1623, %v928
  %v1640 = vmul.f32 %v1624, %v928
  %v1641 = vmul.f32 %v1625, %v928
  %v1642 = vmul.f32 %v1626, %v928
  %v1643 = vmul.f32 %v1627, %v928
  %v1644 = vmul.f32 %v1628, %v928
  %v1645 = vmul.f32 %v1629, %v928
  %v1646 = vmul.f32 %v1630, %v928
  %v1647 = verf.f32.pop %v1639
  %v1648 = verf.f32.pop %v1640
  %v1649 = verf.f32.pop %v1641
  %v1650 = verf.f32.pop %v1642
  %v1651 = verf.f32.pop %v1643
  %v1652 = verf.f32.pop %v1644
  %v1653 = verf.f32.pop %v1645
  %v1654 = verf.f32.pop %v1646
  %v1655 = vadd.f32 %v1647, 1.0
  %v1656 = vadd.f32 %v1648, 1.0
  %v1657 = vadd.f32 %v1649, 1.0
  %v1658 = vadd.f32 %v1650, 1.0
  %v1659 = vadd.f32 %v1651, 1.0
  %v1660 = vadd.f32 %v1652, 1.0
  %v1661 = vadd.f32 %v1653, 1.0
  %v1662 = vadd.f32 %v1654, 1.0
  %v1663 = vmul.f32 %v1631, %v1655
  %v1664 = vmul.f32 %v1632, %v1656
  %v1665 = vmul.f32 %v1633, %v1657
  %v1666 = vmul.f32 %v1634, %v1658
  %v1667 = vmul.f32 %v1635, %v1659
  %v1668 = vmul.f32 %v1636, %v1660
  %v1669 = vmul.f32 %v1637, %v1661
  %v1670 = vmul.f32 %v1638, %v1662
  %v1671 = vadd.f32 %v1663, %v1664
  %v1672 = vadd.f32 %v1671, %v1665
  %v1673 = vadd.f32 %v1672, %v1666
  %1674 = vadd.xlane.f32.xlu0 %v1673
  %v1675 = vpop.xlane.xlu0 %1674
  %v1676 = vadd.f32 %v1667, %v1668
  %v1677 = vadd.f32 %v1676, %v1669
  %v1678 = vadd.f32 %v1677, %v1670
  %1679 = vadd.xlane.f32.xlu0 %v1678
  %v1680 = vpop.xlane.xlu0 %1679
  %v1681 = vmul.f32 %v1675, %v971
  %v1682 = vmul.f32 %v1680, %v971
  %v1683 = vsub.f32 %v1663, %v1681
  %v1684 = vsub.f32 %v1664, %v1681
  %v1685 = vsub.f32 %v1665, %v1681
  %v1686 = vsub.f32 %v1666, %v1681
  %v1687 = vsub.f32 %v1667, %v1682
  %v1688 = vsub.f32 %v1668, %v1682
  %v1689 = vsub.f32 %v1669, %v1682
  %v1690 = vsub.f32 %v1670, %v1682
  %v1691 = vmul.f32 %v1683, %v1683
  %v1692 = vmul.f32 %v1684, %v1684
  %v1693 = vmul.f32 %v1685, %v1685
  %v1694 = vmul.f32 %v1686, %v1686
  %v1695 = vmul.f32 %v1687, %v1687
  %v1696 = vmul.f32 %v1688, %v1688
  %v1697 = vmul.f32 %v1689, %v1689
  %v1698 = vmul.f32 %v1690, %v1690
  %v1699 = vadd.f32 %v1691, %v1692
  %v1700 = vadd.f32 %v1699, %v1693
  %v1701 = vadd.f32 %v1700, %v1694
  %1702 = vadd.xlane.f32.xlu0 %v1701
  %v1703 = vpop.xlane.xlu0 %1702
  %v1704 = vadd.f32 %v1695, %v1696
  %v1705 = vadd.f32 %v1704, %v1697
  %v1706 = vadd.f32 %v1705, %v1698
  %1707 = vadd.xlane.f32.xlu0 %v1706
  %v1708 = vpop.xlane.xlu0 %1707
  %v1709 = vmul.f32 %v1703, %v971
  %v1710 = vmul.f32 %v1708, %v971
  %v1711 = vadd.f32 %v1709, 1e-05
  %v1712 = vadd.f32 %v1710, 1e-05
  %v1713 = vrsqrt.pop %v1711
  %v1714 = vrsqrt.pop %v1712
  %v1715 = vmul.f32 %v1683, %v1713
  %v1716 = vmul.f32 %v1684, %v1713
  %v1717 = vmul.f32 %v1685, %v1713
  %v1718 = vmul.f32 %v1686, %v1713
  %v1719 = vmul.f32 %v1687, %v1714
  %v1720 = vmul.f32 %v1688, %v1714
  %v1721 = vmul.f32 %v1689, %v1714
  %v1722 = vmul.f32 %v1690, %v1714
  %v1723 = vmul.f32 %v1715, %v1018
  %v1724 = vmul.f32 %v1716, %v1022
  %v1725 = vmul.f32 %v1717, %v1026
  %v1726 = vmul.f32 %v1718, %v1030
  %v1727 = vmul.f32 %v1719, %v1018
  %v1728 = vmul.f32 %v1720, %v1022
  %v1729 = vmul.f32 %v1721, %v1026
  %v1730 = vmul.f32 %v1722, %v1030
  %v1731 = vadd.f32 %v1723, %v1047
  %v1732 = vadd.f32 %v1724, %v1051
  %v1733 = vadd.f32 %v1725, %v1055
  %v1734 = vadd.f32 %v1726, %v1059
  %v1735 = vadd.f32 %v1727, %v1047
  %v1736 = vadd.f32 %v1728, %v1051
  %v1737 = vadd.f32 %v1729, %v1055
  %v1738 = vadd.f32 %v1730, %v1059
  %v1739 = vpack.c.bf16 %v1735, %v1731
  %v1740 = vpack.c.bf16 %v1736, %v1732
  %v1741 = vpack.c.bf16 %v1737, %v1733
  %v1742 = vpack.c.bf16 %v1738, %v1734
  %1743 = vmatprep.subr.bf16.mxu0 0
  %1744 = vmatpush1.bf16.msra.mxu0 %v1217
  %1745 = vmatprep.subr.bf16.mxu0 0
  %1746 = vmatpush1.bf16.msra.mxu0 %v1216
  %1747 = vmatprep.subr.bf16.mxu0 0
  %1748 = vmatpush1.bf16.msra.mxu0 %v1215
  %1749 = vmatprep.subr.bf16.mxu0 0
  %1750 = vmatpush1.bf16.msra.mxu0 %v1214
  %1751 = vmatprep.subr.bf16.mxu0 0
  %1752 = vmatpush1.bf16.msra.mxu0 %v1213
  %1753 = vmatprep.subr.bf16.mxu0 0
  %1754 = vmatpush1.bf16.msra.mxu0 %v1212
  %1755 = vmatprep.subr.bf16.mxu0 0
  %1756 = vmatpush1.bf16.msra.mxu0 %v1211
  %1757 = vmatprep.subr.bf16.mxu0 0
  %1758 = vmatpush1.bf16.msra.mxu0 %v1210
  %1759 = vmatprep.subr.bf16.mxu0 0
  %1760 = vmatpush2.bf16.msra.mxu0 %v1225
  %1761 = vmatprep.subr.bf16.mxu0 0
  %1762 = vmatpush2.bf16.msra.mxu0 %v1224
  %1763 = vmatprep.subr.bf16.mxu0 0
  %1764 = vmatpush2.bf16.msra.mxu0 %v1223
  %1765 = vmatprep.subr.bf16.mxu0 0
  %1766 = vmatpush2.bf16.msra.mxu0 %v1222
  %1767 = vmatprep.subr.bf16.mxu0 0
  %1768 = vmatpush2.bf16.msra.mxu0 %v1221
  %1769 = vmatprep.subr.bf16.mxu0 0
  %1770 = vmatpush2.bf16.msra.mxu0 %v1220
  %1771 = vmatprep.subr.bf16.mxu0 0
  %1772 = vmatpush2.bf16.msra.mxu0 %v1219
  %1773 = vmatprep.subr.bf16.mxu0 0
  %1774 = vmatpush2.bf16.msra.mxu0 %v1218
  %1775 = vmatprep.mubr.bf16.mxu0 %v1740
  %1776 = vmatmul.mubr.bf16.gmra.mxu0 %v1739
  %v1777 = vpop.f32.mrf.mxu0
  %v1778 = vadd.f32 %v1080, %v1777
  %v1779 = vpop.f32.mrf.mxu0
  %v1780 = vpop.f32.mrf.mxu0
  %v1781 = vadd.f32 %v1080, %v1780
  %v1782 = vpop.f32.mrf.mxu0
  %1783 = vdwg.mxu0
  %1784 = vmatprep.subr.bf16.mxu0 0
  %1785 = vmatpush1.bf16.msra.mxu0 %v1233
  %1786 = vmatprep.subr.bf16.mxu0 0
  %1787 = vmatpush1.bf16.msra.mxu0 %v1232
  %1788 = vmatprep.subr.bf16.mxu0 0
  %1789 = vmatpush1.bf16.msra.mxu0 %v1231
  %1790 = vmatprep.subr.bf16.mxu0 0
  %1791 = vmatpush1.bf16.msra.mxu0 %v1230
  %1792 = vmatprep.subr.bf16.mxu0 0
  %1793 = vmatpush1.bf16.msra.mxu0 %v1229
  %1794 = vmatprep.subr.bf16.mxu0 0
  %1795 = vmatpush1.bf16.msra.mxu0 %v1228
  %1796 = vmatprep.subr.bf16.mxu0 0
  %1797 = vmatpush1.bf16.msra.mxu0 %v1227
  %1798 = vmatprep.subr.bf16.mxu0 0
  %1799 = vmatpush1.bf16.msra.mxu0 %v1226
  %1800 = vmatprep.subr.bf16.mxu0 0
  %1801 = vmatpush2.bf16.msra.mxu0 %v1241
  %1802 = vmatprep.subr.bf16.mxu0 0
  %1803 = vmatpush2.bf16.msra.mxu0 %v1240
  %1804 = vmatprep.subr.bf16.mxu0 0
  %1805 = vmatpush2.bf16.msra.mxu0 %v1239
  %1806 = vmatprep.subr.bf16.mxu0 0
  %1807 = vmatpush2.bf16.msra.mxu0 %v1238
  %1808 = vmatprep.subr.bf16.mxu0 0
  %1809 = vmatpush2.bf16.msra.mxu0 %v1237
  %1810 = vmatprep.subr.bf16.mxu0 0
  %1811 = vmatpush2.bf16.msra.mxu0 %v1236
  %1812 = vmatprep.subr.bf16.mxu0 0
  %1813 = vmatpush2.bf16.msra.mxu0 %v1235
  %1814 = vmatprep.subr.bf16.mxu0 0
  %1815 = vmatpush2.bf16.msra.mxu0 %v1234
  %1816 = vmatprep.mubr.bf16.mxu0 %v1742
  %1817 = vmatmul.mubr.bf16.gmra.mxu0 %v1741
  %v1818 = vpop.f32.mrf.mxu0
  %v1819 = vadd.f32 %v1778, %v1818
  %v1820 = vpop.f32.mrf.mxu0
  %v1821 = vpop.f32.mrf.mxu0
  %v1822 = vadd.f32 %v1781, %v1821
  %v1823 = vpop.f32.mrf.mxu0
  %1824 = vdwg.mxu0
  %v1825 = vadd.f32 %v1819, %v173
  %v1826 = vadd.f32 %v1822, %v175
  %1827 = vst [vmem:[%s11] sm:$0xff] %v1825
  %1828 = vst [vmem:[%s11 + $0x8] sm:$0xff] %v1826
  // Predicated region
  $region42: #{_lambda_.8} parent=0 // pred_check
    _
  $region43: #{_lambda_.8} parent=0 // pred_check_branch
    %1830 = sbr.rel (0) target = $region45
  $region44: #{_lambda_.8} parent=0 // pred_region
    _
  $region45: #{_lambda_.8} parent=0 // pred_fallthru
    _
  // Predicated region
  $region46: #{_lambda_.8} parent=0 // pred_check
    _
  $region47: #{_lambda_.8} parent=0 // pred_check_branch
    %1832 = sbr.rel (0) target = $region49
  $region48: #{_lambda_.8} parent=0 // pred_region
    _
  $region49: #{_lambda_.8} parent=0 // pred_fallthru
    _
  // Predicated region
  $region50: #{_lambda_.8} parent=0 // pred_check
    _
  $region51: #{_lambda_.8} parent=0 // pred_check_branch
    %1834 = sbr.rel (0) target = $region53
  $region52: #{_lambda_.8} parent=0 // pred_region
    _
  $region53: #{_lambda_.8} parent=0 // pred_fallthru
    _
  // Predicated region
  $region54: #{_lambda_.8} parent=0 // pred_check
    _
  $region55: #{_lambda_.8} parent=0 // pred_check_branch
    %1836 = sbr.rel (0) target = $region57
  $region56: #{_lambda_.8} parent=0 // pred_region
    _
  $region57: #{_lambda_.8} parent=0 // pred_fallthru
    _

// kernel: _lambda_.9
$region0: #{_lambda_.9}
  #allocation0 [shape = 'u32[]', space=smem, size = 0x4, offset = 0x4, fixed_abs, tag = 'smem constant byte address 0x4 - core index']
  #allocation1 [shape = 'u32[144,128]{1,0:T(1,128)}', space=vmem, size = 0x12000, scoped, tag = 'internal scratch']
  %s0 = inlined_call_operand.vmem [shape: f32[2,2,8,128], index: 0, kind: input, shape index: {}]
  %s1 = inlined_call_operand.vmem [shape: f32[2,2,8,128], index: 1, kind: input, shape index: {}]
  %s2 = inlined_call_operand.vmem [shape: bf16[2,128,384], index: 2, kind: input, shape index: {}]
  %s3 = inlined_call_operand.vmem [shape: f32[2,1,384], index: 3, kind: input, shape index: {}]
  %s4 = inlined_call_operand.vmem [shape: bf16[2,128,128], index: 4, kind: input, shape index: {}]
  %s5 = inlined_call_operand.vmem [shape: f32[2,1,128], index: 5, kind: input, shape index: {}]
  %s6 = inlined_call_operand.vmem [shape: bf16[2,128,256], index: 6, kind: input, shape index: {}]
  %s7 = inlined_call_operand.vmem [shape: f32[2,1,256], index: 7, kind: input, shape index: {}]
  %s8 = inlined_call_operand.vmem [shape: bf16[2,256,128], index: 8, kind: input, shape index: {}]
  %s9 = inlined_call_operand.vmem [shape: f32[2,1,128], index: 9, kind: input, shape index: {}]
  %s10 = inlined_call_operand.vmem [shape: f32[2,1,128], index: 10, kind: input, shape index: {}]
  %s11 = inlined_call_operand.vmem [shape: f32[2,1,128], index: 11, kind: input, shape index: {}]
  %s12 = inlined_call_operand.vmem [shape: f32[2,2,8,128], index: 12, kind: output, shape index: {}]
  %s13 = sld [smem:[#allocation0]]
  $region81: #{_lambda_.9} parent=0
    _
  %s15 = ssub.s32 1, %s13
  %s16 = scalar_select 0, %s15, %s13
  loop: start=0, step=1, limit=4
  $region2: #{_lambda_.9} parent=0 // loop_pre_header
    _
  $region3: #{_lambda_.9} parent=0 // loop_header
    %s18 = sphi 0, %s22
    %p19 = scmp.ge.s32.totalorder %s18, 4
    %s28 = sphi 0, %s30
    %s31 = sphi 0, %s28
    %s32 = sphi 0, %s31
    %s48 = sphi 0, %s32
    %s54 = sphi 0, %s56
    %s57 = sphi 0, %s54
    %s58 = sphi 0, %s57
    %s74 = sphi 0, %s58
    %s80 = sphi 0, %s82
    %s83 = sphi 0, %s80
    %s84 = sphi 0, %s83
    %s100 = sphi 0, %s84
    %s106 = sphi 0, %s108
    %s109 = sphi 0, %s106
    %s110 = sphi 0, %s109
    %s126 = sphi 0, %s110
    %s132 = sphi 0, %s134
    %s135 = sphi 0, %s132
    %s136 = sphi 0, %s135
    %s152 = sphi 0, %s136
    %s158 = sphi 0, %s160
    %s161 = sphi 0, %s158
    %s162 = sphi 0, %s161
    %s178 = sphi 0, %s162
    %s184 = sphi 0, %s186
    %s187 = sphi 0, %s184
    %s188 = sphi 0, %s187
    %s204 = sphi 0, %s188
    %s210 = sphi 0, %s212
    %s213 = sphi 0, %s210
    %s214 = sphi 0, %s213
    %s230 = sphi 0, %s214
    %s236 = sphi 0, %s238
    %s239 = sphi 0, %s236
    %s240 = sphi 0, %s239
    %s256 = sphi 0, %s240
    %s262 = sphi 0, %s264
    %s265 = sphi 0, %s262
    %s266 = sphi 0, %s265
    %s282 = sphi 0, %s266
    %s288 = sphi 0, %s290
    %s291 = sphi 0, %s288
    %s292 = sphi 0, %s291
    %s308 = sphi 0, %s292
    %s314 = sphi 0, %s316
    %s317 = sphi 0, %s314
    %s318 = sphi 0, %s317
    %s334 = sphi 0, %s318
    %s340 = sphi 0, %s342
    %s343 = sphi 0, %s340
    %s344 = sphi 0, %s343
    %s360 = sphi 0, %s344
  $region4: #{_lambda_.9} parent=0 // loop_header_branch
    %21 = sbr.rel (%p19) target = $region8
  $region5: #{_lambda_.9} parent=0 // loop_body
    %s23 = ssub.s32 %s18, 1
    %s24 = ssub.s32 %s18, 2
    %s25 = sadd.s32 %s18, 1
    %s26 = ssub.s32 %s18, %s25
    %p27 = scmp.eq.s32.totalorder %s26, 0
    %s29 = sadd.s32 %s28, 1
    %s30 = scalar_select %p27, %s28, %s29
    %p33 = pneg %p27
    %p34 = scmp.eq.s32.totalorder %s18, 1
    %p35 = por %p33, %p34
    %p36 = scmp.ne.s32.totalorder %s28, %s31
    %p37 = scmp.eq.s32.totalorder %s18, 0
    %p38 = por %p36, %p37
    %p39 = scmp.ne.s32.totalorder %s28, %s31
    %p40 = scmp.eq.s32.totalorder %s23, 1
    %p41 = por %p39, %p40
    %p42 = scmp.ne.s32.totalorder %s31, %s32
    %p43 = scmp.eq.s32.totalorder %s23, 0
    %p44 = por %p42, %p43
    %p45 = scmp.ne.s32.totalorder %s31, %s32
    %p46 = scmp.eq.s32.totalorder %s24, 1
    %p47 = por %p45, %p46
    %p49 = scmp.ne.s32.totalorder %s32, %s48
    %p50 = scmp.eq.s32.totalorder %s24, 0
    %p51 = por %p49, %p50
    %s52 = ssub.s32 %s18, %s25
    %p53 = scmp.eq.s32.totalorder %s52, 0
    %s55 = sadd.s32 %s54, 1
    %s56 = scalar_select %p53, %s54, %s55
    %p59 = pneg %p53
    %p60 = scmp.eq.s32.totalorder %s18, 1
    %p61 = por %p59, %p60
    %p62 = scmp.ne.s32.totalorder %s54, %s57
    %p63 = scmp.eq.s32.totalorder %s18, 0
    %p64 = por %p62, %p63
    %p65 = scmp.ne.s32.totalorder %s54, %s57
    %p66 = scmp.eq.s32.totalorder %s23, 1
    %p67 = por %p65, %p66
    %p68 = scmp.ne.s32.totalorder %s57, %s58
    %p69 = scmp.eq.s32.totalorder %s23, 0
    %p70 = por %p68, %p69
    %p71 = scmp.ne.s32.totalorder %s57, %s58
    %p72 = scmp.eq.s32.totalorder %s24, 1
    %p73 = por %p71, %p72
    %p75 = scmp.ne.s32.totalorder %s58, %s74
    %p76 = scmp.eq.s32.totalorder %s24, 0
    %p77 = por %p75, %p76
    %s78 = ssub.s32 %s18, %s25
    %p79 = scmp.eq.s32.totalorder %s78, 0
    %s81 = sadd.s32 %s80, 1
    %s82 = scalar_select %p79, %s80, %s81
    %p85 = pneg %p79
    %p86 = scmp.eq.s32.totalorder %s18, 1
    %p87 = por %p85, %p86
    %p88 = scmp.ne.s32.totalorder %s80, %s83
    %p89 = scmp.eq.s32.totalorder %s18, 0
    %p90 = por %p88, %p89
    %p91 = scmp.ne.s32.totalorder %s80, %s83
    %p92 = scmp.eq.s32.totalorder %s23, 1
    %p93 = por %p91, %p92
    %p94 = scmp.ne.s32.totalorder %s83, %s84
    %p95 = scmp.eq.s32.totalorder %s23, 0
    %p96 = por %p94, %p95
    %p97 = scmp.ne.s32.totalorder %s83, %s84
    %p98 = scmp.eq.s32.totalorder %s24, 1
    %p99 = por %p97, %p98
    %p101 = scmp.ne.s32.totalorder %s84, %s100
    %p102 = scmp.eq.s32.totalorder %s24, 0
    %p103 = por %p101, %p102
    %s104 = ssub.s32 %s18, %s25
    %p105 = scmp.eq.s32.totalorder %s104, 0
    %s107 = sadd.s32 %s106, 1
    %s108 = scalar_select %p105, %s106, %s107
    %p111 = pneg %p105
    %p112 = scmp.eq.s32.totalorder %s18, 1
    %p113 = por %p111, %p112
    %p114 = scmp.ne.s32.totalorder %s106, %s109
    %p115 = scmp.eq.s32.totalorder %s18, 0
    %p116 = por %p114, %p115
    %p117 = scmp.ne.s32.totalorder %s106, %s109
    %p118 = scmp.eq.s32.totalorder %s23, 1
    %p119 = por %p117, %p118
    %p120 = scmp.ne.s32.totalorder %s109, %s110
    %p121 = scmp.eq.s32.totalorder %s23, 0
    %p122 = por %p120, %p121
    %p123 = scmp.ne.s32.totalorder %s109, %s110
    %p124 = scmp.eq.s32.totalorder %s24, 1
    %p125 = por %p123, %p124
    %p127 = scmp.ne.s32.totalorder %s110, %s126
    %p128 = scmp.eq.s32.totalorder %s24, 0
    %p129 = por %p127, %p128
    %s130 = ssub.s32 %s18, %s25
    %p131 = scmp.eq.s32.totalorder %s130, 0
    %s133 = sadd.s32 %s132, 1
    %s134 = scalar_select %p131, %s132, %s133
    %p137 = pneg %p131
    %p138 = scmp.eq.s32.totalorder %s18, 1
    %p139 = por %p137, %p138
    %p140 = scmp.ne.s32.totalorder %s132, %s135
    %p141 = scmp.eq.s32.totalorder %s18, 0
    %p142 = por %p140, %p141
    %p143 = scmp.ne.s32.totalorder %s132, %s135
    %p144 = scmp.eq.s32.totalorder %s23, 1
    %p145 = por %p143, %p144
    %p146 = scmp.ne.s32.totalorder %s135, %s136
    %p147 = scmp.eq.s32.totalorder %s23, 0
    %p148 = por %p146, %p147
    %p149 = scmp.ne.s32.totalorder %s135, %s136
    %p150 = scmp.eq.s32.totalorder %s24, 1
    %p151 = por %p149, %p150
    %p153 = scmp.ne.s32.totalorder %s136, %s152
    %p154 = scmp.eq.s32.totalorder %s24, 0
    %p155 = por %p153, %p154
    %s156 = ssub.s32 %s18, %s25
    %p157 = scmp.eq.s32.totalorder %s156, 0
    %s159 = sadd.s32 %s158, 1
    %s160 = scalar_select %p157, %s158, %s159
    %p163 = pneg %p157
    %p164 = scmp.eq.s32.totalorder %s18, 1
    %p165 = por %p163, %p164
    %p166 = scmp.ne.s32.totalorder %s158, %s161
    %p167 = scmp.eq.s32.totalorder %s18, 0
    %p168 = por %p166, %p167
    %p169 = scmp.ne.s32.totalorder %s158, %s161
    %p170 = scmp.eq.s32.totalorder %s23, 1
    %p171 = por %p169, %p170
    %p172 = scmp.ne.s32.totalorder %s161, %s162
    %p173 = scmp.eq.s32.totalorder %s23, 0
    %p174 = por %p172, %p173
    %p175 = scmp.ne.s32.totalorder %s161, %s162
    %p176 = scmp.eq.s32.totalorder %s24, 1
    %p177 = por %p175, %p176
    %p179 = scmp.ne.s32.totalorder %s162, %s178
    %p180 = scmp.eq.s32.totalorder %s24, 0
    %p181 = por %p179, %p180
    %s182 = ssub.s32 %s18, %s25
    %p183 = scmp.eq.s32.totalorder %s182, 0
    %s185 = sadd.s32 %s184, 1
    %s186 = scalar_select %p183, %s184, %s185
    %p189 = pneg %p183
    %p190 = scmp.eq.s32.totalorder %s18, 1
    %p191 = por %p189, %p190
    %p192 = scmp.ne.s32.totalorder %s184, %s187
    %p193 = scmp.eq.s32.totalorder %s18, 0
    %p194 = por %p192, %p193
    %p195 = scmp.ne.s32.totalorder %s184, %s187
    %p196 = scmp.eq.s32.totalorder %s23, 1
    %p197 = por %p195, %p196
    %p198 = scmp.ne.s32.totalorder %s187, %s188
    %p199 = scmp.eq.s32.totalorder %s23, 0
    %p200 = por %p198, %p199
    %p201 = scmp.ne.s32.totalorder %s187, %s188
    %p202 = scmp.eq.s32.totalorder %s24, 1
    %p203 = por %p201, %p202
    %p205 = scmp.ne.s32.totalorder %s188, %s204
    %p206 = scmp.eq.s32.totalorder %s24, 0
    %p207 = por %p205, %p206
    %s208 = ssub.s32 %s18, %s25
    %p209 = scmp.eq.s32.totalorder %s208, 0
    %s211 = sadd.s32 %s210, 1
    %s212 = scalar_select %p209, %s210, %s211
    %p215 = pneg %p209
    %p216 = scmp.eq.s32.totalorder %s18, 1
    %p217 = por %p215, %p216
    %p218 = scmp.ne.s32.totalorder %s210, %s213
    %p219 = scmp.eq.s32.totalorder %s18, 0
    %p220 = por %p218, %p219
    %p221 = scmp.ne.s32.totalorder %s210, %s213
    %p222 = scmp.eq.s32.totalorder %s23, 1
    %p223 = por %p221, %p222
    %p224 = scmp.ne.s32.totalorder %s213, %s214
    %p225 = scmp.eq.s32.totalorder %s23, 0
    %p226 = por %p224, %p225
    %p227 = scmp.ne.s32.totalorder %s213, %s214
    %p228 = scmp.eq.s32.totalorder %s24, 1
    %p229 = por %p227, %p228
    %p231 = scmp.ne.s32.totalorder %s214, %s230
    %p232 = scmp.eq.s32.totalorder %s24, 0
    %p233 = por %p231, %p232
    %s234 = ssub.s32 %s18, %s25
    %p235 = scmp.eq.s32.totalorder %s234, 0
    %s237 = sadd.s32 %s236, 1
    %s238 = scalar_select %p235, %s236, %s237
    %p241 = pneg %p235
    %p242 = scmp.eq.s32.totalorder %s18, 1
    %p243 = por %p241, %p242
    %p244 = scmp.ne.s32.totalorder %s236, %s239
    %p245 = scmp.eq.s32.totalorder %s18, 0
    %p246 = por %p244, %p245
    %p247 = scmp.ne.s32.totalorder %s236, %s239
    %p248 = scmp.eq.s32.totalorder %s23, 1
    %p249 = por %p247, %p248
    %p250 = scmp.ne.s32.totalorder %s239, %s240
    %p251 = scmp.eq.s32.totalorder %s23, 0
    %p252 = por %p250, %p251
    %p253 = scmp.ne.s32.totalorder %s239, %s240
    %p254 = scmp.eq.s32.totalorder %s24, 1
    %p255 = por %p253, %p254
    %p257 = scmp.ne.s32.totalorder %s240, %s256
    %p258 = scmp.eq.s32.totalorder %s24, 0
    %p259 = por %p257, %p258
    %s260 = ssub.s32 %s18, %s25
    %p261 = scmp.eq.s32.totalorder %s260, 0
    %s263 = sadd.s32 %s262, 1
    %s264 = scalar_select %p261, %s262, %s263
    %p267 = pneg %p261
    %p268 = scmp.eq.s32.totalorder %s18, 1
    %p269 = por %p267, %p268
    %p270 = scmp.ne.s32.totalorder %s262, %s265
    %p271 = scmp.eq.s32.totalorder %s18, 0
    %p272 = por %p270, %p271
    %p273 = scmp.ne.s32.totalorder %s262, %s265
    %p274 = scmp.eq.s32.totalorder %s23, 1
    %p275 = por %p273, %p274
    %p276 = scmp.ne.s32.totalorder %s265, %s266
    %p277 = scmp.eq.s32.totalorder %s23, 0
    %p278 = por %p276, %p277
    %p279 = scmp.ne.s32.totalorder %s265, %s266
    %p280 = scmp.eq.s32.totalorder %s24, 1
    %p281 = por %p279, %p280
    %p283 = scmp.ne.s32.totalorder %s266, %s282
    %p284 = scmp.eq.s32.totalorder %s24, 0
    %p285 = por %p283, %p284
    %s286 = ssub.s32 %s18, %s25
    %p287 = scmp.eq.s32.totalorder %s286, 0
    %s289 = sadd.s32 %s288, 1
    %s290 = scalar_select %p287, %s288, %s289
    %p293 = pneg %p287
    %p294 = scmp.eq.s32.totalorder %s18, 1
    %p295 = por %p293, %p294
    %p296 = scmp.ne.s32.totalorder %s288, %s291
    %p297 = scmp.eq.s32.totalorder %s18, 0
    %p298 = por %p296, %p297
    %p299 = scmp.ne.s32.totalorder %s288, %s291
    %p300 = scmp.eq.s32.totalorder %s23, 1
    %p301 = por %p299, %p300
    %p302 = scmp.ne.s32.totalorder %s291, %s292
    %p303 = scmp.eq.s32.totalorder %s23, 0
    %p304 = por %p302, %p303
    %p305 = scmp.ne.s32.totalorder %s291, %s292
    %p306 = scmp.eq.s32.totalorder %s24, 1
    %p307 = por %p305, %p306
    %p309 = scmp.ne.s32.totalorder %s292, %s308
    %p310 = scmp.eq.s32.totalorder %s24, 0
    %p311 = por %p309, %p310
    %s312 = ssub.s32 %s18, %s25
    %p313 = scmp.eq.s32.totalorder %s312, 0
    %s315 = sadd.s32 %s314, 1
    %s316 = scalar_select %p313, %s314, %s315
    %p319 = pneg %p313
    %p320 = scmp.eq.s32.totalorder %s18, 1
    %p321 = por %p319, %p320
    %p322 = scmp.ne.s32.totalorder %s314, %s317
    %p323 = scmp.eq.s32.totalorder %s18, 0
    %p324 = por %p322, %p323
    %p325 = scmp.ne.s32.totalorder %s314, %s317
    %p326 = scmp.eq.s32.totalorder %s23, 1
    %p327 = por %p325, %p326
    %p328 = scmp.ne.s32.totalorder %s317, %s318
    %p329 = scmp.eq.s32.totalorder %s23, 0
    %p330 = por %p328, %p329
    %p331 = scmp.ne.s32.totalorder %s317, %s318
    %p332 = scmp.eq.s32.totalorder %s24, 1
    %p333 = por %p331, %p332
    %p335 = scmp.ne.s32.totalorder %s318, %s334
    %p336 = scmp.eq.s32.totalorder %s24, 0
    %p337 = por %p335, %p336
    %s338 = ssub.s32 %s18, %s25
    %p339 = scmp.eq.s32.totalorder %s338, 0
    %s341 = sadd.s32 %s340, 1
    %s342 = scalar_select %p339, %s340, %s341
    %p345 = pneg %p339
    %p346 = scmp.eq.s32.totalorder %s18, 1
    %p347 = por %p345, %p346
    %p348 = scmp.ne.s32.totalorder %s340, %s343
    %p349 = scmp.eq.s32.totalorder %s18, 0
    %p350 = por %p348, %p349
    %p351 = scmp.ne.s32.totalorder %s340, %s343
    %p352 = scmp.eq.s32.totalorder %s23, 1
    %p353 = por %p351, %p352
    %p354 = scmp.ne.s32.totalorder %s343, %s344
    %p355 = scmp.eq.s32.totalorder %s23, 0
    %p356 = por %p354, %p355
    %p357 = scmp.ne.s32.totalorder %s343, %s344
    %p358 = scmp.eq.s32.totalorder %s24, 1
    %p359 = por %p357, %p358
    %p361 = scmp.ne.s32.totalorder %s344, %s360
    %p362 = scmp.eq.s32.totalorder %s24, 0
    %p363 = por %p361, %p362
    %p364 = scmp.le.s32.totalorder 1, %s18
    %p365 = scmp.lt.s32.totalorder %s18, 3
    %p366 = pnand %p364, %p365
    %p367 = pneg %p366
    // Predicated region
    $region9: #{_lambda_.9} parent=5 // pred_check
      _
    $region10: #{_lambda_.9} parent=5 // pred_check_branch
      %369 = sbr.rel (%p366) target = $region12
    $region11: #{_lambda_.9} parent=5 // pred_region
      %s370 = ssub.s32 %s18, 1
    $region12: #{_lambda_.9} parent=5 // pred_fallthru
      _
    %p371 = scmp.lt.s32.totalorder %s18, 2
    // Predicated region
    $region13: #{_lambda_.9} parent=5 // pred_check
      %p372 = pneg %p371
    $region14: #{_lambda_.9} parent=5 // pred_check_branch
      %374 = sbr.rel (%p372) target = $region16
    $region15: #{_lambda_.9} parent=5 // pred_region
      // Predicated region
      $region17: #{_lambda_.9} parent=15 // pred_check
        %p375 = pneg %p38
      $region18: #{_lambda_.9} parent=15 // pred_check_branch
        %377 = sbr.rel (%p375) target = $region20
      $region19: #{_lambda_.9} parent=15 // pred_region
        %p378 = scmp.lt.s32.totalorder %s18, 1
        %s379 = scalar_select %p378, %s18, 1
        %s380 = smul.addr %s379, 2
        %s381 = smul.addr %s380, 8
        %s382 = scalar_lea.vmem %s0, %s381
      $region20: #{_lambda_.9} parent=15 // pred_fallthru
        _
      // Predicated region
      $region21: #{_lambda_.9} parent=15 // pred_check
        %p383 = pneg %p64
      $region22: #{_lambda_.9} parent=15 // pred_check_branch
        %385 = sbr.rel (%p383) target = $region24
      $region23: #{_lambda_.9} parent=15 // pred_region
        %p386 = scmp.lt.s32.totalorder %s18, 1
        %s387 = scalar_select %p386, %s18, 1
        %s388 = smul.addr %s387, 2
        %s389 = smul.addr %s388, 8
        %s390 = scalar_lea.vmem %s1, %s389
      $region24: #{_lambda_.9} parent=15 // pred_fallthru
        _
      // Predicated region
      $region25: #{_lambda_.9} parent=15 // pred_check
        %p391 = pneg %p90
      $region26: #{_lambda_.9} parent=15 // pred_check_branch
        %393 = sbr.rel (%p391) target = $region28
      $region27: #{_lambda_.9} parent=15 // pred_region
        %p394 = scmp.lt.s32.totalorder %s18, 1
        %s395 = scalar_select %p394, %s18, 1
        %s396 = smul.addr %s395, 48
        %s397 = smul.addr %s396, 4
        %s398 = scalar_lea.vmem %s2, %s397
      $region28: #{_lambda_.9} parent=15 // pred_fallthru
        _
      // Predicated region
      $region29: #{_lambda_.9} parent=15 // pred_check
        %p399 = pneg %p116
      $region30: #{_lambda_.9} parent=15 // pred_check_branch
        %401 = sbr.rel (%p399) target = $region32
      $region31: #{_lambda_.9} parent=15 // pred_region
        %p402 = scmp.lt.s32.totalorder %s18, 1
        %s403 = scalar_select %p402, %s18, 1
        %s404 = smul.addr %s403, 3
        %s405 = scalar_lea.vmem %s3, %s404
      $region32: #{_lambda_.9} parent=15 // pred_fallthru
        _
      // Predicated region
      $region33: #{_lambda_.9} parent=15 // pred_check
        %p406 = pneg %p142
      $region34: #{_lambda_.9} parent=15 // pred_check_branch
        %408 = sbr.rel (%p406) target = $region36
      $region35: #{_lambda_.9} parent=15 // pred_region
        %p409 = scmp.lt.s32.totalorder %s18, 1
        %s410 = scalar_select %p409, %s18, 1
        %s411 = smul.addr %s410, 16
        %s412 = smul.addr %s411, 4
        %s413 = scalar_lea.vmem %s4, %s412
      $region36: #{_lambda_.9} parent=15 // pred_fallthru
        _
      // Predicated region
      $region37: #{_lambda_.9} parent=15 // pred_check
        %p414 = pneg %p168
      $region38: #{_lambda_.9} parent=15 // pred_check_branch
        %416 = sbr.rel (%p414) target = $region40
      $region39: #{_lambda_.9} parent=15 // pred_region
        %p417 = scmp.lt.s32.totalorder %s18, 1
        %s418 = scalar_select %p417, %s18, 1
        %s419 = scalar_lea.vmem %s5, %s418
      $region40: #{_lambda_.9} parent=15 // pred_fallthru
        _
      // Predicated region
      $region41: #{_lambda_.9} parent=15 // pred_check
        %p420 = pneg %p194
      $region42: #{_lambda_.9} parent=15 // pred_check_branch
        %422 = sbr.rel (%p420) target = $region44
      $region43: #{_lambda_.9} parent=15 // pred_region
        %p423 = scmp.lt.s32.totalorder %s18, 1
        %s424 = scalar_select %p423, %s18, 1
        %s425 = smul.addr %s424, 32
        %s426 = smul.addr %s425, 4
        %s427 = scalar_lea.vmem %s6, %s426
      $region44: #{_lambda_.9} parent=15 // pred_fallthru
        _
      // Predicated region
      $region45: #{_lambda_.9} parent=15 // pred_check
        %p428 = pneg %p220
      $region46: #{_lambda_.9} parent=15 // pred_check_branch
        %430 = sbr.rel (%p428) target = $region48
      $region47: #{_lambda_.9} parent=15 // pred_region
        %p431 = scmp.lt.s32.totalorder %s18, 1
        %s432 = scalar_select %p431, %s18, 1
        %s433 = smul.addr %s432, 2
        %s434 = scalar_lea.vmem %s7, %s433
      $region48: #{_lambda_.9} parent=15 // pred_fallthru
        _
      // Predicated region
      $region49: #{_lambda_.9} parent=15 // pred_check
        %p435 = pneg %p246
      $region50: #{_lambda_.9} parent=15 // pred_check_branch
        %437 = sbr.rel (%p435) target = $region52
      $region51: #{_lambda_.9} parent=15 // pred_region
        %p438 = scmp.lt.s32.totalorder %s18, 1
        %s439 = scalar_select %p438, %s18, 1
        %s440 = smul.addr %s439, 32
        %s441 = smul.addr %s440, 4
        %s442 = scalar_lea.vmem %s8, %s441
      $region52: #{_lambda_.9} parent=15 // pred_fallthru
        _
      // Predicated region
      $region53: #{_lambda_.9} parent=15 // pred_check
        %p443 = pneg %p272
      $region54: #{_lambda_.9} parent=15 // pred_check_branch
        %445 = sbr.rel (%p443) target = $region56
      $region55: #{_lambda_.9} parent=15 // pred_region
        %p446 = scmp.lt.s32.totalorder %s18, 1
        %s447 = scalar_select %p446, %s18, 1
        %s448 = scalar_lea.vmem %s9, %s447
      $region56: #{_lambda_.9} parent=15 // pred_fallthru
        _
      // Predicated region
      $region57: #{_lambda_.9} parent=15 // pred_check
        %p449 = pneg %p298
      $region58: #{_lambda_.9} parent=15 // pred_check_branch
        %451 = sbr.rel (%p449) target = $region60
      $region59: #{_lambda_.9} parent=15 // pred_region
        %p452 = scmp.lt.s32.totalorder %s18, 1
        %s453 = scalar_select %p452, %s18, 1
        %s454 = scalar_lea.vmem %s10, %s453
      $region60: #{_lambda_.9} parent=15 // pred_fallthru
        _
      // Predicated region
      $region61: #{_lambda_.9} parent=15 // pred_check
        %p455 = pneg %p324
      $region62: #{_lambda_.9} parent=15 // pred_check_branch
        %457 = sbr.rel (%p455) target = $region64
      $region63: #{_lambda_.9} parent=15 // pred_region
        %p458 = scmp.lt.s32.totalorder %s18, 1
        %s459 = scalar_select %p458, %s18, 1
        %s460 = scalar_lea.vmem %s11, %s459
      $region64: #{_lambda_.9} parent=15 // pred_fallthru
        _
    $region16: #{_lambda_.9} parent=5 // pred_fallthru
      _
    %p461 = scmp.le.s32.totalorder 1, %s18
    %p462 = scmp.lt.s32.totalorder %s18, 3
    %p463 = pnand %p461, %p462
    %p464 = pneg %p463
    // Predicated region
    $region65: #{_lambda_.9} parent=5 // pred_check
      _
    $region66: #{_lambda_.9} parent=5 // pred_check_branch
      %466 = sbr.rel (%p463) target = $region68
    $region67: #{_lambda_.9} parent=5 // pred_region
      %s467 = ssub.s32 %s18, 1
      %p468 = scmp.lt.s32.totalorder %s23, 1
      %s469 = scalar_select %p468, %s23, 1
      %s470 = smul.addr %s469, 2
      %s471 = smul.addr %s470, 8
      %s472 = scalar_lea.vmem %s0, %s471
      %p473 = pneg %p44
      %p474 = pneg %p41
      %p475 = scmp.lt.s32.totalorder %s23, 1
      %s476 = scalar_select %p475, %s23, 1
      %s477 = smul.addr %s476, 2
      %s478 = smul.addr %s477, 8
      %s479 = scalar_lea.vmem %s1, %s478
      %p480 = pneg %p70
      %p481 = pneg %p67
      %p482 = scmp.lt.s32.totalorder %s23, 1
      %s483 = scalar_select %p482, %s23, 1
      %s484 = smul.addr %s483, 48
      %s485 = smul.addr %s484, 4
      %s486 = scalar_lea.vmem %s2, %s485
      %p487 = pneg %p96
      %p488 = pneg %p93
      %p489 = scmp.lt.s32.totalorder %s23, 1
      %s490 = scalar_select %p489, %s23, 1
      %s491 = smul.addr %s490, 3
      %s492 = scalar_lea.vmem %s3, %s491
      %p493 = pneg %p122
      %p494 = pneg %p119
      %p495 = scmp.lt.s32.totalorder %s23, 1
      %s496 = scalar_select %p495, %s23, 1
      %s497 = smul.addr %s496, 16
      %s498 = smul.addr %s497, 4
      %s499 = scalar_lea.vmem %s4, %s498
      %p500 = pneg %p148
      %p501 = pneg %p145
      %p502 = scmp.lt.s32.totalorder %s23, 1
      %s503 = scalar_select %p502, %s23, 1
      %s504 = scalar_lea.vmem %s5, %s503
      %p505 = pneg %p174
      %p506 = pneg %p171
      %p507 = scmp.lt.s32.totalorder %s23, 1
      %s508 = scalar_select %p507, %s23, 1
      %s509 = smul.addr %s508, 32
      %s510 = smul.addr %s509, 4
      %s511 = scalar_lea.vmem %s6, %s510
      %p512 = pneg %p200
      %p513 = pneg %p197
      %p514 = scmp.lt.s32.totalorder %s23, 1
      %s515 = scalar_select %p514, %s23, 1
      %s516 = smul.addr %s515, 2
      %s517 = scalar_lea.vmem %s7, %s516
      %p518 = pneg %p226
      %p519 = pneg %p223
      %p520 = scmp.lt.s32.totalorder %s23, 1
      %s521 = scalar_select %p520, %s23, 1
      %s522 = smul.addr %s521, 32
      %s523 = smul.addr %s522, 4
      %s524 = scalar_lea.vmem %s8, %s523
      %p525 = pneg %p252
      %p526 = pneg %p249
      %p527 = scmp.lt.s32.totalorder %s23, 1
      %s528 = scalar_select %p527, %s23, 1
      %s529 = scalar_lea.vmem %s9, %s528
      %p530 = pneg %p278
      %p531 = pneg %p275
      %p532 = scmp.lt.s32.totalorder %s23, 1
      %s533 = scalar_select %p532, %s23, 1
      %s534 = scalar_lea.vmem %s10, %s533
      %p535 = pneg %p304
      %p536 = pneg %p301
      %p537 = scmp.lt.s32.totalorder %s23, 1
      %s538 = scalar_select %p537, %s23, 1
      %s539 = scalar_lea.vmem %s11, %s538
      %p540 = pneg %p330
      %p541 = pneg %p327
      %p542 = pneg %p356
      %p543 = pneg %p353
      %p544 = scmp.lt.s32.totalorder %s23, 1
      %s545 = scalar_select %p544, %s23, 1
      %s546 = smul.addr %s545, 2
      %s547 = smul.addr %s546, 8
      %s548 = scalar_lea.vmem %s12, %s547
      %p549 = scmp.lt.s32.totalorder %s23, 1
      %s550 = scalar_select %p549, %s23, 1
      %s551 = smul.addr %s550, 2
      %s552 = smul.addr %s551, 8
      %s553 = scalar_lea.vmem %s0, %s552
      %p554 = scmp.lt.s32.totalorder %s23, 1
      %s555 = scalar_select %p554, %s23, 1
      %s556 = smul.addr %s555, 2
      %s557 = smul.addr %s556, 8
      %s558 = scalar_lea.vmem %s1, %s557
      %p559 = scmp.lt.s32.totalorder %s23, 1
      %s560 = scalar_select %p559, %s23, 1
      %s561 = smul.addr %s560, 48
      %s562 = smul.addr %s561, 4
      %s563 = scalar_lea.vmem %s2, %s562
      %p564 = scmp.lt.s32.totalorder %s23, 1
      %s565 = scalar_select %p564, %s23, 1
      %s566 = smul.addr %s565, 3
      %s567 = scalar_lea.vmem %s3, %s566
      %p568 = scmp.lt.s32.totalorder %s23, 1
      %s569 = scalar_select %p568, %s23, 1
      %s570 = smul.addr %s569, 16
      %s571 = smul.addr %s570, 4
      %s572 = scalar_lea.vmem %s4, %s571
      %p573 = scmp.lt.s32.totalorder %s23, 1
      %s574 = scalar_select %p573, %s23, 1
      %s575 = scalar_lea.vmem %s5, %s574
      %p576 = scmp.lt.s32.totalorder %s23, 1
      %s577 = scalar_select %p576, %s23, 1
      %s578 = smul.addr %s577, 32
      %s579 = smul.addr %s578, 4
      %s580 = scalar_lea.vmem %s6, %s579
      %p581 = scmp.lt.s32.totalorder %s23, 1
      %s582 = scalar_select %p581, %s23, 1
      %s583 = smul.addr %s582, 2
      %s584 = scalar_lea.vmem %s7, %s583
      %p585 = scmp.lt.s32.totalorder %s23, 1
      %s586 = scalar_select %p585, %s23, 1
      %s587 = smul.addr %s586, 32
      %s588 = smul.addr %s587, 4
      %s589 = scalar_lea.vmem %s8, %s588
      %p590 = scmp.lt.s32.totalorder %s23, 1
      %s591 = scalar_select %p590, %s23, 1
      %s592 = scalar_lea.vmem %s9, %s591
      %p593 = scmp.lt.s32.totalorder %s23, 1
      %s594 = scalar_select %p593, %s23, 1
      %s595 = scalar_lea.vmem %s10, %s594
      %p596 = scmp.lt.s32.totalorder %s23, 1
      %s597 = scalar_select %p596, %s23, 1
      %s598 = scalar_lea.vmem %s11, %s597
      %p599 = scmp.lt.s32.totalorder %s23, 1
      %s600 = scalar_select %p599, %s23, 1
      %s601 = smul.addr %s600, 2
      %s602 = smul.addr %s601, 8
      %s603 = scalar_lea.vmem %s12, %s602
      %v605 = vld [vmem:[%s553] sm:$0xff]
      %v606 = vld [vmem:[%s553 + $0x8] sm:$0xff]
      %v607 = vld [vmem:[%s558] sm:$0xff]
      %v608 = vld [vmem:[%s558 + $0x8] sm:$0xff]
      %v609 = vpack.c.bf16 %v606, %v605
      %v610 = vpack.c.bf16 %v608, %v607
      %v611 = vld [vmem:[%s563] sm:$0xff]
      %v612 = vld [vmem:[%s563 + $0x8] sm:$0xf]
      %v613 = vld [vmem:[%s563 + $0xc] sm:$0xff]
      %v614 = vld [vmem:[%s563 + $0x14] sm:$0xf]
      %v615 = vld [vmem:[%s563 + $0x18] sm:$0xff]
      %v616 = vld [vmem:[%s563 + $0x20] sm:$0xf]
      %v617 = vld [vmem:[%s563 + $0x24] sm:$0xff]
      %v618 = vld [vmem:[%s563 + $0x2c] sm:$0xf]
      %v619 = vld [vmem:[%s563 + $0x30] sm:$0xff]
      %v620 = vld [vmem:[%s563 + $0x38] sm:$0xf]
      %v621 = vld [vmem:[%s563 + $0x3c] sm:$0xff]
      %v622 = vld [vmem:[%s563 + $0x44] sm:$0xf]
      %v623 = vld [vmem:[%s563 + $0x48] sm:$0xff]
      %v624 = vld [vmem:[%s563 + $0x50] sm:$0xf]
      %v625 = vld [vmem:[%s563 + $0x54] sm:$0xff]
      %v626 = vld [vmem:[%s563 + $0x5c] sm:$0xf]
      %v627 = vld [vmem:[%s563 + $0x60] sm:$0xff]
      %v628 = vld [vmem:[%s563 + $0x68] sm:$0xf]
      %v629 = vld [vmem:[%s563 + $0x6c] sm:$0xff]
      %v630 = vld [vmem:[%s563 + $0x74] sm:$0xf]
      %v631 = vld [vmem:[%s563 + $0x78] sm:$0xff]
      %v632 = vld [vmem:[%s563 + $0x80] sm:$0xf]
      %v633 = vld [vmem:[%s563 + $0x84] sm:$0xff]
      %v634 = vld [vmem:[%s563 + $0x8c] sm:$0xf]
      %v635 = vld [vmem:[%s563 + $0x90] sm:$0xff]
      %v636 = vld [vmem:[%s563 + $0x98] sm:$0xf]
      %v637 = vld [vmem:[%s563 + $0x9c] sm:$0xff]
      %v638 = vld [vmem:[%s563 + $0xa4] sm:$0xf]
      %v639 = vld [vmem:[%s563 + $0xa8] sm:$0xff]
      %v640 = vld [vmem:[%s563 + $0xb0] sm:$0xf]
      %v641 = vld [vmem:[%s563 + $0xb4] sm:$0xff]
      %v642 = vld [vmem:[%s563 + $0xbc] sm:$0xf]
      %v643 = vld [vmem:[%s567] sm:$0x7]
      %v645 = vlaneseq
      %v646 = vshrl.u32 %v645, 7
      %v647 = vsub.s32 0, %v646
      %v648 = vrot.slane %v643, %v647
      %v649 = vlaneseq
      %v650 = vshrl.u32 %v649, 7
      %v651 = vsub.s32 1, %v650
      %v652 = vrot.slane %v643, %v651
      %v653 = vlaneseq
      %v654 = vshrl.u32 %v653, 7
      %v655 = vsub.s32 2, %v654
      %v656 = vrot.slane %v643, %v655
      %v692 = vunpack.c.l.b16 %v611
      %v693 = vunpack.c.h.b16 %v611
      %v694 = vunpack.c.l.b16 %v612
      %v695 = vunpack.c.l.b16 %v613
      %v696 = vunpack.c.h.b16 %v613
      %v697 = vunpack.c.l.b16 %v614
      %v698 = vunpack.c.l.b16 %v615
      %v699 = vunpack.c.h.b16 %v615
      %v700 = vunpack.c.l.b16 %v616
      %v701 = vunpack.c.l.b16 %v617
      %v702 = vunpack.c.h.b16 %v617
      %v703 = vunpack.c.l.b16 %v618
      %v704 = vunpack.c.l.b16 %v619
      %v705 = vunpack.c.h.b16 %v619
      %v706 = vunpack.c.l.b16 %v620
      %v707 = vunpack.c.l.b16 %v621
      %v708 = vunpack.c.h.b16 %v621
      %v709 = vunpack.c.l.b16 %v622
      %v710 = vunpack.c.l.b16 %v623
      %v711 = vunpack.c.h.b16 %v623
      %v712 = vunpack.c.l.b16 %v624
      %v713 = vunpack.c.l.b16 %v625
      %v714 = vunpack.c.h.b16 %v625
      %v715 = vunpack.c.l.b16 %v626
      %v716 = vunpack.c.l.b16 %v627
      %v717 = vunpack.c.h.b16 %v627
      %v718 = vunpack.c.l.b16 %v628
      %v719 = vunpack.c.l.b16 %v629
      %v720 = vunpack.c.h.b16 %v629
      %v721 = vunpack.c.l.b16 %v630
      %v722 = vunpack.c.l.b16 %v631
      %v723 = vunpack.c.h.b16 %v631
      %v724 = vunpack.c.l.b16 %v632
      %v725 = vunpack.c.l.b16 %v633
      %v726 = vunpack.c.h.b16 %v633
      %v727 = vunpack.c.l.b16 %v634
      %v728 = vunpack.c.l.b16 %v635
      %v729 = vunpack.c.h.b16 %v635
      %v730 = vunpack.c.l.b16 %v636
      %v731 = vunpack.c.l.b16 %v637
      %v732 = vunpack.c.h.b16 %v637
      %v733 = vunpack.c.l.b16 %v638
      %v734 = vunpack.c.l.b16 %v639
      %v735 = vunpack.c.h.b16 %v639
      %v736 = vunpack.c.l.b16 %v640
      %v737 = vunpack.c.l.b16 %v641
      %v738 = vunpack.c.h.b16 %v641
      %v739 = vunpack.c.l.b16 %v642
      %v740 = vpack.c.b16 %v695, %v692
      %v741 = vpack.c.b16 %v696, %v693
      %v742 = vpack.c.b16 %v697, %v694
      %v743 = vpack.c.b16 %v701, %v698
      %v744 = vpack.c.b16 %v702, %v699
      %v745 = vpack.c.b16 %v703, %v700
      %v746 = vpack.c.b16 %v707, %v704
      %v747 = vpack.c.b16 %v708, %v705
      %v748 = vpack.c.b16 %v709, %v706
      %v749 = vpack.c.b16 %v713, %v710
      %v750 = vpack.c.b16 %v714, %v711
      %v751 = vpack.c.b16 %v715, %v712
      %v752 = vpack.c.b16 %v719, %v716
      %v753 = vpack.c.b16 %v720, %v717
      %v754 = vpack.c.b16 %v721, %v718
      %v755 = vpack.c.b16 %v725, %v722
      %v756 = vpack.c.b16 %v726, %v723
      %v757 = vpack.c.b16 %v727, %v724
      %v758 = vpack.c.b16 %v731, %v728
      %v759 = vpack.c.b16 %v732, %v729
      %v760 = vpack.c.b16 %v733, %v730
      %v761 = vpack.c.b16 %v737, %v734
      %v762 = vpack.c.b16 %v738, %v735
      %v763 = vpack.c.b16 %v739, %v736
      %788 = vmatprep.subr.bf16.mxu0 %v762
      %789 = vmatpush1.bf16.msra.mxu0 %v761
      %790 = vmatprep.subr.bf16.mxu0 %v759
      %791 = vmatpush1.bf16.msra.mxu0 %v758
      %792 = vmatprep.subr.bf16.mxu0 %v756
      %793 = vmatpush1.bf16.msra.mxu0 %v755
      %794 = vmatprep.subr.bf16.mxu0 %v753
      %795 = vmatpush1.bf16.msra.mxu0 %v752
      %796 = vmatprep.subr.bf16.mxu0 %v750
      %797 = vmatpush1.bf16.msra.mxu0 %v749
      %798 = vmatprep.subr.bf16.mxu0 %v747
      %799 = vmatpush1.bf16.msra.mxu0 %v746
      %800 = vmatprep.subr.bf16.mxu0 %v744
      %801 = vmatpush1.bf16.msra.mxu0 %v743
      %802 = vmatprep.subr.bf16.mxu0 %v741
      %803 = vmatpush1.bf16.msra.mxu0 %v740
      %804 = vmatprep.subr.bf16.mxu0 0
      %805 = vmatpush2.bf16.msra.mxu0 0
      %806 = vmatprep.subr.bf16.mxu0 0
      %807 = vmatpush2.bf16.msra.mxu0 0
      %808 = vmatprep.subr.bf16.mxu0 0
      %809 = vmatpush2.bf16.msra.mxu0 0
      %810 = vmatprep.subr.bf16.mxu0 0
      %811 = vmatpush2.bf16.msra.mxu0 0
      %812 = vmatprep.subr.bf16.mxu0 0
      %813 = vmatpush2.bf16.msra.mxu0 0
      %814 = vmatprep.subr.bf16.mxu0 0
      %815 = vmatpush2.bf16.msra.mxu0 0
      %816 = vmatprep.subr.bf16.mxu0 0
      %817 = vmatpush2.bf16.msra.mxu0 0
      %818 = vmatprep.subr.bf16.mxu0 0
      %819 = vmatpush2.bf16.msra.mxu0 0
      %820 = vmatprep.mubr.bf16.mxu0 0
      %821 = vmatmul.mubr.bf16.gmra.mxu0 %v609
      %v822 = vpop.f32.mrf.mxu0
      %v823 = vadd.f32 %v648, %v822
      %v824 = vpop.f32.mrf.mxu0
      %v825 = vpop.f32.mrf.mxu0
      %v826 = vadd.f32 %v648, %v825
      %v827 = vpop.f32.mrf.mxu0
      %828 = vmatprep.mubr.bf16.mxu0 0
      %829 = vmatmul.mubr.bf16.gmra.mxu0 %v610
      %v830 = vpop.f32.mrf.mxu0
      %v831 = vpop.f32.mrf.mxu0
      %v832 = vadd.f32 %v652, %v831
      %v833 = vpop.f32.mrf.mxu0
      %v834 = vpop.f32.mrf.mxu0
      %v835 = vadd.f32 %v652, %v834
      %836 = vdwg.mxu0
      %837 = vmatprep.subr.bf16.mxu0 0
      %838 = vmatpush1.bf16.msra.mxu0 %v763
      %839 = vmatprep.subr.bf16.mxu0 0
      %840 = vmatpush1.bf16.msra.mxu0 %v760
      %841 = vmatprep.subr.bf16.mxu0 0
      %842 = vmatpush1.bf16.msra.mxu0 %v757
      %843 = vmatprep.subr.bf16.mxu0 0
      %844 = vmatpush1.bf16.msra.mxu0 %v754
      %845 = vmatprep.subr.bf16.mxu0 0
      %846 = vmatpush1.bf16.msra.mxu0 %v751
      %847 = vmatprep.subr.bf16.mxu0 0
      %848 = vmatpush1.bf16.msra.mxu0 %v748
      %849 = vmatprep.subr.bf16.mxu0 0
      %850 = vmatpush1.bf16.msra.mxu0 %v745
      %851 = vmatprep.subr.bf16.mxu0 0
      %852 = vmatpush1.bf16.msra.mxu0 %v742
      %853 = vmatprep.subr.bf16.mxu0 0
      %854 = vmatpush2.bf16.msra.mxu0 0
      %855 = vmatprep.subr.bf16.mxu0 0
      %856 = vmatpush2.bf16.msra.mxu0 0
      %857 = vmatprep.subr.bf16.mxu0 0
      %858 = vmatpush2.bf16.msra.mxu0 0
      %859 = vmatprep.subr.bf16.mxu0 0
      %860 = vmatpush2.bf16.msra.mxu0 0
      %861 = vmatprep.subr.bf16.mxu0 0
      %862 = vmatpush2.bf16.msra.mxu0 0
      %863 = vmatprep.subr.bf16.mxu0 0
      %864 = vmatpush2.bf16.msra.mxu0 0
      %865 = vmatprep.subr.bf16.mxu0 0
      %866 = vmatpush2.bf16.msra.mxu0 0
      %867 = vmatprep.subr.bf16.mxu0 0
      %868 = vmatpush2.bf16.msra.mxu0 0
      %869 = vmatprep.mubr.bf16.mxu0 0
      %870 = vmatmul.mubr.bf16.gmra.mxu0 %v609
      %v871 = vpop.f32.mrf.mxu0
      %v872 = vpop.f32.mrf.mxu0
      %v873 = vpop.f32.mrf.mxu0
      %v874 = vpop.f32.mrf.mxu0
      %875 = vmatprep.mubr.bf16.mxu0 0
      %876 = vmatmul.mubr.bf16.gmra.mxu0 %v610
      %v877 = vpop.f32.mrf.mxu0
      %v878 = vadd.f32 %v656, %v877
      %v879 = vpop.f32.mrf.mxu0
      %v880 = vpop.f32.mrf.mxu0
      %v881 = vadd.f32 %v656, %v880
      %v882 = vpop.f32.mrf.mxu0
      %883 = vdwg.mxu0
      %v884 = vld [vmem:[%s572] sm:$0xf]
      %v885 = vld [vmem:[%s572 + $0x4] sm:$0xf]
      %v886 = vld [vmem:[%s572 + $0x8] sm:$0xf]
      %v887 = vld [vmem:[%s572 + $0xc] sm:$0xf]
      %v888 = vld [vmem:[%s572 + $0x10] sm:$0xf]
      %v889 = vld [vmem:[%s572 + $0x14] sm:$0xf]
      %v890 = vld [vmem:[%s572 + $0x18] sm:$0xf]
      %v891 = vld [vmem:[%s572 + $0x1c] sm:$0xf]
      %v892 = vld [vmem:[%s572 + $0x20] sm:$0xf]
      %v893 = vld [vmem:[%s572 + $0x24] sm:$0xf]
      %v894 = vld [vmem:[%s572 + $0x28] sm:$0xf]
      %v895 = vld [vmem:[%s572 + $0x2c] sm:$0xf]
      %v896 = vld [vmem:[%s572 + $0x30] sm:$0xf]
      %v897 = vld [vmem:[%s572 + $0x34] sm:$0xf]
      %v898 = vld [vmem:[%s572 + $0x38] sm:$0xf]
      %v899 = vld [vmem:[%s572 + $0x3c] sm:$0xf]
      %v900 = vpack.c.bf16 %v823, %v823
      %v901 = vpack.c.bf16 %v826, %v826
      %v902 = vpack.c.bf16 %v832, %v832
      %v903 = vpack.c.bf16 %v835, %v835
      %v904 = vpack.c.bf16 %v878, %v878
      %v905 = vpack.c.bf16 %v881, %v881
      %vm906 = vcmask 261120
      %v908 = vsel %vm906, %v900, 0
      %v911 = vsel %vm906, %v902, 0
      %913 = vmatprep.subr.bf16.mxu0 0
      %914 = vmatpush1.bf16.xpose.msra.mxu0 0
      %915 = vmatprep.subr.bf16.mxu0 0
      %916 = vmatpush1.bf16.xpose.msra.mxu0 0
      %917 = vmatprep.subr.bf16.mxu0 0
      %918 = vmatpush1.bf16.xpose.msra.mxu0 0
      %919 = vmatprep.subr.bf16.mxu0 0
      %920 = vmatpush1.bf16.xpose.msra.mxu0 0
      %921 = vmatprep.subr.bf16.mxu0 0
      %922 = vmatpush1.bf16.xpose.msra.mxu0 0
      %923 = vmatprep.subr.bf16.mxu0 0
      %924 = vmatpush1.bf16.xpose.msra.mxu0 0
      %925 = vmatprep.subr.bf16.mxu0 0
      %926 = vmatpush1.bf16.xpose.msra.mxu0 0
      %927 = vmatprep.subr.bf16.mxu0 0
      %928 = vmatpush1.bf16.xpose.msra.mxu0 %v911
      %929 = vmatprep.subr.bf16.mxu0 0
      %930 = vmatpush2.bf16.xpose.msra.mxu0 0
      %931 = vmatprep.subr.bf16.mxu0 0
      %932 = vmatpush2.bf16.xpose.msra.mxu0 0
      %933 = vmatprep.subr.bf16.mxu0 0
      %934 = vmatpush2.bf16.xpose.msra.mxu0 0
      %935 = vmatprep.subr.bf16.mxu0 0
      %936 = vmatpush2.bf16.xpose.msra.mxu0 0
      %937 = vmatprep.subr.bf16.mxu0 0
      %938 = vmatpush2.bf16.xpose.msra.mxu0 0
      %939 = vmatprep.subr.bf16.mxu0 0
      %940 = vmatpush2.bf16.xpose.msra.mxu0 0
      %941 = vmatprep.subr.bf16.mxu0 0
      %942 = vmatpush2.bf16.xpose.msra.mxu0 0
      %943 = vmatprep.subr.bf16.mxu0 0
      %944 = vmatpush2.bf16.xpose.msra.mxu0 0
      %945 = vmatprep.mubr.bf16.mxu0 0
      %946 = vmatmul.mubr.bf16.gmra.mxu0 %v908
      %v947 = vpop.f32.mrf.mxu0
      %v948 = vadd.f32 0.0, %v947
      %v949 = vpop.f32.mrf.mxu0
      %v950 = vpop.f32.mrf.mxu0
      %v951 = vpop.f32.mrf.mxu0
      %952 = vdwg.mxu0
      %v954 = vsel %vm906, %v901, 0
      %v957 = vsel %vm906, %v903, 0
      %959 = vmatprep.subr.bf16.mxu0 0
      %960 = vmatpush1.bf16.xpose.msra.mxu0 0
      %961 = vmatprep.subr.bf16.mxu0 0
      %962 = vmatpush1.bf16.xpose.msra.mxu0 0
      %963 = vmatprep.subr.bf16.mxu0 0
      %964 = vmatpush1.bf16.xpose.msra.mxu0 0
      %965 = vmatprep.subr.bf16.mxu0 0
      %966 = vmatpush1.bf16.xpose.msra.mxu0 0
      %967 = vmatprep.subr.bf16.mxu0 0
      %968 = vmatpush1.bf16.xpose.msra.mxu0 0
      %969 = vmatprep.subr.bf16.mxu0 0
      %970 = vmatpush1.bf16.xpose.msra.mxu0 0
      %971 = vmatprep.subr.bf16.mxu0 0
      %972 = vmatpush1.bf16.xpose.msra.mxu0 0
      %973 = vmatprep.subr.bf16.mxu0 0
      %974 = vmatpush1.bf16.xpose.msra.mxu0 %v957
      %975 = vmatprep.subr.bf16.mxu0 0
      %976 = vmatpush2.bf16.xpose.msra.mxu0 0
      %977 = vmatprep.subr.bf16.mxu0 0
      %978 = vmatpush2.bf16.xpose.msra.mxu0 0
      %979 = vmatprep.subr.bf16.mxu0 0
      %980 = vmatpush2.bf16.xpose.msra.mxu0 0
      %981 = vmatprep.subr.bf16.mxu0 0
      %982 = vmatpush2.bf16.xpose.msra.mxu0 0
      %983 = vmatprep.subr.bf16.mxu0 0
      %984 = vmatpush2.bf16.xpose.msra.mxu0 0
      %985 = vmatprep.subr.bf16.mxu0 0
      %986 = vmatpush2.bf16.xpose.msra.mxu0 0
      %987 = vmatprep.subr.bf16.mxu0 0
      %988 = vmatpush2.bf16.xpose.msra.mxu0 0
      %989 = vmatprep.subr.bf16.mxu0 0
      %990 = vmatpush2.bf16.xpose.msra.mxu0 0
      %991 = vmatprep.mubr.bf16.mxu0 0
      %992 = vmatmul.mubr.bf16.gmra.mxu0 %v954
      %v993 = vpop.f32.mrf.mxu0
      %v994 = vadd.f32 0.0, %v993
      %v995 = vpop.f32.mrf.mxu0
      %v996 = vpop.f32.mrf.mxu0
      %v997 = vpop.f32.mrf.mxu0
      %998 = vdwg.mxu0
      %v999 = vmul.f32 %v948, 0.17677669
      %v1000 = vmul.f32 %v994, 0.17677669
      %vm1001 = vcmask 64512
      %v1002 = vsel %vm1001, %v999, -inf
      %1003 = vmax.xlane.f32.xlu0 %v1002
      %v1004 = vpop.xlane.xlu0 %1003
      %v1005 = vsel %vm1001, %v1000, -inf
      %1006 = vmax.xlane.f32.xlu0 %v1005
      %v1007 = vpop.xlane.xlu0 %1006
      %v1008 = vsub.f32 %v999, %v1004
      %v1009 = vsub.f32 %v1000, %v1007
      %v1010 = vmul.f32 %v1008, 1.442695
      %v1011 = vpow.pop %v1010
      %v1012 = vmul.f32 %v1009, 1.442695
      %v1013 = vpow.pop %v1012
      %v1014 = vsel %vm1001, %v1011, 0.0
      %1015 = vadd.xlane.f32.xlu0 %v1014
      %v1016 = vpop.xlane.xlu0 %1015
      %v1017 = vsel %vm1001, %v1013, 0.0
      %1018 = vadd.xlane.f32.xlu0 %v1017
      %v1019 = vpop.xlane.xlu0 %1018
      %v1020 = vrcp.pop %v1016
      %v1021 = vmul.f32 %v1011, %v1020
      %v1022 = vrcp.pop %v1019
      %v1023 = vmul.f32 %v1013, %v1022
      %v1024 = vpack.c.bf16 %v1021, %v1021
      %v1025 = vpack.c.bf16 %v1023, %v1023
      %v1027 = vsel %vm1001, %v1024, 0
      %vm1029 = vcmask 1043456
      %v1031 = vsel %vm1029, %v904, 0
      %1033 = vmatprep.subr.bf16.mxu0 0
      %1034 = vmatpush1.bf16.msra.mxu0 0
      %1035 = vmatprep.subr.bf16.mxu0 0
      %1036 = vmatpush1.bf16.msra.mxu0 0
      %1037 = vmatprep.subr.bf16.mxu0 0
      %1038 = vmatpush1.bf16.msra.mxu0 0
      %1039 = vmatprep.subr.bf16.mxu0 0
      %1040 = vmatpush1.bf16.msra.mxu0 0
      %1041 = vmatprep.subr.bf16.mxu0 0
      %1042 = vmatpush1.bf16.msra.mxu0 0
      %1043 = vmatprep.subr.bf16.mxu0 0
      %1044 = vmatpush1.bf16.msra.mxu0 0
      %1045 = vmatprep.subr.bf16.mxu0 0
      %1046 = vmatpush1.bf16.msra.mxu0 0
      %1047 = vmatprep.subr.bf16.mxu0 0
      %1048 = vmatpush1.bf16.msra.mxu0 %v1031
      %1049 = vmatprep.subr.bf16.mxu0 0
      %1050 = vmatpush2.bf16.msra.mxu0 0
      %1051 = vmatprep.subr.bf16.mxu0 0
      %1052 = vmatpush2.bf16.msra.mxu0 0
      %1053 = vmatprep.subr.bf16.mxu0 0
      %1054 = vmatpush2.bf16.msra.mxu0 0
      %1055 = vmatprep.subr.bf16.mxu0 0
      %1056 = vmatpush2.bf16.msra.mxu0 0
      %1057 = vmatprep.subr.bf16.mxu0 0
      %1058 = vmatpush2.bf16.msra.mxu0 0
      %1059 = vmatprep.subr.bf16.mxu0 0
      %1060 = vmatpush2.bf16.msra.mxu0 0
      %1061 = vmatprep.subr.bf16.mxu0 0
      %1062 = vmatpush2.bf16.msra.mxu0 0
      %1063 = vmatprep.subr.bf16.mxu0 0
      %1064 = vmatpush2.bf16.msra.mxu0 0
      %1065 = vmatprep.mubr.bf16.mxu0 0
      %1066 = vmatmul.mubr.bf16.gmra.mxu0 %v1027
      %v1067 = vpop.f32.mrf.mxu0
      %v1068 = vadd.f32 0.0, %v1067
      %v1069 = vpop.f32.mrf.mxu0
      %v1070 = vpop.f32.mrf.mxu0
      %v1071 = vpop.f32.mrf.mxu0
      %1072 = vdwg.mxu0
      %v1074 = vsel %vm1001, %v1025, 0
      %v1077 = vsel %vm1029, %v905, 0
      %1079 = vmatprep.subr.bf16.mxu0 0
      %1080 = vmatpush1.bf16.msra.mxu0 0
      %1081 = vmatprep.subr.bf16.mxu0 0
      %1082 = vmatpush1.bf16.msra.mxu0 0
      %1083 = vmatprep.subr.bf16.mxu0 0
      %1084 = vmatpush1.bf16.msra.mxu0 0
      %1085 = vmatprep.subr.bf16.mxu0 0
      %1086 = vmatpush1.bf16.msra.mxu0 0
      %1087 = vmatprep.subr.bf16.mxu0 0
      %1088 = vmatpush1.bf16.msra.mxu0 0
      %1089 = vmatprep.subr.bf16.mxu0 0
      %1090 = vmatpush1.bf16.msra.mxu0 0
      %1091 = vmatprep.subr.bf16.mxu0 0
      %1092 = vmatpush1.bf16.msra.mxu0 0
      %1093 = vmatprep.subr.bf16.mxu0 0
      %1094 = vmatpush1.bf16.msra.mxu0 %v1077
      %1095 = vmatprep.subr.bf16.mxu0 0
      %1096 = vmatpush2.bf16.msra.mxu0 0
      %1097 = vmatprep.subr.bf16.mxu0 0
      %1098 = vmatpush2.bf16.msra.mxu0 0
      %1099 = vmatprep.subr.bf16.mxu0 0
      %1100 = vmatpush2.bf16.msra.mxu0 0
      %1101 = vmatprep.subr.bf16.mxu0 0
      %1102 = vmatpush2.bf16.msra.mxu0 0
      %1103 = vmatprep.subr.bf16.mxu0 0
      %1104 = vmatpush2.bf16.msra.mxu0 0
      %1105 = vmatprep.subr.bf16.mxu0 0
      %1106 = vmatpush2.bf16.msra.mxu0 0
      %1107 = vmatprep.subr.bf16.mxu0 0
      %1108 = vmatpush2.bf16.msra.mxu0 0
      %1109 = vmatprep.subr.bf16.mxu0 0
      %1110 = vmatpush2.bf16.msra.mxu0 0
      %1111 = vmatprep.mubr.bf16.mxu0 0
      %1112 = vmatmul.mubr.bf16.gmra.mxu0 %v1074
      %v1113 = vpop.f32.mrf.mxu0
      %v1114 = vadd.f32 0.0, %v1113
      %v1115 = vpop.f32.mrf.mxu0
      %v1116 = vpop.f32.mrf.mxu0
      %v1117 = vpop.f32.mrf.mxu0
      %1118 = vdwg.mxu0
      %v1119 = vpack.c.bf16 %v1114, %v1068
      %1121 = vrot.lane.b32.xlu0 %v900, 96
      %v1122 = vpop.permute.xlu0 %1121
      %1124 = vrot.lane.b32.xlu0 %v902, 96
      %v1125 = vpop.permute.xlu0 %1124
      %v1127 = vsel %vm906, %v1122, 0
      %v1130 = vsel %vm906, %v1125, 0
      %1132 = vmatprep.subr.bf16.mxu0 0
      %1133 = vmatpush1.bf16.xpose.msra.mxu0 0
      %1134 = vmatprep.subr.bf16.mxu0 0
      %1135 = vmatpush1.bf16.xpose.msra.mxu0 0
      %1136 = vmatprep.subr.bf16.mxu0 0
      %1137 = vmatpush1.bf16.xpose.msra.mxu0 0
      %1138 = vmatprep.subr.bf16.mxu0 0
      %1139 = vmatpush1.bf16.xpose.msra.mxu0 0
      %1140 = vmatprep.subr.bf16.mxu0 0
      %1141 = vmatpush1.bf16.xpose.msra.mxu0 0
      %1142 = vmatprep.subr.bf16.mxu0 0
      %1143 = vmatpush1.bf16.xpose.msra.mxu0 0
      %1144 = vmatprep.subr.bf16.mxu0 0
      %1145 = vmatpush1.bf16.xpose.msra.mxu0 0
      %1146 = vmatprep.subr.bf16.mxu0 0
      %1147 = vmatpush1.bf16.xpose.msra.mxu0 %v1130
      %1148 = vmatprep.subr.bf16.mxu0 0
      %1149 = vmatpush2.bf16.xpose.msra.mxu0 0
      %1150 = vmatprep.subr.bf16.mxu0 0
      %1151 = vmatpush2.bf16.xpose.msra.mxu0 0
      %1152 = vmatprep.subr.bf16.mxu0 0
      %1153 = vmatpush2.bf16.xpose.msra.mxu0 0
      %1154 = vmatprep.subr.bf16.mxu0 0
      %1155 = vmatpush2.bf16.xpose.msra.mxu0 0
      %1156 = vmatprep.subr.bf16.mxu0 0
      %1157 = vmatpush2.bf16.xpose.msra.mxu0 0
      %1158 = vmatprep.subr.bf16.mxu0 0
      %1159 = vmatpush2.bf16.xpose.msra.mxu0 0
      %1160 = vmatprep.subr.bf16.mxu0 0
      %1161 = vmatpush2.bf16.xpose.msra.mxu0 0
      %1162 = vmatprep.subr.bf16.mxu0 0
      %1163 = vmatpush2.bf16.xpose.msra.mxu0 0
      %1164 = vmatprep.mubr.bf16.mxu0 0
      %1165 = vmatmul.mubr.bf16.gmra.mxu0 %v1127
      %v1166 = vpop.f32.mrf.mxu0
      %v1167 = vadd.f32 0.0, %v1166
      %v1168 = vpop.f32.mrf.mxu0
      %v1169 = vpop.f32.mrf.mxu0
      %v1170 = vpop.f32.mrf.mxu0
      %1171 = vdwg.mxu0
      %1173 = vrot.lane.b32.xlu0 %v901, 96
      %v1174 = vpop.permute.xlu0 %1173
      %1176 = vrot.lane.b32.xlu0 %v903, 96
      %v1177 = vpop.permute.xlu0 %1176
      %v1179 = vsel %vm906, %v1174, 0
      %v1182 = vsel %vm906, %v1177, 0
      %1184 = vmatprep.subr.bf16.mxu0 0
      %1185 = vmatpush1.bf16.xpose.msra.mxu0 0
      %1186 = vmatprep.subr.bf16.mxu0 0
      %1187 = vmatpush1.bf16.xpose.msra.mxu0 0
      %1188 = vmatprep.subr.bf16.mxu0 0
      %1189 = vmatpush1.bf16.xpose.msra.mxu0 0
      %1190 = vmatprep.subr.bf16.mxu0 0
      %1191 = vmatpush1.bf16.xpose.msra.mxu0 0
      %1192 = vmatprep.subr.bf16.mxu0 0
      %1193 = vmatpush1.bf16.xpose.msra.mxu0 0
      %1194 = vmatprep.subr.bf16.mxu0 0
      %1195 = vmatpush1.bf16.xpose.msra.mxu0 0
      %1196 = vmatprep.subr.bf16.mxu0 0
      %1197 = vmatpush1.bf16.xpose.msra.mxu0 0
      %1198 = vmatprep.subr.bf16.mxu0 0
      %1199 = vmatpush1.bf16.xpose.msra.mxu0 %v1182
      %1200 = vmatprep.subr.bf16.mxu0 0
      %1201 = vmatpush2.bf16.xpose.msra.mxu0 0
      %1202 = vmatprep.subr.bf16.mxu0 0
      %1203 = vmatpush2.bf16.xpose.msra.mxu0 0
      %1204 = vmatprep.subr.bf16.mxu0 0
      %1205 = vmatpush2.bf16.xpose.msra.mxu0 0
      %1206 = vmatprep.subr.bf16.mxu0 0
      %1207 = vmatpush2.bf16.xpose.msra.mxu0 0
      %1208 = vmatprep.subr.bf16.mxu0 0
      %1209 = vmatpush2.bf16.xpose.msra.mxu0 0
      %1210 = vmatprep.subr.bf16.mxu0 0
      %1211 = vmatpush2.bf16.xpose.msra.mxu0 0
      %1212 = vmatprep.subr.bf16.mxu0 0
      %1213 = vmatpush2.bf16.xpose.msra.mxu0 0
      %1214 = vmatprep.subr.bf16.mxu0 0
      %1215 = vmatpush2.bf16.xpose.msra.mxu0 0
      %1216 = vmatprep.mubr.bf16.mxu0 0
      %1217 = vmatmul.mubr.bf16.gmra.mxu0 %v1179
      %v1218 = vpop.f32.mrf.mxu0
      %v1219 = vadd.f32 0.0, %v1218
      %v1220 = vpop.f32.mrf.mxu0
      %v1221 = vpop.f32.mrf.mxu0
      %v1222 = vpop.f32.mrf.mxu0
      %1223 = vdwg.mxu0
      %v1224 = vmul.f32 %v1167, 0.17677669
      %v1225 = vmul.f32 %v1219, 0.17677669
      %v1226 = vsel %vm1001, %v1224, -inf
      %1227 = vmax.xlane.f32.xlu0 %v1226
      %v1228 = vpop.xlane.xlu0 %1227
      %v1229 = vsel %vm1001, %v1225, -inf
      %1230 = vmax.xlane.f32.xlu0 %v1229
      %v1231 = vpop.xlane.xlu0 %1230
      %v1232 = vsub.f32 %v1224, %v1228
      %v1233 = vsub.f32 %v1225, %v1231
      %v1234 = vmul.f32 %v1232, 1.442695
      %v1235 = vpow.pop %v1234
      %v1236 = vmul.f32 %v1233, 1.442695
      %v1237 = vpow.pop %v1236
      %v1238 = vsel %vm1001, %v1235, 0.0
      %1239 = vadd.xlane.f32.xlu0 %v1238
      %v1240 = vpop.xlane.xlu0 %1239
      %v1241 = vsel %vm1001, %v1237, 0.0
      %1242 = vadd.xlane.f32.xlu0 %v1241
      %v1243 = vpop.xlane.xlu0 %1242
      %v1244 = vrcp.pop %v1240
      %v1245 = vmul.f32 %v1235, %v1244
      %v1246 = vrcp.pop %v1243
      %v1247 = vmul.f32 %v1237, %v1246
      %v1248 = vpack.c.bf16 %v1245, %v1245
      %v1249 = vpack.c.bf16 %v1247, %v1247
      %1251 = vrot.lane.b32.xlu0 %v904, 96
      %v1252 = vpop.permute.xlu0 %1251
      %v1254 = vsel %vm1001, %v1248, 0
      %v1257 = vsel %vm1029, %v1252, 0
      %1259 = vmatprep.subr.bf16.mxu0 0
      %1260 = vmatpush1.bf16.msra.mxu0 0
      %1261 = vmatprep.subr.bf16.mxu0 0
      %1262 = vmatpush1.bf16.msra.mxu0 0
      %1263 = vmatprep.subr.bf16.mxu0 0
      %1264 = vmatpush1.bf16.msra.mxu0 0
      %1265 = vmatprep.subr.bf16.mxu0 0
      %1266 = vmatpush1.bf16.msra.mxu0 0
      %1267 = vmatprep.subr.bf16.mxu0 0
      %1268 = vmatpush1.bf16.msra.mxu0 0
      %1269 = vmatprep.subr.bf16.mxu0 0
      %1270 = vmatpush1.bf16.msra.mxu0 0
      %1271 = vmatprep.subr.bf16.mxu0 0
      %1272 = vmatpush1.bf16.msra.mxu0 0
      %1273 = vmatprep.subr.bf16.mxu0 0
      %1274 = vmatpush1.bf16.msra.mxu0 %v1257
      %1275 = vmatprep.subr.bf16.mxu0 0
      %1276 = vmatpush2.bf16.msra.mxu0 0
      %1277 = vmatprep.subr.bf16.mxu0 0
      %1278 = vmatpush2.bf16.msra.mxu0 0
      %1279 = vmatprep.subr.bf16.mxu0 0
      %1280 = vmatpush2.bf16.msra.mxu0 0
      %1281 = vmatprep.subr.bf16.mxu0 0
      %1282 = vmatpush2.bf16.msra.mxu0 0
      %1283 = vmatprep.subr.bf16.mxu0 0
      %1284 = vmatpush2.bf16.msra.mxu0 0
      %1285 = vmatprep.subr.bf16.mxu0 0
      %1286 = vmatpush2.bf16.msra.mxu0 0
      %1287 = vmatprep.subr.bf16.mxu0 0
      %1288 = vmatpush2.bf16.msra.mxu0 0
      %1289 = vmatprep.subr.bf16.mxu0 0
      %1290 = vmatpush2.bf16.msra.mxu0 0
      %1291 = vmatprep.mubr.bf16.mxu0 0
      %1292 = vmatmul.mubr.bf16.gmra.mxu0 %v1254
      %v1293 = vpop.f32.mrf.mxu0
      %v1294 = vadd.f32 0.0, %v1293
      %v1295 = vpop.f32.mrf.mxu0
      %v1296 = vpop.f32.mrf.mxu0
      %v1297 = vpop.f32.mrf.mxu0
      %1298 = vdwg.mxu0
      %1300 = vrot.lane.b32.xlu0 %v905, 96
      %v1301 = vpop.permute.xlu0 %1300
      %v1303 = vsel %vm1001, %v1249, 0
      %v1306 = vsel %vm1029, %v1301, 0
      %1308 = vmatprep.subr.bf16.mxu0 0
      %1309 = vmatpush1.bf16.msra.mxu0 0
      %1310 = vmatprep.subr.bf16.mxu0 0
      %1311 = vmatpush1.bf16.msra.mxu0 0
      %1312 = vmatprep.subr.bf16.mxu0 0
      %1313 = vmatpush1.bf16.msra.mxu0 0
      %1314 = vmatprep.subr.bf16.mxu0 0
      %1315 = vmatpush1.bf16.msra.mxu0 0
      %1316 = vmatprep.subr.bf16.mxu0 0
      %1317 = vmatpush1.bf16.msra.mxu0 0
      %1318 = vmatprep.subr.bf16.mxu0 0
      %1319 = vmatpush1.bf16.msra.mxu0 0
      %1320 = vmatprep.subr.bf16.mxu0 0
      %1321 = vmatpush1.bf16.msra.mxu0 0
      %1322 = vmatprep.subr.bf16.mxu0 0
      %1323 = vmatpush1.bf16.msra.mxu0 %v1306
      %1324 = vmatprep.subr.bf16.mxu0 0
      %1325 = vmatpush2.bf16.msra.mxu0 0
      %1326 = vmatprep.subr.bf16.mxu0 0
      %1327 = vmatpush2.bf16.msra.mxu0 0
      %1328 = vmatprep.subr.bf16.mxu0 0
      %1329 = vmatpush2.bf16.msra.mxu0 0
      %1330 = vmatprep.subr.bf16.mxu0 0
      %1331 = vmatpush2.bf16.msra.mxu0 0
      %1332 = vmatprep.subr.bf16.mxu0 0
      %1333 = vmatpush2.bf16.msra.mxu0 0
      %1334 = vmatprep.subr.bf16.mxu0 0
      %1335 = vmatpush2.bf16.msra.mxu0 0
      %1336 = vmatprep.subr.bf16.mxu0 0
      %1337 = vmatpush2.bf16.msra.mxu0 0
      %1338 = vmatprep.subr.bf16.mxu0 0
      %1339 = vmatpush2.bf16.msra.mxu0 0
      %1340 = vmatprep.mubr.bf16.mxu0 0
      %1341 = vmatmul.mubr.bf16.gmra.mxu0 %v1303
      %v1342 = vpop.f32.mrf.mxu0
      %v1343 = vadd.f32 0.0, %v1342
      %v1344 = vpop.f32.mrf.mxu0
      %v1345 = vpop.f32.mrf.mxu0
      %v1346 = vpop.f32.mrf.mxu0
      %1347 = vdwg.mxu0
      %v1348 = vpack.c.bf16 %v1343, %v1294
      %v1353 = vunpack.c.l.b16 %v888
      %v1354 = vunpack.c.l.b16 %v889
      %v1355 = vunpack.c.l.b16 %v890
      %v1356 = vunpack.c.l.b16 %v891
      %v1357 = vpack.c.b16 %v1354, %v1353
      %v1358 = vpack.c.b16 %v1356, %v1355
      %v1362 = vsel %vm906, %v1348, 0
      %1364 = vmatprep.subr.bf16.mxu0 0
      %1365 = vmatpush1.bf16.msra.mxu0 0
      %1366 = vmatprep.subr.bf16.mxu0 0
      %1367 = vmatpush1.bf16.msra.mxu0 0
      %1368 = vmatprep.subr.bf16.mxu0 0
      %1369 = vmatpush1.bf16.msra.mxu0 0
      %1370 = vmatprep.subr.bf16.mxu0 0
      %1371 = vmatpush1.bf16.msra.mxu0 0
      %1372 = vmatprep.subr.bf16.mxu0 0
      %1373 = vmatpush1.bf16.msra.mxu0 0
      %1374 = vmatprep.subr.bf16.mxu0 0
      %1375 = vmatpush1.bf16.msra.mxu0 0
      %1376 = vmatprep.subr.bf16.mxu0 0
      %1377 = vmatpush1.bf16.msra.mxu0 %v1358
      %1378 = vmatprep.subr.bf16.mxu0 0
      %1379 = vmatpush1.bf16.msra.mxu0 %v1357
      %1380 = vmatprep.subr.bf16.mxu0 0
      %1381 = vmatpush2.bf16.msra.mxu0 0
      %1382 = vmatprep.subr.bf16.mxu0 0
      %1383 = vmatpush2.bf16.msra.mxu0 0
      %1384 = vmatprep.subr.bf16.mxu0 0
      %1385 = vmatpush2.bf16.msra.mxu0 0
      %1386 = vmatprep.subr.bf16.mxu0 0
      %1387 = vmatpush2.bf16.msra.mxu0 0
      %1388 = vmatprep.subr.bf16.mxu0 0
      %1389 = vmatpush2.bf16.msra.mxu0 0
      %1390 = vmatprep.subr.bf16.mxu0 0
      %1391 = vmatpush2.bf16.msra.mxu0 0
      %1392 = vmatprep.subr.bf16.mxu0 0
      %1393 = vmatpush2.bf16.msra.mxu0 0
      %1394 = vmatprep.subr.bf16.mxu0 0
      %1395 = vmatpush2.bf16.msra.mxu0 0
      %1396 = vmatprep.mubr.bf16.mxu0 0
      %1397 = vmatmul.mubr.bf16.gmra.mxu0 %v1362
      %v1398 = vpop.f32.mrf.mxu0
      %v1399 = vadd.f32 0.0, %v1398
      %v1400 = vpop.f32.mrf.mxu0
      %v1401 = vpop.f32.mrf.mxu0
      %v1402 = vadd.f32 0.0, %v1401
      %v1403 = vpop.f32.mrf.mxu0
      %1404 = vdwg.mxu0
      %v1409 = vunpack.c.l.b16 %v884
      %v1410 = vunpack.c.l.b16 %v885
      %v1411 = vunpack.c.l.b16 %v886
      %v1412 = vunpack.c.l.b16 %v887
      %v1413 = vpack.c.b16 %v1410, %v1409
      %v1414 = vpack.c.b16 %v1412, %v1411
      %v1418 = vsel %vm906, %v1119, 0
      %1420 = vmatprep.subr.bf16.mxu0 0
      %1421 = vmatpush1.bf16.msra.mxu0 0
      %1422 = vmatprep.subr.bf16.mxu0 0
      %1423 = vmatpush1.bf16.msra.mxu0 0
      %1424 = vmatprep.subr.bf16.mxu0 0
      %1425 = vmatpush1.bf16.msra.mxu0 0
      %1426 = vmatprep.subr.bf16.mxu0 0
      %1427 = vmatpush1.bf16.msra.mxu0 0
      %1428 = vmatprep.subr.bf16.mxu0 0
      %1429 = vmatpush1.bf16.msra.mxu0 0
      %1430 = vmatprep.subr.bf16.mxu0 0
      %1431 = vmatpush1.bf16.msra.mxu0 0
      %1432 = vmatprep.subr.bf16.mxu0 0
      %1433 = vmatpush1.bf16.msra.mxu0 %v1414
      %1434 = vmatprep.subr.bf16.mxu0 0
      %1435 = vmatpush1.bf16.msra.mxu0 %v1413
      %1436 = vmatprep.subr.bf16.mxu0 0
      %1437 = vmatpush2.bf16.msra.mxu0 0
      %1438 = vmatprep.subr.bf16.mxu0 0
      %1439 = vmatpush2.bf16.msra.mxu0 0
      %1440 = vmatprep.subr.bf16.mxu0 0
      %1441 = vmatpush2.bf16.msra.mxu0 0
      %1442 = vmatprep.subr.bf16.mxu0 0
      %1443 = vmatpush2.bf16.msra.mxu0 0
      %1444 = vmatprep.subr.bf16.mxu0 0
      %1445 = vmatpush2.bf16.msra.mxu0 0
      %1446 = vmatprep.subr.bf16.mxu0 0
      %1447 = vmatpush2.bf16.msra.mxu0 0
      %1448 = vmatprep.subr.bf16.mxu0 0
      %1449 = vmatpush2.bf16.msra.mxu0 0
      %1450 = vmatprep.subr.bf16.mxu0 0
      %1451 = vmatpush2.bf16.msra.mxu0 0
      %1452 = vmatprep.mubr.bf16.mxu0 0
      %1453 = vmatmul.mubr.bf16.gmra.mxu0 %v1418
      %v1454 = vpop.f32.mrf.mxu0
      %v1455 = vadd.f32 %v1399, %v1454
      %v1456 = vpop.f32.mrf.mxu0
      %v1457 = vpop.f32.mrf.mxu0
      %v1458 = vadd.f32 %v1402, %v1457
      %v1459 = vpop.f32.mrf.mxu0
      %1460 = vdwg.mxu0
      %1461 = vrot.lane.b32.xlu0 %v900, 64
      %v1462 = vpop.permute.xlu0 %1461
      %1463 = vrot.lane.b32.xlu0 %v902, 64
      %v1464 = vpop.permute.xlu0 %1463
      %v1466 = vsel %vm906, %v1462, 0
      %v1469 = vsel %vm906, %v1464, 0
      %1471 = vmatprep.subr.bf16.mxu0 0
      %1472 = vmatpush1.bf16.xpose.msra.mxu0 0
      %1473 = vmatprep.subr.bf16.mxu0 0
      %1474 = vmatpush1.bf16.xpose.msra.mxu0 0
      %1475 = vmatprep.subr.bf16.mxu0 0
      %1476 = vmatpush1.bf16.xpose.msra.mxu0 0
      %1477 = vmatprep.subr.bf16.mxu0 0
      %1478 = vmatpush1.bf16.xpose.msra.mxu0 0
      %1479 = vmatprep.subr.bf16.mxu0 0
      %1480 = vmatpush1.bf16.xpose.msra.mxu0 0
      %1481 = vmatprep.subr.bf16.mxu0 0
      %1482 = vmatpush1.bf16.xpose.msra.mxu0 0
      %1483 = vmatprep.subr.bf16.mxu0 0
      %1484 = vmatpush1.bf16.xpose.msra.mxu0 0
      %1485 = vmatprep.subr.bf16.mxu0 0
      %1486 = vmatpush1.bf16.xpose.msra.mxu0 %v1469
      %1487 = vmatprep.subr.bf16.mxu0 0
      %1488 = vmatpush2.bf16.xpose.msra.mxu0 0
      %1489 = vmatprep.subr.bf16.mxu0 0
      %1490 = vmatpush2.bf16.xpose.msra.mxu0 0
      %1491 = vmatprep.subr.bf16.mxu0 0
      %1492 = vmatpush2.bf16.xpose.msra.mxu0 0
      %1493 = vmatprep.subr.bf16.mxu0 0
      %1494 = vmatpush2.bf16.xpose.msra.mxu0 0
      %1495 = vmatprep.subr.bf16.mxu0 0
      %1496 = vmatpush2.bf16.xpose.msra.mxu0 0
      %1497 = vmatprep.subr.bf16.mxu0 0
      %1498 = vmatpush2.bf16.xpose.msra.mxu0 0
      %1499 = vmatprep.subr.bf16.mxu0 0
      %1500 = vmatpush2.bf16.xpose.msra.mxu0 0
      %1501 = vmatprep.subr.bf16.mxu0 0
      %1502 = vmatpush2.bf16.xpose.msra.mxu0 0
      %1503 = vmatprep.mubr.bf16.mxu0 0
      %1504 = vmatmul.mubr.bf16.gmra.mxu0 %v1466
      %v1505 = vpop.f32.mrf.mxu0
      %v1506 = vadd.f32 0.0, %v1505
      %v1507 = vpop.f32.mrf.mxu0
      %v1508 = vpop.f32.mrf.mxu0
      %v1509 = vpop.f32.mrf.mxu0
      %1510 = vdwg.mxu0
      %1511 = vrot.lane.b32.xlu0 %v901, 64
      %v1512 = vpop.permute.xlu0 %1511
      %1513 = vrot.lane.b32.xlu0 %v903, 64
      %v1514 = vpop.permute.xlu0 %1513
      %v1516 = vsel %vm906, %v1512, 0
      %v1519 = vsel %vm906, %v1514, 0
      %1521 = vmatprep.subr.bf16.mxu0 0
      %1522 = vmatpush1.bf16.xpose.msra.mxu0 0
      %1523 = vmatprep.subr.bf16.mxu0 0
      %1524 = vmatpush1.bf16.xpose.msra.mxu0 0
      %1525 = vmatprep.subr.bf16.mxu0 0
      %1526 = vmatpush1.bf16.xpose.msra.mxu0 0
      %1527 = vmatprep.subr.bf16.mxu0 0
      %1528 = vmatpush1.bf16.xpose.msra.mxu0 0
      %1529 = vmatprep.subr.bf16.mxu0 0
      %1530 = vmatpush1.bf16.xpose.msra.mxu0 0
      %1531 = vmatprep.subr.bf16.mxu0 0
      %1532 = vmatpush1.bf16.xpose.msra.mxu0 0
      %1533 = vmatprep.subr.bf16.mxu0 0
      %1534 = vmatpush1.bf16.xpose.msra.mxu0 0
      %1535 = vmatprep.subr.bf16.mxu0 0
      %1536 = vmatpush1.bf16.xpose.msra.mxu0 %v1519
      %1537 = vmatprep.subr.bf16.mxu0 0
      %1538 = vmatpush2.bf16.xpose.msra.mxu0 0
      %1539 = vmatprep.subr.bf16.mxu0 0
      %1540 = vmatpush2.bf16.xpose.msra.mxu0 0
      %1541 = vmatprep.subr.bf16.mxu0 0
      %1542 = vmatpush2.bf16.xpose.msra.mxu0 0
      %1543 = vmatprep.subr.bf16.mxu0 0
      %1544 = vmatpush2.bf16.xpose.msra.mxu0 0
      %1545 = vmatprep.subr.bf16.mxu0 0
      %1546 = vmatpush2.bf16.xpose.msra.mxu0 0
      %1547 = vmatprep.subr.bf16.mxu0 0
      %1548 = vmatpush2.bf16.xpose.msra.mxu0 0
      %1549 = vmatprep.subr.bf16.mxu0 0
      %1550 = vmatpush2.bf16.xpose.msra.mxu0 0
      %1551 = vmatprep.subr.bf16.mxu0 0
      %1552 = vmatpush2.bf16.xpose.msra.mxu0 0
      %1553 = vmatprep.mubr.bf16.mxu0 0
      %1554 = vmatmul.mubr.bf16.gmra.mxu0 %v1516
      %v1555 = vpop.f32.mrf.mxu0
      %v1556 = vadd.f32 0.0, %v1555
      %v1557 = vpop.f32.mrf.mxu0
      %v1558 = vpop.f32.mrf.mxu0
      %v1559 = vpop.f32.mrf.mxu0
      %1560 = vdwg.mxu0
      %v1561 = vmul.f32 %v1506, 0.17677669
      %v1562 = vmul.f32 %v1556, 0.17677669
      %v1563 = vsel %vm1001, %v1561, -inf
      %1564 = vmax.xlane.f32.xlu0 %v1563
      %v1565 = vpop.xlane.xlu0 %1564
      %v1566 = vsel %vm1001, %v1562, -inf
      %1567 = vmax.xlane.f32.xlu0 %v1566
      %v1568 = vpop.xlane.xlu0 %1567
      %v1569 = vsub.f32 %v1561, %v1565
      %v1570 = vsub.f32 %v1562, %v1568
      %v1571 = vmul.f32 %v1569, 1.442695
      %v1572 = vpow.pop %v1571
      %v1573 = vmul.f32 %v1570, 1.442695
      %v1574 = vpow.pop %v1573
      %v1575 = vsel %vm1001, %v1572, 0.0
      %1576 = vadd.xlane.f32.xlu0 %v1575
      %v1577 = vpop.xlane.xlu0 %1576
      %v1578 = vsel %vm1001, %v1574, 0.0
      %1579 = vadd.xlane.f32.xlu0 %v1578
      %v1580 = vpop.xlane.xlu0 %1579
      %v1581 = vrcp.pop %v1577
      %v1582 = vmul.f32 %v1572, %v1581
      %v1583 = vrcp.pop %v1580
      %v1584 = vmul.f32 %v1574, %v1583
      %v1585 = vpack.c.bf16 %v1582, %v1582
      %v1586 = vpack.c.bf16 %v1584, %v1584
      %1587 = vrot.lane.b32.xlu0 %v904, 64
      %v1588 = vpop.permute.xlu0 %1587
      %v1590 = vsel %vm1001, %v1585, 0
      %v1593 = vsel %vm1029, %v1588, 0
      %1595 = vmatprep.subr.bf16.mxu0 0
      %1596 = vmatpush1.bf16.msra.mxu0 0
      %1597 = vmatprep.subr.bf16.mxu0 0
      %1598 = vmatpush1.bf16.msra.mxu0 0
      %1599 = vmatprep.subr.bf16.mxu0 0
      %1600 = vmatpush1.bf16.msra.mxu0 0
      %1601 = vmatprep.subr.bf16.mxu0 0
      %1602 = vmatpush1.bf16.msra.mxu0 0
      %1603 = vmatprep.subr.bf16.mxu0 0
      %1604 = vmatpush1.bf16.msra.mxu0 0
      %1605 = vmatprep.subr.bf16.mxu0 0
      %1606 = vmatpush1.bf16.msra.mxu0 0
      %1607 = vmatprep.subr.bf16.mxu0 0
      %1608 = vmatpush1.bf16.msra.mxu0 0
      %1609 = vmatprep.subr.bf16.mxu0 0
      %1610 = vmatpush1.bf16.msra.mxu0 %v1593
      %1611 = vmatprep.subr.bf16.mxu0 0
      %1612 = vmatpush2.bf16.msra.mxu0 0
      %1613 = vmatprep.subr.bf16.mxu0 0
      %1614 = vmatpush2.bf16.msra.mxu0 0
      %1615 = vmatprep.subr.bf16.mxu0 0
      %1616 = vmatpush2.bf16.msra.mxu0 0
      %1617 = vmatprep.subr.bf16.mxu0 0
      %1618 = vmatpush2.bf16.msra.mxu0 0
      %1619 = vmatprep.subr.bf16.mxu0 0
      %1620 = vmatpush2.bf16.msra.mxu0 0
      %1621 = vmatprep.subr.bf16.mxu0 0
      %1622 = vmatpush2.bf16.msra.mxu0 0
      %1623 = vmatprep.subr.bf16.mxu0 0
      %1624 = vmatpush2.bf16.msra.mxu0 0
      %1625 = vmatprep.subr.bf16.mxu0 0
      %1626 = vmatpush2.bf16.msra.mxu0 0
      %1627 = vmatprep.mubr.bf16.mxu0 0
      %1628 = vmatmul.mubr.bf16.gmra.mxu0 %v1590
      %v1629 = vpop.f32.mrf.mxu0
      %v1630 = vadd.f32 0.0, %v1629
      %v1631 = vpop.f32.mrf.mxu0
      %v1632 = vpop.f32.mrf.mxu0
      %v1633 = vpop.f32.mrf.mxu0
      %1634 = vdwg.mxu0
      %1635 = vrot.lane.b32.xlu0 %v905, 64
      %v1636 = vpop.permute.xlu0 %1635
      %v1638 = vsel %vm1001, %v1586, 0
      %v1641 = vsel %vm1029, %v1636, 0
      %1643 = vmatprep.subr.bf16.mxu0 0
      %1644 = vmatpush1.bf16.msra.mxu0 0
      %1645 = vmatprep.subr.bf16.mxu0 0
      %1646 = vmatpush1.bf16.msra.mxu0 0
      %1647 = vmatprep.subr.bf16.mxu0 0
      %1648 = vmatpush1.bf16.msra.mxu0 0
      %1649 = vmatprep.subr.bf16.mxu0 0
      %1650 = vmatpush1.bf16.msra.mxu0 0
      %1651 = vmatprep.subr.bf16.mxu0 0
      %1652 = vmatpush1.bf16.msra.mxu0 0
      %1653 = vmatprep.subr.bf16.mxu0 0
      %1654 = vmatpush1.bf16.msra.mxu0 0
      %1655 = vmatprep.subr.bf16.mxu0 0
      %1656 = vmatpush1.bf16.msra.mxu0 0
      %1657 = vmatprep.subr.bf16.mxu0 0
      %1658 = vmatpush1.bf16.msra.mxu0 %v1641
      %1659 = vmatprep.subr.bf16.mxu0 0
      %1660 = vmatpush2.bf16.msra.mxu0 0
      %1661 = vmatprep.subr.bf16.mxu0 0
      %1662 = vmatpush2.bf16.msra.mxu0 0
      %1663 = vmatprep.subr.bf16.mxu0 0
      %1664 = vmatpush2.bf16.msra.mxu0 0
      %1665 = vmatprep.subr.bf16.mxu0 0
      %1666 = vmatpush2.bf16.msra.mxu0 0
      %1667 = vmatprep.subr.bf16.mxu0 0
      %1668 = vmatpush2.bf16.msra.mxu0 0
      %1669 = vmatprep.subr.bf16.mxu0 0
      %1670 = vmatpush2.bf16.msra.mxu0 0
      %1671 = vmatprep.subr.bf16.mxu0 0
      %1672 = vmatpush2.bf16.msra.mxu0 0
      %1673 = vmatprep.subr.bf16.mxu0 0
      %1674 = vmatpush2.bf16.msra.mxu0 0
      %1675 = vmatprep.mubr.bf16.mxu0 0
      %1676 = vmatmul.mubr.bf16.gmra.mxu0 %v1638
      %v1677 = vpop.f32.mrf.mxu0
      %v1678 = vadd.f32 0.0, %v1677
      %v1679 = vpop.f32.mrf.mxu0
      %v1680 = vpop.f32.mrf.mxu0
      %v1681 = vpop.f32.mrf.mxu0
      %1682 = vdwg.mxu0
      %v1683 = vpack.c.bf16 %v1678, %v1630
      %v1688 = vunpack.c.l.b16 %v892
      %v1689 = vunpack.c.l.b16 %v893
      %v1690 = vunpack.c.l.b16 %v894
      %v1691 = vunpack.c.l.b16 %v895
      %v1692 = vpack.c.b16 %v1689, %v1688
      %v1693 = vpack.c.b16 %v1691, %v1690
      %v1697 = vsel %vm906, %v1683, 0
      %1699 = vmatprep.subr.bf16.mxu0 0
      %1700 = vmatpush1.bf16.msra.mxu0 0
      %1701 = vmatprep.subr.bf16.mxu0 0
      %1702 = vmatpush1.bf16.msra.mxu0 0
      %1703 = vmatprep.subr.bf16.mxu0 0
      %1704 = vmatpush1.bf16.msra.mxu0 0
      %1705 = vmatprep.subr.bf16.mxu0 0
      %1706 = vmatpush1.bf16.msra.mxu0 0
      %1707 = vmatprep.subr.bf16.mxu0 0
      %1708 = vmatpush1.bf16.msra.mxu0 0
      %1709 = vmatprep.subr.bf16.mxu0 0
      %1710 = vmatpush1.bf16.msra.mxu0 0
      %1711 = vmatprep.subr.bf16.mxu0 0
      %1712 = vmatpush1.bf16.msra.mxu0 %v1693
      %1713 = vmatprep.subr.bf16.mxu0 0
      %1714 = vmatpush1.bf16.msra.mxu0 %v1692
      %1715 = vmatprep.subr.bf16.mxu0 0
      %1716 = vmatpush2.bf16.msra.mxu0 0
      %1717 = vmatprep.subr.bf16.mxu0 0
      %1718 = vmatpush2.bf16.msra.mxu0 0
      %1719 = vmatprep.subr.bf16.mxu0 0
      %1720 = vmatpush2.bf16.msra.mxu0 0
      %1721 = vmatprep.subr.bf16.mxu0 0
      %1722 = vmatpush2.bf16.msra.mxu0 0
      %1723 = vmatprep.subr.bf16.mxu0 0
      %1724 = vmatpush2.bf16.msra.mxu0 0
      %1725 = vmatprep.subr.bf16.mxu0 0
      %1726 = vmatpush2.bf16.msra.mxu0 0
      %1727 = vmatprep.subr.bf16.mxu0 0
      %1728 = vmatpush2.bf16.msra.mxu0 0
      %1729 = vmatprep.subr.bf16.mxu0 0
      %1730 = vmatpush2.bf16.msra.mxu0 0
      %1731 = vmatprep.mubr.bf16.mxu0 0
      %1732 = vmatmul.mubr.bf16.gmra.mxu0 %v1697
      %v1733 = vpop.f32.mrf.mxu0
      %v1734 = vadd.f32 0.0, %v1733
      %v1735 = vpop.f32.mrf.mxu0
      %v1736 = vpop.f32.mrf.mxu0
      %v1737 = vadd.f32 0.0, %v1736
      %v1738 = vpop.f32.mrf.mxu0
      %1739 = vdwg.mxu0
      %v1740 = vadd.f32 %v1455, %v1734
      %v1741 = vadd.f32 %v1458, %v1737
      %1742 = vrot.lane.b32.xlu0 %v900, 32
      %v1743 = vpop.permute.xlu0 %1742
      %1744 = vrot.lane.b32.xlu0 %v902, 32
      %v1745 = vpop.permute.xlu0 %1744
      %v1747 = vsel %vm906, %v1743, 0
      %v1750 = vsel %vm906, %v1745, 0
      %1752 = vmatprep.subr.bf16.mxu0 0
      %1753 = vmatpush1.bf16.xpose.msra.mxu0 0
      %1754 = vmatprep.subr.bf16.mxu0 0
      %1755 = vmatpush1.bf16.xpose.msra.mxu0 0
      %1756 = vmatprep.subr.bf16.mxu0 0
      %1757 = vmatpush1.bf16.xpose.msra.mxu0 0
      %1758 = vmatprep.subr.bf16.mxu0 0
      %1759 = vmatpush1.bf16.xpose.msra.mxu0 0
      %1760 = vmatprep.subr.bf16.mxu0 0
      %1761 = vmatpush1.bf16.xpose.msra.mxu0 0
      %1762 = vmatprep.subr.bf16.mxu0 0
      %1763 = vmatpush1.bf16.xpose.msra.mxu0 0
      %1764 = vmatprep.subr.bf16.mxu0 0
      %1765 = vmatpush1.bf16.xpose.msra.mxu0 0
      %1766 = vmatprep.subr.bf16.mxu0 0
      %1767 = vmatpush1.bf16.xpose.msra.mxu0 %v1750
      %1768 = vmatprep.subr.bf16.mxu0 0
      %1769 = vmatpush2.bf16.xpose.msra.mxu0 0
      %1770 = vmatprep.subr.bf16.mxu0 0
      %1771 = vmatpush2.bf16.xpose.msra.mxu0 0
      %1772 = vmatprep.subr.bf16.mxu0 0
      %1773 = vmatpush2.bf16.xpose.msra.mxu0 0
      %1774 = vmatprep.subr.bf16.mxu0 0
      %1775 = vmatpush2.bf16.xpose.msra.mxu0 0
      %1776 = vmatprep.subr.bf16.mxu0 0
      %1777 = vmatpush2.bf16.xpose.msra.mxu0 0
      %1778 = vmatprep.subr.bf16.mxu0 0
      %1779 = vmatpush2.bf16.xpose.msra.mxu0 0
      %1780 = vmatprep.subr.bf16.mxu0 0
      %1781 = vmatpush2.bf16.xpose.msra.mxu0 0
      %1782 = vmatprep.subr.bf16.mxu0 0
      %1783 = vmatpush2.bf16.xpose.msra.mxu0 0
      %1784 = vmatprep.mubr.bf16.mxu0 0
      %1785 = vmatmul.mubr.bf16.gmra.mxu0 %v1747
      %v1786 = vpop.f32.mrf.mxu0
      %v1787 = vadd.f32 0.0, %v1786
      %v1788 = vpop.f32.mrf.mxu0
      %v1789 = vpop.f32.mrf.mxu0
      %v1790 = vpop.f32.mrf.mxu0
      %1791 = vdwg.mxu0
      %1792 = vrot.lane.b32.xlu0 %v901, 32
      %v1793 = vpop.permute.xlu0 %1792
      %1794 = vrot.lane.b32.xlu0 %v903, 32
      %v1795 = vpop.permute.xlu0 %1794
      %v1797 = vsel %vm906, %v1793, 0
      %v1800 = vsel %vm906, %v1795, 0
      %1802 = vmatprep.subr.bf16.mxu0 0
      %1803 = vmatpush1.bf16.xpose.msra.mxu0 0
      %1804 = vmatprep.subr.bf16.mxu0 0
      %1805 = vmatpush1.bf16.xpose.msra.mxu0 0
      %1806 = vmatprep.subr.bf16.mxu0 0
      %1807 = vmatpush1.bf16.xpose.msra.mxu0 0
      %1808 = vmatprep.subr.bf16.mxu0 0
      %1809 = vmatpush1.bf16.xpose.msra.mxu0 0
      %1810 = vmatprep.subr.bf16.mxu0 0
      %1811 = vmatpush1.bf16.xpose.msra.mxu0 0
      %1812 = vmatprep.subr.bf16.mxu0 0
      %1813 = vmatpush1.bf16.xpose.msra.mxu0 0
      %1814 = vmatprep.subr.bf16.mxu0 0
      %1815 = vmatpush1.bf16.xpose.msra.mxu0 0
      %1816 = vmatprep.subr.bf16.mxu0 0
      %1817 = vmatpush1.bf16.xpose.msra.mxu0 %v1800
      %1818 = vmatprep.subr.bf16.mxu0 0
      %1819 = vmatpush2.bf16.xpose.msra.mxu0 0
      %1820 = vmatprep.subr.bf16.mxu0 0
      %1821 = vmatpush2.bf16.xpose.msra.mxu0 0
      %1822 = vmatprep.subr.bf16.mxu0 0
      %1823 = vmatpush2.bf16.xpose.msra.mxu0 0
      %1824 = vmatprep.subr.bf16.mxu0 0
      %1825 = vmatpush2.bf16.xpose.msra.mxu0 0
      %1826 = vmatprep.subr.bf16.mxu0 0
      %1827 = vmatpush2.bf16.xpose.msra.mxu0 0
      %1828 = vmatprep.subr.bf16.mxu0 0
      %1829 = vmatpush2.bf16.xpose.msra.mxu0 0
      %1830 = vmatprep.subr.bf16.mxu0 0
      %1831 = vmatpush2.bf16.xpose.msra.mxu0 0
      %1832 = vmatprep.subr.bf16.mxu0 0
      %1833 = vmatpush2.bf16.xpose.msra.mxu0 0
      %1834 = vmatprep.mubr.bf16.mxu0 0
      %1835 = vmatmul.mubr.bf16.gmra.mxu0 %v1797
      %v1836 = vpop.f32.mrf.mxu0
      %v1837 = vadd.f32 0.0, %v1836
      %v1838 = vpop.f32.mrf.mxu0
      %v1839 = vpop.f32.mrf.mxu0
      %v1840 = vpop.f32.mrf.mxu0
      %1841 = vdwg.mxu0
      %v1842 = vmul.f32 %v1787, 0.17677669
      %v1843 = vmul.f32 %v1837, 0.17677669
      %v1844 = vsel %vm1001, %v1842, -inf
      %1845 = vmax.xlane.f32.xlu0 %v1844
      %v1846 = vpop.xlane.xlu0 %1845
      %v1847 = vsel %vm1001, %v1843, -inf
      %1848 = vmax.xlane.f32.xlu0 %v1847
      %v1849 = vpop.xlane.xlu0 %1848
      %v1850 = vsub.f32 %v1842, %v1846
      %v1851 = vsub.f32 %v1843, %v1849
      %v1852 = vmul.f32 %v1850, 1.442695
      %v1853 = vpow.pop %v1852
      %v1854 = vmul.f32 %v1851, 1.442695
      %v1855 = vpow.pop %v1854
      %v1856 = vsel %vm1001, %v1853, 0.0
      %1857 = vadd.xlane.f32.xlu0 %v1856
      %v1858 = vpop.xlane.xlu0 %1857
      %v1859 = vsel %vm1001, %v1855, 0.0
      %1860 = vadd.xlane.f32.xlu0 %v1859
      %v1861 = vpop.xlane.xlu0 %1860
      %v1862 = vrcp.pop %v1858
      %v1863 = vmul.f32 %v1853, %v1862
      %v1864 = vrcp.pop %v1861
      %v1865 = vmul.f32 %v1855, %v1864
      %v1866 = vpack.c.bf16 %v1863, %v1863
      %v1867 = vpack.c.bf16 %v1865, %v1865
      %1868 = vrot.lane.b32.xlu0 %v904, 32
      %v1869 = vpop.permute.xlu0 %1868
      %v1871 = vsel %vm1001, %v1866, 0
      %v1874 = vsel %vm1029, %v1869, 0
      %1876 = vmatprep.subr.bf16.mxu0 0
      %1877 = vmatpush1.bf16.msra.mxu0 0
      %1878 = vmatprep.subr.bf16.mxu0 0
      %1879 = vmatpush1.bf16.msra.mxu0 0
      %1880 = vmatprep.subr.bf16.mxu0 0
      %1881 = vmatpush1.bf16.msra.mxu0 0
      %1882 = vmatprep.subr.bf16.mxu0 0
      %1883 = vmatpush1.bf16.msra.mxu0 0
      %1884 = vmatprep.subr.bf16.mxu0 0
      %1885 = vmatpush1.bf16.msra.mxu0 0
      %1886 = vmatprep.subr.bf16.mxu0 0
      %1887 = vmatpush1.bf16.msra.mxu0 0
      %1888 = vmatprep.subr.bf16.mxu0 0
      %1889 = vmatpush1.bf16.msra.mxu0 0
      %1890 = vmatprep.subr.bf16.mxu0 0
      %1891 = vmatpush1.bf16.msra.mxu0 %v1874
      %1892 = vmatprep.subr.bf16.mxu0 0
      %1893 = vmatpush2.bf16.msra.mxu0 0
      %1894 = vmatprep.subr.bf16.mxu0 0
      %1895 = vmatpush2.bf16.msra.mxu0 0
      %1896 = vmatprep.subr.bf16.mxu0 0
      %1897 = vmatpush2.bf16.msra.mxu0 0
      %1898 = vmatprep.subr.bf16.mxu0 0
      %1899 = vmatpush2.bf16.msra.mxu0 0
      %1900 = vmatprep.subr.bf16.mxu0 0
      %1901 = vmatpush2.bf16.msra.mxu0 0
      %1902 = vmatprep.subr.bf16.mxu0 0
      %1903 = vmatpush2.bf16.msra.mxu0 0
      %1904 = vmatprep.subr.bf16.mxu0 0
      %1905 = vmatpush2.bf16.msra.mxu0 0
      %1906 = vmatprep.subr.bf16.mxu0 0
      %1907 = vmatpush2.bf16.msra.mxu0 0
      %1908 = vmatprep.mubr.bf16.mxu0 0
      %1909 = vmatmul.mubr.bf16.gmra.mxu0 %v1871
      %v1910 = vpop.f32.mrf.mxu0
      %v1911 = vadd.f32 0.0, %v1910
      %v1912 = vpop.f32.mrf.mxu0
      %v1913 = vpop.f32.mrf.mxu0
      %v1914 = vpop.f32.mrf.mxu0
      %1915 = vdwg.mxu0
      %1916 = vrot.lane.b32.xlu0 %v905, 32
      %v1917 = vpop.permute.xlu0 %1916
      %v1919 = vsel %vm1001, %v1867, 0
      %v1922 = vsel %vm1029, %v1917, 0
      %1924 = vmatprep.subr.bf16.mxu0 0
      %1925 = vmatpush1.bf16.msra.mxu0 0
      %1926 = vmatprep.subr.bf16.mxu0 0
      %1927 = vmatpush1.bf16.msra.mxu0 0
      %1928 = vmatprep.subr.bf16.mxu0 0
      %1929 = vmatpush1.bf16.msra.mxu0 0
      %1930 = vmatprep.subr.bf16.mxu0 0
      %1931 = vmatpush1.bf16.msra.mxu0 0
      %1932 = vmatprep.subr.bf16.mxu0 0
      %1933 = vmatpush1.bf16.msra.mxu0 0
      %1934 = vmatprep.subr.bf16.mxu0 0
      %1935 = vmatpush1.bf16.msra.mxu0 0
      %1936 = vmatprep.subr.bf16.mxu0 0
      %1937 = vmatpush1.bf16.msra.mxu0 0
      %1938 = vmatprep.subr.bf16.mxu0 0
      %1939 = vmatpush1.bf16.msra.mxu0 %v1922
      %1940 = vmatprep.subr.bf16.mxu0 0
      %1941 = vmatpush2.bf16.msra.mxu0 0
      %1942 = vmatprep.subr.bf16.mxu0 0
      %1943 = vmatpush2.bf16.msra.mxu0 0
      %1944 = vmatprep.subr.bf16.mxu0 0
      %1945 = vmatpush2.bf16.msra.mxu0 0
      %1946 = vmatprep.subr.bf16.mxu0 0
      %1947 = vmatpush2.bf16.msra.mxu0 0
      %1948 = vmatprep.subr.bf16.mxu0 0
      %1949 = vmatpush2.bf16.msra.mxu0 0
      %1950 = vmatprep.subr.bf16.mxu0 0
      %1951 = vmatpush2.bf16.msra.mxu0 0
      %1952 = vmatprep.subr.bf16.mxu0 0
      %1953 = vmatpush2.bf16.msra.mxu0 0
      %1954 = vmatprep.subr.bf16.mxu0 0
      %1955 = vmatpush2.bf16.msra.mxu0 0
      %1956 = vmatprep.mubr.bf16.mxu0 0
      %1957 = vmatmul.mubr.bf16.gmra.mxu0 %v1919
      %v1958 = vpop.f32.mrf.mxu0
      %v1959 = vadd.f32 0.0, %v1958
      %v1960 = vpop.f32.mrf.mxu0
      %v1961 = vpop.f32.mrf.mxu0
      %v1962 = vpop.f32.mrf.mxu0
      %1963 = vdwg.mxu0
      %v1964 = vpack.c.bf16 %v1959, %v1911
      %v1969 = vunpack.c.l.b16 %v896
      %v1970 = vunpack.c.l.b16 %v897
      %v1971 = vunpack.c.l.b16 %v898
      %v1972 = vunpack.c.l.b16 %v899
      %v1973 = vpack.c.b16 %v1970, %v1969
      %v1974 = vpack.c.b16 %v1972, %v1971
      %v1978 = vsel %vm906, %v1964, 0
      %1980 = vmatprep.subr.bf16.mxu0 0
      %1981 = vmatpush1.bf16.msra.mxu0 0
      %1982 = vmatprep.subr.bf16.mxu0 0
      %1983 = vmatpush1.bf16.msra.mxu0 0
      %1984 = vmatprep.subr.bf16.mxu0 0
      %1985 = vmatpush1.bf16.msra.mxu0 0
      %1986 = vmatprep.subr.bf16.mxu0 0
      %1987 = vmatpush1.bf16.msra.mxu0 0
      %1988 = vmatprep.subr.bf16.mxu0 0
      %1989 = vmatpush1.bf16.msra.mxu0 0
      %1990 = vmatprep.subr.bf16.mxu0 0
      %1991 = vmatpush1.bf16.msra.mxu0 0
      %1992 = vmatprep.subr.bf16.mxu0 0
      %1993 = vmatpush1.bf16.msra.mxu0 %v1974
      %1994 = vmatprep.subr.bf16.mxu0 0
      %1995 = vmatpush1.bf16.msra.mxu0 %v1973
      %1996 = vmatprep.subr.bf16.mxu0 0
      %1997 = vmatpush2.bf16.msra.mxu0 0
      %1998 = vmatprep.subr.bf16.mxu0 0
      %1999 = vmatpush2.bf16.msra.mxu0 0
      %2000 = vmatprep.subr.bf16.mxu0 0
      %2001 = vmatpush2.bf16.msra.mxu0 0
      %2002 = vmatprep.subr.bf16.mxu0 0
      %2003 = vmatpush2.bf16.msra.mxu0 0
      %2004 = vmatprep.subr.bf16.mxu0 0
      %2005 = vmatpush2.bf16.msra.mxu0 0
      %2006 = vmatprep.subr.bf16.mxu0 0
      %2007 = vmatpush2.bf16.msra.mxu0 0
      %2008 = vmatprep.subr.bf16.mxu0 0
      %2009 = vmatpush2.bf16.msra.mxu0 0
      %2010 = vmatprep.subr.bf16.mxu0 0
      %2011 = vmatpush2.bf16.msra.mxu0 0
      %2012 = vmatprep.mubr.bf16.mxu0 0
      %2013 = vmatmul.mubr.bf16.gmra.mxu0 %v1978
      %v2014 = vpop.f32.mrf.mxu0
      %v2015 = vadd.f32 0.0, %v2014
      %v2016 = vpop.f32.mrf.mxu0
      %v2017 = vpop.f32.mrf.mxu0
      %v2018 = vadd.f32 0.0, %v2017
      %v2019 = vpop.f32.mrf.mxu0
      %2020 = vdwg.mxu0
      %v2021 = vadd.f32 %v1740, %v2015
      %v2022 = vadd.f32 %v1741, %v2018
      %v2023 = vld [vmem:[%s575] sm:$0x1]
      %v2025 = vlaneseq
      %v2026 = vshrl.u32 %v2025, 7
      %v2027 = vsub.s32 0, %v2026
      %v2028 = vrot.slane %v2023, %v2027
      %v2030 = vadd.f32 %v2021, %v2028
      %v2031 = vadd.f32 %v2022, %v2028
      %v2032 = vadd.f32 %v2030, %v605
      %v2033 = vadd.f32 %v2031, %v606
      %v2034 = vpack.c.bf16 %v2033, %v2032
      %v2035 = vld [vmem:[%s580] sm:$0xff]
      %v2036 = vld [vmem:[%s580 + $0x8] sm:$0xff]
      %v2037 = vld [vmem:[%s580 + $0x10] sm:$0xff]
      %v2038 = vld [vmem:[%s580 + $0x18] sm:$0xff]
      %v2039 = vld [vmem:[%s580 + $0x20] sm:$0xff]
      %v2040 = vld [vmem:[%s580 + $0x28] sm:$0xff]
      %v2041 = vld [vmem:[%s580 + $0x30] sm:$0xff]
      %v2042 = vld [vmem:[%s580 + $0x38] sm:$0xff]
      %v2043 = vld [vmem:[%s580 + $0x40] sm:$0xff]
      %v2044 = vld [vmem:[%s580 + $0x48] sm:$0xff]
      %v2045 = vld [vmem:[%s580 + $0x50] sm:$0xff]
      %v2046 = vld [vmem:[%s580 + $0x58] sm:$0xff]
      %v2047 = vld [vmem:[%s580 + $0x60] sm:$0xff]
      %v2048 = vld [vmem:[%s580 + $0x68] sm:$0xff]
      %v2049 = vld [vmem:[%s580 + $0x70] sm:$0xff]
      %v2050 = vld [vmem:[%s580 + $0x78] sm:$0xff]
      %v2051 = vld [vmem:[%s584] sm:$0x3]
      %v2053 = vlaneseq
      %v2054 = vshrl.u32 %v2053, 7
      %v2055 = vsub.s32 0, %v2054
      %v2056 = vrot.slane %v2051, %v2055
      %v2057 = vlaneseq
      %v2058 = vshrl.u32 %v2057, 7
      %v2059 = vsub.s32 1, %v2058
      %v2060 = vrot.slane %v2051, %v2059
      %v2079 = vunpack.c.l.b16 %v2035
      %v2080 = vunpack.c.h.b16 %v2035
      %v2081 = vunpack.c.l.b16 %v2036
      %v2082 = vunpack.c.h.b16 %v2036
      %v2083 = vunpack.c.l.b16 %v2037
      %v2084 = vunpack.c.h.b16 %v2037
      %v2085 = vunpack.c.l.b16 %v2038
      %v2086 = vunpack.c.h.b16 %v2038
      %v2087 = vunpack.c.l.b16 %v2039
      %v2088 = vunpack.c.h.b16 %v2039
      %v2089 = vunpack.c.l.b16 %v2040
      %v2090 = vunpack.c.h.b16 %v2040
      %v2091 = vunpack.c.l.b16 %v2041
      %v2092 = vunpack.c.h.b16 %v2041
      %v2093 = vunpack.c.l.b16 %v2042
      %v2094 = vunpack.c.h.b16 %v2042
      %v2095 = vunpack.c.l.b16 %v2043
      %v2096 = vunpack.c.h.b16 %v2043
      %v2097 = vunpack.c.l.b16 %v2044
      %v2098 = vunpack.c.h.b16 %v2044
      %v2099 = vunpack.c.l.b16 %v2045
      %v2100 = vunpack.c.h.b16 %v2045
      %v2101 = vunpack.c.l.b16 %v2046
      %v2102 = vunpack.c.h.b16 %v2046
      %v2103 = vunpack.c.l.b16 %v2047
      %v2104 = vunpack.c.h.b16 %v2047
      %v2105 = vunpack.c.l.b16 %v2048
      %v2106 = vunpack.c.h.b16 %v2048
      %v2107 = vunpack.c.l.b16 %v2049
      %v2108 = vunpack.c.h.b16 %v2049
      %v2109 = vunpack.c.l.b16 %v2050
      %v2110 = vunpack.c.h.b16 %v2050
      %v2111 = vpack.c.b16 %v2081, %v2079
      %v2112 = vpack.c.b16 %v2082, %v2080
      %v2113 = vpack.c.b16 %v2085, %v2083
      %v2114 = vpack.c.b16 %v2086, %v2084
      %v2115 = vpack.c.b16 %v2089, %v2087
      %v2116 = vpack.c.b16 %v2090, %v2088
      %v2117 = vpack.c.b16 %v2093, %v2091
      %v2118 = vpack.c.b16 %v2094, %v2092
      %v2119 = vpack.c.b16 %v2097, %v2095
      %v2120 = vpack.c.b16 %v2098, %v2096
      %v2121 = vpack.c.b16 %v2101, %v2099
      %v2122 = vpack.c.b16 %v2102, %v2100
      %v2123 = vpack.c.b16 %v2105, %v2103
      %v2124 = vpack.c.b16 %v2106, %v2104
      %v2125 = vpack.c.b16 %v2109, %v2107
      %v2126 = vpack.c.b16 %v2110, %v2108
      %2143 = vmatprep.subr.bf16.mxu0 %v2126
      %2144 = vmatpush1.bf16.msra.mxu0 %v2125
      %2145 = vmatprep.subr.bf16.mxu0 %v2124
      %2146 = vmatpush1.bf16.msra.mxu0 %v2123
      %2147 = vmatprep.subr.bf16.mxu0 %v2122
      %2148 = vmatpush1.bf16.msra.mxu0 %v2121
      %2149 = vmatprep.subr.bf16.mxu0 %v2120
      %2150 = vmatpush1.bf16.msra.mxu0 %v2119
      %2151 = vmatprep.subr.bf16.mxu0 %v2118
      %2152 = vmatpush1.bf16.msra.mxu0 %v2117
      %2153 = vmatprep.subr.bf16.mxu0 %v2116
      %2154 = vmatpush1.bf16.msra.mxu0 %v2115
      %2155 = vmatprep.subr.bf16.mxu0 %v2114
      %2156 = vmatpush1.bf16.msra.mxu0 %v2113
      %2157 = vmatprep.subr.bf16.mxu0 %v2112
      %2158 = vmatpush1.bf16.msra.mxu0 %v2111
      %2159 = vmatprep.subr.bf16.mxu0 0
      %2160 = vmatpush2.bf16.msra.mxu0 0
      %2161 = vmatprep.subr.bf16.mxu0 0
      %2162 = vmatpush2.bf16.msra.mxu0 0
      %2163 = vmatprep.subr.bf16.mxu0 0
      %2164 = vmatpush2.bf16.msra.mxu0 0
      %2165 = vmatprep.subr.bf16.mxu0 0
      %2166 = vmatpush2.bf16.msra.mxu0 0
      %2167 = vmatprep.subr.bf16.mxu0 0
      %2168 = vmatpush2.bf16.msra.mxu0 0
      %2169 = vmatprep.subr.bf16.mxu0 0
      %2170 = vmatpush2.bf16.msra.mxu0 0
      %2171 = vmatprep.subr.bf16.mxu0 0
      %2172 = vmatpush2.bf16.msra.mxu0 0
      %2173 = vmatprep.subr.bf16.mxu0 0
      %2174 = vmatpush2.bf16.msra.mxu0 0
      %2175 = vmatprep.mubr.bf16.mxu0 0
      %2176 = vmatmul.mubr.bf16.gmra.mxu0 %v2034
      %v2177 = vpop.f32.mrf.mxu0
      %v2178 = vadd.f32 %v2056, %v2177
      %v2179 = vpop.f32.mrf.mxu0
      %v2180 = vadd.f32 %v2060, %v2179
      %v2181 = vpop.f32.mrf.mxu0
      %v2182 = vadd.f32 %v2056, %v2181
      %v2183 = vpop.f32.mrf.mxu0
      %v2184 = vadd.f32 %v2060, %v2183
      %2185 = vdwg.mxu0
      %v2186 = vmul.f32 %v2178, 0.5
      %v2187 = vmul.f32 %v2180, 0.5
      %v2188 = vmul.f32 %v2182, 0.5
      %v2189 = vmul.f32 %v2184, 0.5
      %v2190 = vrcp.pop 1.4142135
      %v2191 = vmul.f32 %v2178, %v2190
      %v2192 = vmul.f32 %v2180, %v2190
      %v2193 = vmul.f32 %v2182, %v2190
      %v2194 = vmul.f32 %v2184, %v2190
      %v2195 = verf.f32.pop %v2191
      %v2196 = verf.f32.pop %v2192
      %v2197 = verf.f32.pop %v2193
      %v2198 = verf.f32.pop %v2194
      %v2199 = vadd.f32 %v2195, 1.0
      %v2200 = vadd.f32 %v2196, 1.0
      %v2201 = vadd.f32 %v2197, 1.0
      %v2202 = vadd.f32 %v2198, 1.0
      %v2203 = vmul.f32 %v2186, %v2199
      %v2204 = vmul.f32 %v2187, %v2200
      %v2205 = vmul.f32 %v2188, %v2201
      %v2206 = vmul.f32 %v2189, %v2202
      %v2207 = vpack.c.bf16 %v2205, %v2203
      %v2208 = vpack.c.bf16 %v2206, %v2204
      %v2209 = vld [vmem:[%s589] sm:$0xf]
      %v2210 = vld [vmem:[%s589 + $0x4] sm:$0xf]
      %v2211 = vld [vmem:[%s589 + $0x8] sm:$0xf]
      %v2212 = vld [vmem:[%s589 + $0xc] sm:$0xf]
      %v2213 = vld [vmem:[%s589 + $0x10] sm:$0xf]
      %v2214 = vld [vmem:[%s589 + $0x14] sm:$0xf]
      %v2215 = vld [vmem:[%s589 + $0x18] sm:$0xf]
      %v2216 = vld [vmem:[%s589 + $0x1c] sm:$0xf]
      %v2217 = vld [vmem:[%s589 + $0x20] sm:$0xf]
      %v2218 = vld [vmem:[%s589 + $0x24] sm:$0xf]
      %v2219 = vld [vmem:[%s589 + $0x28] sm:$0xf]
      %v2220 = vld [vmem:[%s589 + $0x2c] sm:$0xf]
      %v2221 = vld [vmem:[%s589 + $0x30] sm:$0xf]
      %v2222 = vld [vmem:[%s589 + $0x34] sm:$0xf]
      %v2223 = vld [vmem:[%s589 + $0x38] sm:$0xf]
      %v2224 = vld [vmem:[%s589 + $0x3c] sm:$0xf]
      %v2225 = vld [vmem:[%s589 + $0x40] sm:$0xf]
      %v2226 = vld [vmem:[%s589 + $0x44] sm:$0xf]
      %v2227 = vld [vmem:[%s589 + $0x48] sm:$0xf]
      %v2228 = vld [vmem:[%s589 + $0x4c] sm:$0xf]
      %v2229 = vld [vmem:[%s589 + $0x50] sm:$0xf]
      %v2230 = vld [vmem:[%s589 + $0x54] sm:$0xf]
      %v2231 = vld [vmem:[%s589 + $0x58] sm:$0xf]
      %v2232 = vld [vmem:[%s589 + $0x5c] sm:$0xf]
      %v2233 = vld [vmem:[%s589 + $0x60] sm:$0xf]
      %v2234 = vld [vmem:[%s589 + $0x64] sm:$0xf]
      %v2235 = vld [vmem:[%s589 + $0x68] sm:$0xf]
      %v2236 = vld [vmem:[%s589 + $0x6c] sm:$0xf]
      %v2237 = vld [vmem:[%s589 + $0x70] sm:$0xf]
      %v2238 = vld [vmem:[%s589 + $0x74] sm:$0xf]
      %v2239 = vld [vmem:[%s589 + $0x78] sm:$0xf]
      %v2240 = vld [vmem:[%s589 + $0x7c] sm:$0xf]
      %v2241 = vld [vmem:[%s592] sm:$0x1]
      %v2243 = vlaneseq
      %v2244 = vshrl.u32 %v2243, 7
      %v2245 = vsub.s32 0, %v2244
      %v2246 = vrot.slane %v2241, %v2245
      %v2280 = vunpack.c.l.b16 %v2209
      %v2281 = vunpack.c.l.b16 %v2210
      %v2282 = vunpack.c.l.b16 %v2211
      %v2283 = vunpack.c.l.b16 %v2212
      %v2284 = vunpack.c.l.b16 %v2213
      %v2285 = vunpack.c.l.b16 %v2214
      %v2286 = vunpack.c.l.b16 %v2215
      %v2287 = vunpack.c.l.b16 %v2216
      %v2288 = vunpack.c.l.b16 %v2217
      %v2289 = vunpack.c.l.b16 %v2218
      %v2290 = vunpack.c.l.b16 %v2219
      %v2291 = vunpack.c.l.b16 %v2220
      %v2292 = vunpack.c.l.b16 %v2221
      %v2293 = vunpack.c.l.b16 %v2222
      %v2294 = vunpack.c.l.b16 %v2223
      %v2295 = vunpack.c.l.b16 %v2224
      %v2296 = vunpack.c.l.b16 %v2225
      %v2297 = vunpack.c.l.b16 %v2226
      %v2298 = vunpack.c.l.b16 %v2227
      %v2299 = vunpack.c.l.b16 %v2228
      %v2300 = vunpack.c.l.b16 %v2229
      %v2301 = vunpack.c.l.b16 %v2230
      %v2302 = vunpack.c.l.b16 %v2231
      %v2303 = vunpack.c.l.b16 %v2232
      %v2304 = vunpack.c.l.b16 %v2233
      %v2305 = vunpack.c.l.b16 %v2234
      %v2306 = vunpack.c.l.b16 %v2235
      %v2307 = vunpack.c.l.b16 %v2236
      %v2308 = vunpack.c.l.b16 %v2237
      %v2309 = vunpack.c.l.b16 %v2238
      %v2310 = vunpack.c.l.b16 %v2239
      %v2311 = vunpack.c.l.b16 %v2240
      %v2312 = vpack.c.b16 %v2281, %v2280
      %v2313 = vpack.c.b16 %v2283, %v2282
      %v2314 = vpack.c.b16 %v2285, %v2284
      %v2315 = vpack.c.b16 %v2287, %v2286
      %v2316 = vpack.c.b16 %v2289, %v2288
      %v2317 = vpack.c.b16 %v2291, %v2290
      %v2318 = vpack.c.b16 %v2293, %v2292
      %v2319 = vpack.c.b16 %v2295, %v2294
      %v2320 = vpack.c.b16 %v2297, %v2296
      %v2321 = vpack.c.b16 %v2299, %v2298
      %v2322 = vpack.c.b16 %v2301, %v2300
      %v2323 = vpack.c.b16 %v2303, %v2302
      %v2324 = vpack.c.b16 %v2305, %v2304
      %v2325 = vpack.c.b16 %v2307, %v2306
      %v2326 = vpack.c.b16 %v2309, %v2308
      %v2327 = vpack.c.b16 %v2311, %v2310
      %2344 = vmatprep.subr.bf16.mxu0 0
      %2345 = vmatpush1.bf16.msra.mxu0 %v2319
      %2346 = vmatprep.subr.bf16.mxu0 0
      %2347 = vmatpush1.bf16.msra.mxu0 %v2318
      %2348 = vmatprep.subr.bf16.mxu0 0
      %2349 = vmatpush1.bf16.msra.mxu0 %v2317
      %2350 = vmatprep.subr.bf16.mxu0 0
      %2351 = vmatpush1.bf16.msra.mxu0 %v2316
      %2352 = vmatprep.subr.bf16.mxu0 0
      %2353 = vmatpush1.bf16.msra.mxu0 %v2315
      %2354 = vmatprep.subr.bf16.mxu0 0
      %2355 = vmatpush1.bf16.msra.mxu0 %v2314
      %2356 = vmatprep.subr.bf16.mxu0 0
      %2357 = vmatpush1.bf16.msra.mxu0 %v2313
      %2358 = vmatprep.subr.bf16.mxu0 0
      %2359 = vmatpush1.bf16.msra.mxu0 %v2312
      %2360 = vmatprep.subr.bf16.mxu0 0
      %2361 = vmatpush2.bf16.msra.mxu0 %v2327
      %2362 = vmatprep.subr.bf16.mxu0 0
      %2363 = vmatpush2.bf16.msra.mxu0 %v2326
      %2364 = vmatprep.subr.bf16.mxu0 0
      %2365 = vmatpush2.bf16.msra.mxu0 %v2325
      %2366 = vmatprep.subr.bf16.mxu0 0
      %2367 = vmatpush2.bf16.msra.mxu0 %v2324
      %2368 = vmatprep.subr.bf16.mxu0 0
      %2369 = vmatpush2.bf16.msra.mxu0 %v2323
      %2370 = vmatprep.subr.bf16.mxu0 0
      %2371 = vmatpush2.bf16.msra.mxu0 %v2322
      %2372 = vmatprep.subr.bf16.mxu0 0
      %2373 = vmatpush2.bf16.msra.mxu0 %v2321
      %2374 = vmatprep.subr.bf16.mxu0 0
      %2375 = vmatpush2.bf16.msra.mxu0 %v2320
      %2376 = vmatprep.mubr.bf16.mxu0 %v2208
      %2377 = vmatmul.mubr.bf16.gmra.mxu0 %v2207
      %v2378 = vpop.f32.mrf.mxu0
      %v2379 = vadd.f32 %v2246, %v2378
      %v2380 = vpop.f32.mrf.mxu0
      %v2381 = vpop.f32.mrf.mxu0
      %v2382 = vadd.f32 %v2246, %v2381
      %v2383 = vpop.f32.mrf.mxu0
      %2384 = vdwg.mxu0
      %v2385 = vadd.f32 %v2379, %v2032
      %v2386 = vadd.f32 %v2382, %v2033
      %v2387 = vld [vmem:[%s595] sm:$0x1]
      %v2388 = vld [vmem:[%s598] sm:$0x1]
      %2389 = vadd.xlane.f32.xlu0 %v2385
      %v2390 = vpop.xlane.xlu0 %2389
      %2391 = vadd.xlane.f32.xlu0 %v2386
      %v2392 = vpop.xlane.xlu0 %2391
      %v2393 = vrcp.pop 128.0
      %v2394 = vmul.f32 %v2390, %v2393
      %v2395 = vmul.f32 %v2392, %v2393
      %v2396 = vsub.f32 %v2385, %v2394
      %v2397 = vsub.f32 %v2386, %v2395
      %v2398 = vmul.f32 %v2396, %v2396
      %v2399 = vmul.f32 %v2397, %v2397
      %2400 = vadd.xlane.f32.xlu0 %v2398
      %v2401 = vpop.xlane.xlu0 %2400
      %2402 = vadd.xlane.f32.xlu0 %v2399
      %v2403 = vpop.xlane.xlu0 %2402
      %v2404 = vmul.f32 %v2401, %v2393
      %v2405 = vmul.f32 %v2403, %v2393
      %v2406 = vadd.f32 %v2404, 1e-05
      %v2407 = vadd.f32 %v2405, 1e-05
      %v2408 = vrsqrt.pop %v2406
      %v2409 = vrsqrt.pop %v2407
      %v2410 = vmul.f32 %v2396, %v2408
      %v2411 = vmul.f32 %v2397, %v2409
      %v2413 = vlaneseq
      %v2414 = vshrl.u32 %v2413, 7
      %v2415 = vsub.s32 0, %v2414
      %v2416 = vrot.slane %v2387, %v2415
      %v2418 = vmul.f32 %v2410, %v2416
      %v2419 = vmul.f32 %v2411, %v2416
      %v2421 = vlaneseq
      %v2422 = vshrl.u32 %v2421, 7
      %v2423 = vsub.s32 0, %v2422
      %v2424 = vrot.slane %v2388, %v2423
      %v2426 = vadd.f32 %v2418, %v2424
      %v2427 = vadd.f32 %v2419, %v2424
      %2428 = vst [vmem:[%s603] sm:$0xff] %v2426
      %2429 = vst [vmem:[%s603 + $0x8] sm:$0xff] %v2427
      %p2430 = scmp.lt.s32.totalorder %s23, 1
      %s2431 = scalar_select %p2430, %s23, 1
      %s2432 = smul.addr %s2431, 2
      %s2433 = smul.addr %s2432, 8
      %s2434 = scalar_lea.vmem %s12, %s2433
      // Predicated region
      $region69: #{_lambda_.9} parent=67 // pred_check
        %p2435 = pneg %p353
      $region70: #{_lambda_.9} parent=67 // pred_check_branch
        %2437 = sbr.rel (%p2435) target = $region72
      $region71: #{_lambda_.9} parent=67 // pred_region
        _
      $region72: #{_lambda_.9} parent=67 // pred_fallthru
        _
    $region68: #{_lambda_.9} parent=5 // pred_fallthru
      _
    %p2438 = scmp.le.s32.totalorder 2, %s18
    // Predicated region
    $region73: #{_lambda_.9} parent=5 // pred_check
      %p2439 = pneg %p2438
    $region74: #{_lambda_.9} parent=5 // pred_check_branch
      %2441 = sbr.rel (%p2439) target = $region76
    $region75: #{_lambda_.9} parent=5 // pred_region
      %s2442 = ssub.s32 %s18, 2
      // Predicated region
      $region77: #{_lambda_.9} parent=75 // pred_check
        %p2443 = pneg %p359
      $region78: #{_lambda_.9} parent=75 // pred_check_branch
        %2445 = sbr.rel (%p2443) target = $region80
      $region79: #{_lambda_.9} parent=75 // pred_region
        %p2446 = scmp.lt.s32.totalorder %s24, 1
        %s2447 = scalar_select %p2446, %s24, 1
        %s2448 = smul.addr %s2447, 2
        %s2449 = smul.addr %s2448, 8
        %s2450 = scalar_lea.vmem %s12, %s2449
      $region80: #{_lambda_.9} parent=75 // pred_fallthru
        _
    $region76: #{_lambda_.9} parent=5 // pred_fallthru
      _
  $region6: #{_lambda_.9} parent=0 // loop_footer
    %s22 = sadd.s32 1, %s18
  $region7: #{_lambda_.9} parent=0 // loop_footer_branch
    %17 = sbr.rel target = $region3
  $region8: #{_lambda_.9} parent=0 // loop_exit
    _

// kernel: _lambda_.11
$region0: #{_lambda_.11}
  #allocation0 [shape = 'u32[]', space=smem, size = 0x4, offset = 0x4, fixed_abs, tag = 'smem constant byte address 0x4 - core index']
  #allocation1 [shape = 'u32[144,128]{1,0:T(1,128)}', space=vmem, size = 0x12000, scoped, tag = 'internal scratch']
  %s0 = inlined_call_operand.vmem [shape: f32[6,8,128], index: 0, kind: input, shape index: {}]
  %s1 = inlined_call_operand.vmem [shape: bf16[128,256], index: 1, kind: input, shape index: {}]
  %s2 = inlined_call_operand.vmem [shape: f32[1,256], index: 2, kind: input, shape index: {}]
  %s3 = inlined_call_operand.vmem [shape: f32[1,256], index: 3, kind: input, shape index: {}]
  %s4 = inlined_call_operand.vmem [shape: f32[1,256], index: 4, kind: input, shape index: {}]
  %s5 = inlined_call_operand.vmem [shape: bf16[256,128], index: 5, kind: input, shape index: {}]
  %s6 = inlined_call_operand.vmem [shape: f32[1,128], index: 6, kind: input, shape index: {}]
  %s7 = inlined_call_operand.vmem [shape: f32[6,128], index: 7, kind: output, shape index: {}]
  %s8 = sld [smem:[#allocation0]]
  $region38: #{_lambda_.11} parent=0
    _
  %s10 = ssub.s32 1, %s8
  %s11 = scalar_select 0, %s10, %s8
  // Predicated region
  $region2: #{_lambda_.11} parent=0 // pred_check
    _
  $region3: #{_lambda_.11} parent=0 // pred_check_branch
    %13 = sbr.rel (0) target = $region5
  $region4: #{_lambda_.11} parent=0 // pred_region
    _
  $region5: #{_lambda_.11} parent=0 // pred_fallthru
    _
  // Predicated region
  $region6: #{_lambda_.11} parent=0 // pred_check
    _
  $region7: #{_lambda_.11} parent=0 // pred_check_branch
    %15 = sbr.rel (0) target = $region9
  $region8: #{_lambda_.11} parent=0 // pred_region
    _
  $region9: #{_lambda_.11} parent=0 // pred_fallthru
    _
  // Predicated region
  $region10: #{_lambda_.11} parent=0 // pred_check
    _
  $region11: #{_lambda_.11} parent=0 // pred_check_branch
    %17 = sbr.rel (0) target = $region13
  $region12: #{_lambda_.11} parent=0 // pred_region
    _
  $region13: #{_lambda_.11} parent=0 // pred_fallthru
    _
  // Predicated region
  $region14: #{_lambda_.11} parent=0 // pred_check
    _
  $region15: #{_lambda_.11} parent=0 // pred_check_branch
    %19 = sbr.rel (0) target = $region17
  $region16: #{_lambda_.11} parent=0 // pred_region
    _
  $region17: #{_lambda_.11} parent=0 // pred_fallthru
    _
  // Predicated region
  $region18: #{_lambda_.11} parent=0 // pred_check
    _
  $region19: #{_lambda_.11} parent=0 // pred_check_branch
    %21 = sbr.rel (0) target = $region21
  $region20: #{_lambda_.11} parent=0 // pred_region
    _
  $region21: #{_lambda_.11} parent=0 // pred_fallthru
    _
  // Predicated region
  $region22: #{_lambda_.11} parent=0 // pred_check
    _
  $region23: #{_lambda_.11} parent=0 // pred_check_branch
    %23 = sbr.rel (0) target = $region25
  $region24: #{_lambda_.11} parent=0 // pred_region
    _
  $region25: #{_lambda_.11} parent=0 // pred_fallthru
    _
  // Predicated region
  $region26: #{_lambda_.11} parent=0 // pred_check
    _
  $region27: #{_lambda_.11} parent=0 // pred_check_branch
    %25 = sbr.rel (0) target = $region29
  $region28: #{_lambda_.11} parent=0 // pred_region
    _
  $region29: #{_lambda_.11} parent=0 // pred_fallthru
    _
  %v27 = vld [vmem:[%s0] sm:$0xff]
  %v28 = vld [vmem:[%s0 + $0x8] sm:$0xff]
  %v29 = vld [vmem:[%s0 + $0x10] sm:$0xff]
  %v30 = vld [vmem:[%s0 + $0x18] sm:$0xff]
  %v31 = vld [vmem:[%s0 + $0x20] sm:$0xff]
  %v32 = vld [vmem:[%s0 + $0x28] sm:$0xff]
  %v33 = vrot.slane %v27, 4
  %v34 = vadd.f32 %v27, %v33
  %v35 = vrot.slane %v34, 2
  %v36 = vadd.f32 %v34, %v35
  %v37 = vrot.slane %v36, 1
  %v38 = vadd.f32 %v36, %v37
  %v39 = vrot.slane %v28, 4
  %v40 = vadd.f32 %v28, %v39
  %v41 = vrot.slane %v40, 2
  %v42 = vadd.f32 %v40, %v41
  %v43 = vrot.slane %v42, 1
  %v44 = vadd.f32 %v42, %v43
  %v45 = vrot.slane %v29, 4
  %v46 = vadd.f32 %v29, %v45
  %v47 = vrot.slane %v46, 2
  %v48 = vadd.f32 %v46, %v47
  %v49 = vrot.slane %v48, 1
  %v50 = vadd.f32 %v48, %v49
  %v51 = vrot.slane %v30, 4
  %v52 = vadd.f32 %v30, %v51
  %v53 = vrot.slane %v52, 2
  %v54 = vadd.f32 %v52, %v53
  %v55 = vrot.slane %v54, 1
  %v56 = vadd.f32 %v54, %v55
  %v57 = vrot.slane %v31, 4
  %v58 = vadd.f32 %v31, %v57
  %v59 = vrot.slane %v58, 2
  %v60 = vadd.f32 %v58, %v59
  %v61 = vrot.slane %v60, 1
  %v62 = vadd.f32 %v60, %v61
  %v63 = vrot.slane %v32, 4
  %v64 = vadd.f32 %v32, %v63
  %v65 = vrot.slane %v64, 2
  %v66 = vadd.f32 %v64, %v65
  %v67 = vrot.slane %v66, 1
  %v68 = vadd.f32 %v66, %v67
  %v69 = vrcp.pop 8.0
  %v70 = vmul.f32 %v38, %v69
  %v71 = vmul.f32 %v44, %v69
  %v72 = vmul.f32 %v50, %v69
  %v73 = vmul.f32 %v56, %v69
  %v74 = vmul.f32 %v62, %v69
  %v75 = vmul.f32 %v68, %v69
  %v76 = vpack.c.bf16 %v70, %v70
  %v77 = vpack.c.bf16 %v71, %v71
  %v78 = vpack.c.bf16 %v72, %v72
  %v79 = vpack.c.bf16 %v73, %v73
  %v80 = vpack.c.bf16 %v74, %v74
  %v81 = vpack.c.bf16 %v75, %v75
  %v82 = vld [vmem:[%s1] sm:$0xff]
  %v83 = vld [vmem:[%s1 + $0x8] sm:$0xff]
  %v84 = vld [vmem:[%s1 + $0x10] sm:$0xff]
  %v85 = vld [vmem:[%s1 + $0x18] sm:$0xff]
  %v86 = vld [vmem:[%s1 + $0x20] sm:$0xff]
  %v87 = vld [vmem:[%s1 + $0x28] sm:$0xff]
  %v88 = vld [vmem:[%s1 + $0x30] sm:$0xff]
  %v89 = vld [vmem:[%s1 + $0x38] sm:$0xff]
  %v90 = vld [vmem:[%s1 + $0x40] sm:$0xff]
  %v91 = vld [vmem:[%s1 + $0x48] sm:$0xff]
  %v92 = vld [vmem:[%s1 + $0x50] sm:$0xff]
  %v93 = vld [vmem:[%s1 + $0x58] sm:$0xff]
  %v94 = vld [vmem:[%s1 + $0x60] sm:$0xff]
  %v95 = vld [vmem:[%s1 + $0x68] sm:$0xff]
  %v96 = vld [vmem:[%s1 + $0x70] sm:$0xff]
  %v97 = vld [vmem:[%s1 + $0x78] sm:$0xff]
  %v98 = vld [vmem:[%s2] sm:$0x3]
  %v100 = vlaneseq
  %v101 = vshrl.u32 %v100, 7
  %v102 = vsub.s32 0, %v101
  %v103 = vrot.slane %v98, %v102
  %v104 = vlaneseq
  %v105 = vshrl.u32 %v104, 7
  %v106 = vsub.s32 1, %v105
  %v107 = vrot.slane %v98, %v106
  %v116 = vunpack.c.l.b16 %v76
  %v117 = vunpack.c.l.b16 %v77
  %v118 = vunpack.c.l.b16 %v78
  %v119 = vunpack.c.l.b16 %v79
  %v120 = vunpack.c.l.b16 %v80
  %v121 = vunpack.c.l.b16 %v81
  %vm122 = vcmask 1041409
  %v123 = vsel %vm122, %v117, %v116
  %vm124 = vcmask 1042434
  %v125 = vsel %vm124, %v118, %v123
  %vm126 = vcmask 1043459
  %v127 = vsel %vm126, %v119, %v125
  %vm128 = vcmask 1044484
  %v129 = vsel %vm128, %v120, %v127
  %vm130 = vcmask 1045509
  %v131 = vsel %vm130, %v121, %v129
  %v132 = vpack.c.b16 %v131, %v131
  %v150 = vunpack.c.l.b16 %v82
  %v151 = vunpack.c.h.b16 %v82
  %v152 = vunpack.c.l.b16 %v83
  %v153 = vunpack.c.h.b16 %v83
  %v154 = vunpack.c.l.b16 %v84
  %v155 = vunpack.c.h.b16 %v84
  %v156 = vunpack.c.l.b16 %v85
  %v157 = vunpack.c.h.b16 %v85
  %v158 = vunpack.c.l.b16 %v86
  %v159 = vunpack.c.h.b16 %v86
  %v160 = vunpack.c.l.b16 %v87
  %v161 = vunpack.c.h.b16 %v87
  %v162 = vunpack.c.l.b16 %v88
  %v163 = vunpack.c.h.b16 %v88
  %v164 = vunpack.c.l.b16 %v89
  %v165 = vunpack.c.h.b16 %v89
  %v166 = vunpack.c.l.b16 %v90
  %v167 = vunpack.c.h.b16 %v90
  %v168 = vunpack.c.l.b16 %v91
  %v169 = vunpack.c.h.b16 %v91
  %v170 = vunpack.c.l.b16 %v92
  %v171 = vunpack.c.h.b16 %v92
  %v172 = vunpack.c.l.b16 %v93
  %v173 = vunpack.c.h.b16 %v93
  %v174 = vunpack.c.l.b16 %v94
  %v175 = vunpack.c.h.b16 %v94
  %v176 = vunpack.c.l.b16 %v95
  %v177 = vunpack.c.h.b16 %v95
  %v178 = vunpack.c.l.b16 %v96
  %v179 = vunpack.c.h.b16 %v96
  %v180 = vunpack.c.l.b16 %v97
  %v181 = vunpack.c.h.b16 %v97
  %v182 = vpack.c.b16 %v152, %v150
  %v183 = vpack.c.b16 %v153, %v151
  %v184 = vpack.c.b16 %v156, %v154
  %v185 = vpack.c.b16 %v157, %v155
  %v186 = vpack.c.b16 %v160, %v158
  %v187 = vpack.c.b16 %v161, %v159
  %v188 = vpack.c.b16 %v164, %v162
  %v189 = vpack.c.b16 %v165, %v163
  %v190 = vpack.c.b16 %v168, %v166
  %v191 = vpack.c.b16 %v169, %v167
  %v192 = vpack.c.b16 %v172, %v170
  %v193 = vpack.c.b16 %v173, %v171
  %v194 = vpack.c.b16 %v176, %v174
  %v195 = vpack.c.b16 %v177, %v175
  %v196 = vpack.c.b16 %v180, %v178
  %v197 = vpack.c.b16 %v181, %v179
  %214 = vmatprep.subr.bf16.mxu0 %v197
  %215 = vmatpush1.bf16.msra.mxu0 %v196
  %216 = vmatprep.subr.bf16.mxu0 %v195
  %217 = vmatpush1.bf16.msra.mxu0 %v194
  %218 = vmatprep.subr.bf16.mxu0 %v193
  %219 = vmatpush1.bf16.msra.mxu0 %v192
  %220 = vmatprep.subr.bf16.mxu0 %v191
  %221 = vmatpush1.bf16.msra.mxu0 %v190
  %222 = vmatprep.subr.bf16.mxu0 %v189
  %223 = vmatpush1.bf16.msra.mxu0 %v188
  %224 = vmatprep.subr.bf16.mxu0 %v187
  %225 = vmatpush1.bf16.msra.mxu0 %v186
  %226 = vmatprep.subr.bf16.mxu0 %v185
  %227 = vmatpush1.bf16.msra.mxu0 %v184
  %228 = vmatprep.subr.bf16.mxu0 %v183
  %229 = vmatpush1.bf16.msra.mxu0 %v182
  %230 = vmatprep.subr.bf16.mxu0 0
  %231 = vmatpush2.bf16.msra.mxu0 0
  %232 = vmatprep.subr.bf16.mxu0 0
  %233 = vmatpush2.bf16.msra.mxu0 0
  %234 = vmatprep.subr.bf16.mxu0 0
  %235 = vmatpush2.bf16.msra.mxu0 0
  %236 = vmatprep.subr.bf16.mxu0 0
  %237 = vmatpush2.bf16.msra.mxu0 0
  %238 = vmatprep.subr.bf16.mxu0 0
  %239 = vmatpush2.bf16.msra.mxu0 0
  %240 = vmatprep.subr.bf16.mxu0 0
  %241 = vmatpush2.bf16.msra.mxu0 0
  %242 = vmatprep.subr.bf16.mxu0 0
  %243 = vmatpush2.bf16.msra.mxu0 0
  %244 = vmatprep.subr.bf16.mxu0 0
  %245 = vmatpush2.bf16.msra.mxu0 0
  %246 = vmatprep.mubr.bf16.mxu0 0
  %247 = vmatmul.mubr.bf16.gmra.mxu0 %v132
  %v248 = vpop.f32.mrf.mxu0
  %v249 = vadd.f32 %v103, %v248
  %v250 = vpop.f32.mrf.mxu0
  %v251 = vadd.f32 %v107, %v250
  %v252 = vpop.f32.mrf.mxu0
  %v253 = vpop.f32.mrf.mxu0
  %254 = vdwg.mxu0
  %v255 = vmul.f32 %v249, 0.5
  %v256 = vmul.f32 %v251, 0.5
  %v257 = vrcp.pop 1.4142135
  %v258 = vmul.f32 %v249, %v257
  %v259 = vmul.f32 %v251, %v257
  %v260 = verf.f32.pop %v258
  %v261 = verf.f32.pop %v259
  %v262 = vadd.f32 %v260, 1.0
  %v263 = vadd.f32 %v261, 1.0
  %v264 = vmul.f32 %v255, %v262
  %v265 = vmul.f32 %v256, %v263
  %v266 = vld [vmem:[%s3] sm:$0x3]
  %v267 = vld [vmem:[%s4] sm:$0x3]
  %vm268 = vcmask 1045504
  %v269 = vsel %vm268, %v264, 0.0
  %v270 = vsel %vm268, %v265, 0.0
  %v271 = vadd.f32 %v269, %v270
  %272 = vadd.xlane.f32.xlu0 %v271
  %v273 = vpop.xlane.xlu0 %272
  %v274 = vrcp.pop 256.0
  %v275 = vmul.f32 %v273, %v274
  %v276 = vsub.f32 %v264, %v275
  %v277 = vsub.f32 %v265, %v275
  %v278 = vmul.f32 %v276, %v276
  %v279 = vmul.f32 %v277, %v277
  %v280 = vsel %vm268, %v278, 0.0
  %v281 = vsel %vm268, %v279, 0.0
  %v282 = vadd.f32 %v280, %v281
  %283 = vadd.xlane.f32.xlu0 %v282
  %v284 = vpop.xlane.xlu0 %283
  %v285 = vmul.f32 %v284, %v274
  %v286 = vadd.f32 %v285, 1e-05
  %v287 = vrsqrt.pop %v286
  %v288 = vmul.f32 %v276, %v287
  %v289 = vmul.f32 %v277, %v287
  %v291 = vlaneseq
  %v292 = vshrl.u32 %v291, 7
  %v293 = vsub.s32 0, %v292
  %v294 = vrot.slane %v266, %v293
  %v295 = vlaneseq
  %v296 = vshrl.u32 %v295, 7
  %v297 = vsub.s32 1, %v296
  %v298 = vrot.slane %v266, %v297
  %v301 = vmul.f32 %v288, %v294
  %v302 = vmul.f32 %v289, %v298
  %v304 = vlaneseq
  %v305 = vshrl.u32 %v304, 7
  %v306 = vsub.s32 0, %v305
  %v307 = vrot.slane %v267, %v306
  %v308 = vlaneseq
  %v309 = vshrl.u32 %v308, 7
  %v310 = vsub.s32 1, %v309
  %v311 = vrot.slane %v267, %v310
  %v314 = vadd.f32 %v301, %v307
  %v315 = vadd.f32 %v302, %v311
  %v316 = vpack.c.bf16 %v314, %v314
  %v317 = vpack.c.bf16 %v315, %v315
  %v318 = vld [vmem:[%s5] sm:$0xf]
  %v319 = vld [vmem:[%s5 + $0x4] sm:$0xf]
  %v320 = vld [vmem:[%s5 + $0x8] sm:$0xf]
  %v321 = vld [vmem:[%s5 + $0xc] sm:$0xf]
  %v322 = vld [vmem:[%s5 + $0x10] sm:$0xf]
  %v323 = vld [vmem:[%s5 + $0x14] sm:$0xf]
  %v324 = vld [vmem:[%s5 + $0x18] sm:$0xf]
  %v325 = vld [vmem:[%s5 + $0x1c] sm:$0xf]
  %v326 = vld [vmem:[%s5 + $0x20] sm:$0xf]
  %v327 = vld [vmem:[%s5 + $0x24] sm:$0xf]
  %v328 = vld [vmem:[%s5 + $0x28] sm:$0xf]
  %v329 = vld [vmem:[%s5 + $0x2c] sm:$0xf]
  %v330 = vld [vmem:[%s5 + $0x30] sm:$0xf]
  %v331 = vld [vmem:[%s5 + $0x34] sm:$0xf]
  %v332 = vld [vmem:[%s5 + $0x38] sm:$0xf]
  %v333 = vld [vmem:[%s5 + $0x3c] sm:$0xf]
  %v334 = vld [vmem:[%s5 + $0x40] sm:$0xf]
  %v335 = vld [vmem:[%s5 + $0x44] sm:$0xf]
  %v336 = vld [vmem:[%s5 + $0x48] sm:$0xf]
  %v337 = vld [vmem:[%s5 + $0x4c] sm:$0xf]
  %v338 = vld [vmem:[%s5 + $0x50] sm:$0xf]
  %v339 = vld [vmem:[%s5 + $0x54] sm:$0xf]
  %v340 = vld [vmem:[%s5 + $0x58] sm:$0xf]
  %v341 = vld [vmem:[%s5 + $0x5c] sm:$0xf]
  %v342 = vld [vmem:[%s5 + $0x60] sm:$0xf]
  %v343 = vld [vmem:[%s5 + $0x64] sm:$0xf]
  %v344 = vld [vmem:[%s5 + $0x68] sm:$0xf]
  %v345 = vld [vmem:[%s5 + $0x6c] sm:$0xf]
  %v346 = vld [vmem:[%s5 + $0x70] sm:$0xf]
  %v347 = vld [vmem:[%s5 + $0x74] sm:$0xf]
  %v348 = vld [vmem:[%s5 + $0x78] sm:$0xf]
  %v349 = vld [vmem:[%s5 + $0x7c] sm:$0xf]
  %v350 = vld [vmem:[%s6] sm:$0x1]
  %v352 = vlaneseq
  %v353 = vshrl.u32 %v352, 7
  %v354 = vsub.s32 0, %v353
  %v355 = vrot.slane %v350, %v354
  %v389 = vunpack.c.l.b16 %v318
  %v390 = vunpack.c.l.b16 %v319
  %v391 = vunpack.c.l.b16 %v320
  %v392 = vunpack.c.l.b16 %v321
  %v393 = vunpack.c.l.b16 %v322
  %v394 = vunpack.c.l.b16 %v323
  %v395 = vunpack.c.l.b16 %v324
  %v396 = vunpack.c.l.b16 %v325
  %v397 = vunpack.c.l.b16 %v326
  %v398 = vunpack.c.l.b16 %v327
  %v399 = vunpack.c.l.b16 %v328
  %v400 = vunpack.c.l.b16 %v329
  %v401 = vunpack.c.l.b16 %v330
  %v402 = vunpack.c.l.b16 %v331
  %v403 = vunpack.c.l.b16 %v332
  %v404 = vunpack.c.l.b16 %v333
  %v405 = vunpack.c.l.b16 %v334
  %v406 = vunpack.c.l.b16 %v335
  %v407 = vunpack.c.l.b16 %v336
  %v408 = vunpack.c.l.b16 %v337
  %v409 = vunpack.c.l.b16 %v338
  %v410 = vunpack.c.l.b16 %v339
  %v411 = vunpack.c.l.b16 %v340
  %v412 = vunpack.c.l.b16 %v341
  %v413 = vunpack.c.l.b16 %v342
  %v414 = vunpack.c.l.b16 %v343
  %v415 = vunpack.c.l.b16 %v344
  %v416 = vunpack.c.l.b16 %v345
  %v417 = vunpack.c.l.b16 %v346
  %v418 = vunpack.c.l.b16 %v347
  %v419 = vunpack.c.l.b16 %v348
  %v420 = vunpack.c.l.b16 %v349
  %v421 = vpack.c.b16 %v390, %v389
  %v422 = vpack.c.b16 %v392, %v391
  %v423 = vpack.c.b16 %v394, %v393
  %v424 = vpack.c.b16 %v396, %v395
  %v425 = vpack.c.b16 %v398, %v397
  %v426 = vpack.c.b16 %v400, %v399
  %v427 = vpack.c.b16 %v402, %v401
  %v428 = vpack.c.b16 %v404, %v403
  %v429 = vpack.c.b16 %v406, %v405
  %v430 = vpack.c.b16 %v408, %v407
  %v431 = vpack.c.b16 %v410, %v409
  %v432 = vpack.c.b16 %v412, %v411
  %v433 = vpack.c.b16 %v414, %v413
  %v434 = vpack.c.b16 %v416, %v415
  %v435 = vpack.c.b16 %v418, %v417
  %v436 = vpack.c.b16 %v420, %v419
  %453 = vmatprep.subr.bf16.mxu0 0
  %454 = vmatpush1.bf16.msra.mxu0 %v428
  %455 = vmatprep.subr.bf16.mxu0 0
  %456 = vmatpush1.bf16.msra.mxu0 %v427
  %457 = vmatprep.subr.bf16.mxu0 0
  %458 = vmatpush1.bf16.msra.mxu0 %v426
  %459 = vmatprep.subr.bf16.mxu0 0
  %460 = vmatpush1.bf16.msra.mxu0 %v425
  %461 = vmatprep.subr.bf16.mxu0 0
  %462 = vmatpush1.bf16.msra.mxu0 %v424
  %463 = vmatprep.subr.bf16.mxu0 0
  %464 = vmatpush1.bf16.msra.mxu0 %v423
  %465 = vmatprep.subr.bf16.mxu0 0
  %466 = vmatpush1.bf16.msra.mxu0 %v422
  %467 = vmatprep.subr.bf16.mxu0 0
  %468 = vmatpush1.bf16.msra.mxu0 %v421
  %469 = vmatprep.subr.bf16.mxu0 0
  %470 = vmatpush2.bf16.msra.mxu0 %v436
  %471 = vmatprep.subr.bf16.mxu0 0
  %472 = vmatpush2.bf16.msra.mxu0 %v435
  %473 = vmatprep.subr.bf16.mxu0 0
  %474 = vmatpush2.bf16.msra.mxu0 %v434
  %475 = vmatprep.subr.bf16.mxu0 0
  %476 = vmatpush2.bf16.msra.mxu0 %v433
  %477 = vmatprep.subr.bf16.mxu0 0
  %478 = vmatpush2.bf16.msra.mxu0 %v432
  %479 = vmatprep.subr.bf16.mxu0 0
  %480 = vmatpush2.bf16.msra.mxu0 %v431
  %481 = vmatprep.subr.bf16.mxu0 0
  %482 = vmatpush2.bf16.msra.mxu0 %v430
  %483 = vmatprep.subr.bf16.mxu0 0
  %484 = vmatpush2.bf16.msra.mxu0 %v429
  %485 = vmatprep.mubr.bf16.mxu0 %v317
  %486 = vmatmul.mubr.bf16.gmra.mxu0 %v316
  %v487 = vpop.f32.mrf.mxu0
  %v488 = vadd.f32 %v355, %v487
  %v489 = vpop.f32.mrf.mxu0
  %v490 = vpop.f32.mrf.mxu0
  %v491 = vpop.f32.mrf.mxu0
  %492 = vdwg.mxu0
  %493 = vst [vmem:[%s7] sm:$0x3f] %v488
  // Predicated region
  $region30: #{_lambda_.11} parent=0 // pred_check
    _
  $region31: #{_lambda_.11} parent=0 // pred_check_branch
    %495 = sbr.rel (0) target = $region33
  $region32: #{_lambda_.11} parent=0 // pred_region
    _
  $region33: #{_lambda_.11} parent=0 // pred_fallthru
    _
  // Predicated region
  $region34: #{_lambda_.11} parent=0 // pred_check
    _
  $region35: #{_lambda_.11} parent=0 // pred_check_branch
    %497 = sbr.rel (0) target = $region37
  $region36: #{_lambda_.11} parent=0 // pred_region
    _
  $region37: #{_lambda_.11} parent=0 // pred_fallthru
    _

</llo_original>
